<compile_context>
chip_gen: v6e
topology: v6e:2x2x1
jax: 0.10.0
libtpu: 0.0.40
codegen_flags: <defaults>
</compile_context>

<pallas_src>
from functools import partial

import jax
import jax.numpy as jnp
from jax.experimental import pallas as pl
from jax.experimental.pallas import tpu as pltpu

LANE = 128           # TPU lane width: GEMM outputs padded to a multiple of this
NEG_SLOPE = 0.01     # nn.LeakyReLU default
BN_EPS = 1e-5        # nn.BatchNorm2d default


def _round_up(x, m):
    return ((x + m - 1) // m) * m


_VMEM_LIMIT = None


def _vmem_limit():
    """Generation-aware VMEM limit (v7x has 64 MiB, v5e/v6e have 128 MiB)."""
    global _VMEM_LIMIT
    if _VMEM_LIMIT is None:
        try:
            cap = int(pltpu.get_tpu_info().vmem_capacity_bytes)
        except Exception:
            cap = 64 * 1024 * 1024
        _VMEM_LIMIT = max(32 * 1024 * 1024, min(3 * cap // 4, 112 * 1024 * 1024))
    return _VMEM_LIMIT


def _cparams(grid_rank=0):
    if grid_rank:
        return pltpu.CompilerParams(
            dimension_semantics=("parallel",) * grid_rank,
            vmem_limit_bytes=_vmem_limit())
    return pltpu.CompilerParams(vmem_limit_bytes=_vmem_limit())


# ------------------------------------------------------------------
# Fused conv kernel: prologue (BN affine + LeakyReLU) -> k x k GEMM loop over
# shifted VMEM windows -> bias -> (optional per-tile BN partial stats) ->
# (optional tanh) -> lane-dense store of the valid output width.
# ------------------------------------------------------------------
def _conv_kernel(*refs, kh, kw, oh, owp, ow, npad, cin, prologue, stats,
                 tanh_out, slope):
    x_ref, w_ref, b_ref = refs[0], refs[1], refs[2]
    nin = 3
    if prologue:
        s_ref, t_ref = refs[3], refs[4]
        nin = 5
    o_ref = refs[nin]
    if stats:
        sum_ref, m2_ref = refs[nin + 1], refs[nin + 2]

    # Load the whole halo tile once; apply the producer's BN+LeakyReLU once (f32).
    x = x_ref[0].astype(jnp.float32)
    if prologue:
        x = x * s_ref[...] + t_ref[...]
        x = jnp.where(x > 0, x, slope * x)

    m = oh * owp
    acc = jnp.zeros((m, npad), jnp.float32)
    for dy in range(kh):
        for dx in range(kw):
            win = x[dy:dy + oh, dx:dx + owp, :]
            # owp % 8 == 0  ->  this flatten is layout preserving.
            a2 = win.reshape(m, cin).astype(jnp.bfloat16)
            acc = acc + jnp.dot(a2, w_ref[dy * kw + dx],
                                preferred_element_type=jnp.float32)
    y = acc + b_ref[...]

    if stats:
        # Per-tile moments about the tile mean (no resident accumulator -> the
        # batch grid axis stays 'parallel'; combined with Chan's formula in JAX).
        col = jax.lax.broadcasted_iota(jnp.int32, (m, 1), 0) % owp
        valid = col < ow                       # mask garbage width-padding columns
        inv_cnt = 1.0 / float(oh * ow)
        s = jnp.sum(jnp.where(valid, y, 0.0), axis=0, keepdims=True)
        mean = s * inv_cnt
        d = jnp.where(valid, y - mean, 0.0)
        m2 = jnp.sum(d * d, axis=0, keepdims=True)
        sum_ref[...] = s.reshape(1, 1, npad)
        m2_ref[...] = m2.reshape(1, 1, npad)

    if tanh_out:
        y = jnp.tanh(y)
    # Store only the valid width; lane dim stays a dense multiple of 128.
    y = y.reshape(oh, owp, npad)[:, :ow, :]
    o_ref[...] = y.reshape(1, oh, ow, npad).astype(o_ref.dtype)


def conv2d_fused(x, w, b, scale=None, shift=None, *, out_h, out_w, out_w_pad,
                 stats=False, tanh_out=False, out_dtype=jnp.bfloat16):
    """Stride-1 kxk conv (k in {2,3}) as one Pallas kernel, one image per grid step.

    x: (B, out_h + k - 1, >= out_w_pad + k - 1, Cin) bf16, already halo-padded.
    w: (k*k, Cin, Npad) bf16 (Npad multiple of 128).  b: (1, Npad) f32.
    Returns y (B, out_h, out_w, Npad) plus optional per-image BN partial stats.
    """
    B, in_h, in_w, cin = x.shape
    khkw, cin_w, npad = w.shape
    assert cin_w == cin
    kh = kw = {4: 2, 9: 3}[khkw]
    assert in_h == out_h + kh - 1
    assert in_w >= out_w_pad + kw - 1
    assert out_w_pad % 8 == 0 and npad % LANE == 0
    prologue = scale is not None

    in_arrays = [x, w, b]
    in_specs = [pl.BlockSpec((1, in_h, in_w, cin), lambda i: (i, 0, 0, 0)),
                pl.BlockSpec((khkw, cin, npad), lambda i: (0, 0, 0)),
                pl.BlockSpec((1, npad), lambda i: (0, 0))]
    if prologue:
        in_arrays += [scale.reshape(1, cin).astype(jnp.float32),
                      shift.reshape(1, cin).astype(jnp.float32)]
        in_specs += [pl.BlockSpec((1, cin), lambda i: (0, 0)),
                     pl.BlockSpec((1, cin), lambda i: (0, 0))]

    out_shapes = [jax.ShapeDtypeStruct((B, out_h, out_w, npad), out_dtype)]
    out_specs = [pl.BlockSpec((1, out_h, out_w, npad), lambda i: (i, 0, 0, 0))]
    if stats:
        out_shapes += [jax.ShapeDtypeStruct((B, 1, npad), jnp.float32)] * 2
        out_specs += [pl.BlockSpec((1, 1, npad), lambda i: (i, 0, 0)),
                      pl.BlockSpec((1, 1, npad), lambda i: (i, 0, 0))]

    outs = pl.pallas_call(
        partial(_conv_kernel, kh=kh, kw=kw, oh=out_h, owp=out_w_pad, ow=out_w,
                npad=npad, cin=cin, prologue=prologue, stats=stats,
                tanh_out=tanh_out, slope=NEG_SLOPE),
        out_shape=tuple(out_shapes),
        grid=(B,),
        in_specs=in_specs,
        out_specs=tuple(out_specs),
        compiler_params=_cparams(1),
    )(*in_arrays)
    if stats:
        return outs
    return outs[0]


# ------------------------------------------------------------------
# Encoder head: BN+LeakyReLU prologue + fused fc_mu/fc_var GEMM + reparameterize.
# mu occupies lanes [0,128), log_var lanes [128,256) of one (K, 256) weight.
# ------------------------------------------------------------------
def _head_kernel(a_ref, w_ref, b_ref, s_ref, t_ref, eps_ref,
                 mu_ref, lv_ref, z_ref, *, slope):
    a = a_ref[...].astype(jnp.float32) * s_ref[...] + t_ref[...]
    a = jnp.where(a > 0, a, slope * a)
    y = jnp.dot(a.astype(jnp.bfloat16), w_ref[...],
                preferred_element_type=jnp.float32) + b_ref[...]
    mu = y[:, :LANE]
    lv = y[:, LANE:]
    mu_ref[...] = mu
    lv_ref[...] = lv
    z_ref[...] = eps_ref[...] * jnp.exp(0.5 * lv) + mu


def encoder_head(flat_bf16, wc, bc, scale_k, shift_k, eps_pad):
    B, K = flat_bf16.shape
    return pl.pallas_call(
        partial(_head_kernel, slope=NEG_SLOPE),
        out_shape=(jax.ShapeDtypeStruct((B, LANE), jnp.float32),
                   jax.ShapeDtypeStruct((B, LANE), jnp.float32),
                   jax.ShapeDtypeStruct((B, LANE), jnp.float32)),
        compiler_params=_cparams(0),
    )(flat_bf16, wc, bc,
      scale_k.reshape(1, K).astype(jnp.float32),
      shift_k.reshape(1, K).astype(jnp.float32), eps_pad)


# ------------------------------------------------------------------
# Plain small GEMM (decoder_input): bf16 x bf16 -> f32 acc -> bf16 out.
# ------------------------------------------------------------------
def _linear_kernel(a_ref, w_ref, b_ref, o_ref):
    o_ref[...] = (jnp.dot(a_ref[...], w_ref[...],
                          preferred_element_type=jnp.float32)
                  + b_ref[...]).astype(o_ref.dtype)


def linear(a_bf16, w_bf16, b_f32, out_dtype=jnp.bfloat16):
    B = a_bf16.shape[0]
    npad = w_bf16.shape[1]
    return pl.pallas_call(
        _linear_kernel,
        out_shape=jax.ShapeDtypeStruct((B, npad), out_dtype),
        compiler_params=_cparams(0),
    )(a_bf16, w_bf16, b_f32)


# ------------------------------------------------------------------
# JAX glue: per-channel padding, BatchNorm statistics combine, pad value.
# ------------------------------------------------------------------
def _pad_nhwc(x, top, bottom, left, right, value_c=None):
    """Spatial pad; with value_c the padding equals zero *after* the fused BN affine."""
    B, H, W, C = x.shape
    if value_c is None:
        return jnp.pad(x, ((0, 0), (top, bottom), (left, right), (0, 0)))
    base = jnp.broadcast_to(value_c.astype(x.dtype).reshape(1, 1, 1, C),
                            (B, H + top + bottom, W + left + right, C))
    return jax.lax.dynamic_update_slice(base, x, (0, top, left, 0))


def _bn_affine(sums, m2s, count, gamma, beta, eps=BN_EPS):
    """Chan's parallel combine of per-tile (sum, M2) partials -> BN affine."""
    G = sums.shape[0]
    total = G * count
    mean_g = sums / count
    mean = jnp.sum(sums, axis=0) / total
    m2 = jnp.sum(m2s, axis=0) + count * jnp.sum((mean_g - mean[None, :]) ** 2, axis=0)
    var = jnp.maximum(m2 / total, 0.0)
    scale = gamma * jax.lax.rsqrt(var + eps)
    shift = beta - mean * scale
    return scale, shift


def _bn_pad_value(scale_c, shift_c):
    safe = jnp.where(scale_c == 0, 1.0, scale_c)
    return jnp.where(scale_c == 0, 0.0, -shift_c / safe)


# ------------------------------------------------------------------
# Parameters (deterministic synthetic init, torch layouts) + one-time packing.
# ------------------------------------------------------------------
def init_params(key, hidden_dims, latent_dim, music_latent_dim, in_channels,
                conv_out_dim):
    keys = iter(jax.random.split(key, 64))

    def nrm(shape, scale=0.05):
        return scale * jax.random.normal(next(keys), shape, dtype=jnp.float32)

    L = len(hidden_dims)
    params = {}
    c_in = in_channels
    for i, h in enumerate(hidden_dims):
        params[f'enc{i}'] = dict(w=nrm((h, c_in, 3, 3)), b=nrm((h,)),
                                 gamma=jnp.ones((h,), jnp.float32),
                                 beta=jnp.zeros((h,), jnp.float32))
        c_in = h
    params['fc_mu'] = dict(w=nrm((latent_dim, conv_out_dim)), b=nrm((latent_dim,)))
    params['fc_var'] = dict(w=nrm((latent_dim, conv_out_dim)), b=nrm((latent_dim,)))
    params['dec_in'] = dict(w=nrm((conv_out_dim, latent_dim + music_latent_dim)),
                            b=nrm((conv_out_dim,)))
    for j, i in enumerate(range(L - 1, 0, -1)):
        params[f'dec{j}'] = dict(w=nrm((hidden_dims[i], hidden_dims[i - 1], 3, 3)),
                                 b=nrm((hidden_dims[i - 1],)),
                                 gamma=jnp.ones((hidden_dims[i - 1],), jnp.float32),
                                 beta=jnp.zeros((hidden_dims[i - 1],), jnp.float32))
    h0 = hidden_dims[0]
    params['final_convT'] = dict(w=nrm((h0, h0, 3, 3)), b=nrm((h0,)),
                                 gamma=jnp.ones((h0,), jnp.float32),
                                 beta=jnp.zeros((h0,), jnp.float32))
    params['final_conv'] = dict(w=nrm((1, h0, 3, 3)), b=nrm((1,)))
    return params


def prepare_params(params, hidden_dims, latent_dim):
    """One-time weight packing (review item: hoist all packing out of the hot path)."""
    L = len(hidden_dims)
    packed = {}

    def pack_bias(b, npad):
        return jnp.pad(b.astype(jnp.float32), (0, npad - b.shape[0])).reshape(1, npad)

    # encoder convs: 3x3 stride-2 -> space-to-depth 2x2 stride-1 over 4*Ci channels
    for i in range(L):
        p = params[f'enc{i}']
        w = p['w']                                   # (Co, Ci, 3, 3)
        Co, Ci = w.shape[0], w.shape[1]
        npad = _round_up(Co, LANE)
        w2 = jnp.zeros((4, 4 * Ci, npad), jnp.float32)
        for dy in range(2):
            for dx in range(2):
                for py in range(2):
                    for px in range(2):
                        ky, kx = 2 * dy + py, 2 * dx + px
                        if ky < 3 and kx < 3:
                            blk = jnp.transpose(w[:, :, ky, kx])      # (Ci, Co)
                            r0 = (py * 2 + px) * Ci
                            w2 = w2.at[dy * 2 + dx, r0:r0 + Ci, :Co].set(blk)
        packed[f'enc{i}'] = dict(w=w2.astype(jnp.bfloat16), b=pack_bias(p['b'], npad),
                                 gamma=p['gamma'], beta=p['beta'])

    # fused fc_mu / fc_var head
    K = params['fc_mu']['w'].shape[1]
    wc = jnp.zeros((K, 2 * LANE), jnp.float32)
    wc = wc.at[:, :latent_dim].set(params['fc_mu']['w'].T)
    wc = wc.at[:, LANE:LANE + latent_dim].set(params['fc_var']['w'].T)
    bc = jnp.zeros((1, 2 * LANE), jnp.float32)
    bc = bc.at[0, :latent_dim].set(params['fc_mu']['b'])
    bc = bc.at[0, LANE:LANE + latent_dim].set(params['fc_var']['b'])
    packed['head'] = dict(w=wc.astype(jnp.bfloat16), b=bc)

    # decoder_input linear
    w = params['dec_in']['w']                        # (conv_out_dim, latent+music)
    nout = w.shape[0]
    npad = _round_up(nout, LANE)
    wd = jnp.pad(w.T.astype(jnp.float32), ((0, 0), (0, npad - nout)))
    packed['dec_in'] = dict(w=wd.astype(jnp.bfloat16),
                            b=pack_bias(params['dec_in']['b'], npad))

    # ConvTranspose2d(k=3, s=2, p=1, output_padding=1) -> sub-pixel 2x2 conv
    def pack_convT(p):
        wt_src = p['w']                              # (Ci, Co, 3, 3)
        Ci, Co = wt_src.shape[0], wt_src.shape[1]
        npad = _round_up(4 * Co, LANE)
        wt = jnp.zeros((4, Ci, npad), jnp.float32)
        for ry in range(2):
            for rx in range(2):
                for dy in range(2):
                    for dx in range(2):
                        ky, kx = dy + 1 - 2 * ry, dx + 1 - 2 * rx
                        if 0 <= ky < 3 and 0 <= kx < 3:
                            c0 = (dy * 2 + dx) * Co
                            wt = wt.at[ry * 2 + rx, :, c0:c0 + Co].set(
                                wt_src[:, :, ky, kx])
        b4 = jnp.tile(p['b'].astype(jnp.float32), 4)
        return dict(w=wt.astype(jnp.bfloat16), b=pack_bias(b4, npad),
                    gamma=p['gamma'], beta=p['beta'])

    for j in range(L - 1):
        packed[f'dec{j}'] = pack_convT(params[f'dec{j}'])
    packed['final_convT'] = pack_convT(params['final_convT'])

    # final 3x3 stride-1 conv
    w = params['final_conv']['w']                    # (1, h0, 3, 3)
    Co, Ci = w.shape[0], w.shape[1]
    npad = _round_up(Co, LANE)
    w9 = jnp.zeros((9, Ci, npad), jnp.float32)
    for ky in range(3):
        for kx in range(3):
            w9 = w9.at[ky * 3 + kx, :, :Co].set(jnp.transpose(w[:, :, ky, kx]))
    packed['final_conv'] = dict(w=w9.astype(jnp.bfloat16),
                                b=pack_bias(params['final_conv']['b'], npad))
    return packed


# ------------------------------------------------------------------
# Forward pass
# ------------------------------------------------------------------
def timbre_vae_forward(packed, x_nchw, z_music, eps, hidden_dims, H_in, W_in,
                       timbre_latent_converge='none'):
    L = len(hidden_dims)
    B, C0 = x_nchw.shape[0], x_nchw.shape[1]
    He, We, Ce = H_in // 2 ** L, W_in // 2 ** L, hidden_dims[-1]
    latent_dim = eps.shape[1]
    conv_out_dim = He * We * Ce

    # ---- encode ----
    act = jnp.transpose(x_nchw, (0, 2, 3, 1)).astype(jnp.bfloat16)   # NHWC, bf16
    scale_c = shift_c = None          # pending BN+LeakyReLU of `act` (fused downstream)
    enc_cin = [C0] + list(hidden_dims[:-1])
    for i in range(L):
        lp = packed[f'enc{i}']
        Ci, Co = enc_cin[i], hidden_dims[i]
        src = act[..., :Ci]                            # drop producer lane padding
        H, W = src.shape[1], src.shape[2]
        Ho, Wo = H // 2, W // 2
        Wop = _round_up(Wo, 8)
        pad_v = None if scale_c is None else _bn_pad_value(scale_c, shift_c)
        # pad (zero in the post-BN domain) + free space-to-depth reshape: the
        # stride-2 3x3 conv becomes a stride-1 2x2 conv over 4*Ci channels.
        xp = _pad_nhwc(src, 1, 1, 1, 2 * Wop + 1 - W, pad_v)
        xs = xp.reshape(B, Ho + 1, 2, Wop + 1, 2, Ci)
        xs = jnp.transpose(xs, (0, 1, 3, 2, 4, 5)).reshape(B, Ho + 1, Wop + 1, 4 * Ci)
        s4 = None if scale_c is None else jnp.tile(scale_c, 4)
        t4 = None if shift_c is None else jnp.tile(shift_c, 4)
        y, s_sum, s_m2 = conv2d_fused(xs, lp['w'], lp['b'], s4, t4,
                                      out_h=Ho, out_w=Wo, out_w_pad=Wop, stats=True)
        scale_c, shift_c = _bn_affine(s_sum[:, 0, :Co], s_m2[:, 0, :Co],
                                      float(Ho * Wo), lp['gamma'], lp['beta'])
        act = y                                        # (B, Ho, Wo, 128) bf16, pre-BN

    # torch.flatten(NCHW, start_dim=1): columns in (c, h, w) order
    flat = jnp.transpose(act[..., :Ce], (0, 3, 1, 2)).reshape(B, conv_out_dim)
    sF = jnp.repeat(scale_c, He * We)
    tF = jnp.repeat(shift_c, He * We)
    eps_p = jnp.zeros((B, LANE), jnp.float32).at[:, :latent_dim].set(eps)
    mu_p, lv_p, z_p = encoder_head(flat, packed['head']['w'], packed['head']['b'],
                                   sF, tF, eps_p)
    mu = mu_p[:, :latent_dim]
    log_var = lv_p[:, :latent_dim]
    z = z_p[:, :latent_dim]

    # ---- decode ----
    if timbre_latent_converge == 'first':
        z_dec = jnp.tile(z[0:1], (8, 1))               # torch: z[0].repeat(8, 1)
    elif timbre_latent_converge == 'mean':
        z_dec = jnp.mean(z, axis=0)                    # mirrors the reference shape bug
    elif timbre_latent_converge == 'max':
        z_dec = jnp.max(z, axis=0)
    else:
        z_dec = z
    zc = jnp.concatenate([z_dec, z_music], axis=1).astype(jnp.bfloat16)
    d = linear(zc, packed['dec_in']['w'], packed['dec_in']['b'])
    act = jnp.transpose(d[:, :conv_out_dim].reshape(B, Ce, He, We), (0, 2, 3, 1))
    scale_c = shift_c = None                           # decoder_input has no BN / act

    dec_keys = [f'dec{j}' for j in range(L - 1)] + ['final_convT']
    dec_io = [(hidden_dims[i], hidden_dims[i - 1]) for i in range(L - 1, 0, -1)]
    dec_io.append((hidden_dims[0], hidden_dims[0]))
    for kname, (Ci, Co) in zip(dec_keys, dec_io):
        lp = packed[kname]
        H, W = act.shape[1], act.shape[2]
        Wp = _round_up(W, 8)
        pad_v = None if scale_c is None else _bn_pad_value(scale_c, shift_c)
        # ConvTranspose2d(k=3,s=2,p=1,op=1) == 2x2 stride-1 conv over the
        # (bottom/right padded) input producing 4 sub-pixel phases per channel.
        xp = _pad_nhwc(act, 0, 1, 0, Wp + 1 - W, pad_v)
        y, s_sum, s_m2 = conv2d_fused(xp, lp['w'], lp['b'], scale_c, shift_c,
                                      out_h=H, out_w=W, out_w_pad=Wp, stats=True)
        sg = s_sum[:, 0, :4 * Co].reshape(B * 4, Co)   # fold phases into BN groups
        mg = s_m2[:, 0, :4 * Co].reshape(B * 4, Co)
        scale_c, shift_c = _bn_affine(sg, mg, float(H * W), lp['gamma'], lp['beta'])
        # pixel shuffle (single fused XLA copy, bf16)
        t = y[..., :4 * Co].reshape(B, H, W, 2, 2, Co)
        act = jnp.transpose(t, (0, 1, 3, 2, 4, 5)).reshape(B, 2 * H, 2 * W, Co)

    # final 3x3 stride-1 conv with fused BN+LeakyReLU prologue and tanh epilogue
    lp = packed['final_conv']
    H, W = act.shape[1], act.shape[2]
    Wp = _round_up(W, 8)
    pad_v = _bn_pad_value(scale_c, shift_c)
    xp = _pad_nhwc(act, 1, 1, 1, Wp + 1 - W, pad_v)
    y = conv2d_fused(xp, lp['w'], lp['b'], scale_c, shift_c,
                     out_h=H, out_w=W, out_w_pad=Wp, stats=False, tanh_out=True,
                     out_dtype=jnp.float32)
    recon = jnp.transpose(y[..., :1], (0, 3, 1, 2))    # back to NCHW

    return [recon, x_nchw, mu, log_var, z]


# ------------------------------------------------------------------
# Main
# ------------------------------------------------------------------
if __name__ == "__main__":
    B = 2
    H_IN, W_IN = 16, 8           # small stand-in for the original 256 x 64 spectrogram
    hidden_dims = [8, 16, 32]
    latent_dim = 8
    music_latent_dim = 4
    L = len(hidden_dims)
    conv_out_dim = (H_IN // 2 ** L) * (W_IN // 2 ** L) * hidden_dims[-1]

    key = jax.random.PRNGKey(0)
    k_x, k_m, k_eps, k_p = jax.random.split(key, 4)
    x = jax.random.normal(k_x, (B, 1, H_IN, W_IN), dtype=jnp.float32)
    z_music = jax.random.normal(k_m, (B, music_latent_dim), dtype=jnp.float32)
    eps = jax.random.normal(k_eps, (B, latent_dim), dtype=jnp.float32)

    params = init_params(k_p, hidden_dims, latent_dim, music_latent_dim,
                         in_channels=1, conv_out_dim=conv_out_dim)
    packed = prepare_params(params, hidden_dims, latent_dim)   # one-time packing

    fwd = jax.jit(partial(timbre_vae_forward, hidden_dims=hidden_dims,
                          H_in=H_IN, W_in=W_IN, timbre_latent_converge='none'))
    outs = jax.block_until_ready(fwd(packed, x, z_music, eps))
    recon, inp, mu, log_var, z = outs

    assert recon.shape == (B, 1, H_IN, W_IN)
    assert mu.shape == (B, latent_dim)
    assert log_var.shape == (B, latent_dim)
    assert z.shape == (B, latent_dim)
    assert bool(jnp.all(jnp.isfinite(recon)))
    assert bool(jnp.all(jnp.isfinite(mu))) and bool(jnp.all(jnp.isfinite(log_var)))
    assert bool(jnp.all(jnp.abs(recon) <= 1.0))      # tanh output range
    print("KERNEL_OK")
</pallas_src>

<mosaic_0001>
module attributes {stable_mosaic.version = 11 : i64} {
  func.func @_conv_kernel(%arg0: i32, %arg1: memref<1x9x9x4xbf16, #tpu.memory_space<vmem>>, %arg2: memref<4x4x128xbf16, #tpu.memory_space<vmem>>, %arg3: memref<1x128xf32, #tpu.memory_space<vmem>>, %arg4: memref<1x8x4x128xbf16, #tpu.memory_space<vmem>>, %arg5: memref<1x1x128xf32, #tpu.memory_space<vmem>>, %arg6: memref<1x1x128xf32, #tpu.memory_space<vmem>>) attributes {dimension_semantics = [#tpu.dimension_semantics<parallel>], iteration_bounds = array<i64: 2>, scalar_prefetch = 0 : i64, scratch_operands = 0 : i64, tpu.core_type = #tpu.core_type<tc>, window_params = [{transform_indices = @transform_0, window_bounds = array<i64: 1, 9, 9, 4>}, {pipeline_mode = #tpu.pipeline_mode<synchronous>, transform_indices = @transform_1, window_bounds = array<i64: 4, 4, 128>}, {pipeline_mode = #tpu.pipeline_mode<synchronous>, transform_indices = @transform_2, window_bounds = array<i64: 1, 128>}, {transform_indices = @transform_3, window_bounds = array<i64: 1, 8, 4, 128>}, {transform_indices = @transform_4, window_bounds = array<i64: 1, 1, 128>}, {transform_indices = @transform_5, window_bounds = array<i64: 1, 1, 128>}]} {
    %c0 = arith.constant 0 : index
    %c0_0 = arith.constant 0 : index
    %c0_1 = arith.constant 0 : index
    %c0_2 = arith.constant 0 : index
    %0 = vector.load %arg1[%c0, %c0_0, %c0_1, %c0_2] : memref<1x9x9x4xbf16, #tpu.memory_space<vmem>>, vector<1x9x9x4xbf16>
    %1 = vector.shape_cast %0 : vector<1x9x9x4xbf16> to vector<9x9x4xbf16>
    %2 = arith.extf %1 : vector<9x9x4xbf16> to vector<9x9x4xf32>
    %cst = arith.constant 0.000000e+00 : f32
    %3 = vector.broadcast %cst : f32 to vector<64x128xf32>
    %4 = vector.extract_strided_slice %2 {offsets = [0, 0, 0], sizes = [8, 8, 4], strides = [1, 1, 1]} : vector<9x9x4xf32> to vector<8x8x4xf32>
    %5 = vector.shape_cast %4 : vector<8x8x4xf32> to vector<64x4xf32>
    %6 = arith.truncf %5 : vector<64x4xf32> to vector<64x4xbf16>
    %c0_3 = arith.constant 0 : index
    %c0_4 = arith.constant 0 : index
    %c0_5 = arith.constant 0 : index
    %7 = vector.load %arg2[%c0_3, %c0_4, %c0_5] : memref<4x4x128xbf16, #tpu.memory_space<vmem>>, vector<1x4x128xbf16>
    %8 = vector.shape_cast %7 : vector<1x4x128xbf16> to vector<4x128xbf16>
    %cst_6 = arith.constant dense<0.000000e+00> : vector<64x128xf32>
    %9 = tpu.matmul %6, %8, %cst_6 {dimension_numbers = #tpu.dot_dimension_numbers<[1], [0], [0], [1], [0, 0, 1, 1], [], []>} : vector<64x4xbf16>, vector<4x128xbf16>, vector<64x128xf32> -> vector<64x128xf32>
    %10 = arith.addf %3, %9 : vector<64x128xf32>
    %11 = vector.extract_strided_slice %2 {offsets = [0, 1, 0], sizes = [8, 8, 4], strides = [1, 1, 1]} : vector<9x9x4xf32> to vector<8x8x4xf32>
    %12 = vector.shape_cast %11 : vector<8x8x4xf32> to vector<64x4xf32>
    %13 = arith.truncf %12 : vector<64x4xf32> to vector<64x4xbf16>
    %c1 = arith.constant 1 : index
    %c0_7 = arith.constant 0 : index
    %c0_8 = arith.constant 0 : index
    %14 = vector.load %arg2[%c1, %c0_7, %c0_8] : memref<4x4x128xbf16, #tpu.memory_space<vmem>>, vector<1x4x128xbf16>
    %15 = vector.shape_cast %14 : vector<1x4x128xbf16> to vector<4x128xbf16>
    %cst_9 = arith.constant dense<0.000000e+00> : vector<64x128xf32>
    %16 = tpu.matmul %13, %15, %cst_9 {dimension_numbers = #tpu.dot_dimension_numbers<[1], [0], [0], [1], [0, 0, 1, 1], [], []>} : vector<64x4xbf16>, vector<4x128xbf16>, vector<64x128xf32> -> vector<64x128xf32>
    %17 = arith.addf %10, %16 : vector<64x128xf32>
    %18 = vector.extract_strided_slice %2 {offsets = [1, 0, 0], sizes = [8, 8, 4], strides = [1, 1, 1]} : vector<9x9x4xf32> to vector<8x8x4xf32>
    %19 = vector.shape_cast %18 : vector<8x8x4xf32> to vector<64x4xf32>
    %20 = arith.truncf %19 : vector<64x4xf32> to vector<64x4xbf16>
    %c2 = arith.constant 2 : index
    %c0_10 = arith.constant 0 : index
    %c0_11 = arith.constant 0 : index
    %21 = vector.load %arg2[%c2, %c0_10, %c0_11] : memref<4x4x128xbf16, #tpu.memory_space<vmem>>, vector<1x4x128xbf16>
    %22 = vector.shape_cast %21 : vector<1x4x128xbf16> to vector<4x128xbf16>
    %cst_12 = arith.constant dense<0.000000e+00> : vector<64x128xf32>
    %23 = tpu.matmul %20, %22, %cst_12 {dimension_numbers = #tpu.dot_dimension_numbers<[1], [0], [0], [1], [0, 0, 1, 1], [], []>} : vector<64x4xbf16>, vector<4x128xbf16>, vector<64x128xf32> -> vector<64x128xf32>
    %24 = arith.addf %17, %23 : vector<64x128xf32>
    %25 = vector.extract_strided_slice %2 {offsets = [1, 1, 0], sizes = [8, 8, 4], strides = [1, 1, 1]} : vector<9x9x4xf32> to vector<8x8x4xf32>
    %26 = vector.shape_cast %25 : vector<8x8x4xf32> to vector<64x4xf32>
    %27 = arith.truncf %26 : vector<64x4xf32> to vector<64x4xbf16>
    %c3 = arith.constant 3 : index
    %c0_13 = arith.constant 0 : index
    %c0_14 = arith.constant 0 : index
    %28 = vector.load %arg2[%c3, %c0_13, %c0_14] : memref<4x4x128xbf16, #tpu.memory_space<vmem>>, vector<1x4x128xbf16>
    %29 = vector.shape_cast %28 : vector<1x4x128xbf16> to vector<4x128xbf16>
    %cst_15 = arith.constant dense<0.000000e+00> : vector<64x128xf32>
    %30 = tpu.matmul %27, %29, %cst_15 {dimension_numbers = #tpu.dot_dimension_numbers<[1], [0], [0], [1], [0, 0, 1, 1], [], []>} : vector<64x4xbf16>, vector<4x128xbf16>, vector<64x128xf32> -> vector<64x128xf32>
    %31 = arith.addf %24, %30 : vector<64x128xf32>
    %c0_16 = arith.constant 0 : index
    %c0_17 = arith.constant 0 : index
    %32 = vector.load %arg3[%c0_16, %c0_17] : memref<1x128xf32, #tpu.memory_space<vmem>>, vector<1x128xf32>
    %33 = vector.broadcast %32 : vector<1x128xf32> to vector<64x128xf32>
    %34 = arith.addf %31, %33 : vector<64x128xf32>
    %35 = tpu.iota {dimensions = array<i32: 0>} : vector<64x1xi32>
    %c8_i32 = arith.constant 8 : i32
    %c0_i32 = arith.constant 0 : i32
    %36 = arith.cmpi eq, %c8_i32, %c0_i32 : i32
    %c1_i32 = arith.constant 1 : i32
    %37 = arith.select %36, %c1_i32, %c8_i32 : i32
    %38 = vector.broadcast %37 : i32 to vector<64x1xi32>
    %39 = arith.remsi %35, %38 : vector<64x1xi32>
    %c0_i32_18 = arith.constant 0 : i32
    %40 = vector.broadcast %c0_i32_18 : i32 to vector<64x1xi32>
    %41 = arith.cmpi ne, %39, %40 : vector<64x1xi32>
    %c0_i32_19 = arith.constant 0 : i32
    %42 = vector.broadcast %c0_i32_19 : i32 to vector<64x1xi32>
    %43 = arith.cmpi slt, %39, %42 : vector<64x1xi32>
    %c0_i32_20 = arith.constant 0 : i32
    %44 = arith.cmpi slt, %37, %c0_i32_20 : i32
    %45 = vector.broadcast %44 : i1 to vector<64x1xi1>
    %46 = vector.broadcast %45 : vector<64x1xi1> to vector<64x1xi1>
    %47 = arith.xori %43, %46 : vector<64x1xi1>
    %48 = arith.andi %47, %41 : vector<64x1xi1>
    %49 = vector.broadcast %37 : i32 to vector<64x1xi32>
    %50 = arith.addi %39, %49 : vector<64x1xi32>
    %51 = arith.select %48, %50, %39 : vector<64x1xi1>, vector<64x1xi32>
    %c4_i32 = arith.constant 4 : i32
    %52 = vector.broadcast %c4_i32 : i32 to vector<64x1xi32>
    %53 = arith.cmpi slt, %51, %52 : vector<64x1xi32>
    %cst_21 = arith.constant 0.000000e+00 : f32
    %54 = vector.shape_cast %53 : vector<64x1xi1> to vector<64x1xi1>
    %55 = vector.broadcast %54 : vector<64x1xi1> to vector<64x128xi1>
    %56 = vector.broadcast %cst_21 : f32 to vector<64x128xf32>
    %57 = arith.select %55, %34, %56 : vector<64x128xi1>, vector<64x128xf32>
    %cst_22 = arith.constant dense<0.000000e+00> : vector<128xf32>
    %58 = vector.multi_reduction <add>, %57, %cst_22 [0] : vector<64x128xf32> to vector<128xf32>
    %59 = vector.shape_cast %58 : vector<128xf32> to vector<1x128xf32>
    %cst_23 = arith.constant 3.125000e-02 : f32
    %60 = vector.broadcast %cst_23 : f32 to vector<1x128xf32>
    %61 = arith.mulf %59, %60 : vector<1x128xf32>
    %62 = vector.broadcast %61 : vector<1x128xf32> to vector<64x128xf32>
    %63 = arith.subf %34, %62 : vector<64x128xf32>
    %cst_24 = arith.constant 0.000000e+00 : f32
    %64 = vector.shape_cast %53 : vector<64x1xi1> to vector<64x1xi1>
    %65 = vector.broadcast %64 : vector<64x1xi1> to vector<64x128xi1>
    %66 = vector.broadcast %cst_24 : f32 to vector<64x128xf32>
    %67 = arith.select %65, %63, %66 : vector<64x128xi1>, vector<64x128xf32>
    %68 = arith.mulf %67, %67 : vector<64x128xf32>
    %cst_25 = arith.constant dense<0.000000e+00> : vector<128xf32>
    %69 = vector.multi_reduction <add>, %68, %cst_25 [0] : vector<64x128xf32> to vector<128xf32>
    %70 = vector.shape_cast %69 : vector<128xf32> to vector<1x128xf32>
    %71 = vector.shape_cast %59 : vector<1x128xf32> to vector<1x1x128xf32>
    %c0_26 = arith.constant 0 : index
    %c0_27 = arith.constant 0 : index
    %c0_28 = arith.constant 0 : index
    %72 = vector.load %arg5[%c0_26, %c0_27, %c0_28] : memref<1x1x128xf32, #tpu.memory_space<vmem>>, vector<1x1x128xf32>
    tpu.vector_store %arg5[%c0_26, %c0_27, %c0_28], %71 {strides = array<i32>} : memref<1x1x128xf32, #tpu.memory_space<vmem>>, vector<1x1x128xf32>,
    %73 = vector.shape_cast %70 : vector<1x128xf32> to vector<1x1x128xf32>
    %c0_29 = arith.constant 0 : index
    %c0_30 = arith.constant 0 : index
    %c0_31 = arith.constant 0 : index
    %74 = vector.load %arg6[%c0_29, %c0_30, %c0_31] : memref<1x1x128xf32, #tpu.memory_space<vmem>>, vector<1x1x128xf32>
    tpu.vector_store %arg6[%c0_29, %c0_30, %c0_31], %73 {strides = array<i32>} : memref<1x1x128xf32, #tpu.memory_space<vmem>>, vector<1x1x128xf32>,
    %75 = vector.shape_cast %34 : vector<64x128xf32> to vector<8x8x128xf32>
    %76 = vector.extract_strided_slice %75 {offsets = [0, 0, 0], sizes = [8, 4, 128], strides = [1, 1, 1]} : vector<8x8x128xf32> to vector<8x4x128xf32>
    %77 = vector.shape_cast %76 : vector<8x4x128xf32> to vector<1x8x4x128xf32>
    %78 = arith.truncf %77 : vector<1x8x4x128xf32> to vector<1x8x4x128xbf16>
    %c0_32 = arith.constant 0 : index
    %c0_33 = arith.constant 0 : index
    %c0_34 = arith.constant 0 : index
    %c0_35 = arith.constant 0 : index
    %79 = vector.load %arg4[%c0_32, %c0_33, %c0_34, %c0_35] : memref<1x8x4x128xbf16, #tpu.memory_space<vmem>>, vector<1x8x4x128xbf16>
    tpu.vector_store %arg4[%c0_32, %c0_33, %c0_34, %c0_35], %78 {strides = array<i32>} : memref<1x8x4x128xbf16, #tpu.memory_space<vmem>>, vector<1x8x4x128xbf16>,
    return
  }
  func.func @transform_0(%arg0: i32) -> (i32, i32, i32, i32) {
    %c0_i32 = arith.constant 0 : i32
    %c0_i32_0 = arith.constant 0 : i32
    %c0_i32_1 = arith.constant 0 : i32
    %c0_i32_2 = arith.constant 0 : i32
    return %arg0, %c0_i32, %c0_i32_0, %c0_i32_1 : i32, i32, i32, i32
  }
  func.func @transform_1(%arg0: i32) -> (i32, i32, i32) {
    %c0_i32 = arith.constant 0 : i32
    %c0_i32_0 = arith.constant 0 : i32
    %c0_i32_1 = arith.constant 0 : i32
    %c0_i32_2 = arith.constant 0 : i32
    return %c0_i32, %c0_i32_0, %c0_i32_1 : i32, i32, i32
  }
  func.func @transform_2(%arg0: i32) -> (i32, i32) {
    %c0_i32 = arith.constant 0 : i32
    %c0_i32_0 = arith.constant 0 : i32
    %c0_i32_1 = arith.constant 0 : i32
    return %c0_i32, %c0_i32_0 : i32, i32
  }
  func.func @transform_3(%arg0: i32) -> (i32, i32, i32, i32) {
    %c0_i32 = arith.constant 0 : i32
    %c0_i32_0 = arith.constant 0 : i32
    %c0_i32_1 = arith.constant 0 : i32
    %c0_i32_2 = arith.constant 0 : i32
    return %arg0, %c0_i32, %c0_i32_0, %c0_i32_1 : i32, i32, i32, i32
  }
  func.func @transform_4(%arg0: i32) -> (i32, i32, i32) {
    %c0_i32 = arith.constant 0 : i32
    %c0_i32_0 = arith.constant 0 : i32
    %c0_i32_1 = arith.constant 0 : i32
    return %arg0, %c0_i32, %c0_i32_0 : i32, i32, i32
  }
  func.func @transform_5(%arg0: i32) -> (i32, i32, i32) {
    %c0_i32 = arith.constant 0 : i32
    %c0_i32_0 = arith.constant 0 : i32
    %c0_i32_1 = arith.constant 0 : i32
    return %arg0, %c0_i32, %c0_i32_0 : i32, i32, i32
  }
}

module attributes {stable_mosaic.version = 11 : i64} {
  func.func @_conv_kernel(%arg0: i32, %arg1: memref<1x5x9x32xbf16, #tpu.memory_space<vmem>>, %arg2: memref<4x32x128xbf16, #tpu.memory_space<vmem>>, %arg3: memref<1x128xf32, #tpu.memory_space<vmem>>, %arg4: memref<1x32xf32, #tpu.memory_space<vmem>>, %arg5: memref<1x32xf32, #tpu.memory_space<vmem>>, %arg6: memref<1x4x2x128xbf16, #tpu.memory_space<vmem>>, %arg7: memref<1x1x128xf32, #tpu.memory_space<vmem>>, %arg8: memref<1x1x128xf32, #tpu.memory_space<vmem>>) attributes {dimension_semantics = [#tpu.dimension_semantics<parallel>], iteration_bounds = array<i64: 2>, scalar_prefetch = 0 : i64, scratch_operands = 0 : i64, tpu.core_type = #tpu.core_type<tc>, window_params = [{transform_indices = @transform_0, window_bounds = array<i64: 1, 5, 9, 32>}, {pipeline_mode = #tpu.pipeline_mode<synchronous>, transform_indices = @transform_1, window_bounds = array<i64: 4, 32, 128>}, {pipeline_mode = #tpu.pipeline_mode<synchronous>, transform_indices = @transform_2, window_bounds = array<i64: 1, 128>}, {pipeline_mode = #tpu.pipeline_mode<synchronous>, transform_indices = @transform_3, window_bounds = array<i64: 1, 32>}, {pipeline_mode = #tpu.pipeline_mode<synchronous>, transform_indices = @transform_4, window_bounds = array<i64: 1, 32>}, {transform_indices = @transform_5, window_bounds = array<i64: 1, 4, 2, 128>}, {transform_indices = @transform_6, window_bounds = array<i64: 1, 1, 128>}, {transform_indices = @transform_7, window_bounds = array<i64: 1, 1, 128>}]} {
    %c0 = arith.constant 0 : index
    %c0_0 = arith.constant 0 : index
    %c0_1 = arith.constant 0 : index
    %c0_2 = arith.constant 0 : index
    %0 = vector.load %arg1[%c0, %c0_0, %c0_1, %c0_2] : memref<1x5x9x32xbf16, #tpu.memory_space<vmem>>, vector<1x5x9x32xbf16>
    %1 = vector.shape_cast %0 : vector<1x5x9x32xbf16> to vector<5x9x32xbf16>
    %2 = arith.extf %1 : vector<5x9x32xbf16> to vector<5x9x32xf32>
    %c0_3 = arith.constant 0 : index
    %c0_4 = arith.constant 0 : index
    %3 = vector.load %arg4[%c0_3, %c0_4] : memref<1x32xf32, #tpu.memory_space<vmem>>, vector<1x32xf32>
    %4 = vector.shape_cast %3 : vector<1x32xf32> to vector<1x1x32xf32>
    %5 = vector.broadcast %4 : vector<1x1x32xf32> to vector<5x9x32xf32>
    %6 = arith.mulf %2, %5 : vector<5x9x32xf32>
    %c0_5 = arith.constant 0 : index
    %c0_6 = arith.constant 0 : index
    %7 = vector.load %arg5[%c0_5, %c0_6] : memref<1x32xf32, #tpu.memory_space<vmem>>, vector<1x32xf32>
    %8 = vector.shape_cast %7 : vector<1x32xf32> to vector<1x1x32xf32>
    %9 = vector.broadcast %8 : vector<1x1x32xf32> to vector<5x9x32xf32>
    %10 = arith.addf %6, %9 : vector<5x9x32xf32>
    %cst = arith.constant 0.000000e+00 : f32
    %11 = vector.broadcast %cst : f32 to vector<5x9x32xf32>
    %12 = arith.cmpf ogt, %10, %11 : vector<5x9x32xf32>
    %cst_7 = arith.constant 0.00999999977 : f32
    %13 = vector.broadcast %cst_7 : f32 to vector<5x9x32xf32>
    %14 = arith.mulf %13, %10 : vector<5x9x32xf32>
    %15 = arith.select %12, %10, %14 : vector<5x9x32xi1>, vector<5x9x32xf32>
    %cst_8 = arith.constant 0.000000e+00 : f32
    %16 = vector.broadcast %cst_8 : f32 to vector<32x128xf32>
    %17 = vector.extract_strided_slice %15 {offsets = [0, 0, 0], sizes = [4, 8, 32], strides = [1, 1, 1]} : vector<5x9x32xf32> to vector<4x8x32xf32>
    %18 = vector.shape_cast %17 : vector<4x8x32xf32> to vector<32x32xf32>
    %19 = arith.truncf %18 : vector<32x32xf32> to vector<32x32xbf16>
    %c0_9 = arith.constant 0 : index
    %c0_10 = arith.constant 0 : index
    %c0_11 = arith.constant 0 : index
    %20 = vector.load %arg2[%c0_9, %c0_10, %c0_11] : memref<4x32x128xbf16, #tpu.memory_space<vmem>>, vector<1x32x128xbf16>
    %21 = vector.shape_cast %20 : vector<1x32x128xbf16> to vector<32x128xbf16>
    %cst_12 = arith.constant dense<0.000000e+00> : vector<32x128xf32>
    %22 = tpu.matmul %19, %21, %cst_12 {dimension_numbers = #tpu.dot_dimension_numbers<[1], [0], [0], [1], [0, 0, 1, 1], [], []>} : vector<32x32xbf16>, vector<32x128xbf16>, vector<32x128xf32> -> vector<32x128xf32>
    %23 = arith.addf %16, %22 : vector<32x128xf32>
    %24 = vector.extract_strided_slice %15 {offsets = [0, 1, 0], sizes = [4, 8, 32], strides = [1, 1, 1]} : vector<5x9x32xf32> to vector<4x8x32xf32>
    %25 = vector.shape_cast %24 : vector<4x8x32xf32> to vector<32x32xf32>
    %26 = arith.truncf %25 : vector<32x32xf32> to vector<32x32xbf16>
    %c1 = arith.constant 1 : index
    %c0_13 = arith.constant 0 : index
    %c0_14 = arith.constant 0 : index
    %27 = vector.load %arg2[%c1, %c0_13, %c0_14] : memref<4x32x128xbf16, #tpu.memory_space<vmem>>, vector<1x32x128xbf16>
    %28 = vector.shape_cast %27 : vector<1x32x128xbf16> to vector<32x128xbf16>
    %cst_15 = arith.constant dense<0.000000e+00> : vector<32x128xf32>
    %29 = tpu.matmul %26, %28, %cst_15 {dimension_numbers = #tpu.dot_dimension_numbers<[1], [0], [0], [1], [0, 0, 1, 1], [], []>} : vector<32x32xbf16>, vector<32x128xbf16>, vector<32x128xf32> -> vector<32x128xf32>
    %30 = arith.addf %23, %29 : vector<32x128xf32>
    %31 = vector.extract_strided_slice %15 {offsets = [1, 0, 0], sizes = [4, 8, 32], strides = [1, 1, 1]} : vector<5x9x32xf32> to vector<4x8x32xf32>
    %32 = vector.shape_cast %31 : vector<4x8x32xf32> to vector<32x32xf32>
    %33 = arith.truncf %32 : vector<32x32xf32> to vector<32x32xbf16>
    %c2 = arith.constant 2 : index
    %c0_16 = arith.constant 0 : index
    %c0_17 = arith.constant 0 : index
    %34 = vector.load %arg2[%c2, %c0_16, %c0_17] : memref<4x32x128xbf16, #tpu.memory_space<vmem>>, vector<1x32x128xbf16>
    %35 = vector.shape_cast %34 : vector<1x32x128xbf16> to vector<32x128xbf16>
    %cst_18 = arith.constant dense<0.000000e+00> : vector<32x128xf32>
    %36 = tpu.matmul %33, %35, %cst_18 {dimension_numbers = #tpu.dot_dimension_numbers<[1], [0], [0], [1], [0, 0, 1, 1], [], []>} : vector<32x32xbf16>, vector<32x128xbf16>, vector<32x128xf32> -> vector<32x128xf32>
    %37 = arith.addf %30, %36 : vector<32x128xf32>
    %38 = vector.extract_strided_slice %15 {offsets = [1, 1, 0], sizes = [4, 8, 32], strides = [1, 1, 1]} : vector<5x9x32xf32> to vector<4x8x32xf32>
    %39 = vector.shape_cast %38 : vector<4x8x32xf32> to vector<32x32xf32>
    %40 = arith.truncf %39 : vector<32x32xf32> to vector<32x32xbf16>
    %c3 = arith.constant 3 : index
    %c0_19 = arith.constant 0 : index
    %c0_20 = arith.constant 0 : index
    %41 = vector.load %arg2[%c3, %c0_19, %c0_20] : memref<4x32x128xbf16, #tpu.memory_space<vmem>>, vector<1x32x128xbf16>
    %42 = vector.shape_cast %41 : vector<1x32x128xbf16> to vector<32x128xbf16>
    %cst_21 = arith.constant dense<0.000000e+00> : vector<32x128xf32>
    %43 = tpu.matmul %40, %42, %cst_21 {dimension_numbers = #tpu.dot_dimension_numbers<[1], [0], [0], [1], [0, 0, 1, 1], [], []>} : vector<32x32xbf16>, vector<32x128xbf16>, vector<32x128xf32> -> vector<32x128xf32>
    %44 = arith.addf %37, %43 : vector<32x128xf32>
    %c0_22 = arith.constant 0 : index
    %c0_23 = arith.constant 0 : index
    %45 = vector.load %arg3[%c0_22, %c0_23] : memref<1x128xf32, #tpu.memory_space<vmem>>, vector<1x128xf32>
    %46 = vector.broadcast %45 : vector<1x128xf32> to vector<32x128xf32>
    %47 = arith.addf %44, %46 : vector<32x128xf32>
    %48 = tpu.iota {dimensions = array<i32: 0>} : vector<32x1xi32>
    %c8_i32 = arith.constant 8 : i32
    %c0_i32 = arith.constant 0 : i32
    %49 = arith.cmpi eq, %c8_i32, %c0_i32 : i32
    %c1_i32 = arith.constant 1 : i32
    %50 = arith.select %49, %c1_i32, %c8_i32 : i32
    %51 = vector.broadcast %50 : i32 to vector<32x1xi32>
    %52 = arith.remsi %48, %51 : vector<32x1xi32>
    %c0_i32_24 = arith.constant 0 : i32
    %53 = vector.broadcast %c0_i32_24 : i32 to vector<32x1xi32>
    %54 = arith.cmpi ne, %52, %53 : vector<32x1xi32>
    %c0_i32_25 = arith.constant 0 : i32
    %55 = vector.broadcast %c0_i32_25 : i32 to vector<32x1xi32>
    %56 = arith.cmpi slt, %52, %55 : vector<32x1xi32>
    %c0_i32_26 = arith.constant 0 : i32
    %57 = arith.cmpi slt, %50, %c0_i32_26 : i32
    %58 = vector.broadcast %57 : i1 to vector<32x1xi1>
    %59 = vector.broadcast %58 : vector<32x1xi1> to vector<32x1xi1>
    %60 = arith.xori %56, %59 : vector<32x1xi1>
    %61 = arith.andi %60, %54 : vector<32x1xi1>
    %62 = vector.broadcast %50 : i32 to vector<32x1xi32>
    %63 = arith.addi %52, %62 : vector<32x1xi32>
    %64 = arith.select %61, %63, %52 : vector<32x1xi1>, vector<32x1xi32>
    %c2_i32 = arith.constant 2 : i32
    %65 = vector.broadcast %c2_i32 : i32 to vector<32x1xi32>
    %66 = arith.cmpi slt, %64, %65 : vector<32x1xi32>
    %cst_27 = arith.constant 0.000000e+00 : f32
    %67 = vector.shape_cast %66 : vector<32x1xi1> to vector<32x1xi1>
    %68 = vector.broadcast %67 : vector<32x1xi1> to vector<32x128xi1>
    %69 = vector.broadcast %cst_27 : f32 to vector<32x128xf32>
    %70 = arith.select %68, %47, %69 : vector<32x128xi1>, vector<32x128xf32>
    %cst_28 = arith.constant dense<0.000000e+00> : vector<128xf32>
    %71 = vector.multi_reduction <add>, %70, %cst_28 [0] : vector<32x128xf32> to vector<128xf32>
    %72 = vector.shape_cast %71 : vector<128xf32> to vector<1x128xf32>
    %cst_29 = arith.constant 1.250000e-01 : f32
    %73 = vector.broadcast %cst_29 : f32 to vector<1x128xf32>
    %74 = arith.mulf %72, %73 : vector<1x128xf32>
    %75 = vector.broadcast %74 : vector<1x128xf32> to vector<32x128xf32>
    %76 = arith.subf %47, %75 : vector<32x128xf32>
    %cst_30 = arith.constant 0.000000e+00 : f32
    %77 = vector.shape_cast %66 : vector<32x1xi1> to vector<32x1xi1>
    %78 = vector.broadcast %77 : vector<32x1xi1> to vector<32x128xi1>
    %79 = vector.broadcast %cst_30 : f32 to vector<32x128xf32>
    %80 = arith.select %78, %76, %79 : vector<32x128xi1>, vector<32x128xf32>
    %81 = arith.mulf %80, %80 : vector<32x128xf32>
    %cst_31 = arith.constant dense<0.000000e+00> : vector<128xf32>
    %82 = vector.multi_reduction <add>, %81, %cst_31 [0] : vector<32x128xf32> to vector<128xf32>
    %83 = vector.shape_cast %82 : vector<128xf32> to vector<1x128xf32>
    %84 = vector.shape_cast %72 : vector<1x128xf32> to vector<1x1x128xf32>
    %c0_32 = arith.constant 0 : index
    %c0_33 = arith.constant 0 : index
    %c0_34 = arith.constant 0 : index
    %85 = vector.load %arg7[%c0_32, %c0_33, %c0_34] : memref<1x1x128xf32, #tpu.memory_space<vmem>>, vector<1x1x128xf32>
    tpu.vector_store %arg7[%c0_32, %c0_33, %c0_34], %84 {strides = array<i32>} : memref<1x1x128xf32, #tpu.memory_space<vmem>>, vector<1x1x128xf32>,
    %86 = vector.shape_cast %83 : vector<1x128xf32> to vector<1x1x128xf32>
    %c0_35 = arith.constant 0 : index
    %c0_36 = arith.constant 0 : index
    %c0_37 = arith.constant 0 : index
    %87 = vector.load %arg8[%c0_35, %c0_36, %c0_37] : memref<1x1x128xf32, #tpu.memory_space<vmem>>, vector<1x1x128xf32>
    tpu.vector_store %arg8[%c0_35, %c0_36, %c0_37], %86 {strides = array<i32>} : memref<1x1x128xf32, #tpu.memory_space<vmem>>, vector<1x1x128xf32>,
    %88 = vector.shape_cast %47 : vector<32x128xf32> to vector<4x8x128xf32>
    %89 = vector.extract_strided_slice %88 {offsets = [0, 0, 0], sizes = [4, 2, 128], strides = [1, 1, 1]} : vector<4x8x128xf32> to vector<4x2x128xf32>
    %90 = vector.shape_cast %89 : vector<4x2x128xf32> to vector<1x4x2x128xf32>
    %91 = arith.truncf %90 : vector<1x4x2x128xf32> to vector<1x4x2x128xbf16>
    %c0_38 = arith.constant 0 : index
    %c0_39 = arith.constant 0 : index
    %c0_40 = arith.constant 0 : index
    %c0_41 = arith.constant 0 : index
    %92 = vector.load %arg6[%c0_38, %c0_39, %c0_40, %c0_41] : memref<1x4x2x128xbf16, #tpu.memory_space<vmem>>, vector<1x4x2x128xbf16>
    tpu.vector_store %arg6[%c0_38, %c0_39, %c0_40, %c0_41], %91 {strides = array<i32>} : memref<1x4x2x128xbf16, #tpu.memory_space<vmem>>, vector<1x4x2x128xbf16>,
    return
  }
  func.func @transform_0(%arg0: i32) -> (i32, i32, i32, i32) {
    %c0_i32 = arith.constant 0 : i32
    %c0_i32_0 = arith.constant 0 : i32
    %c0_i32_1 = arith.constant 0 : i32
    %c0_i32_2 = arith.constant 0 : i32
    return %arg0, %c0_i32, %c0_i32_0, %c0_i32_1 : i32, i32, i32, i32
  }
  func.func @transform_1(%arg0: i32) -> (i32, i32, i32) {
    %c0_i32 = arith.constant 0 : i32
    %c0_i32_0 = arith.constant 0 : i32
    %c0_i32_1 = arith.constant 0 : i32
    %c0_i32_2 = arith.constant 0 : i32
    return %c0_i32, %c0_i32_0, %c0_i32_1 : i32, i32, i32
  }
  func.func @transform_2(%arg0: i32) -> (i32, i32) {
    %c0_i32 = arith.constant 0 : i32
    %c0_i32_0 = arith.constant 0 : i32
    %c0_i32_1 = arith.constant 0 : i32
    return %c0_i32, %c0_i32_0 : i32, i32
  }
  func.func @transform_3(%arg0: i32) -> (i32, i32) {
    %c0_i32 = arith.constant 0 : i32
    %c0_i32_0 = arith.constant 0 : i32
    %c0_i32_1 = arith.constant 0 : i32
    return %c0_i32, %c0_i32_0 : i32, i32
  }
  func.func @transform_4(%arg0: i32) -> (i32, i32) {
    %c0_i32 = arith.constant 0 : i32
    %c0_i32_0 = arith.constant 0 : i32
    %c0_i32_1 = arith.constant 0 : i32
    return %c0_i32, %c0_i32_0 : i32, i32
  }
  func.func @transform_5(%arg0: i32) -> (i32, i32, i32, i32) {
    %c0_i32 = arith.constant 0 : i32
    %c0_i32_0 = arith.constant 0 : i32
    %c0_i32_1 = arith.constant 0 : i32
    %c0_i32_2 = arith.constant 0 : i32
    return %arg0, %c0_i32, %c0_i32_0, %c0_i32_1 : i32, i32, i32, i32
  }
  func.func @transform_6(%arg0: i32) -> (i32, i32, i32) {
    %c0_i32 = arith.constant 0 : i32
    %c0_i32_0 = arith.constant 0 : i32
    %c0_i32_1 = arith.constant 0 : i32
    return %arg0, %c0_i32, %c0_i32_0 : i32, i32, i32
  }
  func.func @transform_7(%arg0: i32) -> (i32, i32, i32) {
    %c0_i32 = arith.constant 0 : i32
    %c0_i32_0 = arith.constant 0 : i32
    %c0_i32_1 = arith.constant 0 : i32
    return %arg0, %c0_i32, %c0_i32_0 : i32, i32, i32
  }
}

module attributes {stable_mosaic.version = 11 : i64} {
  func.func @_conv_kernel(%arg0: i32, %arg1: memref<1x3x9x64xbf16, #tpu.memory_space<vmem>>, %arg2: memref<4x64x128xbf16, #tpu.memory_space<vmem>>, %arg3: memref<1x128xf32, #tpu.memory_space<vmem>>, %arg4: memref<1x64xf32, #tpu.memory_space<vmem>>, %arg5: memref<1x64xf32, #tpu.memory_space<vmem>>, %arg6: memref<1x2x1x128xbf16, #tpu.memory_space<vmem>>, %arg7: memref<1x1x128xf32, #tpu.memory_space<vmem>>, %arg8: memref<1x1x128xf32, #tpu.memory_space<vmem>>) attributes {dimension_semantics = [#tpu.dimension_semantics<parallel>], iteration_bounds = array<i64: 2>, scalar_prefetch = 0 : i64, scratch_operands = 0 : i64, tpu.core_type = #tpu.core_type<tc>, window_params = [{transform_indices = @transform_0, window_bounds = array<i64: 1, 3, 9, 64>}, {pipeline_mode = #tpu.pipeline_mode<synchronous>, transform_indices = @transform_1, window_bounds = array<i64: 4, 64, 128>}, {pipeline_mode = #tpu.pipeline_mode<synchronous>, transform_indices = @transform_2, window_bounds = array<i64: 1, 128>}, {pipeline_mode = #tpu.pipeline_mode<synchronous>, transform_indices = @transform_3, window_bounds = array<i64: 1, 64>}, {pipeline_mode = #tpu.pipeline_mode<synchronous>, transform_indices = @transform_4, window_bounds = array<i64: 1, 64>}, {transform_indices = @transform_5, window_bounds = array<i64: 1, 2, 1, 128>}, {transform_indices = @transform_6, window_bounds = array<i64: 1, 1, 128>}, {transform_indices = @transform_7, window_bounds = array<i64: 1, 1, 128>}]} {
    %c0 = arith.constant 0 : index
    %c0_0 = arith.constant 0 : index
    %c0_1 = arith.constant 0 : index
    %c0_2 = arith.constant 0 : index
    %0 = vector.load %arg1[%c0, %c0_0, %c0_1, %c0_2] : memref<1x3x9x64xbf16, #tpu.memory_space<vmem>>, vector<1x3x9x64xbf16>
    %1 = vector.shape_cast %0 : vector<1x3x9x64xbf16> to vector<3x9x64xbf16>
    %2 = arith.extf %1 : vector<3x9x64xbf16> to vector<3x9x64xf32>
    %c0_3 = arith.constant 0 : index
    %c0_4 = arith.constant 0 : index
    %3 = vector.load %arg4[%c0_3, %c0_4] : memref<1x64xf32, #tpu.memory_space<vmem>>, vector<1x64xf32>
    %4 = vector.shape_cast %3 : vector<1x64xf32> to vector<1x1x64xf32>
    %5 = vector.broadcast %4 : vector<1x1x64xf32> to vector<3x9x64xf32>
    %6 = arith.mulf %2, %5 : vector<3x9x64xf32>
    %c0_5 = arith.constant 0 : index
    %c0_6 = arith.constant 0 : index
    %7 = vector.load %arg5[%c0_5, %c0_6] : memref<1x64xf32, #tpu.memory_space<vmem>>, vector<1x64xf32>
    %8 = vector.shape_cast %7 : vector<1x64xf32> to vector<1x1x64xf32>
    %9 = vector.broadcast %8 : vector<1x1x64xf32> to vector<3x9x64xf32>
    %10 = arith.addf %6, %9 : vector<3x9x64xf32>
    %cst = arith.constant 0.000000e+00 : f32
    %11 = vector.broadcast %cst : f32 to vector<3x9x64xf32>
    %12 = arith.cmpf ogt, %10, %11 : vector<3x9x64xf32>
    %cst_7 = arith.constant 0.00999999977 : f32
    %13 = vector.broadcast %cst_7 : f32 to vector<3x9x64xf32>
    %14 = arith.mulf %13, %10 : vector<3x9x64xf32>
    %15 = arith.select %12, %10, %14 : vector<3x9x64xi1>, vector<3x9x64xf32>
    %cst_8 = arith.constant 0.000000e+00 : f32
    %16 = vector.broadcast %cst_8 : f32 to vector<16x128xf32>
    %17 = vector.extract_strided_slice %15 {offsets = [0, 0, 0], sizes = [2, 8, 64], strides = [1, 1, 1]} : vector<3x9x64xf32> to vector<2x8x64xf32>
    %18 = vector.shape_cast %17 : vector<2x8x64xf32> to vector<16x64xf32>
    %19 = arith.truncf %18 : vector<16x64xf32> to vector<16x64xbf16>
    %c0_9 = arith.constant 0 : index
    %c0_10 = arith.constant 0 : index
    %c0_11 = arith.constant 0 : index
    %20 = vector.load %arg2[%c0_9, %c0_10, %c0_11] : memref<4x64x128xbf16, #tpu.memory_space<vmem>>, vector<1x64x128xbf16>
    %21 = vector.shape_cast %20 : vector<1x64x128xbf16> to vector<64x128xbf16>
    %cst_12 = arith.constant dense<0.000000e+00> : vector<16x128xf32>
    %22 = tpu.matmul %19, %21, %cst_12 {dimension_numbers = #tpu.dot_dimension_numbers<[1], [0], [0], [1], [0, 0, 1, 1], [], []>} : vector<16x64xbf16>, vector<64x128xbf16>, vector<16x128xf32> -> vector<16x128xf32>
    %23 = arith.addf %16, %22 : vector<16x128xf32>
    %24 = vector.extract_strided_slice %15 {offsets = [0, 1, 0], sizes = [2, 8, 64], strides = [1, 1, 1]} : vector<3x9x64xf32> to vector<2x8x64xf32>
    %25 = vector.shape_cast %24 : vector<2x8x64xf32> to vector<16x64xf32>
    %26 = arith.truncf %25 : vector<16x64xf32> to vector<16x64xbf16>
    %c1 = arith.constant 1 : index
    %c0_13 = arith.constant 0 : index
    %c0_14 = arith.constant 0 : index
    %27 = vector.load %arg2[%c1, %c0_13, %c0_14] : memref<4x64x128xbf16, #tpu.memory_space<vmem>>, vector<1x64x128xbf16>
    %28 = vector.shape_cast %27 : vector<1x64x128xbf16> to vector<64x128xbf16>
    %cst_15 = arith.constant dense<0.000000e+00> : vector<16x128xf32>
    %29 = tpu.matmul %26, %28, %cst_15 {dimension_numbers = #tpu.dot_dimension_numbers<[1], [0], [0], [1], [0, 0, 1, 1], [], []>} : vector<16x64xbf16>, vector<64x128xbf16>, vector<16x128xf32> -> vector<16x128xf32>
    %30 = arith.addf %23, %29 : vector<16x128xf32>
    %31 = vector.extract_strided_slice %15 {offsets = [1, 0, 0], sizes = [2, 8, 64], strides = [1, 1, 1]} : vector<3x9x64xf32> to vector<2x8x64xf32>
    %32 = vector.shape_cast %31 : vector<2x8x64xf32> to vector<16x64xf32>
    %33 = arith.truncf %32 : vector<16x64xf32> to vector<16x64xbf16>
    %c2 = arith.constant 2 : index
    %c0_16 = arith.constant 0 : index
    %c0_17 = arith.constant 0 : index
    %34 = vector.load %arg2[%c2, %c0_16, %c0_17] : memref<4x64x128xbf16, #tpu.memory_space<vmem>>, vector<1x64x128xbf16>
    %35 = vector.shape_cast %34 : vector<1x64x128xbf16> to vector<64x128xbf16>
    %cst_18 = arith.constant dense<0.000000e+00> : vector<16x128xf32>
    %36 = tpu.matmul %33, %35, %cst_18 {dimension_numbers = #tpu.dot_dimension_numbers<[1], [0], [0], [1], [0, 0, 1, 1], [], []>} : vector<16x64xbf16>, vector<64x128xbf16>, vector<16x128xf32> -> vector<16x128xf32>
    %37 = arith.addf %30, %36 : vector<16x128xf32>
    %38 = vector.extract_strided_slice %15 {offsets = [1, 1, 0], sizes = [2, 8, 64], strides = [1, 1, 1]} : vector<3x9x64xf32> to vector<2x8x64xf32>
    %39 = vector.shape_cast %38 : vector<2x8x64xf32> to vector<16x64xf32>
    %40 = arith.truncf %39 : vector<16x64xf32> to vector<16x64xbf16>
    %c3 = arith.constant 3 : index
    %c0_19 = arith.constant 0 : index
    %c0_20 = arith.constant 0 : index
    %41 = vector.load %arg2[%c3, %c0_19, %c0_20] : memref<4x64x128xbf16, #tpu.memory_space<vmem>>, vector<1x64x128xbf16>
    %42 = vector.shape_cast %41 : vector<1x64x128xbf16> to vector<64x128xbf16>
    %cst_21 = arith.constant dense<0.000000e+00> : vector<16x128xf32>
    %43 = tpu.matmul %40, %42, %cst_21 {dimension_numbers = #tpu.dot_dimension_numbers<[1], [0], [0], [1], [0, 0, 1, 1], [], []>} : vector<16x64xbf16>, vector<64x128xbf16>, vector<16x128xf32> -> vector<16x128xf32>
    %44 = arith.addf %37, %43 : vector<16x128xf32>
    %c0_22 = arith.constant 0 : index
    %c0_23 = arith.constant 0 : index
    %45 = vector.load %arg3[%c0_22, %c0_23] : memref<1x128xf32, #tpu.memory_space<vmem>>, vector<1x128xf32>
    %46 = vector.broadcast %45 : vector<1x128xf32> to vector<16x128xf32>
    %47 = arith.addf %44, %46 : vector<16x128xf32>
    %48 = tpu.iota {dimensions = array<i32: 0>} : vector<16x1xi32>
    %c8_i32 = arith.constant 8 : i32
    %c0_i32 = arith.constant 0 : i32
    %49 = arith.cmpi eq, %c8_i32, %c0_i32 : i32
    %c1_i32 = arith.constant 1 : i32
    %50 = arith.select %49, %c1_i32, %c8_i32 : i32
    %51 = vector.broadcast %50 : i32 to vector<16x1xi32>
    %52 = arith.remsi %48, %51 : vector<16x1xi32>
    %c0_i32_24 = arith.constant 0 : i32
    %53 = vector.broadcast %c0_i32_24 : i32 to vector<16x1xi32>
    %54 = arith.cmpi ne, %52, %53 : vector<16x1xi32>
    %c0_i32_25 = arith.constant 0 : i32
    %55 = vector.broadcast %c0_i32_25 : i32 to vector<16x1xi32>
    %56 = arith.cmpi slt, %52, %55 : vector<16x1xi32>
    %c0_i32_26 = arith.constant 0 : i32
    %57 = arith.cmpi slt, %50, %c0_i32_26 : i32
    %58 = vector.broadcast %57 : i1 to vector<16x1xi1>
    %59 = vector.broadcast %58 : vector<16x1xi1> to vector<16x1xi1>
    %60 = arith.xori %56, %59 : vector<16x1xi1>
    %61 = arith.andi %60, %54 : vector<16x1xi1>
    %62 = vector.broadcast %50 : i32 to vector<16x1xi32>
    %63 = arith.addi %52, %62 : vector<16x1xi32>
    %64 = arith.select %61, %63, %52 : vector<16x1xi1>, vector<16x1xi32>
    %c1_i32_27 = arith.constant 1 : i32
    %65 = vector.broadcast %c1_i32_27 : i32 to vector<16x1xi32>
    %66 = arith.cmpi slt, %64, %65 : vector<16x1xi32>
    %cst_28 = arith.constant 0.000000e+00 : f32
    %67 = vector.shape_cast %66 : vector<16x1xi1> to vector<16x1xi1>
    %68 = vector.broadcast %67 : vector<16x1xi1> to vector<16x128xi1>
    %69 = vector.broadcast %cst_28 : f32 to vector<16x128xf32>
    %70 = arith.select %68, %47, %69 : vector<16x128xi1>, vector<16x128xf32>
    %cst_29 = arith.constant dense<0.000000e+00> : vector<128xf32>
    %71 = vector.multi_reduction <add>, %70, %cst_29 [0] : vector<16x128xf32> to vector<128xf32>
    %72 = vector.shape_cast %71 : vector<128xf32> to vector<1x128xf32>
    %cst_30 = arith.constant 5.000000e-01 : f32
    %73 = vector.broadcast %cst_30 : f32 to vector<1x128xf32>
    %74 = arith.mulf %72, %73 : vector<1x128xf32>
    %75 = vector.broadcast %74 : vector<1x128xf32> to vector<16x128xf32>
    %76 = arith.subf %47, %75 : vector<16x128xf32>
    %cst_31 = arith.constant 0.000000e+00 : f32
    %77 = vector.shape_cast %66 : vector<16x1xi1> to vector<16x1xi1>
    %78 = vector.broadcast %77 : vector<16x1xi1> to vector<16x128xi1>
    %79 = vector.broadcast %cst_31 : f32 to vector<16x128xf32>
    %80 = arith.select %78, %76, %79 : vector<16x128xi1>, vector<16x128xf32>
    %81 = arith.mulf %80, %80 : vector<16x128xf32>
    %cst_32 = arith.constant dense<0.000000e+00> : vector<128xf32>
    %82 = vector.multi_reduction <add>, %81, %cst_32 [0] : vector<16x128xf32> to vector<128xf32>
    %83 = vector.shape_cast %82 : vector<128xf32> to vector<1x128xf32>
    %84 = vector.shape_cast %72 : vector<1x128xf32> to vector<1x1x128xf32>
    %c0_33 = arith.constant 0 : index
    %c0_34 = arith.constant 0 : index
    %c0_35 = arith.constant 0 : index
    %85 = vector.load %arg7[%c0_33, %c0_34, %c0_35] : memref<1x1x128xf32, #tpu.memory_space<vmem>>, vector<1x1x128xf32>
    tpu.vector_store %arg7[%c0_33, %c0_34, %c0_35], %84 {strides = array<i32>} : memref<1x1x128xf32, #tpu.memory_space<vmem>>, vector<1x1x128xf32>,
    %86 = vector.shape_cast %83 : vector<1x128xf32> to vector<1x1x128xf32>
    %c0_36 = arith.constant 0 : index
    %c0_37 = arith.constant 0 : index
    %c0_38 = arith.constant 0 : index
    %87 = vector.load %arg8[%c0_36, %c0_37, %c0_38] : memref<1x1x128xf32, #tpu.memory_space<vmem>>, vector<1x1x128xf32>
    tpu.vector_store %arg8[%c0_36, %c0_37, %c0_38], %86 {strides = array<i32>} : memref<1x1x128xf32, #tpu.memory_space<vmem>>, vector<1x1x128xf32>,
    %88 = vector.shape_cast %47 : vector<16x128xf32> to vector<2x8x128xf32>
    %89 = vector.extract_strided_slice %88 {offsets = [0, 0, 0], sizes = [2, 1, 128], strides = [1, 1, 1]} : vector<2x8x128xf32> to vector<2x1x128xf32>
    %90 = vector.shape_cast %89 : vector<2x1x128xf32> to vector<1x2x1x128xf32>
    %91 = arith.truncf %90 : vector<1x2x1x128xf32> to vector<1x2x1x128xbf16>
    %c0_39 = arith.constant 0 : index
    %c0_40 = arith.constant 0 : index
    %c0_41 = arith.constant 0 : index
    %c0_42 = arith.constant 0 : index
    %92 = vector.load %arg6[%c0_39, %c0_40, %c0_41, %c0_42] : memref<1x2x1x128xbf16, #tpu.memory_space<vmem>>, vector<1x2x1x128xbf16>
    tpu.vector_store %arg6[%c0_39, %c0_40, %c0_41, %c0_42], %91 {strides = array<i32>} : memref<1x2x1x128xbf16, #tpu.memory_space<vmem>>, vector<1x2x1x128xbf16>,
    return
  }
  func.func @transform_0(%arg0: i32) -> (i32, i32, i32, i32) {
    %c0_i32 = arith.constant 0 : i32
    %c0_i32_0 = arith.constant 0 : i32
    %c0_i32_1 = arith.constant 0 : i32
    %c0_i32_2 = arith.constant 0 : i32
    return %arg0, %c0_i32, %c0_i32_0, %c0_i32_1 : i32, i32, i32, i32
  }
  func.func @transform_1(%arg0: i32) -> (i32, i32, i32) {
    %c0_i32 = arith.constant 0 : i32
    %c0_i32_0 = arith.constant 0 : i32
    %c0_i32_1 = arith.constant 0 : i32
    %c0_i32_2 = arith.constant 0 : i32
    return %c0_i32, %c0_i32_0, %c0_i32_1 : i32, i32, i32
  }
  func.func @transform_2(%arg0: i32) -> (i32, i32) {
    %c0_i32 = arith.constant 0 : i32
    %c0_i32_0 = arith.constant 0 : i32
    %c0_i32_1 = arith.constant 0 : i32
    return %c0_i32, %c0_i32_0 : i32, i32
  }
  func.func @transform_3(%arg0: i32) -> (i32, i32) {
    %c0_i32 = arith.constant 0 : i32
    %c0_i32_0 = arith.constant 0 : i32
    %c0_i32_1 = arith.constant 0 : i32
    return %c0_i32, %c0_i32_0 : i32, i32
  }
  func.func @transform_4(%arg0: i32) -> (i32, i32) {
    %c0_i32 = arith.constant 0 : i32
    %c0_i32_0 = arith.constant 0 : i32
    %c0_i32_1 = arith.constant 0 : i32
    return %c0_i32, %c0_i32_0 : i32, i32
  }
  func.func @transform_5(%arg0: i32) -> (i32, i32, i32, i32) {
    %c0_i32 = arith.constant 0 : i32
    %c0_i32_0 = arith.constant 0 : i32
    %c0_i32_1 = arith.constant 0 : i32
    %c0_i32_2 = arith.constant 0 : i32
    return %arg0, %c0_i32, %c0_i32_0, %c0_i32_1 : i32, i32, i32, i32
  }
  func.func @transform_6(%arg0: i32) -> (i32, i32, i32) {
    %c0_i32 = arith.constant 0 : i32
    %c0_i32_0 = arith.constant 0 : i32
    %c0_i32_1 = arith.constant 0 : i32
    return %arg0, %c0_i32, %c0_i32_0 : i32, i32, i32
  }
  func.func @transform_7(%arg0: i32) -> (i32, i32, i32) {
    %c0_i32 = arith.constant 0 : i32
    %c0_i32_0 = arith.constant 0 : i32
    %c0_i32_1 = arith.constant 0 : i32
    return %arg0, %c0_i32, %c0_i32_0 : i32, i32, i32
  }
}

module attributes {stable_mosaic.version = 11 : i64} {
  func.func @_head_kernel(%arg0: memref<2x64xbf16, #tpu.memory_space<vmem>>, %arg1: memref<64x256xbf16, #tpu.memory_space<vmem>>, %arg2: memref<1x256xf32, #tpu.memory_space<vmem>>, %arg3: memref<1x64xf32, #tpu.memory_space<vmem>>, %arg4: memref<1x64xf32, #tpu.memory_space<vmem>>, %arg5: memref<2x128xf32, #tpu.memory_space<vmem>>, %arg6: memref<2x128xf32, #tpu.memory_space<vmem>>, %arg7: memref<2x128xf32, #tpu.memory_space<vmem>>, %arg8: memref<2x128xf32, #tpu.memory_space<vmem>>) attributes {dimension_semantics = [], scalar_prefetch = 0 : i64, scratch_operands = 0 : i64, tpu.core_type = #tpu.core_type<tc>} {
    %c0 = arith.constant 0 : index
    %c0_0 = arith.constant 0 : index
    %0 = vector.load %arg0[%c0, %c0_0] : memref<2x64xbf16, #tpu.memory_space<vmem>>, vector<2x64xbf16>
    %1 = arith.extf %0 : vector<2x64xbf16> to vector<2x64xf32>
    %c0_1 = arith.constant 0 : index
    %c0_2 = arith.constant 0 : index
    %2 = vector.load %arg3[%c0_1, %c0_2] : memref<1x64xf32, #tpu.memory_space<vmem>>, vector<1x64xf32>
    %3 = vector.broadcast %2 : vector<1x64xf32> to vector<2x64xf32>
    %4 = arith.mulf %1, %3 : vector<2x64xf32>
    %c0_3 = arith.constant 0 : index
    %c0_4 = arith.constant 0 : index
    %5 = vector.load %arg4[%c0_3, %c0_4] : memref<1x64xf32, #tpu.memory_space<vmem>>, vector<1x64xf32>
    %6 = vector.broadcast %5 : vector<1x64xf32> to vector<2x64xf32>
    %7 = arith.addf %4, %6 : vector<2x64xf32>
    %cst = arith.constant 0.000000e+00 : f32
    %8 = vector.broadcast %cst : f32 to vector<2x64xf32>
    %9 = arith.cmpf ogt, %7, %8 : vector<2x64xf32>
    %cst_5 = arith.constant 0.00999999977 : f32
    %10 = vector.broadcast %cst_5 : f32 to vector<2x64xf32>
    %11 = arith.mulf %10, %7 : vector<2x64xf32>
    %12 = arith.select %9, %7, %11 : vector<2x64xi1>, vector<2x64xf32>
    %13 = arith.truncf %12 : vector<2x64xf32> to vector<2x64xbf16>
    %c0_6 = arith.constant 0 : index
    %c0_7 = arith.constant 0 : index
    %14 = vector.load %arg1[%c0_6, %c0_7] : memref<64x256xbf16, #tpu.memory_space<vmem>>, vector<64x256xbf16>
    %cst_8 = arith.constant dense<0.000000e+00> : vector<2x256xf32>
    %15 = tpu.matmul %13, %14, %cst_8 {dimension_numbers = #tpu.dot_dimension_numbers<[1], [0], [0], [1], [0, 0, 1, 1], [], []>} : vector<2x64xbf16>, vector<64x256xbf16>, vector<2x256xf32> -> vector<2x256xf32>
    %c0_9 = arith.constant 0 : index
    %c0_10 = arith.constant 0 : index
    %16 = vector.load %arg2[%c0_9, %c0_10] : memref<1x256xf32, #tpu.memory_space<vmem>>, vector<1x256xf32>
    %17 = vector.broadcast %16 : vector<1x256xf32> to vector<2x256xf32>
    %18 = arith.addf %15, %17 : vector<2x256xf32>
    %19 = vector.extract_strided_slice %18 {offsets = [0, 0], sizes = [2, 128], strides = [1, 1]} : vector<2x256xf32> to vector<2x128xf32>
    %20 = vector.extract_strided_slice %18 {offsets = [0, 128], sizes = [2, 128], strides = [1, 1]} : vector<2x256xf32> to vector<2x128xf32>
    %c0_11 = arith.constant 0 : index
    %c0_12 = arith.constant 0 : index
    %21 = vector.load %arg6[%c0_11, %c0_12] : memref<2x128xf32, #tpu.memory_space<vmem>>, vector<2x128xf32>
    tpu.vector_store %arg6[%c0_11, %c0_12], %19 {strides = array<i32>} : memref<2x128xf32, #tpu.memory_space<vmem>>, vector<2x128xf32>,
    %c0_13 = arith.constant 0 : index
    %c0_14 = arith.constant 0 : index
    %22 = vector.load %arg7[%c0_13, %c0_14] : memref<2x128xf32, #tpu.memory_space<vmem>>, vector<2x128xf32>
    tpu.vector_store %arg7[%c0_13, %c0_14], %20 {strides = array<i32>} : memref<2x128xf32, #tpu.memory_space<vmem>>, vector<2x128xf32>,
    %c0_15 = arith.constant 0 : index
    %c0_16 = arith.constant 0 : index
    %23 = vector.load %arg5[%c0_15, %c0_16] : memref<2x128xf32, #tpu.memory_space<vmem>>, vector<2x128xf32>
    %cst_17 = arith.constant 5.000000e-01 : f32
    %24 = vector.broadcast %cst_17 : f32 to vector<2x128xf32>
    %25 = arith.mulf %24, %20 : vector<2x128xf32>
    %26 = math.exp %25 : vector<2x128xf32>
    %27 = arith.mulf %23, %26 : vector<2x128xf32>
    %28 = arith.addf %27, %19 : vector<2x128xf32>
    %c0_18 = arith.constant 0 : index
    %c0_19 = arith.constant 0 : index
    %29 = vector.load %arg8[%c0_18, %c0_19] : memref<2x128xf32, #tpu.memory_space<vmem>>, vector<2x128xf32>
    tpu.vector_store %arg8[%c0_18, %c0_19], %28 {strides = array<i32>} : memref<2x128xf32, #tpu.memory_space<vmem>>, vector<2x128xf32>,
    return
  }
}

module attributes {stable_mosaic.version = 11 : i64} {
  func.func @_linear_kernel(%arg0: memref<2x12xbf16, #tpu.memory_space<vmem>>, %arg1: memref<12x128xbf16, #tpu.memory_space<vmem>>, %arg2: memref<1x128xf32, #tpu.memory_space<vmem>>, %arg3: memref<2x128xbf16, #tpu.memory_space<vmem>>) attributes {dimension_semantics = [], scalar_prefetch = 0 : i64, scratch_operands = 0 : i64, tpu.core_type = #tpu.core_type<tc>} {
    %c0 = arith.constant 0 : index
    %c0_0 = arith.constant 0 : index
    %0 = vector.load %arg0[%c0, %c0_0] : memref<2x12xbf16, #tpu.memory_space<vmem>>, vector<2x12xbf16>
    %c0_1 = arith.constant 0 : index
    %c0_2 = arith.constant 0 : index
    %1 = vector.load %arg1[%c0_1, %c0_2] : memref<12x128xbf16, #tpu.memory_space<vmem>>, vector<12x128xbf16>
    %cst = arith.constant dense<0.000000e+00> : vector<2x128xf32>
    %2 = tpu.matmul %0, %1, %cst {dimension_numbers = #tpu.dot_dimension_numbers<[1], [0], [0], [1], [0, 0, 1, 1], [], []>} : vector<2x12xbf16>, vector<12x128xbf16>, vector<2x128xf32> -> vector<2x128xf32>
    %c0_3 = arith.constant 0 : index
    %c0_4 = arith.constant 0 : index
    %3 = vector.load %arg2[%c0_3, %c0_4] : memref<1x128xf32, #tpu.memory_space<vmem>>, vector<1x128xf32>
    %4 = vector.broadcast %3 : vector<1x128xf32> to vector<2x128xf32>
    %5 = arith.addf %2, %4 : vector<2x128xf32>
    %6 = arith.truncf %5 : vector<2x128xf32> to vector<2x128xbf16>
    %c0_5 = arith.constant 0 : index
    %c0_6 = arith.constant 0 : index
    %7 = vector.load %arg3[%c0_5, %c0_6] : memref<2x128xbf16, #tpu.memory_space<vmem>>, vector<2x128xbf16>
    tpu.vector_store %arg3[%c0_5, %c0_6], %6 {strides = array<i32>} : memref<2x128xbf16, #tpu.memory_space<vmem>>, vector<2x128xbf16>,
    return
  }
}

module attributes {stable_mosaic.version = 11 : i64} {
  func.func @_conv_kernel(%arg0: i32, %arg1: memref<1x3x9x32xbf16, #tpu.memory_space<vmem>>, %arg2: memref<4x32x128xbf16, #tpu.memory_space<vmem>>, %arg3: memref<1x128xf32, #tpu.memory_space<vmem>>, %arg4: memref<1x2x1x128xbf16, #tpu.memory_space<vmem>>, %arg5: memref<1x1x128xf32, #tpu.memory_space<vmem>>, %arg6: memref<1x1x128xf32, #tpu.memory_space<vmem>>) attributes {dimension_semantics = [#tpu.dimension_semantics<parallel>], iteration_bounds = array<i64: 2>, scalar_prefetch = 0 : i64, scratch_operands = 0 : i64, tpu.core_type = #tpu.core_type<tc>, window_params = [{transform_indices = @transform_0, window_bounds = array<i64: 1, 3, 9, 32>}, {pipeline_mode = #tpu.pipeline_mode<synchronous>, transform_indices = @transform_1, window_bounds = array<i64: 4, 32, 128>}, {pipeline_mode = #tpu.pipeline_mode<synchronous>, transform_indices = @transform_2, window_bounds = array<i64: 1, 128>}, {transform_indices = @transform_3, window_bounds = array<i64: 1, 2, 1, 128>}, {transform_indices = @transform_4, window_bounds = array<i64: 1, 1, 128>}, {transform_indices = @transform_5, window_bounds = array<i64: 1, 1, 128>}]} {
    %c0 = arith.constant 0 : index
    %c0_0 = arith.constant 0 : index
    %c0_1 = arith.constant 0 : index
    %c0_2 = arith.constant 0 : index
    %0 = vector.load %arg1[%c0, %c0_0, %c0_1, %c0_2] : memref<1x3x9x32xbf16, #tpu.memory_space<vmem>>, vector<1x3x9x32xbf16>
    %1 = vector.shape_cast %0 : vector<1x3x9x32xbf16> to vector<3x9x32xbf16>
    %2 = arith.extf %1 : vector<3x9x32xbf16> to vector<3x9x32xf32>
    %cst = arith.constant 0.000000e+00 : f32
    %3 = vector.broadcast %cst : f32 to vector<16x128xf32>
    %4 = vector.extract_strided_slice %2 {offsets = [0, 0, 0], sizes = [2, 8, 32], strides = [1, 1, 1]} : vector<3x9x32xf32> to vector<2x8x32xf32>
    %5 = vector.shape_cast %4 : vector<2x8x32xf32> to vector<16x32xf32>
    %6 = arith.truncf %5 : vector<16x32xf32> to vector<16x32xbf16>
    %c0_3 = arith.constant 0 : index
    %c0_4 = arith.constant 0 : index
    %c0_5 = arith.constant 0 : index
    %7 = vector.load %arg2[%c0_3, %c0_4, %c0_5] : memref<4x32x128xbf16, #tpu.memory_space<vmem>>, vector<1x32x128xbf16>
    %8 = vector.shape_cast %7 : vector<1x32x128xbf16> to vector<32x128xbf16>
    %cst_6 = arith.constant dense<0.000000e+00> : vector<16x128xf32>
    %9 = tpu.matmul %6, %8, %cst_6 {dimension_numbers = #tpu.dot_dimension_numbers<[1], [0], [0], [1], [0, 0, 1, 1], [], []>} : vector<16x32xbf16>, vector<32x128xbf16>, vector<16x128xf32> -> vector<16x128xf32>
    %10 = arith.addf %3, %9 : vector<16x128xf32>
    %11 = vector.extract_strided_slice %2 {offsets = [0, 1, 0], sizes = [2, 8, 32], strides = [1, 1, 1]} : vector<3x9x32xf32> to vector<2x8x32xf32>
    %12 = vector.shape_cast %11 : vector<2x8x32xf32> to vector<16x32xf32>
    %13 = arith.truncf %12 : vector<16x32xf32> to vector<16x32xbf16>
    %c1 = arith.constant 1 : index
    %c0_7 = arith.constant 0 : index
    %c0_8 = arith.constant 0 : index
    %14 = vector.load %arg2[%c1, %c0_7, %c0_8] : memref<4x32x128xbf16, #tpu.memory_space<vmem>>, vector<1x32x128xbf16>
    %15 = vector.shape_cast %14 : vector<1x32x128xbf16> to vector<32x128xbf16>
    %cst_9 = arith.constant dense<0.000000e+00> : vector<16x128xf32>
    %16 = tpu.matmul %13, %15, %cst_9 {dimension_numbers = #tpu.dot_dimension_numbers<[1], [0], [0], [1], [0, 0, 1, 1], [], []>} : vector<16x32xbf16>, vector<32x128xbf16>, vector<16x128xf32> -> vector<16x128xf32>
    %17 = arith.addf %10, %16 : vector<16x128xf32>
    %18 = vector.extract_strided_slice %2 {offsets = [1, 0, 0], sizes = [2, 8, 32], strides = [1, 1, 1]} : vector<3x9x32xf32> to vector<2x8x32xf32>
    %19 = vector.shape_cast %18 : vector<2x8x32xf32> to vector<16x32xf32>
    %20 = arith.truncf %19 : vector<16x32xf32> to vector<16x32xbf16>
    %c2 = arith.constant 2 : index
    %c0_10 = arith.constant 0 : index
    %c0_11 = arith.constant 0 : index
    %21 = vector.load %arg2[%c2, %c0_10, %c0_11] : memref<4x32x128xbf16, #tpu.memory_space<vmem>>, vector<1x32x128xbf16>
    %22 = vector.shape_cast %21 : vector<1x32x128xbf16> to vector<32x128xbf16>
    %cst_12 = arith.constant dense<0.000000e+00> : vector<16x128xf32>
    %23 = tpu.matmul %20, %22, %cst_12 {dimension_numbers = #tpu.dot_dimension_numbers<[1], [0], [0], [1], [0, 0, 1, 1], [], []>} : vector<16x32xbf16>, vector<32x128xbf16>, vector<16x128xf32> -> vector<16x128xf32>
    %24 = arith.addf %17, %23 : vector<16x128xf32>
    %25 = vector.extract_strided_slice %2 {offsets = [1, 1, 0], sizes = [2, 8, 32], strides = [1, 1, 1]} : vector<3x9x32xf32> to vector<2x8x32xf32>
    %26 = vector.shape_cast %25 : vector<2x8x32xf32> to vector<16x32xf32>
    %27 = arith.truncf %26 : vector<16x32xf32> to vector<16x32xbf16>
    %c3 = arith.constant 3 : index
    %c0_13 = arith.constant 0 : index
    %c0_14 = arith.constant 0 : index
    %28 = vector.load %arg2[%c3, %c0_13, %c0_14] : memref<4x32x128xbf16, #tpu.memory_space<vmem>>, vector<1x32x128xbf16>
    %29 = vector.shape_cast %28 : vector<1x32x128xbf16> to vector<32x128xbf16>
    %cst_15 = arith.constant dense<0.000000e+00> : vector<16x128xf32>
    %30 = tpu.matmul %27, %29, %cst_15 {dimension_numbers = #tpu.dot_dimension_numbers<[1], [0], [0], [1], [0, 0, 1, 1], [], []>} : vector<16x32xbf16>, vector<32x128xbf16>, vector<16x128xf32> -> vector<16x128xf32>
    %31 = arith.addf %24, %30 : vector<16x128xf32>
    %c0_16 = arith.constant 0 : index
    %c0_17 = arith.constant 0 : index
    %32 = vector.load %arg3[%c0_16, %c0_17] : memref<1x128xf32, #tpu.memory_space<vmem>>, vector<1x128xf32>
    %33 = vector.broadcast %32 : vector<1x128xf32> to vector<16x128xf32>
    %34 = arith.addf %31, %33 : vector<16x128xf32>
    %35 = tpu.iota {dimensions = array<i32: 0>} : vector<16x1xi32>
    %c8_i32 = arith.constant 8 : i32
    %c0_i32 = arith.constant 0 : i32
    %36 = arith.cmpi eq, %c8_i32, %c0_i32 : i32
    %c1_i32 = arith.constant 1 : i32
    %37 = arith.select %36, %c1_i32, %c8_i32 : i32
    %38 = vector.broadcast %37 : i32 to vector<16x1xi32>
    %39 = arith.remsi %35, %38 : vector<16x1xi32>
    %c0_i32_18 = arith.constant 0 : i32
    %40 = vector.broadcast %c0_i32_18 : i32 to vector<16x1xi32>
    %41 = arith.cmpi ne, %39, %40 : vector<16x1xi32>
    %c0_i32_19 = arith.constant 0 : i32
    %42 = vector.broadcast %c0_i32_19 : i32 to vector<16x1xi32>
    %43 = arith.cmpi slt, %39, %42 : vector<16x1xi32>
    %c0_i32_20 = arith.constant 0 : i32
    %44 = arith.cmpi slt, %37, %c0_i32_20 : i32
    %45 = vector.broadcast %44 : i1 to vector<16x1xi1>
    %46 = vector.broadcast %45 : vector<16x1xi1> to vector<16x1xi1>
    %47 = arith.xori %43, %46 : vector<16x1xi1>
    %48 = arith.andi %47, %41 : vector<16x1xi1>
    %49 = vector.broadcast %37 : i32 to vector<16x1xi32>
    %50 = arith.addi %39, %49 : vector<16x1xi32>
    %51 = arith.select %48, %50, %39 : vector<16x1xi1>, vector<16x1xi32>
    %c1_i32_21 = arith.constant 1 : i32
    %52 = vector.broadcast %c1_i32_21 : i32 to vector<16x1xi32>
    %53 = arith.cmpi slt, %51, %52 : vector<16x1xi32>
    %cst_22 = arith.constant 0.000000e+00 : f32
    %54 = vector.shape_cast %53 : vector<16x1xi1> to vector<16x1xi1>
    %55 = vector.broadcast %54 : vector<16x1xi1> to vector<16x128xi1>
    %56 = vector.broadcast %cst_22 : f32 to vector<16x128xf32>
    %57 = arith.select %55, %34, %56 : vector<16x128xi1>, vector<16x128xf32>
    %cst_23 = arith.constant dense<0.000000e+00> : vector<128xf32>
    %58 = vector.multi_reduction <add>, %57, %cst_23 [0] : vector<16x128xf32> to vector<128xf32>
    %59 = vector.shape_cast %58 : vector<128xf32> to vector<1x128xf32>
    %cst_24 = arith.constant 5.000000e-01 : f32
    %60 = vector.broadcast %cst_24 : f32 to vector<1x128xf32>
    %61 = arith.mulf %59, %60 : vector<1x128xf32>
    %62 = vector.broadcast %61 : vector<1x128xf32> to vector<16x128xf32>
    %63 = arith.subf %34, %62 : vector<16x128xf32>
    %cst_25 = arith.constant 0.000000e+00 : f32
    %64 = vector.shape_cast %53 : vector<16x1xi1> to vector<16x1xi1>
    %65 = vector.broadcast %64 : vector<16x1xi1> to vector<16x128xi1>
    %66 = vector.broadcast %cst_25 : f32 to vector<16x128xf32>
    %67 = arith.select %65, %63, %66 : vector<16x128xi1>, vector<16x128xf32>
    %68 = arith.mulf %67, %67 : vector<16x128xf32>
    %cst_26 = arith.constant dense<0.000000e+00> : vector<128xf32>
    %69 = vector.multi_reduction <add>, %68, %cst_26 [0] : vector<16x128xf32> to vector<128xf32>
    %70 = vector.shape_cast %69 : vector<128xf32> to vector<1x128xf32>
    %71 = vector.shape_cast %59 : vector<1x128xf32> to vector<1x1x128xf32>
    %c0_27 = arith.constant 0 : index
    %c0_28 = arith.constant 0 : index
    %c0_29 = arith.constant 0 : index
    %72 = vector.load %arg5[%c0_27, %c0_28, %c0_29] : memref<1x1x128xf32, #tpu.memory_space<vmem>>, vector<1x1x128xf32>
    tpu.vector_store %arg5[%c0_27, %c0_28, %c0_29], %71 {strides = array<i32>} : memref<1x1x128xf32, #tpu.memory_space<vmem>>, vector<1x1x128xf32>,
    %73 = vector.shape_cast %70 : vector<1x128xf32> to vector<1x1x128xf32>
    %c0_30 = arith.constant 0 : index
    %c0_31 = arith.constant 0 : index
    %c0_32 = arith.constant 0 : index
    %74 = vector.load %arg6[%c0_30, %c0_31, %c0_32] : memref<1x1x128xf32, #tpu.memory_space<vmem>>, vector<1x1x128xf32>
    tpu.vector_store %arg6[%c0_30, %c0_31, %c0_32], %73 {strides = array<i32>} : memref<1x1x128xf32, #tpu.memory_space<vmem>>, vector<1x1x128xf32>,
    %75 = vector.shape_cast %34 : vector<16x128xf32> to vector<2x8x128xf32>
    %76 = vector.extract_strided_slice %75 {offsets = [0, 0, 0], sizes = [2, 1, 128], strides = [1, 1, 1]} : vector<2x8x128xf32> to vector<2x1x128xf32>
    %77 = vector.shape_cast %76 : vector<2x1x128xf32> to vector<1x2x1x128xf32>
    %78 = arith.truncf %77 : vector<1x2x1x128xf32> to vector<1x2x1x128xbf16>
    %c0_33 = arith.constant 0 : index
    %c0_34 = arith.constant 0 : index
    %c0_35 = arith.constant 0 : index
    %c0_36 = arith.constant 0 : index
    %79 = vector.load %arg4[%c0_33, %c0_34, %c0_35, %c0_36] : memref<1x2x1x128xbf16, #tpu.memory_space<vmem>>, vector<1x2x1x128xbf16>
    tpu.vector_store %arg4[%c0_33, %c0_34, %c0_35, %c0_36], %78 {strides = array<i32>} : memref<1x2x1x128xbf16, #tpu.memory_space<vmem>>, vector<1x2x1x128xbf16>,
    return
  }
  func.func @transform_0(%arg0: i32) -> (i32, i32, i32, i32) {
    %c0_i32 = arith.constant 0 : i32
    %c0_i32_0 = arith.constant 0 : i32
    %c0_i32_1 = arith.constant 0 : i32
    %c0_i32_2 = arith.constant 0 : i32
    return %arg0, %c0_i32, %c0_i32_0, %c0_i32_1 : i32, i32, i32, i32
  }
  func.func @transform_1(%arg0: i32) -> (i32, i32, i32) {
    %c0_i32 = arith.constant 0 : i32
    %c0_i32_0 = arith.constant 0 : i32
    %c0_i32_1 = arith.constant 0 : i32
    %c0_i32_2 = arith.constant 0 : i32
    return %c0_i32, %c0_i32_0, %c0_i32_1 : i32, i32, i32
  }
  func.func @transform_2(%arg0: i32) -> (i32, i32) {
    %c0_i32 = arith.constant 0 : i32
    %c0_i32_0 = arith.constant 0 : i32
    %c0_i32_1 = arith.constant 0 : i32
    return %c0_i32, %c0_i32_0 : i32, i32
  }
  func.func @transform_3(%arg0: i32) -> (i32, i32, i32, i32) {
    %c0_i32 = arith.constant 0 : i32
    %c0_i32_0 = arith.constant 0 : i32
    %c0_i32_1 = arith.constant 0 : i32
    %c0_i32_2 = arith.constant 0 : i32
    return %arg0, %c0_i32, %c0_i32_0, %c0_i32_1 : i32, i32, i32, i32
  }
  func.func @transform_4(%arg0: i32) -> (i32, i32, i32) {
    %c0_i32 = arith.constant 0 : i32
    %c0_i32_0 = arith.constant 0 : i32
    %c0_i32_1 = arith.constant 0 : i32
    return %arg0, %c0_i32, %c0_i32_0 : i32, i32, i32
  }
  func.func @transform_5(%arg0: i32) -> (i32, i32, i32) {
    %c0_i32 = arith.constant 0 : i32
    %c0_i32_0 = arith.constant 0 : i32
    %c0_i32_1 = arith.constant 0 : i32
    return %arg0, %c0_i32, %c0_i32_0 : i32, i32, i32
  }
}

module attributes {stable_mosaic.version = 11 : i64} {
  func.func @_conv_kernel(%arg0: i32, %arg1: memref<1x5x9x16xbf16, #tpu.memory_space<vmem>>, %arg2: memref<4x16x128xbf16, #tpu.memory_space<vmem>>, %arg3: memref<1x128xf32, #tpu.memory_space<vmem>>, %arg4: memref<1x16xf32, #tpu.memory_space<vmem>>, %arg5: memref<1x16xf32, #tpu.memory_space<vmem>>, %arg6: memref<1x4x2x128xbf16, #tpu.memory_space<vmem>>, %arg7: memref<1x1x128xf32, #tpu.memory_space<vmem>>, %arg8: memref<1x1x128xf32, #tpu.memory_space<vmem>>) attributes {dimension_semantics = [#tpu.dimension_semantics<parallel>], iteration_bounds = array<i64: 2>, scalar_prefetch = 0 : i64, scratch_operands = 0 : i64, tpu.core_type = #tpu.core_type<tc>, window_params = [{transform_indices = @transform_0, window_bounds = array<i64: 1, 5, 9, 16>}, {pipeline_mode = #tpu.pipeline_mode<synchronous>, transform_indices = @transform_1, window_bounds = array<i64: 4, 16, 128>}, {pipeline_mode = #tpu.pipeline_mode<synchronous>, transform_indices = @transform_2, window_bounds = array<i64: 1, 128>}, {pipeline_mode = #tpu.pipeline_mode<synchronous>, transform_indices = @transform_3, window_bounds = array<i64: 1, 16>}, {pipeline_mode = #tpu.pipeline_mode<synchronous>, transform_indices = @transform_4, window_bounds = array<i64: 1, 16>}, {transform_indices = @transform_5, window_bounds = array<i64: 1, 4, 2, 128>}, {transform_indices = @transform_6, window_bounds = array<i64: 1, 1, 128>}, {transform_indices = @transform_7, window_bounds = array<i64: 1, 1, 128>}]} {
    %c0 = arith.constant 0 : index
    %c0_0 = arith.constant 0 : index
    %c0_1 = arith.constant 0 : index
    %c0_2 = arith.constant 0 : index
    %0 = vector.load %arg1[%c0, %c0_0, %c0_1, %c0_2] : memref<1x5x9x16xbf16, #tpu.memory_space<vmem>>, vector<1x5x9x16xbf16>
    %1 = vector.shape_cast %0 : vector<1x5x9x16xbf16> to vector<5x9x16xbf16>
    %2 = arith.extf %1 : vector<5x9x16xbf16> to vector<5x9x16xf32>
    %c0_3 = arith.constant 0 : index
    %c0_4 = arith.constant 0 : index
    %3 = vector.load %arg4[%c0_3, %c0_4] : memref<1x16xf32, #tpu.memory_space<vmem>>, vector<1x16xf32>
    %4 = vector.shape_cast %3 : vector<1x16xf32> to vector<1x1x16xf32>
    %5 = vector.broadcast %4 : vector<1x1x16xf32> to vector<5x9x16xf32>
    %6 = arith.mulf %2, %5 : vector<5x9x16xf32>
    %c0_5 = arith.constant 0 : index
    %c0_6 = arith.constant 0 : index
    %7 = vector.load %arg5[%c0_5, %c0_6] : memref<1x16xf32, #tpu.memory_space<vmem>>, vector<1x16xf32>
    %8 = vector.shape_cast %7 : vector<1x16xf32> to vector<1x1x16xf32>
    %9 = vector.broadcast %8 : vector<1x1x16xf32> to vector<5x9x16xf32>
    %10 = arith.addf %6, %9 : vector<5x9x16xf32>
    %cst = arith.constant 0.000000e+00 : f32
    %11 = vector.broadcast %cst : f32 to vector<5x9x16xf32>
    %12 = arith.cmpf ogt, %10, %11 : vector<5x9x16xf32>
    %cst_7 = arith.constant 0.00999999977 : f32
    %13 = vector.broadcast %cst_7 : f32 to vector<5x9x16xf32>
    %14 = arith.mulf %13, %10 : vector<5x9x16xf32>
    %15 = arith.select %12, %10, %14 : vector<5x9x16xi1>, vector<5x9x16xf32>
    %cst_8 = arith.constant 0.000000e+00 : f32
    %16 = vector.broadcast %cst_8 : f32 to vector<32x128xf32>
    %17 = vector.extract_strided_slice %15 {offsets = [0, 0, 0], sizes = [4, 8, 16], strides = [1, 1, 1]} : vector<5x9x16xf32> to vector<4x8x16xf32>
    %18 = vector.shape_cast %17 : vector<4x8x16xf32> to vector<32x16xf32>
    %19 = arith.truncf %18 : vector<32x16xf32> to vector<32x16xbf16>
    %c0_9 = arith.constant 0 : index
    %c0_10 = arith.constant 0 : index
    %c0_11 = arith.constant 0 : index
    %20 = vector.load %arg2[%c0_9, %c0_10, %c0_11] : memref<4x16x128xbf16, #tpu.memory_space<vmem>>, vector<1x16x128xbf16>
    %21 = vector.shape_cast %20 : vector<1x16x128xbf16> to vector<16x128xbf16>
    %cst_12 = arith.constant dense<0.000000e+00> : vector<32x128xf32>
    %22 = tpu.matmul %19, %21, %cst_12 {dimension_numbers = #tpu.dot_dimension_numbers<[1], [0], [0], [1], [0, 0, 1, 1], [], []>} : vector<32x16xbf16>, vector<16x128xbf16>, vector<32x128xf32> -> vector<32x128xf32>
    %23 = arith.addf %16, %22 : vector<32x128xf32>
    %24 = vector.extract_strided_slice %15 {offsets = [0, 1, 0], sizes = [4, 8, 16], strides = [1, 1, 1]} : vector<5x9x16xf32> to vector<4x8x16xf32>
    %25 = vector.shape_cast %24 : vector<4x8x16xf32> to vector<32x16xf32>
    %26 = arith.truncf %25 : vector<32x16xf32> to vector<32x16xbf16>
    %c1 = arith.constant 1 : index
    %c0_13 = arith.constant 0 : index
    %c0_14 = arith.constant 0 : index
    %27 = vector.load %arg2[%c1, %c0_13, %c0_14] : memref<4x16x128xbf16, #tpu.memory_space<vmem>>, vector<1x16x128xbf16>
    %28 = vector.shape_cast %27 : vector<1x16x128xbf16> to vector<16x128xbf16>
    %cst_15 = arith.constant dense<0.000000e+00> : vector<32x128xf32>
    %29 = tpu.matmul %26, %28, %cst_15 {dimension_numbers = #tpu.dot_dimension_numbers<[1], [0], [0], [1], [0, 0, 1, 1], [], []>} : vector<32x16xbf16>, vector<16x128xbf16>, vector<32x128xf32> -> vector<32x128xf32>
    %30 = arith.addf %23, %29 : vector<32x128xf32>
    %31 = vector.extract_strided_slice %15 {offsets = [1, 0, 0], sizes = [4, 8, 16], strides = [1, 1, 1]} : vector<5x9x16xf32> to vector<4x8x16xf32>
    %32 = vector.shape_cast %31 : vector<4x8x16xf32> to vector<32x16xf32>
    %33 = arith.truncf %32 : vector<32x16xf32> to vector<32x16xbf16>
    %c2 = arith.constant 2 : index
    %c0_16 = arith.constant 0 : index
    %c0_17 = arith.constant 0 : index
    %34 = vector.load %arg2[%c2, %c0_16, %c0_17] : memref<4x16x128xbf16, #tpu.memory_space<vmem>>, vector<1x16x128xbf16>
    %35 = vector.shape_cast %34 : vector<1x16x128xbf16> to vector<16x128xbf16>
    %cst_18 = arith.constant dense<0.000000e+00> : vector<32x128xf32>
    %36 = tpu.matmul %33, %35, %cst_18 {dimension_numbers = #tpu.dot_dimension_numbers<[1], [0], [0], [1], [0, 0, 1, 1], [], []>} : vector<32x16xbf16>, vector<16x128xbf16>, vector<32x128xf32> -> vector<32x128xf32>
    %37 = arith.addf %30, %36 : vector<32x128xf32>
    %38 = vector.extract_strided_slice %15 {offsets = [1, 1, 0], sizes = [4, 8, 16], strides = [1, 1, 1]} : vector<5x9x16xf32> to vector<4x8x16xf32>
    %39 = vector.shape_cast %38 : vector<4x8x16xf32> to vector<32x16xf32>
    %40 = arith.truncf %39 : vector<32x16xf32> to vector<32x16xbf16>
    %c3 = arith.constant 3 : index
    %c0_19 = arith.constant 0 : index
    %c0_20 = arith.constant 0 : index
    %41 = vector.load %arg2[%c3, %c0_19, %c0_20] : memref<4x16x128xbf16, #tpu.memory_space<vmem>>, vector<1x16x128xbf16>
    %42 = vector.shape_cast %41 : vector<1x16x128xbf16> to vector<16x128xbf16>
    %cst_21 = arith.constant dense<0.000000e+00> : vector<32x128xf32>
    %43 = tpu.matmul %40, %42, %cst_21 {dimension_numbers = #tpu.dot_dimension_numbers<[1], [0], [0], [1], [0, 0, 1, 1], [], []>} : vector<32x16xbf16>, vector<16x128xbf16>, vector<32x128xf32> -> vector<32x128xf32>
    %44 = arith.addf %37, %43 : vector<32x128xf32>
    %c0_22 = arith.constant 0 : index
    %c0_23 = arith.constant 0 : index
    %45 = vector.load %arg3[%c0_22, %c0_23] : memref<1x128xf32, #tpu.memory_space<vmem>>, vector<1x128xf32>
    %46 = vector.broadcast %45 : vector<1x128xf32> to vector<32x128xf32>
    %47 = arith.addf %44, %46 : vector<32x128xf32>
    %48 = tpu.iota {dimensions = array<i32: 0>} : vector<32x1xi32>
    %c8_i32 = arith.constant 8 : i32
    %c0_i32 = arith.constant 0 : i32
    %49 = arith.cmpi eq, %c8_i32, %c0_i32 : i32
    %c1_i32 = arith.constant 1 : i32
    %50 = arith.select %49, %c1_i32, %c8_i32 : i32
    %51 = vector.broadcast %50 : i32 to vector<32x1xi32>
    %52 = arith.remsi %48, %51 : vector<32x1xi32>
    %c0_i32_24 = arith.constant 0 : i32
    %53 = vector.broadcast %c0_i32_24 : i32 to vector<32x1xi32>
    %54 = arith.cmpi ne, %52, %53 : vector<32x1xi32>
    %c0_i32_25 = arith.constant 0 : i32
    %55 = vector.broadcast %c0_i32_25 : i32 to vector<32x1xi32>
    %56 = arith.cmpi slt, %52, %55 : vector<32x1xi32>
    %c0_i32_26 = arith.constant 0 : i32
    %57 = arith.cmpi slt, %50, %c0_i32_26 : i32
    %58 = vector.broadcast %57 : i1 to vector<32x1xi1>
    %59 = vector.broadcast %58 : vector<32x1xi1> to vector<32x1xi1>
    %60 = arith.xori %56, %59 : vector<32x1xi1>
    %61 = arith.andi %60, %54 : vector<32x1xi1>
    %62 = vector.broadcast %50 : i32 to vector<32x1xi32>
    %63 = arith.addi %52, %62 : vector<32x1xi32>
    %64 = arith.select %61, %63, %52 : vector<32x1xi1>, vector<32x1xi32>
    %c2_i32 = arith.constant 2 : i32
    %65 = vector.broadcast %c2_i32 : i32 to vector<32x1xi32>
    %66 = arith.cmpi slt, %64, %65 : vector<32x1xi32>
    %cst_27 = arith.constant 0.000000e+00 : f32
    %67 = vector.shape_cast %66 : vector<32x1xi1> to vector<32x1xi1>
    %68 = vector.broadcast %67 : vector<32x1xi1> to vector<32x128xi1>
    %69 = vector.broadcast %cst_27 : f32 to vector<32x128xf32>
    %70 = arith.select %68, %47, %69 : vector<32x128xi1>, vector<32x128xf32>
    %cst_28 = arith.constant dense<0.000000e+00> : vector<128xf32>
    %71 = vector.multi_reduction <add>, %70, %cst_28 [0] : vector<32x128xf32> to vector<128xf32>
    %72 = vector.shape_cast %71 : vector<128xf32> to vector<1x128xf32>
    %cst_29 = arith.constant 1.250000e-01 : f32
    %73 = vector.broadcast %cst_29 : f32 to vector<1x128xf32>
    %74 = arith.mulf %72, %73 : vector<1x128xf32>
    %75 = vector.broadcast %74 : vector<1x128xf32> to vector<32x128xf32>
    %76 = arith.subf %47, %75 : vector<32x128xf32>
    %cst_30 = arith.constant 0.000000e+00 : f32
    %77 = vector.shape_cast %66 : vector<32x1xi1> to vector<32x1xi1>
    %78 = vector.broadcast %77 : vector<32x1xi1> to vector<32x128xi1>
    %79 = vector.broadcast %cst_30 : f32 to vector<32x128xf32>
    %80 = arith.select %78, %76, %79 : vector<32x128xi1>, vector<32x128xf32>
    %81 = arith.mulf %80, %80 : vector<32x128xf32>
    %cst_31 = arith.constant dense<0.000000e+00> : vector<128xf32>
    %82 = vector.multi_reduction <add>, %81, %cst_31 [0] : vector<32x128xf32> to vector<128xf32>
    %83 = vector.shape_cast %82 : vector<128xf32> to vector<1x128xf32>
    %84 = vector.shape_cast %72 : vector<1x128xf32> to vector<1x1x128xf32>
    %c0_32 = arith.constant 0 : index
    %c0_33 = arith.constant 0 : index
    %c0_34 = arith.constant 0 : index
    %85 = vector.load %arg7[%c0_32, %c0_33, %c0_34] : memref<1x1x128xf32, #tpu.memory_space<vmem>>, vector<1x1x128xf32>
    tpu.vector_store %arg7[%c0_32, %c0_33, %c0_34], %84 {strides = array<i32>} : memref<1x1x128xf32, #tpu.memory_space<vmem>>, vector<1x1x128xf32>,
    %86 = vector.shape_cast %83 : vector<1x128xf32> to vector<1x1x128xf32>
    %c0_35 = arith.constant 0 : index
    %c0_36 = arith.constant 0 : index
    %c0_37 = arith.constant 0 : index
    %87 = vector.load %arg8[%c0_35, %c0_36, %c0_37] : memref<1x1x128xf32, #tpu.memory_space<vmem>>, vector<1x1x128xf32>
    tpu.vector_store %arg8[%c0_35, %c0_36, %c0_37], %86 {strides = array<i32>} : memref<1x1x128xf32, #tpu.memory_space<vmem>>, vector<1x1x128xf32>,
    %88 = vector.shape_cast %47 : vector<32x128xf32> to vector<4x8x128xf32>
    %89 = vector.extract_strided_slice %88 {offsets = [0, 0, 0], sizes = [4, 2, 128], strides = [1, 1, 1]} : vector<4x8x128xf32> to vector<4x2x128xf32>
    %90 = vector.shape_cast %89 : vector<4x2x128xf32> to vector<1x4x2x128xf32>
    %91 = arith.truncf %90 : vector<1x4x2x128xf32> to vector<1x4x2x128xbf16>
    %c0_38 = arith.constant 0 : index
    %c0_39 = arith.constant 0 : index
    %c0_40 = arith.constant 0 : index
    %c0_41 = arith.constant 0 : index
    %92 = vector.load %arg6[%c0_38, %c0_39, %c0_40, %c0_41] : memref<1x4x2x128xbf16, #tpu.memory_space<vmem>>, vector<1x4x2x128xbf16>
    tpu.vector_store %arg6[%c0_38, %c0_39, %c0_40, %c0_41], %91 {strides = array<i32>} : memref<1x4x2x128xbf16, #tpu.memory_space<vmem>>, vector<1x4x2x128xbf16>,
    return
  }
  func.func @transform_0(%arg0: i32) -> (i32, i32, i32, i32) {
    %c0_i32 = arith.constant 0 : i32
    %c0_i32_0 = arith.constant 0 : i32
    %c0_i32_1 = arith.constant 0 : i32
    %c0_i32_2 = arith.constant 0 : i32
    return %arg0, %c0_i32, %c0_i32_0, %c0_i32_1 : i32, i32, i32, i32
  }
  func.func @transform_1(%arg0: i32) -> (i32, i32, i32) {
    %c0_i32 = arith.constant 0 : i32
    %c0_i32_0 = arith.constant 0 : i32
    %c0_i32_1 = arith.constant 0 : i32
    %c0_i32_2 = arith.constant 0 : i32
    return %c0_i32, %c0_i32_0, %c0_i32_1 : i32, i32, i32
  }
  func.func @transform_2(%arg0: i32) -> (i32, i32) {
    %c0_i32 = arith.constant 0 : i32
    %c0_i32_0 = arith.constant 0 : i32
    %c0_i32_1 = arith.constant 0 : i32
    return %c0_i32, %c0_i32_0 : i32, i32
  }
  func.func @transform_3(%arg0: i32) -> (i32, i32) {
    %c0_i32 = arith.constant 0 : i32
    %c0_i32_0 = arith.constant 0 : i32
    %c0_i32_1 = arith.constant 0 : i32
    return %c0_i32, %c0_i32_0 : i32, i32
  }
  func.func @transform_4(%arg0: i32) -> (i32, i32) {
    %c0_i32 = arith.constant 0 : i32
    %c0_i32_0 = arith.constant 0 : i32
    %c0_i32_1 = arith.constant 0 : i32
    return %c0_i32, %c0_i32_0 : i32, i32
  }
  func.func @transform_5(%arg0: i32) -> (i32, i32, i32, i32) {
    %c0_i32 = arith.constant 0 : i32
    %c0_i32_0 = arith.constant 0 : i32
    %c0_i32_1 = arith.constant 0 : i32
    %c0_i32_2 = arith.constant 0 : i32
    return %arg0, %c0_i32, %c0_i32_0, %c0_i32_1 : i32, i32, i32, i32
  }
  func.func @transform_6(%arg0: i32) -> (i32, i32, i32) {
    %c0_i32 = arith.constant 0 : i32
    %c0_i32_0 = arith.constant 0 : i32
    %c0_i32_1 = arith.constant 0 : i32
    return %arg0, %c0_i32, %c0_i32_0 : i32, i32, i32
  }
  func.func @transform_7(%arg0: i32) -> (i32, i32, i32) {
    %c0_i32 = arith.constant 0 : i32
    %c0_i32_0 = arith.constant 0 : i32
    %c0_i32_1 = arith.constant 0 : i32
    return %arg0, %c0_i32, %c0_i32_0 : i32, i32, i32
  }
}

module attributes {stable_mosaic.version = 11 : i64} {
  func.func @_conv_kernel(%arg0: i32, %arg1: memref<1x9x9x8xbf16, #tpu.memory_space<vmem>>, %arg2: memref<4x8x128xbf16, #tpu.memory_space<vmem>>, %arg3: memref<1x128xf32, #tpu.memory_space<vmem>>, %arg4: memref<1x8xf32, #tpu.memory_space<vmem>>, %arg5: memref<1x8xf32, #tpu.memory_space<vmem>>, %arg6: memref<1x8x4x128xbf16, #tpu.memory_space<vmem>>, %arg7: memref<1x1x128xf32, #tpu.memory_space<vmem>>, %arg8: memref<1x1x128xf32, #tpu.memory_space<vmem>>) attributes {dimension_semantics = [#tpu.dimension_semantics<parallel>], iteration_bounds = array<i64: 2>, scalar_prefetch = 0 : i64, scratch_operands = 0 : i64, tpu.core_type = #tpu.core_type<tc>, window_params = [{transform_indices = @transform_0, window_bounds = array<i64: 1, 9, 9, 8>}, {pipeline_mode = #tpu.pipeline_mode<synchronous>, transform_indices = @transform_1, window_bounds = array<i64: 4, 8, 128>}, {pipeline_mode = #tpu.pipeline_mode<synchronous>, transform_indices = @transform_2, window_bounds = array<i64: 1, 128>}, {pipeline_mode = #tpu.pipeline_mode<synchronous>, transform_indices = @transform_3, window_bounds = array<i64: 1, 8>}, {pipeline_mode = #tpu.pipeline_mode<synchronous>, transform_indices = @transform_4, window_bounds = array<i64: 1, 8>}, {transform_indices = @transform_5, window_bounds = array<i64: 1, 8, 4, 128>}, {transform_indices = @transform_6, window_bounds = array<i64: 1, 1, 128>}, {transform_indices = @transform_7, window_bounds = array<i64: 1, 1, 128>}]} {
    %c0 = arith.constant 0 : index
    %c0_0 = arith.constant 0 : index
    %c0_1 = arith.constant 0 : index
    %c0_2 = arith.constant 0 : index
    %0 = vector.load %arg1[%c0, %c0_0, %c0_1, %c0_2] : memref<1x9x9x8xbf16, #tpu.memory_space<vmem>>, vector<1x9x9x8xbf16>
    %1 = vector.shape_cast %0 : vector<1x9x9x8xbf16> to vector<9x9x8xbf16>
    %2 = arith.extf %1 : vector<9x9x8xbf16> to vector<9x9x8xf32>
    %c0_3 = arith.constant 0 : index
    %c0_4 = arith.constant 0 : index
    %3 = vector.load %arg4[%c0_3, %c0_4] : memref<1x8xf32, #tpu.memory_space<vmem>>, vector<1x8xf32>
    %4 = vector.shape_cast %3 : vector<1x8xf32> to vector<1x1x8xf32>
    %5 = vector.broadcast %4 : vector<1x1x8xf32> to vector<9x9x8xf32>
    %6 = arith.mulf %2, %5 : vector<9x9x8xf32>
    %c0_5 = arith.constant 0 : index
    %c0_6 = arith.constant 0 : index
    %7 = vector.load %arg5[%c0_5, %c0_6] : memref<1x8xf32, #tpu.memory_space<vmem>>, vector<1x8xf32>
    %8 = vector.shape_cast %7 : vector<1x8xf32> to vector<1x1x8xf32>
    %9 = vector.broadcast %8 : vector<1x1x8xf32> to vector<9x9x8xf32>
    %10 = arith.addf %6, %9 : vector<9x9x8xf32>
    %cst = arith.constant 0.000000e+00 : f32
    %11 = vector.broadcast %cst : f32 to vector<9x9x8xf32>
    %12 = arith.cmpf ogt, %10, %11 : vector<9x9x8xf32>
    %cst_7 = arith.constant 0.00999999977 : f32
    %13 = vector.broadcast %cst_7 : f32 to vector<9x9x8xf32>
    %14 = arith.mulf %13, %10 : vector<9x9x8xf32>
    %15 = arith.select %12, %10, %14 : vector<9x9x8xi1>, vector<9x9x8xf32>
    %cst_8 = arith.constant 0.000000e+00 : f32
    %16 = vector.broadcast %cst_8 : f32 to vector<64x128xf32>
    %17 = vector.extract_strided_slice %15 {offsets = [0, 0, 0], sizes = [8, 8, 8], strides = [1, 1, 1]} : vector<9x9x8xf32> to vector<8x8x8xf32>
    %18 = vector.shape_cast %17 : vector<8x8x8xf32> to vector<64x8xf32>
    %19 = arith.truncf %18 : vector<64x8xf32> to vector<64x8xbf16>
    %c0_9 = arith.constant 0 : index
    %c0_10 = arith.constant 0 : index
    %c0_11 = arith.constant 0 : index
    %20 = vector.load %arg2[%c0_9, %c0_10, %c0_11] : memref<4x8x128xbf16, #tpu.memory_space<vmem>>, vector<1x8x128xbf16>
    %21 = vector.shape_cast %20 : vector<1x8x128xbf16> to vector<8x128xbf16>
    %cst_12 = arith.constant dense<0.000000e+00> : vector<64x128xf32>
    %22 = tpu.matmul %19, %21, %cst_12 {dimension_numbers = #tpu.dot_dimension_numbers<[1], [0], [0], [1], [0, 0, 1, 1], [], []>} : vector<64x8xbf16>, vector<8x128xbf16>, vector<64x128xf32> -> vector<64x128xf32>
    %23 = arith.addf %16, %22 : vector<64x128xf32>
    %24 = vector.extract_strided_slice %15 {offsets = [0, 1, 0], sizes = [8, 8, 8], strides = [1, 1, 1]} : vector<9x9x8xf32> to vector<8x8x8xf32>
    %25 = vector.shape_cast %24 : vector<8x8x8xf32> to vector<64x8xf32>
    %26 = arith.truncf %25 : vector<64x8xf32> to vector<64x8xbf16>
    %c1 = arith.constant 1 : index
    %c0_13 = arith.constant 0 : index
    %c0_14 = arith.constant 0 : index
    %27 = vector.load %arg2[%c1, %c0_13, %c0_14] : memref<4x8x128xbf16, #tpu.memory_space<vmem>>, vector<1x8x128xbf16>
    %28 = vector.shape_cast %27 : vector<1x8x128xbf16> to vector<8x128xbf16>
    %cst_15 = arith.constant dense<0.000000e+00> : vector<64x128xf32>
    %29 = tpu.matmul %26, %28, %cst_15 {dimension_numbers = #tpu.dot_dimension_numbers<[1], [0], [0], [1], [0, 0, 1, 1], [], []>} : vector<64x8xbf16>, vector<8x128xbf16>, vector<64x128xf32> -> vector<64x128xf32>
    %30 = arith.addf %23, %29 : vector<64x128xf32>
    %31 = vector.extract_strided_slice %15 {offsets = [1, 0, 0], sizes = [8, 8, 8], strides = [1, 1, 1]} : vector<9x9x8xf32> to vector<8x8x8xf32>
    %32 = vector.shape_cast %31 : vector<8x8x8xf32> to vector<64x8xf32>
    %33 = arith.truncf %32 : vector<64x8xf32> to vector<64x8xbf16>
    %c2 = arith.constant 2 : index
    %c0_16 = arith.constant 0 : index
    %c0_17 = arith.constant 0 : index
    %34 = vector.load %arg2[%c2, %c0_16, %c0_17] : memref<4x8x128xbf16, #tpu.memory_space<vmem>>, vector<1x8x128xbf16>
    %35 = vector.shape_cast %34 : vector<1x8x128xbf16> to vector<8x128xbf16>
    %cst_18 = arith.constant dense<0.000000e+00> : vector<64x128xf32>
    %36 = tpu.matmul %33, %35, %cst_18 {dimension_numbers = #tpu.dot_dimension_numbers<[1], [0], [0], [1], [0, 0, 1, 1], [], []>} : vector<64x8xbf16>, vector<8x128xbf16>, vector<64x128xf32> -> vector<64x128xf32>
    %37 = arith.addf %30, %36 : vector<64x128xf32>
    %38 = vector.extract_strided_slice %15 {offsets = [1, 1, 0], sizes = [8, 8, 8], strides = [1, 1, 1]} : vector<9x9x8xf32> to vector<8x8x8xf32>
    %39 = vector.shape_cast %38 : vector<8x8x8xf32> to vector<64x8xf32>
    %40 = arith.truncf %39 : vector<64x8xf32> to vector<64x8xbf16>
    %c3 = arith.constant 3 : index
    %c0_19 = arith.constant 0 : index
    %c0_20 = arith.constant 0 : index
    %41 = vector.load %arg2[%c3, %c0_19, %c0_20] : memref<4x8x128xbf16, #tpu.memory_space<vmem>>, vector<1x8x128xbf16>
    %42 = vector.shape_cast %41 : vector<1x8x128xbf16> to vector<8x128xbf16>
    %cst_21 = arith.constant dense<0.000000e+00> : vector<64x128xf32>
    %43 = tpu.matmul %40, %42, %cst_21 {dimension_numbers = #tpu.dot_dimension_numbers<[1], [0], [0], [1], [0, 0, 1, 1], [], []>} : vector<64x8xbf16>, vector<8x128xbf16>, vector<64x128xf32> -> vector<64x128xf32>
    %44 = arith.addf %37, %43 : vector<64x128xf32>
    %c0_22 = arith.constant 0 : index
    %c0_23 = arith.constant 0 : index
    %45 = vector.load %arg3[%c0_22, %c0_23] : memref<1x128xf32, #tpu.memory_space<vmem>>, vector<1x128xf32>
    %46 = vector.broadcast %45 : vector<1x128xf32> to vector<64x128xf32>
    %47 = arith.addf %44, %46 : vector<64x128xf32>
    %48 = tpu.iota {dimensions = array<i32: 0>} : vector<64x1xi32>
    %c8_i32 = arith.constant 8 : i32
    %c0_i32 = arith.constant 0 : i32
    %49 = arith.cmpi eq, %c8_i32, %c0_i32 : i32
    %c1_i32 = arith.constant 1 : i32
    %50 = arith.select %49, %c1_i32, %c8_i32 : i32
    %51 = vector.broadcast %50 : i32 to vector<64x1xi32>
    %52 = arith.remsi %48, %51 : vector<64x1xi32>
    %c0_i32_24 = arith.constant 0 : i32
    %53 = vector.broadcast %c0_i32_24 : i32 to vector<64x1xi32>
    %54 = arith.cmpi ne, %52, %53 : vector<64x1xi32>
    %c0_i32_25 = arith.constant 0 : i32
    %55 = vector.broadcast %c0_i32_25 : i32 to vector<64x1xi32>
    %56 = arith.cmpi slt, %52, %55 : vector<64x1xi32>
    %c0_i32_26 = arith.constant 0 : i32
    %57 = arith.cmpi slt, %50, %c0_i32_26 : i32
    %58 = vector.broadcast %57 : i1 to vector<64x1xi1>
    %59 = vector.broadcast %58 : vector<64x1xi1> to vector<64x1xi1>
    %60 = arith.xori %56, %59 : vector<64x1xi1>
    %61 = arith.andi %60, %54 : vector<64x1xi1>
    %62 = vector.broadcast %50 : i32 to vector<64x1xi32>
    %63 = arith.addi %52, %62 : vector<64x1xi32>
    %64 = arith.select %61, %63, %52 : vector<64x1xi1>, vector<64x1xi32>
    %c4_i32 = arith.constant 4 : i32
    %65 = vector.broadcast %c4_i32 : i32 to vector<64x1xi32>
    %66 = arith.cmpi slt, %64, %65 : vector<64x1xi32>
    %cst_27 = arith.constant 0.000000e+00 : f32
    %67 = vector.shape_cast %66 : vector<64x1xi1> to vector<64x1xi1>
    %68 = vector.broadcast %67 : vector<64x1xi1> to vector<64x128xi1>
    %69 = vector.broadcast %cst_27 : f32 to vector<64x128xf32>
    %70 = arith.select %68, %47, %69 : vector<64x128xi1>, vector<64x128xf32>
    %cst_28 = arith.constant dense<0.000000e+00> : vector<128xf32>
    %71 = vector.multi_reduction <add>, %70, %cst_28 [0] : vector<64x128xf32> to vector<128xf32>
    %72 = vector.shape_cast %71 : vector<128xf32> to vector<1x128xf32>
    %cst_29 = arith.constant 3.125000e-02 : f32
    %73 = vector.broadcast %cst_29 : f32 to vector<1x128xf32>
    %74 = arith.mulf %72, %73 : vector<1x128xf32>
    %75 = vector.broadcast %74 : vector<1x128xf32> to vector<64x128xf32>
    %76 = arith.subf %47, %75 : vector<64x128xf32>
    %cst_30 = arith.constant 0.000000e+00 : f32
    %77 = vector.shape_cast %66 : vector<64x1xi1> to vector<64x1xi1>
    %78 = vector.broadcast %77 : vector<64x1xi1> to vector<64x128xi1>
    %79 = vector.broadcast %cst_30 : f32 to vector<64x128xf32>
    %80 = arith.select %78, %76, %79 : vector<64x128xi1>, vector<64x128xf32>
    %81 = arith.mulf %80, %80 : vector<64x128xf32>
    %cst_31 = arith.constant dense<0.000000e+00> : vector<128xf32>
    %82 = vector.multi_reduction <add>, %81, %cst_31 [0] : vector<64x128xf32> to vector<128xf32>
    %83 = vector.shape_cast %82 : vector<128xf32> to vector<1x128xf32>
    %84 = vector.shape_cast %72 : vector<1x128xf32> to vector<1x1x128xf32>
    %c0_32 = arith.constant 0 : index
    %c0_33 = arith.constant 0 : index
    %c0_34 = arith.constant 0 : index
    %85 = vector.load %arg7[%c0_32, %c0_33, %c0_34] : memref<1x1x128xf32, #tpu.memory_space<vmem>>, vector<1x1x128xf32>
    tpu.vector_store %arg7[%c0_32, %c0_33, %c0_34], %84 {strides = array<i32>} : memref<1x1x128xf32, #tpu.memory_space<vmem>>, vector<1x1x128xf32>,
    %86 = vector.shape_cast %83 : vector<1x128xf32> to vector<1x1x128xf32>
    %c0_35 = arith.constant 0 : index
    %c0_36 = arith.constant 0 : index
    %c0_37 = arith.constant 0 : index
    %87 = vector.load %arg8[%c0_35, %c0_36, %c0_37] : memref<1x1x128xf32, #tpu.memory_space<vmem>>, vector<1x1x128xf32>
    tpu.vector_store %arg8[%c0_35, %c0_36, %c0_37], %86 {strides = array<i32>} : memref<1x1x128xf32, #tpu.memory_space<vmem>>, vector<1x1x128xf32>,
    %88 = vector.shape_cast %47 : vector<64x128xf32> to vector<8x8x128xf32>
    %89 = vector.extract_strided_slice %88 {offsets = [0, 0, 0], sizes = [8, 4, 128], strides = [1, 1, 1]} : vector<8x8x128xf32> to vector<8x4x128xf32>
    %90 = vector.shape_cast %89 : vector<8x4x128xf32> to vector<1x8x4x128xf32>
    %91 = arith.truncf %90 : vector<1x8x4x128xf32> to vector<1x8x4x128xbf16>
    %c0_38 = arith.constant 0 : index
    %c0_39 = arith.constant 0 : index
    %c0_40 = arith.constant 0 : index
    %c0_41 = arith.constant 0 : index
    %92 = vector.load %arg6[%c0_38, %c0_39, %c0_40, %c0_41] : memref<1x8x4x128xbf16, #tpu.memory_space<vmem>>, vector<1x8x4x128xbf16>
    tpu.vector_store %arg6[%c0_38, %c0_39, %c0_40, %c0_41], %91 {strides = array<i32>} : memref<1x8x4x128xbf16, #tpu.memory_space<vmem>>, vector<1x8x4x128xbf16>,
    return
  }
  func.func @transform_0(%arg0: i32) -> (i32, i32, i32, i32) {
    %c0_i32 = arith.constant 0 : i32
    %c0_i32_0 = arith.constant 0 : i32
    %c0_i32_1 = arith.constant 0 : i32
    %c0_i32_2 = arith.constant 0 : i32
    return %arg0, %c0_i32, %c0_i32_0, %c0_i32_1 : i32, i32, i32, i32
  }
  func.func @transform_1(%arg0: i32) -> (i32, i32, i32) {
    %c0_i32 = arith.constant 0 : i32
    %c0_i32_0 = arith.constant 0 : i32
    %c0_i32_1 = arith.constant 0 : i32
    %c0_i32_2 = arith.constant 0 : i32
    return %c0_i32, %c0_i32_0, %c0_i32_1 : i32, i32, i32
  }
  func.func @transform_2(%arg0: i32) -> (i32, i32) {
    %c0_i32 = arith.constant 0 : i32
    %c0_i32_0 = arith.constant 0 : i32
    %c0_i32_1 = arith.constant 0 : i32
    return %c0_i32, %c0_i32_0 : i32, i32
  }
  func.func @transform_3(%arg0: i32) -> (i32, i32) {
    %c0_i32 = arith.constant 0 : i32
    %c0_i32_0 = arith.constant 0 : i32
    %c0_i32_1 = arith.constant 0 : i32
    return %c0_i32, %c0_i32_0 : i32, i32
  }
  func.func @transform_4(%arg0: i32) -> (i32, i32) {
    %c0_i32 = arith.constant 0 : i32
    %c0_i32_0 = arith.constant 0 : i32
    %c0_i32_1 = arith.constant 0 : i32
    return %c0_i32, %c0_i32_0 : i32, i32
  }
  func.func @transform_5(%arg0: i32) -> (i32, i32, i32, i32) {
    %c0_i32 = arith.constant 0 : i32
    %c0_i32_0 = arith.constant 0 : i32
    %c0_i32_1 = arith.constant 0 : i32
    %c0_i32_2 = arith.constant 0 : i32
    return %arg0, %c0_i32, %c0_i32_0, %c0_i32_1 : i32, i32, i32, i32
  }
  func.func @transform_6(%arg0: i32) -> (i32, i32, i32) {
    %c0_i32 = arith.constant 0 : i32
    %c0_i32_0 = arith.constant 0 : i32
    %c0_i32_1 = arith.constant 0 : i32
    return %arg0, %c0_i32, %c0_i32_0 : i32, i32, i32
  }
  func.func @transform_7(%arg0: i32) -> (i32, i32, i32) {
    %c0_i32 = arith.constant 0 : i32
    %c0_i32_0 = arith.constant 0 : i32
    %c0_i32_1 = arith.constant 0 : i32
    return %arg0, %c0_i32, %c0_i32_0 : i32, i32, i32
  }
}

module attributes {stable_mosaic.version = 11 : i64} {
  func.func @_conv_kernel(%arg0: i32, %arg1: memref<1x18x10x8xbf16, #tpu.memory_space<vmem>>, %arg2: memref<9x8x128xbf16, #tpu.memory_space<vmem>>, %arg3: memref<1x128xf32, #tpu.memory_space<vmem>>, %arg4: memref<1x8xf32, #tpu.memory_space<vmem>>, %arg5: memref<1x8xf32, #tpu.memory_space<vmem>>, %arg6: memref<1x16x8x128xf32, #tpu.memory_space<vmem>>) attributes {dimension_semantics = [#tpu.dimension_semantics<parallel>], iteration_bounds = array<i64: 2>, scalar_prefetch = 0 : i64, scratch_operands = 0 : i64, tpu.core_type = #tpu.core_type<tc>, window_params = [{transform_indices = @transform_0, window_bounds = array<i64: 1, 18, 10, 8>}, {pipeline_mode = #tpu.pipeline_mode<synchronous>, transform_indices = @transform_1, window_bounds = array<i64: 9, 8, 128>}, {pipeline_mode = #tpu.pipeline_mode<synchronous>, transform_indices = @transform_2, window_bounds = array<i64: 1, 128>}, {pipeline_mode = #tpu.pipeline_mode<synchronous>, transform_indices = @transform_3, window_bounds = array<i64: 1, 8>}, {pipeline_mode = #tpu.pipeline_mode<synchronous>, transform_indices = @transform_4, window_bounds = array<i64: 1, 8>}, {transform_indices = @transform_5, window_bounds = array<i64: 1, 16, 8, 128>}]} {
    %c0 = arith.constant 0 : index
    %c0_0 = arith.constant 0 : index
    %c0_1 = arith.constant 0 : index
    %c0_2 = arith.constant 0 : index
    %0 = vector.load %arg1[%c0, %c0_0, %c0_1, %c0_2] : memref<1x18x10x8xbf16, #tpu.memory_space<vmem>>, vector<1x18x10x8xbf16>
    %1 = vector.shape_cast %0 : vector<1x18x10x8xbf16> to vector<18x10x8xbf16>
    %2 = arith.extf %1 : vector<18x10x8xbf16> to vector<18x10x8xf32>
    %c0_3 = arith.constant 0 : index
    %c0_4 = arith.constant 0 : index
    %3 = vector.load %arg4[%c0_3, %c0_4] : memref<1x8xf32, #tpu.memory_space<vmem>>, vector<1x8xf32>
    %4 = vector.shape_cast %3 : vector<1x8xf32> to vector<1x1x8xf32>
    %5 = vector.broadcast %4 : vector<1x1x8xf32> to vector<18x10x8xf32>
    %6 = arith.mulf %2, %5 : vector<18x10x8xf32>
    %c0_5 = arith.constant 0 : index
    %c0_6 = arith.constant 0 : index
    %7 = vector.load %arg5[%c0_5, %c0_6] : memref<1x8xf32, #tpu.memory_space<vmem>>, vector<1x8xf32>
    %8 = vector.shape_cast %7 : vector<1x8xf32> to vector<1x1x8xf32>
    %9 = vector.broadcast %8 : vector<1x1x8xf32> to vector<18x10x8xf32>
    %10 = arith.addf %6, %9 : vector<18x10x8xf32>
    %cst = arith.constant 0.000000e+00 : f32
    %11 = vector.broadcast %cst : f32 to vector<18x10x8xf32>
    %12 = arith.cmpf ogt, %10, %11 : vector<18x10x8xf32>
    %cst_7 = arith.constant 0.00999999977 : f32
    %13 = vector.broadcast %cst_7 : f32 to vector<18x10x8xf32>
    %14 = arith.mulf %13, %10 : vector<18x10x8xf32>
    %15 = arith.select %12, %10, %14 : vector<18x10x8xi1>, vector<18x10x8xf32>
    %cst_8 = arith.constant 0.000000e+00 : f32
    %16 = vector.broadcast %cst_8 : f32 to vector<128x128xf32>
    %17 = vector.extract_strided_slice %15 {offsets = [0, 0, 0], sizes = [16, 8, 8], strides = [1, 1, 1]} : vector<18x10x8xf32> to vector<16x8x8xf32>
    %18 = vector.shape_cast %17 : vector<16x8x8xf32> to vector<128x8xf32>
    %19 = arith.truncf %18 : vector<128x8xf32> to vector<128x8xbf16>
    %c0_9 = arith.constant 0 : index
    %c0_10 = arith.constant 0 : index
    %c0_11 = arith.constant 0 : index
    %20 = vector.load %arg2[%c0_9, %c0_10, %c0_11] : memref<9x8x128xbf16, #tpu.memory_space<vmem>>, vector<1x8x128xbf16>
    %21 = vector.shape_cast %20 : vector<1x8x128xbf16> to vector<8x128xbf16>
    %cst_12 = arith.constant dense<0.000000e+00> : vector<128x128xf32>
    %22 = tpu.matmul %19, %21, %cst_12 {dimension_numbers = #tpu.dot_dimension_numbers<[1], [0], [0], [1], [0, 0, 1, 1], [], []>} : vector<128x8xbf16>, vector<8x128xbf16>, vector<128x128xf32> -> vector<128x128xf32>
    %23 = arith.addf %16, %22 : vector<128x128xf32>
    %24 = vector.extract_strided_slice %15 {offsets = [0, 1, 0], sizes = [16, 8, 8], strides = [1, 1, 1]} : vector<18x10x8xf32> to vector<16x8x8xf32>
    %25 = vector.shape_cast %24 : vector<16x8x8xf32> to vector<128x8xf32>
    %26 = arith.truncf %25 : vector<128x8xf32> to vector<128x8xbf16>
    %c1 = arith.constant 1 : index
    %c0_13 = arith.constant 0 : index
    %c0_14 = arith.constant 0 : index
    %27 = vector.load %arg2[%c1, %c0_13, %c0_14] : memref<9x8x128xbf16, #tpu.memory_space<vmem>>, vector<1x8x128xbf16>
    %28 = vector.shape_cast %27 : vector<1x8x128xbf16> to vector<8x128xbf16>
    %cst_15 = arith.constant dense<0.000000e+00> : vector<128x128xf32>
    %29 = tpu.matmul %26, %28, %cst_15 {dimension_numbers = #tpu.dot_dimension_numbers<[1], [0], [0], [1], [0, 0, 1, 1], [], []>} : vector<128x8xbf16>, vector<8x128xbf16>, vector<128x128xf32> -> vector<128x128xf32>
    %30 = arith.addf %23, %29 : vector<128x128xf32>
    %31 = vector.extract_strided_slice %15 {offsets = [0, 2, 0], sizes = [16, 8, 8], strides = [1, 1, 1]} : vector<18x10x8xf32> to vector<16x8x8xf32>
    %32 = vector.shape_cast %31 : vector<16x8x8xf32> to vector<128x8xf32>
    %33 = arith.truncf %32 : vector<128x8xf32> to vector<128x8xbf16>
    %c2 = arith.constant 2 : index
    %c0_16 = arith.constant 0 : index
    %c0_17 = arith.constant 0 : index
    %34 = vector.load %arg2[%c2, %c0_16, %c0_17] : memref<9x8x128xbf16, #tpu.memory_space<vmem>>, vector<1x8x128xbf16>
    %35 = vector.shape_cast %34 : vector<1x8x128xbf16> to vector<8x128xbf16>
    %cst_18 = arith.constant dense<0.000000e+00> : vector<128x128xf32>
    %36 = tpu.matmul %33, %35, %cst_18 {dimension_numbers = #tpu.dot_dimension_numbers<[1], [0], [0], [1], [0, 0, 1, 1], [], []>} : vector<128x8xbf16>, vector<8x128xbf16>, vector<128x128xf32> -> vector<128x128xf32>
    %37 = arith.addf %30, %36 : vector<128x128xf32>
    %38 = vector.extract_strided_slice %15 {offsets = [1, 0, 0], sizes = [16, 8, 8], strides = [1, 1, 1]} : vector<18x10x8xf32> to vector<16x8x8xf32>
    %39 = vector.shape_cast %38 : vector<16x8x8xf32> to vector<128x8xf32>
    %40 = arith.truncf %39 : vector<128x8xf32> to vector<128x8xbf16>
    %c3 = arith.constant 3 : index
    %c0_19 = arith.constant 0 : index
    %c0_20 = arith.constant 0 : index
    %41 = vector.load %arg2[%c3, %c0_19, %c0_20] : memref<9x8x128xbf16, #tpu.memory_space<vmem>>, vector<1x8x128xbf16>
    %42 = vector.shape_cast %41 : vector<1x8x128xbf16> to vector<8x128xbf16>
    %cst_21 = arith.constant dense<0.000000e+00> : vector<128x128xf32>
    %43 = tpu.matmul %40, %42, %cst_21 {dimension_numbers = #tpu.dot_dimension_numbers<[1], [0], [0], [1], [0, 0, 1, 1], [], []>} : vector<128x8xbf16>, vector<8x128xbf16>, vector<128x128xf32> -> vector<128x128xf32>
    %44 = arith.addf %37, %43 : vector<128x128xf32>
    %45 = vector.extract_strided_slice %15 {offsets = [1, 1, 0], sizes = [16, 8, 8], strides = [1, 1, 1]} : vector<18x10x8xf32> to vector<16x8x8xf32>
    %46 = vector.shape_cast %45 : vector<16x8x8xf32> to vector<128x8xf32>
    %47 = arith.truncf %46 : vector<128x8xf32> to vector<128x8xbf16>
    %c4 = arith.constant 4 : index
    %c0_22 = arith.constant 0 : index
    %c0_23 = arith.constant 0 : index
    %48 = vector.load %arg2[%c4, %c0_22, %c0_23] : memref<9x8x128xbf16, #tpu.memory_space<vmem>>, vector<1x8x128xbf16>
    %49 = vector.shape_cast %48 : vector<1x8x128xbf16> to vector<8x128xbf16>
    %cst_24 = arith.constant dense<0.000000e+00> : vector<128x128xf32>
    %50 = tpu.matmul %47, %49, %cst_24 {dimension_numbers = #tpu.dot_dimension_numbers<[1], [0], [0], [1], [0, 0, 1, 1], [], []>} : vector<128x8xbf16>, vector<8x128xbf16>, vector<128x128xf32> -> vector<128x128xf32>
    %51 = arith.addf %44, %50 : vector<128x128xf32>
    %52 = vector.extract_strided_slice %15 {offsets = [1, 2, 0], sizes = [16, 8, 8], strides = [1, 1, 1]} : vector<18x10x8xf32> to vector<16x8x8xf32>
    %53 = vector.shape_cast %52 : vector<16x8x8xf32> to vector<128x8xf32>
    %54 = arith.truncf %53 : vector<128x8xf32> to vector<128x8xbf16>
    %c5 = arith.constant 5 : index
    %c0_25 = arith.constant 0 : index
    %c0_26 = arith.constant 0 : index
    %55 = vector.load %arg2[%c5, %c0_25, %c0_26] : memref<9x8x128xbf16, #tpu.memory_space<vmem>>, vector<1x8x128xbf16>
    %56 = vector.shape_cast %55 : vector<1x8x128xbf16> to vector<8x128xbf16>
    %cst_27 = arith.constant dense<0.000000e+00> : vector<128x128xf32>
    %57 = tpu.matmul %54, %56, %cst_27 {dimension_numbers = #tpu.dot_dimension_numbers<[1], [0], [0], [1], [0, 0, 1, 1], [], []>} : vector<128x8xbf16>, vector<8x128xbf16>, vector<128x128xf32> -> vector<128x128xf32>
    %58 = arith.addf %51, %57 : vector<128x128xf32>
    %59 = vector.extract_strided_slice %15 {offsets = [2, 0, 0], sizes = [16, 8, 8], strides = [1, 1, 1]} : vector<18x10x8xf32> to vector<16x8x8xf32>
    %60 = vector.shape_cast %59 : vector<16x8x8xf32> to vector<128x8xf32>
    %61 = arith.truncf %60 : vector<128x8xf32> to vector<128x8xbf16>
    %c6 = arith.constant 6 : index
    %c0_28 = arith.constant 0 : index
    %c0_29 = arith.constant 0 : index
    %62 = vector.load %arg2[%c6, %c0_28, %c0_29] : memref<9x8x128xbf16, #tpu.memory_space<vmem>>, vector<1x8x128xbf16>
    %63 = vector.shape_cast %62 : vector<1x8x128xbf16> to vector<8x128xbf16>
    %cst_30 = arith.constant dense<0.000000e+00> : vector<128x128xf32>
    %64 = tpu.matmul %61, %63, %cst_30 {dimension_numbers = #tpu.dot_dimension_numbers<[1], [0], [0], [1], [0, 0, 1, 1], [], []>} : vector<128x8xbf16>, vector<8x128xbf16>, vector<128x128xf32> -> vector<128x128xf32>
    %65 = arith.addf %58, %64 : vector<128x128xf32>
    %66 = vector.extract_strided_slice %15 {offsets = [2, 1, 0], sizes = [16, 8, 8], strides = [1, 1, 1]} : vector<18x10x8xf32> to vector<16x8x8xf32>
    %67 = vector.shape_cast %66 : vector<16x8x8xf32> to vector<128x8xf32>
    %68 = arith.truncf %67 : vector<128x8xf32> to vector<128x8xbf16>
    %c7 = arith.constant 7 : index
    %c0_31 = arith.constant 0 : index
    %c0_32 = arith.constant 0 : index
    %69 = vector.load %arg2[%c7, %c0_31, %c0_32] : memref<9x8x128xbf16, #tpu.memory_space<vmem>>, vector<1x8x128xbf16>
    %70 = vector.shape_cast %69 : vector<1x8x128xbf16> to vector<8x128xbf16>
    %cst_33 = arith.constant dense<0.000000e+00> : vector<128x128xf32>
    %71 = tpu.matmul %68, %70, %cst_33 {dimension_numbers = #tpu.dot_dimension_numbers<[1], [0], [0], [1], [0, 0, 1, 1], [], []>} : vector<128x8xbf16>, vector<8x128xbf16>, vector<128x128xf32> -> vector<128x128xf32>
    %72 = arith.addf %65, %71 : vector<128x128xf32>
    %73 = vector.extract_strided_slice %15 {offsets = [2, 2, 0], sizes = [16, 8, 8], strides = [1, 1, 1]} : vector<18x10x8xf32> to vector<16x8x8xf32>
    %74 = vector.shape_cast %73 : vector<16x8x8xf32> to vector<128x8xf32>
    %75 = arith.truncf %74 : vector<128x8xf32> to vector<128x8xbf16>
    %c8 = arith.constant 8 : index
    %c0_34 = arith.constant 0 : index
    %c0_35 = arith.constant 0 : index
    %76 = vector.load %arg2[%c8, %c0_34, %c0_35] : memref<9x8x128xbf16, #tpu.memory_space<vmem>>, vector<1x8x128xbf16>
    %77 = vector.shape_cast %76 : vector<1x8x128xbf16> to vector<8x128xbf16>
    %cst_36 = arith.constant dense<0.000000e+00> : vector<128x128xf32>
    %78 = tpu.matmul %75, %77, %cst_36 {dimension_numbers = #tpu.dot_dimension_numbers<[1], [0], [0], [1], [0, 0, 1, 1], [], []>} : vector<128x8xbf16>, vector<8x128xbf16>, vector<128x128xf32> -> vector<128x128xf32>
    %79 = arith.addf %72, %78 : vector<128x128xf32>
    %c0_37 = arith.constant 0 : index
    %c0_38 = arith.constant 0 : index
    %80 = vector.load %arg3[%c0_37, %c0_38] : memref<1x128xf32, #tpu.memory_space<vmem>>, vector<1x128xf32>
    %81 = vector.broadcast %80 : vector<1x128xf32> to vector<128x128xf32>
    %82 = arith.addf %79, %81 : vector<128x128xf32>
    %83 = math.tanh %82 : vector<128x128xf32>
    %84 = vector.shape_cast %83 : vector<128x128xf32> to vector<16x8x128xf32>
    %85 = vector.shape_cast %84 : vector<16x8x128xf32> to vector<1x16x8x128xf32>
    %c0_39 = arith.constant 0 : index
    %c0_40 = arith.constant 0 : index
    %c0_41 = arith.constant 0 : index
    %c0_42 = arith.constant 0 : index
    %86 = vector.load %arg6[%c0_39, %c0_40, %c0_41, %c0_42] : memref<1x16x8x128xf32, #tpu.memory_space<vmem>>, vector<1x16x8x128xf32>
    tpu.vector_store %arg6[%c0_39, %c0_40, %c0_41, %c0_42], %85 {strides = array<i32>} : memref<1x16x8x128xf32, #tpu.memory_space<vmem>>, vector<1x16x8x128xf32>,
    return
  }
  func.func @transform_0(%arg0: i32) -> (i32, i32, i32, i32) {
    %c0_i32 = arith.constant 0 : i32
    %c0_i32_0 = arith.constant 0 : i32
    %c0_i32_1 = arith.constant 0 : i32
    %c0_i32_2 = arith.constant 0 : i32
    return %arg0, %c0_i32, %c0_i32_0, %c0_i32_1 : i32, i32, i32, i32
  }
  func.func @transform_1(%arg0: i32) -> (i32, i32, i32) {
    %c0_i32 = arith.constant 0 : i32
    %c0_i32_0 = arith.constant 0 : i32
    %c0_i32_1 = arith.constant 0 : i32
    %c0_i32_2 = arith.constant 0 : i32
    return %c0_i32, %c0_i32_0, %c0_i32_1 : i32, i32, i32
  }
  func.func @transform_2(%arg0: i32) -> (i32, i32) {
    %c0_i32 = arith.constant 0 : i32
    %c0_i32_0 = arith.constant 0 : i32
    %c0_i32_1 = arith.constant 0 : i32
    return %c0_i32, %c0_i32_0 : i32, i32
  }
  func.func @transform_3(%arg0: i32) -> (i32, i32) {
    %c0_i32 = arith.constant 0 : i32
    %c0_i32_0 = arith.constant 0 : i32
    %c0_i32_1 = arith.constant 0 : i32
    return %c0_i32, %c0_i32_0 : i32, i32
  }
  func.func @transform_4(%arg0: i32) -> (i32, i32) {
    %c0_i32 = arith.constant 0 : i32
    %c0_i32_0 = arith.constant 0 : i32
    %c0_i32_1 = arith.constant 0 : i32
    return %c0_i32, %c0_i32_0 : i32, i32
  }
  func.func @transform_5(%arg0: i32) -> (i32, i32, i32, i32) {
    %c0_i32 = arith.constant 0 : i32
    %c0_i32_0 = arith.constant 0 : i32
    %c0_i32_1 = arith.constant 0 : i32
    %c0_i32_2 = arith.constant 0 : i32
    return %arg0, %c0_i32, %c0_i32_0, %c0_i32_1 : i32, i32, i32, i32
  }
}

</mosaic_0001>

<llo_original>
// kernel: tile.23
$region0: #{tile.23}
  #allocation0 [shape = 's32[1]{0}', space=sflag, size = 0x4, scoped, tag = 'scoped memory for tile.23']
  %s0 = inlined_call_operand.vmem [shape: f32[8], index: 0, kind: input, shape index: {}]
  %s1 = inlined_call_operand.vmem [shape: f32[4,8], index: 1, kind: output, shape index: {}]
  // Predicated region
  $region2: #{tile.23} parent=0 // pred_check
    _
  $region3: #{tile.23} parent=0 // pred_check_branch
    %3 = sbr.rel (0) target = $region5
  $region4: #{tile.23} parent=0 // pred_region
    _
  $region5: #{tile.23} parent=0 // pred_fallthru
    _
  %v4 = vld [vmem:[%s0] ss:$0 sm:$0xff]
  %5 = vst [vmem:[%s1] sm:$0xf] %v4

// kernel: tile.28
$region0: #{tile.28}
  %s0 = inlined_call_operand.vmem [shape: f32[4,8], index: 0, kind: input, shape index: {}]
  %s1 = inlined_call_operand.vmem [shape: f32[1,32], index: 1, kind: output, shape index: {}]
  $region1: #{tile.28} parent=0
    #allocation0 [shape = 'u8[4096]{0}', space=vmem, size = 0x1000, scoped, tag = 'scoped mem for output reshape']
    #allocation1 [shape = 'u8[4096]{0}', space=vmem, size = 0x1000, scoped, tag = 'scoped mem for input reshape']
    %s3 = sshll.u32 1, 4
    %s4 = ssub.s32 %s3, 1
    %v5 = vld [vmem:[%s0] sm:%s4]
    %6 = vst [vmem:[#allocation1] sm:%s4] %v5
    %v7 = vld [vmem:[#allocation1] sm:$0x1]
    %vm8 = vcmask 64512
    %9 = vst.msk [vmem:[#allocation0] sm:$0x1] %vm8, %v7
    %s10 = scalar_lea.vmem [#allocation1], 3
    %v11 = vld [vmem:[%s10] sm:$0x1]
    %12 = vrot.lane.b32.xlu0 %v11, 24
    %v13 = vpop.permute.xlu0 %12
    %vm14 = vcmask 261312
    %15 = vst.msk [vmem:[#allocation0] sm:$0x1] %vm14, %v13
    %s16 = scalar_lea.vmem [#allocation1], 2
    %v17 = vld [vmem:[%s16] sm:$0x1]
    %18 = vrot.lane.b32.xlu0 %v17, 16
    %v19 = vpop.permute.xlu0 %18
    %vm20 = vcmask 195712
    %21 = vst.msk [vmem:[#allocation0] sm:$0x1] %vm20, %v19
    %s22 = scalar_lea.vmem [#allocation1], 1
    %v23 = vld [vmem:[%s22] sm:$0x1]
    %24 = vrot.lane.b32.xlu0 %v23, 8
    %v25 = vpop.permute.xlu0 %24
    %vm26 = vcmask 130112
    %27 = vst.msk [vmem:[#allocation0] sm:$0x1] %vm26, %v25
    %s29 = sshll.u32 1, 1
    %s30 = ssub.s32 %s29, 1
    %v32 = vld [vmem:[#allocation0] sm:%s30]
    %s33 = sshll.u32 1, 1
    %s34 = ssub.s32 %s33, 1
    %35 = vst [vmem:[%s1] sm:%s34] %v32

// kernel: timbre_vae_forward.9
$region0: #{timbre_vae_forward.9}
  #allocation0 [shape = 'u32[]', space=smem, size = 0x4, offset = 0x4, fixed_abs, tag = 'smem constant byte address 0x4 - core index']
  #allocation1 [shape = 'u32[144,128]{1,0:T(1,128)}', space=vmem, size = 0x12000, scoped, tag = 'internal scratch']
  %s0 = inlined_call_operand.vmem [shape: bf16[2,9,9,4], index: 0, kind: input, shape index: {}]
  %s1 = inlined_call_operand.vmem [shape: bf16[4,4,128], index: 1, kind: input, shape index: {}]
  %s2 = inlined_call_operand.vmem [shape: f32[1,128], index: 2, kind: input, shape index: {}]
  %s3 = inlined_call_operand.vmem [shape: bf16[2,8,4,128], index: 3, kind: output, shape index: {0}]
  %s4 = inlined_call_operand.vmem [shape: f32[2,1,128], index: 4, kind: output, shape index: {1}]
  %s5 = inlined_call_operand.vmem [shape: f32[2,1,128], index: 5, kind: output, shape index: {2}]
  %6 = xla_tuple %s3, %s4, %s5
  %s7 = sld [smem:[#allocation0]]
  $region61: #{timbre_vae_forward.9} parent=0
    _
  %s9 = ssub.s32 1, %s7
  %s10 = scalar_select 0, %s9, %s7
  loop: start=0, step=1, limit=4
  $region2: #{timbre_vae_forward.9} parent=0 // loop_pre_header
    _
  $region3: #{timbre_vae_forward.9} parent=0 // loop_header
    %s12 = sphi 0, %s16
    %p13 = scmp.ge.s32.totalorder %s12, 4
    %s22 = sphi 0, %s24
    %s25 = sphi 0, %s22
    %s26 = sphi 0, %s25
    %s42 = sphi 0, %s26
    %s46 = sphi 0, %s46
    %s48 = sphi 0, %s46
    %s49 = sphi 0, %s48
    %s63 = sphi 0, %s49
    %s67 = sphi 0, %s67
    %s69 = sphi 0, %s67
    %s70 = sphi 0, %s69
    %s84 = sphi 0, %s70
    %s90 = sphi 0, %s92
    %s93 = sphi 0, %s90
    %s94 = sphi 0, %s93
    %s110 = sphi 0, %s94
    %s116 = sphi 0, %s118
    %s119 = sphi 0, %s116
    %s120 = sphi 0, %s119
    %s136 = sphi 0, %s120
    %s142 = sphi 0, %s144
    %s145 = sphi 0, %s142
    %s146 = sphi 0, %s145
    %s162 = sphi 0, %s146
  $region4: #{timbre_vae_forward.9} parent=0 // loop_header_branch
    %15 = sbr.rel (%p13) target = $region8
  $region5: #{timbre_vae_forward.9} parent=0 // loop_body
    %s17 = ssub.s32 %s12, 1
    %s18 = ssub.s32 %s12, 2
    %s19 = sadd.s32 %s12, 1
    %s20 = ssub.s32 %s12, %s19
    %p21 = scmp.eq.s32.totalorder %s20, 0
    %s23 = sadd.s32 %s22, 1
    %s24 = scalar_select %p21, %s22, %s23
    %p27 = pneg %p21
    %p28 = scmp.eq.s32.totalorder %s12, 1
    %p29 = por %p27, %p28
    %p30 = scmp.ne.s32.totalorder %s22, %s25
    %p31 = scmp.eq.s32.totalorder %s12, 0
    %p32 = por %p30, %p31
    %p33 = scmp.ne.s32.totalorder %s22, %s25
    %p34 = scmp.eq.s32.totalorder %s17, 1
    %p35 = por %p33, %p34
    %p36 = scmp.ne.s32.totalorder %s25, %s26
    %p37 = scmp.eq.s32.totalorder %s17, 0
    %p38 = por %p36, %p37
    %p39 = scmp.ne.s32.totalorder %s25, %s26
    %p40 = scmp.eq.s32.totalorder %s18, 1
    %p41 = por %p39, %p40
    %p43 = scmp.ne.s32.totalorder %s26, %s42
    %p44 = scmp.eq.s32.totalorder %s18, 0
    %p45 = por %p43, %p44
    %s47 = sadd.s32 %s46, 1
    %p50 = scmp.eq.s32.totalorder %s12, 1
    %p51 = scmp.ne.s32.totalorder %s46, %s48
    %p52 = scmp.eq.s32.totalorder %s12, 0
    %p53 = por %p51, %p52
    %p54 = scmp.ne.s32.totalorder %s46, %s48
    %p55 = scmp.eq.s32.totalorder %s17, 1
    %p56 = por %p54, %p55
    %p57 = scmp.ne.s32.totalorder %s48, %s49
    %p58 = scmp.eq.s32.totalorder %s17, 0
    %p59 = por %p57, %p58
    %p60 = scmp.ne.s32.totalorder %s48, %s49
    %p61 = scmp.eq.s32.totalorder %s18, 1
    %p62 = por %p60, %p61
    %p64 = scmp.ne.s32.totalorder %s49, %s63
    %p65 = scmp.eq.s32.totalorder %s18, 0
    %p66 = por %p64, %p65
    %s68 = sadd.s32 %s67, 1
    %p71 = scmp.eq.s32.totalorder %s12, 1
    %p72 = scmp.ne.s32.totalorder %s67, %s69
    %p73 = scmp.eq.s32.totalorder %s12, 0
    %p74 = por %p72, %p73
    %p75 = scmp.ne.s32.totalorder %s67, %s69
    %p76 = scmp.eq.s32.totalorder %s17, 1
    %p77 = por %p75, %p76
    %p78 = scmp.ne.s32.totalorder %s69, %s70
    %p79 = scmp.eq.s32.totalorder %s17, 0
    %p80 = por %p78, %p79
    %p81 = scmp.ne.s32.totalorder %s69, %s70
    %p82 = scmp.eq.s32.totalorder %s18, 1
    %p83 = por %p81, %p82
    %p85 = scmp.ne.s32.totalorder %s70, %s84
    %p86 = scmp.eq.s32.totalorder %s18, 0
    %p87 = por %p85, %p86
    %s88 = ssub.s32 %s12, %s19
    %p89 = scmp.eq.s32.totalorder %s88, 0
    %s91 = sadd.s32 %s90, 1
    %s92 = scalar_select %p89, %s90, %s91
    %p95 = pneg %p89
    %p96 = scmp.eq.s32.totalorder %s12, 1
    %p97 = por %p95, %p96
    %p98 = scmp.ne.s32.totalorder %s90, %s93
    %p99 = scmp.eq.s32.totalorder %s12, 0
    %p100 = por %p98, %p99
    %p101 = scmp.ne.s32.totalorder %s90, %s93
    %p102 = scmp.eq.s32.totalorder %s17, 1
    %p103 = por %p101, %p102
    %p104 = scmp.ne.s32.totalorder %s93, %s94
    %p105 = scmp.eq.s32.totalorder %s17, 0
    %p106 = por %p104, %p105
    %p107 = scmp.ne.s32.totalorder %s93, %s94
    %p108 = scmp.eq.s32.totalorder %s18, 1
    %p109 = por %p107, %p108
    %p111 = scmp.ne.s32.totalorder %s94, %s110
    %p112 = scmp.eq.s32.totalorder %s18, 0
    %p113 = por %p111, %p112
    %s114 = ssub.s32 %s12, %s19
    %p115 = scmp.eq.s32.totalorder %s114, 0
    %s117 = sadd.s32 %s116, 1
    %s118 = scalar_select %p115, %s116, %s117
    %p121 = pneg %p115
    %p122 = scmp.eq.s32.totalorder %s12, 1
    %p123 = por %p121, %p122
    %p124 = scmp.ne.s32.totalorder %s116, %s119
    %p125 = scmp.eq.s32.totalorder %s12, 0
    %p126 = por %p124, %p125
    %p127 = scmp.ne.s32.totalorder %s116, %s119
    %p128 = scmp.eq.s32.totalorder %s17, 1
    %p129 = por %p127, %p128
    %p130 = scmp.ne.s32.totalorder %s119, %s120
    %p131 = scmp.eq.s32.totalorder %s17, 0
    %p132 = por %p130, %p131
    %p133 = scmp.ne.s32.totalorder %s119, %s120
    %p134 = scmp.eq.s32.totalorder %s18, 1
    %p135 = por %p133, %p134
    %p137 = scmp.ne.s32.totalorder %s120, %s136
    %p138 = scmp.eq.s32.totalorder %s18, 0
    %p139 = por %p137, %p138
    %s140 = ssub.s32 %s12, %s19
    %p141 = scmp.eq.s32.totalorder %s140, 0
    %s143 = sadd.s32 %s142, 1
    %s144 = scalar_select %p141, %s142, %s143
    %p147 = pneg %p141
    %p148 = scmp.eq.s32.totalorder %s12, 1
    %p149 = por %p147, %p148
    %p150 = scmp.ne.s32.totalorder %s142, %s145
    %p151 = scmp.eq.s32.totalorder %s12, 0
    %p152 = por %p150, %p151
    %p153 = scmp.ne.s32.totalorder %s142, %s145
    %p154 = scmp.eq.s32.totalorder %s17, 1
    %p155 = por %p153, %p154
    %p156 = scmp.ne.s32.totalorder %s145, %s146
    %p157 = scmp.eq.s32.totalorder %s17, 0
    %p158 = por %p156, %p157
    %p159 = scmp.ne.s32.totalorder %s145, %s146
    %p160 = scmp.eq.s32.totalorder %s18, 1
    %p161 = por %p159, %p160
    %p163 = scmp.ne.s32.totalorder %s146, %s162
    %p164 = scmp.eq.s32.totalorder %s18, 0
    %p165 = por %p163, %p164
    %p166 = scmp.le.s32.totalorder 1, %s12
    %p167 = scmp.lt.s32.totalorder %s12, 3
    %p168 = pnand %p166, %p167
    %p169 = pneg %p168
    // Predicated region
    $region9: #{timbre_vae_forward.9} parent=5 // pred_check
      _
    $region10: #{timbre_vae_forward.9} parent=5 // pred_check_branch
      %171 = sbr.rel (%p168) target = $region12
    $region11: #{timbre_vae_forward.9} parent=5 // pred_region
      %s172 = ssub.s32 %s12, 1
      // Predicated region
      $region13: #{timbre_vae_forward.9} parent=11 // pred_check
        %p173 = pneg %p59
      $region14: #{timbre_vae_forward.9} parent=11 // pred_check_branch
        %175 = sbr.rel (%p173) target = $region16
      $region15: #{timbre_vae_forward.9} parent=11 // pred_region
        _
      $region16: #{timbre_vae_forward.9} parent=11 // pred_fallthru
        _
      // Predicated region
      $region17: #{timbre_vae_forward.9} parent=11 // pred_check
        %p176 = pneg %p80
      $region18: #{timbre_vae_forward.9} parent=11 // pred_check_branch
        %178 = sbr.rel (%p176) target = $region20
      $region19: #{timbre_vae_forward.9} parent=11 // pred_region
        _
      $region20: #{timbre_vae_forward.9} parent=11 // pred_fallthru
        _
    $region12: #{timbre_vae_forward.9} parent=5 // pred_fallthru
      _
    %p179 = scmp.lt.s32.totalorder %s12, 2
    // Predicated region
    $region21: #{timbre_vae_forward.9} parent=5 // pred_check
      %p180 = pneg %p179
    $region22: #{timbre_vae_forward.9} parent=5 // pred_check_branch
      %182 = sbr.rel (%p180) target = $region24
    $region23: #{timbre_vae_forward.9} parent=5 // pred_region
      // Predicated region
      $region25: #{timbre_vae_forward.9} parent=23 // pred_check
        %p183 = pneg %p32
      $region26: #{timbre_vae_forward.9} parent=23 // pred_check_branch
        %185 = sbr.rel (%p183) target = $region28
      $region27: #{timbre_vae_forward.9} parent=23 // pred_region
        %p186 = scmp.lt.s32.totalorder %s12, 1
        %s187 = scalar_select %p186, %s12, 1
        %s188 = smul.addr %s187, 18
        %s189 = smul.addr %s188, 4
        %s190 = scalar_lea.vmem %s0, %s189
      $region28: #{timbre_vae_forward.9} parent=23 // pred_fallthru
        _
    $region24: #{timbre_vae_forward.9} parent=5 // pred_fallthru
      _
    %p191 = scmp.le.s32.totalorder 1, %s12
    %p192 = scmp.lt.s32.totalorder %s12, 3
    %p193 = pnand %p191, %p192
    %p194 = pneg %p193
    // Predicated region
    $region29: #{timbre_vae_forward.9} parent=5 // pred_check
      _
    $region30: #{timbre_vae_forward.9} parent=5 // pred_check_branch
      %196 = sbr.rel (%p193) target = $region32
    $region31: #{timbre_vae_forward.9} parent=5 // pred_region
      %s197 = ssub.s32 %s12, 1
      %p198 = scmp.lt.s32.totalorder %s17, 1
      %s199 = scalar_select %p198, %s17, 1
      %s200 = smul.addr %s199, 18
      %s201 = smul.addr %s200, 4
      %s202 = scalar_lea.vmem %s0, %s201
      %p203 = pneg %p38
      %p204 = pneg %p35
      %p205 = pneg %p59
      %p206 = pneg %p56
      %p207 = pneg %p80
      %p208 = pneg %p77
      %p209 = pneg %p106
      %p210 = pneg %p103
      %p211 = scmp.lt.s32.totalorder %s17, 1
      %s212 = scalar_select %p211, %s17, 1
      %s213 = smul.addr %s212, 8
      %s214 = smul.addr %s213, 2
      %s215 = scalar_lea.vmem %s3, %s214
      %p216 = pneg %p132
      %p217 = pneg %p129
      %p218 = scmp.lt.s32.totalorder %s17, 1
      %s219 = scalar_select %p218, %s17, 1
      %s220 = scalar_lea.vmem %s4, %s219
      %p221 = pneg %p158
      %p222 = pneg %p155
      %p223 = scmp.lt.s32.totalorder %s17, 1
      %s224 = scalar_select %p223, %s17, 1
      %s225 = scalar_lea.vmem %s5, %s224
      %p226 = scmp.lt.s32.totalorder %s17, 1
      %s227 = scalar_select %p226, %s17, 1
      %s228 = smul.addr %s227, 18
      %s229 = smul.addr %s228, 4
      %s230 = scalar_lea.vmem %s0, %s229
      %p231 = scmp.lt.s32.totalorder %s17, 1
      %s232 = scalar_select %p231, %s17, 1
      %s233 = smul.addr %s232, 8
      %s234 = smul.addr %s233, 2
      %s235 = scalar_lea.vmem %s3, %s234
      %p236 = scmp.lt.s32.totalorder %s17, 1
      %s237 = scalar_select %p236, %s17, 1
      %s238 = scalar_lea.vmem %s4, %s237
      %p239 = scmp.lt.s32.totalorder %s17, 1
      %s240 = scalar_select %p239, %s17, 1
      %s241 = scalar_lea.vmem %s5, %s240
      %v243 = vld [vmem:[%s230] sm:$0xf]
      %v244 = vld [vmem:[%s230 + $0x4] sm:$0x1]
      %v245 = vld [vmem:[%s230 + $0x8] sm:$0xf]
      %v246 = vld [vmem:[%s230 + $0xc] sm:$0x1]
      %v247 = vld [vmem:[%s230 + $0x10] sm:$0xf]
      %v248 = vld [vmem:[%s230 + $0x14] sm:$0x1]
      %v249 = vld [vmem:[%s230 + $0x18] sm:$0xf]
      %v250 = vld [vmem:[%s230 + $0x1c] sm:$0x1]
      %v251 = vld [vmem:[%s230 + $0x20] sm:$0xf]
      %v252 = vld [vmem:[%s230 + $0x24] sm:$0x1]
      %v253 = vld [vmem:[%s230 + $0x28] sm:$0xf]
      %v254 = vld [vmem:[%s230 + $0x2c] sm:$0x1]
      %v255 = vld [vmem:[%s230 + $0x30] sm:$0xf]
      %v256 = vld [vmem:[%s230 + $0x34] sm:$0x1]
      %v257 = vld [vmem:[%s230 + $0x38] sm:$0xf]
      %v258 = vld [vmem:[%s230 + $0x3c] sm:$0x1]
      %v259 = vld [vmem:[%s230 + $0x40] sm:$0xf]
      %v260 = vld [vmem:[%s230 + $0x44] sm:$0x1]
      %v261 = vunpack.c.l.bf16 %v243
      %v262 = vunpack.c.l.bf16 %v244
      %v263 = vunpack.c.l.bf16 %v245
      %v264 = vunpack.c.l.bf16 %v246
      %v265 = vunpack.c.l.bf16 %v247
      %v266 = vunpack.c.l.bf16 %v248
      %v267 = vunpack.c.l.bf16 %v249
      %v268 = vunpack.c.l.bf16 %v250
      %v269 = vunpack.c.l.bf16 %v251
      %v270 = vunpack.c.l.bf16 %v252
      %v271 = vunpack.c.l.bf16 %v253
      %v272 = vunpack.c.l.bf16 %v254
      %v273 = vunpack.c.l.bf16 %v255
      %v274 = vunpack.c.l.bf16 %v256
      %v275 = vunpack.c.l.bf16 %v257
      %v276 = vunpack.c.l.bf16 %v258
      %v277 = vunpack.c.l.bf16 %v259
      %v278 = vunpack.c.l.bf16 %v260
      %v279 = vpack.c.bf16 %v263, %v261
      %v280 = vpack.c.bf16 %v267, %v265
      %v281 = vpack.c.bf16 %v271, %v269
      %v282 = vpack.c.bf16 %v275, %v273
      %v283 = vld [vmem:[%s1] sm:$0x3]
      %vm300 = vcmask 1046528
      %v301 = vrot.slane %v261, 1
      %v302 = vrot.slane %v262, 1
      %v303 = vsel %vm300, %v301, %v302
      %v304 = vrot.slane %v263, 1
      %v305 = vrot.slane %v264, 1
      %v306 = vsel %vm300, %v304, %v305
      %v307 = vrot.slane %v265, 1
      %v308 = vrot.slane %v266, 1
      %v309 = vsel %vm300, %v307, %v308
      %v310 = vrot.slane %v267, 1
      %v311 = vrot.slane %v268, 1
      %v312 = vsel %vm300, %v310, %v311
      %v313 = vrot.slane %v269, 1
      %v314 = vrot.slane %v270, 1
      %v315 = vsel %vm300, %v313, %v314
      %v316 = vrot.slane %v271, 1
      %v317 = vrot.slane %v272, 1
      %v318 = vsel %vm300, %v316, %v317
      %v319 = vrot.slane %v273, 1
      %v320 = vrot.slane %v274, 1
      %v321 = vsel %vm300, %v319, %v320
      %v322 = vrot.slane %v275, 1
      %v323 = vrot.slane %v276, 1
      %v324 = vsel %vm300, %v322, %v323
      %v333 = vpack.c.bf16 %v306, %v303
      %v334 = vpack.c.bf16 %v312, %v309
      %v335 = vpack.c.bf16 %v318, %v315
      %v336 = vpack.c.bf16 %v324, %v321
      %s337 = scalar_lea.vmem %s1, 2
      %v338 = vld [vmem:[%s337] sm:$0x3]
      %vm339 = vcmask 31744
      %v341 = vsel %vm339, %v333, 0
      %v344 = vsel %vm339, %v334, 0
      %v347 = vsel %vm339, %v335, 0
      %v350 = vsel %vm339, %v336, 0
      %vm352 = vcmask 1041408
      %v354 = vsel %vm352, %v338, 0
      %356 = vmatprep.subr.bf16.mxu0 0
      %357 = vmatpush1.bf16.msra.mxu0 0
      %358 = vmatprep.subr.bf16.mxu0 0
      %359 = vmatpush1.bf16.msra.mxu0 0
      %360 = vmatprep.subr.bf16.mxu0 0
      %361 = vmatpush1.bf16.msra.mxu0 0
      %362 = vmatprep.subr.bf16.mxu0 0
      %363 = vmatpush1.bf16.msra.mxu0 0
      %364 = vmatprep.subr.bf16.mxu0 0
      %365 = vmatpush1.bf16.msra.mxu0 0
      %366 = vmatprep.subr.bf16.mxu0 0
      %367 = vmatpush1.bf16.msra.mxu0 0
      %368 = vmatprep.subr.bf16.mxu0 0
      %369 = vmatpush1.bf16.msra.mxu0 0
      %370 = vmatprep.subr.bf16.mxu0 0
      %371 = vmatpush1.bf16.msra.mxu0 %v354
      %372 = vmatprep.subr.bf16.mxu0 0
      %373 = vmatpush2.bf16.msra.mxu0 0
      %374 = vmatprep.subr.bf16.mxu0 0
      %375 = vmatpush2.bf16.msra.mxu0 0
      %376 = vmatprep.subr.bf16.mxu0 0
      %377 = vmatpush2.bf16.msra.mxu0 0
      %378 = vmatprep.subr.bf16.mxu0 0
      %379 = vmatpush2.bf16.msra.mxu0 0
      %380 = vmatprep.subr.bf16.mxu0 0
      %381 = vmatpush2.bf16.msra.mxu0 0
      %382 = vmatprep.subr.bf16.mxu0 0
      %383 = vmatpush2.bf16.msra.mxu0 0
      %384 = vmatprep.subr.bf16.mxu0 0
      %385 = vmatpush2.bf16.msra.mxu0 0
      %386 = vmatprep.subr.bf16.mxu0 0
      %387 = vmatpush2.bf16.msra.mxu0 0
      %388 = vmatprep.mubr.bf16.mxu0 0
      %389 = vmatmul.mubr.bf16.gmra.mxu0 %v341
      %v390 = vpop.f32.mrf.mxu0
      %v391 = vadd.f32 0.0, %v390
      %v392 = vpop.f32.mrf.mxu0
      %v393 = vpop.f32.mrf.mxu0
      %v394 = vadd.f32 0.0, %v393
      %v395 = vpop.f32.mrf.mxu0
      %396 = vmatprep.mubr.bf16.mxu0 0
      %397 = vmatmul.mubr.bf16.gmra.mxu0 %v344
      %v398 = vpop.f32.mrf.mxu0
      %v399 = vadd.f32 0.0, %v398
      %v400 = vpop.f32.mrf.mxu0
      %v401 = vpop.f32.mrf.mxu0
      %v402 = vadd.f32 0.0, %v401
      %v403 = vpop.f32.mrf.mxu0
      %404 = vmatprep.mubr.bf16.mxu0 0
      %405 = vmatmul.mubr.bf16.gmra.mxu0 %v347
      %v406 = vpop.f32.mrf.mxu0
      %v407 = vadd.f32 0.0, %v406
      %v408 = vpop.f32.mrf.mxu0
      %v409 = vpop.f32.mrf.mxu0
      %v410 = vadd.f32 0.0, %v409
      %v411 = vpop.f32.mrf.mxu0
      %412 = vmatprep.mubr.bf16.mxu0 0
      %413 = vmatmul.mubr.bf16.gmra.mxu0 %v350
      %v414 = vpop.f32.mrf.mxu0
      %v415 = vadd.f32 0.0, %v414
      %v416 = vpop.f32.mrf.mxu0
      %v417 = vpop.f32.mrf.mxu0
      %v418 = vadd.f32 0.0, %v417
      %v419 = vpop.f32.mrf.mxu0
      %420 = vdwg.mxu0
      %v422 = vsel %vm339, %v279, 0
      %v425 = vsel %vm339, %v280, 0
      %v428 = vsel %vm339, %v281, 0
      %v431 = vsel %vm339, %v282, 0
      %v434 = vsel %vm352, %v283, 0
      %436 = vmatprep.subr.bf16.mxu0 0
      %437 = vmatpush1.bf16.msra.mxu0 0
      %438 = vmatprep.subr.bf16.mxu0 0
      %439 = vmatpush1.bf16.msra.mxu0 0
      %440 = vmatprep.subr.bf16.mxu0 0
      %441 = vmatpush1.bf16.msra.mxu0 0
      %442 = vmatprep.subr.bf16.mxu0 0
      %443 = vmatpush1.bf16.msra.mxu0 0
      %444 = vmatprep.subr.bf16.mxu0 0
      %445 = vmatpush1.bf16.msra.mxu0 0
      %446 = vmatprep.subr.bf16.mxu0 0
      %447 = vmatpush1.bf16.msra.mxu0 0
      %448 = vmatprep.subr.bf16.mxu0 0
      %449 = vmatpush1.bf16.msra.mxu0 0
      %450 = vmatprep.subr.bf16.mxu0 0
      %451 = vmatpush1.bf16.msra.mxu0 %v434
      %452 = vmatprep.subr.bf16.mxu0 0
      %453 = vmatpush2.bf16.msra.mxu0 0
      %454 = vmatprep.subr.bf16.mxu0 0
      %455 = vmatpush2.bf16.msra.mxu0 0
      %456 = vmatprep.subr.bf16.mxu0 0
      %457 = vmatpush2.bf16.msra.mxu0 0
      %458 = vmatprep.subr.bf16.mxu0 0
      %459 = vmatpush2.bf16.msra.mxu0 0
      %460 = vmatprep.subr.bf16.mxu0 0
      %461 = vmatpush2.bf16.msra.mxu0 0
      %462 = vmatprep.subr.bf16.mxu0 0
      %463 = vmatpush2.bf16.msra.mxu0 0
      %464 = vmatprep.subr.bf16.mxu0 0
      %465 = vmatpush2.bf16.msra.mxu0 0
      %466 = vmatprep.subr.bf16.mxu0 0
      %467 = vmatpush2.bf16.msra.mxu0 0
      %468 = vmatprep.mubr.bf16.mxu0 0
      %469 = vmatmul.mubr.bf16.gmra.mxu0 %v422
      %v470 = vpop.f32.mrf.mxu0
      %v471 = vadd.f32 %v391, %v470
      %v472 = vpop.f32.mrf.mxu0
      %v473 = vpop.f32.mrf.mxu0
      %v474 = vadd.f32 %v394, %v473
      %v475 = vpop.f32.mrf.mxu0
      %476 = vmatprep.mubr.bf16.mxu0 0
      %477 = vmatmul.mubr.bf16.gmra.mxu0 %v425
      %v478 = vpop.f32.mrf.mxu0
      %v479 = vadd.f32 %v399, %v478
      %v480 = vpop.f32.mrf.mxu0
      %v481 = vpop.f32.mrf.mxu0
      %v482 = vadd.f32 %v402, %v481
      %v483 = vpop.f32.mrf.mxu0
      %484 = vmatprep.mubr.bf16.mxu0 0
      %485 = vmatmul.mubr.bf16.gmra.mxu0 %v428
      %v486 = vpop.f32.mrf.mxu0
      %v487 = vadd.f32 %v407, %v486
      %v488 = vpop.f32.mrf.mxu0
      %v489 = vpop.f32.mrf.mxu0
      %v490 = vadd.f32 %v410, %v489
      %v491 = vpop.f32.mrf.mxu0
      %492 = vmatprep.mubr.bf16.mxu0 0
      %493 = vmatmul.mubr.bf16.gmra.mxu0 %v431
      %v494 = vpop.f32.mrf.mxu0
      %v495 = vadd.f32 %v415, %v494
      %v496 = vpop.f32.mrf.mxu0
      %v497 = vpop.f32.mrf.mxu0
      %v498 = vadd.f32 %v418, %v497
      %v499 = vpop.f32.mrf.mxu0
      %500 = vdwg.mxu0
      %v501 = vpack.c.bf16 %v265, %v263
      %v502 = vpack.c.bf16 %v269, %v267
      %v503 = vpack.c.bf16 %v273, %v271
      %v504 = vpack.c.bf16 %v277, %v275
      %s505 = scalar_lea.vmem %s1, 4
      %v506 = vld [vmem:[%s505] sm:$0x3]
      %v508 = vsel %vm339, %v501, 0
      %v511 = vsel %vm339, %v502, 0
      %v514 = vsel %vm339, %v503, 0
      %v517 = vsel %vm339, %v504, 0
      %v520 = vsel %vm352, %v506, 0
      %522 = vmatprep.subr.bf16.mxu0 0
      %523 = vmatpush1.bf16.msra.mxu0 0
      %524 = vmatprep.subr.bf16.mxu0 0
      %525 = vmatpush1.bf16.msra.mxu0 0
      %526 = vmatprep.subr.bf16.mxu0 0
      %527 = vmatpush1.bf16.msra.mxu0 0
      %528 = vmatprep.subr.bf16.mxu0 0
      %529 = vmatpush1.bf16.msra.mxu0 0
      %530 = vmatprep.subr.bf16.mxu0 0
      %531 = vmatpush1.bf16.msra.mxu0 0
      %532 = vmatprep.subr.bf16.mxu0 0
      %533 = vmatpush1.bf16.msra.mxu0 0
      %534 = vmatprep.subr.bf16.mxu0 0
      %535 = vmatpush1.bf16.msra.mxu0 0
      %536 = vmatprep.subr.bf16.mxu0 0
      %537 = vmatpush1.bf16.msra.mxu0 %v520
      %538 = vmatprep.subr.bf16.mxu0 0
      %539 = vmatpush2.bf16.msra.mxu0 0
      %540 = vmatprep.subr.bf16.mxu0 0
      %541 = vmatpush2.bf16.msra.mxu0 0
      %542 = vmatprep.subr.bf16.mxu0 0
      %543 = vmatpush2.bf16.msra.mxu0 0
      %544 = vmatprep.subr.bf16.mxu0 0
      %545 = vmatpush2.bf16.msra.mxu0 0
      %546 = vmatprep.subr.bf16.mxu0 0
      %547 = vmatpush2.bf16.msra.mxu0 0
      %548 = vmatprep.subr.bf16.mxu0 0
      %549 = vmatpush2.bf16.msra.mxu0 0
      %550 = vmatprep.subr.bf16.mxu0 0
      %551 = vmatpush2.bf16.msra.mxu0 0
      %552 = vmatprep.subr.bf16.mxu0 0
      %553 = vmatpush2.bf16.msra.mxu0 0
      %554 = vmatprep.mubr.bf16.mxu0 0
      %555 = vmatmul.mubr.bf16.gmra.mxu0 %v508
      %v556 = vpop.f32.mrf.mxu0
      %v557 = vadd.f32 0.0, %v556
      %v558 = vpop.f32.mrf.mxu0
      %v559 = vpop.f32.mrf.mxu0
      %v560 = vadd.f32 0.0, %v559
      %v561 = vpop.f32.mrf.mxu0
      %562 = vmatprep.mubr.bf16.mxu0 0
      %563 = vmatmul.mubr.bf16.gmra.mxu0 %v511
      %v564 = vpop.f32.mrf.mxu0
      %v565 = vadd.f32 0.0, %v564
      %v566 = vpop.f32.mrf.mxu0
      %v567 = vpop.f32.mrf.mxu0
      %v568 = vadd.f32 0.0, %v567
      %v569 = vpop.f32.mrf.mxu0
      %570 = vmatprep.mubr.bf16.mxu0 0
      %571 = vmatmul.mubr.bf16.gmra.mxu0 %v514
      %v572 = vpop.f32.mrf.mxu0
      %v573 = vadd.f32 0.0, %v572
      %v574 = vpop.f32.mrf.mxu0
      %v575 = vpop.f32.mrf.mxu0
      %v576 = vadd.f32 0.0, %v575
      %v577 = vpop.f32.mrf.mxu0
      %578 = vmatprep.mubr.bf16.mxu0 0
      %579 = vmatmul.mubr.bf16.gmra.mxu0 %v517
      %v580 = vpop.f32.mrf.mxu0
      %v581 = vadd.f32 0.0, %v580
      %v582 = vpop.f32.mrf.mxu0
      %v583 = vpop.f32.mrf.mxu0
      %v584 = vadd.f32 0.0, %v583
      %v585 = vpop.f32.mrf.mxu0
      %586 = vdwg.mxu0
      %v587 = vadd.f32 %v471, %v557
      %v588 = vadd.f32 %v474, %v560
      %v589 = vadd.f32 %v479, %v565
      %v590 = vadd.f32 %v482, %v568
      %v591 = vadd.f32 %v487, %v573
      %v592 = vadd.f32 %v490, %v576
      %v593 = vadd.f32 %v495, %v581
      %v594 = vadd.f32 %v498, %v584
      %v597 = vrot.slane %v277, 1
      %v598 = vrot.slane %v278, 1
      %v599 = vsel %vm300, %v597, %v598
      %v601 = vpack.c.bf16 %v309, %v306
      %v602 = vpack.c.bf16 %v315, %v312
      %v603 = vpack.c.bf16 %v321, %v318
      %v604 = vpack.c.bf16 %v599, %v324
      %s605 = scalar_lea.vmem %s1, 6
      %v606 = vld [vmem:[%s605] sm:$0x3]
      %v608 = vsel %vm339, %v601, 0
      %v611 = vsel %vm339, %v602, 0
      %v614 = vsel %vm339, %v603, 0
      %v617 = vsel %vm339, %v604, 0
      %v620 = vsel %vm352, %v606, 0
      %622 = vmatprep.subr.bf16.mxu0 0
      %623 = vmatpush1.bf16.msra.mxu0 0
      %624 = vmatprep.subr.bf16.mxu0 0
      %625 = vmatpush1.bf16.msra.mxu0 0
      %626 = vmatprep.subr.bf16.mxu0 0
      %627 = vmatpush1.bf16.msra.mxu0 0
      %628 = vmatprep.subr.bf16.mxu0 0
      %629 = vmatpush1.bf16.msra.mxu0 0
      %630 = vmatprep.subr.bf16.mxu0 0
      %631 = vmatpush1.bf16.msra.mxu0 0
      %632 = vmatprep.subr.bf16.mxu0 0
      %633 = vmatpush1.bf16.msra.mxu0 0
      %634 = vmatprep.subr.bf16.mxu0 0
      %635 = vmatpush1.bf16.msra.mxu0 0
      %636 = vmatprep.subr.bf16.mxu0 0
      %637 = vmatpush1.bf16.msra.mxu0 %v620
      %638 = vmatprep.subr.bf16.mxu0 0
      %639 = vmatpush2.bf16.msra.mxu0 0
      %640 = vmatprep.subr.bf16.mxu0 0
      %641 = vmatpush2.bf16.msra.mxu0 0
      %642 = vmatprep.subr.bf16.mxu0 0
      %643 = vmatpush2.bf16.msra.mxu0 0
      %644 = vmatprep.subr.bf16.mxu0 0
      %645 = vmatpush2.bf16.msra.mxu0 0
      %646 = vmatprep.subr.bf16.mxu0 0
      %647 = vmatpush2.bf16.msra.mxu0 0
      %648 = vmatprep.subr.bf16.mxu0 0
      %649 = vmatpush2.bf16.msra.mxu0 0
      %650 = vmatprep.subr.bf16.mxu0 0
      %651 = vmatpush2.bf16.msra.mxu0 0
      %652 = vmatprep.subr.bf16.mxu0 0
      %653 = vmatpush2.bf16.msra.mxu0 0
      %654 = vmatprep.mubr.bf16.mxu0 0
      %655 = vmatmul.mubr.bf16.gmra.mxu0 %v608
      %v656 = vpop.f32.mrf.mxu0
      %v657 = vadd.f32 0.0, %v656
      %v658 = vpop.f32.mrf.mxu0
      %v659 = vpop.f32.mrf.mxu0
      %v660 = vadd.f32 0.0, %v659
      %v661 = vpop.f32.mrf.mxu0
      %662 = vmatprep.mubr.bf16.mxu0 0
      %663 = vmatmul.mubr.bf16.gmra.mxu0 %v611
      %v664 = vpop.f32.mrf.mxu0
      %v665 = vadd.f32 0.0, %v664
      %v666 = vpop.f32.mrf.mxu0
      %v667 = vpop.f32.mrf.mxu0
      %v668 = vadd.f32 0.0, %v667
      %v669 = vpop.f32.mrf.mxu0
      %670 = vmatprep.mubr.bf16.mxu0 0
      %671 = vmatmul.mubr.bf16.gmra.mxu0 %v614
      %v672 = vpop.f32.mrf.mxu0
      %v673 = vadd.f32 0.0, %v672
      %v674 = vpop.f32.mrf.mxu0
      %v675 = vpop.f32.mrf.mxu0
      %v676 = vadd.f32 0.0, %v675
      %v677 = vpop.f32.mrf.mxu0
      %678 = vmatprep.mubr.bf16.mxu0 0
      %679 = vmatmul.mubr.bf16.gmra.mxu0 %v617
      %v680 = vpop.f32.mrf.mxu0
      %v681 = vadd.f32 0.0, %v680
      %v682 = vpop.f32.mrf.mxu0
      %v683 = vpop.f32.mrf.mxu0
      %v684 = vadd.f32 0.0, %v683
      %v685 = vpop.f32.mrf.mxu0
      %686 = vdwg.mxu0
      %v687 = vadd.f32 %v587, %v657
      %v688 = vadd.f32 %v588, %v660
      %v689 = vadd.f32 %v589, %v665
      %v690 = vadd.f32 %v590, %v668
      %v691 = vadd.f32 %v591, %v673
      %v692 = vadd.f32 %v592, %v676
      %v693 = vadd.f32 %v593, %v681
      %v694 = vadd.f32 %v594, %v684
      %v695 = vld [vmem:[%s2] sm:$0x1]
      %v697 = vlaneseq
      %v698 = vshrl.u32 %v697, 7
      %v699 = vsub.s32 0, %v698
      %v700 = vrot.slane %v695, %v699
      %v702 = vadd.f32 %v687, %v700
      %v703 = vadd.f32 %v688, %v700
      %v704 = vadd.f32 %v689, %v700
      %v705 = vadd.f32 %v690, %v700
      %v706 = vadd.f32 %v691, %v700
      %v707 = vadd.f32 %v692, %v700
      %v708 = vadd.f32 %v693, %v700
      %v709 = vadd.f32 %v694, %v700
      %v710 = vlaneseq
      %v711 = vshrl.u32 %v710, 7
      %v712 = vadd.s32 %v711, 8
      %v713 = vadd.s32 %v711, 16
      %v714 = vadd.s32 %v711, 24
      %v715 = vadd.s32 %v711, 32
      %v716 = vadd.s32 %v711, 40
      %v717 = vadd.s32 %v711, 48
      %v718 = vadd.s32 %v711, 56
      %vm719 = vcmp.lt.s32.totalorder %v711, 0
      %v720 = vsub.s32 0, %v711
      %v721 = vsel %vm719, %v720, %v711
      %v722 = vshrl.u32 %v721, 3
      %v723 = vand.u32 %v721, 7
      %v724 = vsub.s32 0, %v723
      %v725 = vsel %vm719, %v724, %v723
      %vm726 = vcmp.lt.s32.totalorder %v712, 0
      %v727 = vsub.s32 0, %v712
      %v728 = vsel %vm726, %v727, %v712
      %v729 = vshrl.u32 %v728, 3
      %v730 = vand.u32 %v728, 7
      %v731 = vsub.s32 0, %v730
      %v732 = vsel %vm726, %v731, %v730
      %vm733 = vcmp.lt.s32.totalorder %v713, 0
      %v734 = vsub.s32 0, %v713
      %v735 = vsel %vm733, %v734, %v713
      %v736 = vshrl.u32 %v735, 3
      %v737 = vand.u32 %v735, 7
      %v738 = vsub.s32 0, %v737
      %v739 = vsel %vm733, %v738, %v737
      %vm740 = vcmp.lt.s32.totalorder %v714, 0
      %v741 = vsub.s32 0, %v714
      %v742 = vsel %vm740, %v741, %v714
      %v743 = vshrl.u32 %v742, 3
      %v744 = vand.u32 %v742, 7
      %v745 = vsub.s32 0, %v744
      %v746 = vsel %vm740, %v745, %v744
      %vm747 = vcmp.lt.s32.totalorder %v715, 0
      %v748 = vsub.s32 0, %v715
      %v749 = vsel %vm747, %v748, %v715
      %v750 = vshrl.u32 %v749, 3
      %v751 = vand.u32 %v749, 7
      %v752 = vsub.s32 0, %v751
      %v753 = vsel %vm747, %v752, %v751
      %vm754 = vcmp.lt.s32.totalorder %v716, 0
      %v755 = vsub.s32 0, %v716
      %v756 = vsel %vm754, %v755, %v716
      %v757 = vshrl.u32 %v756, 3
      %v758 = vand.u32 %v756, 7
      %v759 = vsub.s32 0, %v758
      %v760 = vsel %vm754, %v759, %v758
      %vm761 = vcmp.lt.s32.totalorder %v717, 0
      %v762 = vsub.s32 0, %v717
      %v763 = vsel %vm761, %v762, %v717
      %v764 = vshrl.u32 %v763, 3
      %v765 = vand.u32 %v763, 7
      %v766 = vsub.s32 0, %v765
      %v767 = vsel %vm761, %v766, %v765
      %vm768 = vcmp.lt.s32.totalorder %v718, 0
      %v769 = vsub.s32 0, %v718
      %v770 = vsel %vm768, %v769, %v718
      %v771 = vshrl.u32 %v770, 3
      %v772 = vand.u32 %v770, 7
      %v773 = vsub.s32 0, %v772
      %v774 = vsel %vm768, %v773, %v772
      %vm775 = vcmp.ne.s32.totalorder %v725, 0
      %vm776 = vcmp.ne.s32.totalorder %v732, 0
      %vm777 = vcmp.ne.s32.totalorder %v739, 0
      %vm778 = vcmp.ne.s32.totalorder %v746, 0
      %vm779 = vcmp.ne.s32.totalorder %v753, 0
      %vm780 = vcmp.ne.s32.totalorder %v760, 0
      %vm781 = vcmp.ne.s32.totalorder %v767, 0
      %vm782 = vcmp.ne.s32.totalorder %v774, 0
      %vm783 = vcmp.lt.s32.totalorder %v725, 0
      %vm784 = vcmp.lt.s32.totalorder %v732, 0
      %vm785 = vcmp.lt.s32.totalorder %v739, 0
      %vm786 = vcmp.lt.s32.totalorder %v746, 0
      %vm787 = vcmp.lt.s32.totalorder %v753, 0
      %vm788 = vcmp.lt.s32.totalorder %v760, 0
      %vm789 = vcmp.lt.s32.totalorder %v767, 0
      %vm790 = vcmp.lt.s32.totalorder %v774, 0
      %vm791 = vmand %vm783, %vm775
      %vm792 = vmand %vm784, %vm776
      %vm793 = vmand %vm785, %vm777
      %vm794 = vmand %vm786, %vm778
      %vm795 = vmand %vm787, %vm779
      %vm796 = vmand %vm788, %vm780
      %vm797 = vmand %vm789, %vm781
      %vm798 = vmand %vm790, %vm782
      %v799 = vadd.s32 %v725, 8
      %v800 = vadd.s32 %v732, 8
      %v801 = vadd.s32 %v739, 8
      %v802 = vadd.s32 %v746, 8
      %v803 = vadd.s32 %v753, 8
      %v804 = vadd.s32 %v760, 8
      %v805 = vadd.s32 %v767, 8
      %v806 = vadd.s32 %v774, 8
      %v807 = vsel %vm791, %v799, %v725
      %v808 = vsel %vm792, %v800, %v732
      %v809 = vsel %vm793, %v801, %v739
      %v810 = vsel %vm794, %v802, %v746
      %v811 = vsel %vm795, %v803, %v753
      %v812 = vsel %vm796, %v804, %v760
      %v813 = vsel %vm797, %v805, %v767
      %v814 = vsel %vm798, %v806, %v774
      %vm815 = vcmp.lt.s32.totalorder %v807, 4
      %vm816 = vcmp.lt.s32.totalorder %v808, 4
      %vm817 = vcmp.lt.s32.totalorder %v809, 4
      %vm818 = vcmp.lt.s32.totalorder %v810, 4
      %vm819 = vcmp.lt.s32.totalorder %v811, 4
      %vm820 = vcmp.lt.s32.totalorder %v812, 4
      %vm821 = vcmp.lt.s32.totalorder %v813, 4
      %vm822 = vcmp.lt.s32.totalorder %v814, 4
      %v823 = vsel %vm815, 1, 0
      %v824 = vsel %vm816, 1, 0
      %v825 = vsel %vm817, 1, 0
      %v826 = vsel %vm818, 1, 0
      %v827 = vsel %vm819, 1, 0
      %v828 = vsel %vm820, 1, 0
      %v829 = vsel %vm821, 1, 0
      %v830 = vsel %vm822, 1, 0
      %vm831 = vcmp.eq.s32.totalorder %v823, 1
      %vm832 = vcmp.eq.s32.totalorder %v824, 1
      %vm833 = vcmp.eq.s32.totalorder %v825, 1
      %vm834 = vcmp.eq.s32.totalorder %v826, 1
      %vm835 = vcmp.eq.s32.totalorder %v827, 1
      %vm836 = vcmp.eq.s32.totalorder %v828, 1
      %vm837 = vcmp.eq.s32.totalorder %v829, 1
      %vm838 = vcmp.eq.s32.totalorder %v830, 1
      %v839 = vsel %vm831, %v702, 0.0
      %v840 = vsel %vm832, %v703, 0.0
      %v841 = vsel %vm833, %v704, 0.0
      %v842 = vsel %vm834, %v705, 0.0
      %v843 = vsel %vm835, %v706, 0.0
      %v844 = vsel %vm836, %v707, 0.0
      %v845 = vsel %vm837, %v708, 0.0
      %v846 = vsel %vm838, %v709, 0.0
      %v847 = vadd.f32 %v839, %v840
      %v848 = vadd.f32 %v847, %v841
      %v849 = vadd.f32 %v848, %v842
      %v850 = vadd.f32 %v849, %v843
      %v851 = vadd.f32 %v850, %v844
      %v852 = vadd.f32 %v851, %v845
      %v853 = vadd.f32 %v852, %v846
      %v854 = vrot.slane %v853, 4
      %v855 = vadd.f32 %v853, %v854
      %v856 = vrot.slane %v855, 2
      %v857 = vadd.f32 %v855, %v856
      %v858 = vrot.slane %v857, 1
      %v859 = vadd.f32 %v857, %v858
      %v860 = vmul.f32 %v859, 0.03125
      %v861 = vsub.f32 %v702, %v860
      %v862 = vsub.f32 %v703, %v860
      %v863 = vsub.f32 %v704, %v860
      %v864 = vsub.f32 %v705, %v860
      %v865 = vsub.f32 %v706, %v860
      %v866 = vsub.f32 %v707, %v860
      %v867 = vsub.f32 %v708, %v860
      %v868 = vsub.f32 %v709, %v860
      %v869 = vsel %vm831, %v861, 0.0
      %v870 = vsel %vm832, %v862, 0.0
      %v871 = vsel %vm833, %v863, 0.0
      %v872 = vsel %vm834, %v864, 0.0
      %v873 = vsel %vm835, %v865, 0.0
      %v874 = vsel %vm836, %v866, 0.0
      %v875 = vsel %vm837, %v867, 0.0
      %v876 = vsel %vm838, %v868, 0.0
      %v877 = vmul.f32 %v869, %v869
      %v878 = vmul.f32 %v870, %v870
      %v879 = vmul.f32 %v871, %v871
      %v880 = vmul.f32 %v872, %v872
      %v881 = vmul.f32 %v873, %v873
      %v882 = vmul.f32 %v874, %v874
      %v883 = vmul.f32 %v875, %v875
      %v884 = vmul.f32 %v876, %v876
      %v885 = vadd.f32 %v877, %v878
      %v886 = vadd.f32 %v885, %v879
      %v887 = vadd.f32 %v886, %v880
      %v888 = vadd.f32 %v887, %v881
      %v889 = vadd.f32 %v888, %v882
      %v890 = vadd.f32 %v889, %v883
      %v891 = vadd.f32 %v890, %v884
      %v892 = vrot.slane %v891, 4
      %v893 = vadd.f32 %v891, %v892
      %v894 = vrot.slane %v893, 2
      %v895 = vadd.f32 %v893, %v894
      %v896 = vrot.slane %v895, 1
      %v897 = vadd.f32 %v895, %v896
      %898 = vst [vmem:[%s238] sm:$0x1] %v859
      %899 = vst [vmem:[%s241] sm:$0x1] %v897
      %v900 = vpack.c.bf16 %v702, %v702
      %v901 = vpack.c.bf16 %v703, %v703
      %v902 = vpack.c.bf16 %v704, %v704
      %v903 = vpack.c.bf16 %v705, %v705
      %v904 = vpack.c.bf16 %v706, %v706
      %v905 = vpack.c.bf16 %v707, %v707
      %v906 = vpack.c.bf16 %v708, %v708
      %v907 = vpack.c.bf16 %v709, %v709
      %908 = vst [vmem:[%s235] sm:$0x3] %v900
      %909 = vst [vmem:[%s235 + $0x2] sm:$0x3] %v901
      %910 = vst [vmem:[%s235 + $0x4] sm:$0x3] %v902
      %911 = vst [vmem:[%s235 + $0x6] sm:$0x3] %v903
      %912 = vst [vmem:[%s235 + $0x8] sm:$0x3] %v904
      %913 = vst [vmem:[%s235 + $0xa] sm:$0x3] %v905
      %914 = vst [vmem:[%s235 + $0xc] sm:$0x3] %v906
      %915 = vst [vmem:[%s235 + $0xe] sm:$0x3] %v907
      %p916 = scmp.lt.s32.totalorder %s17, 1
      %s917 = scalar_select %p916, %s17, 1
      %s918 = smul.addr %s917, 8
      %s919 = smul.addr %s918, 2
      %s920 = scalar_lea.vmem %s3, %s919
      %p921 = scmp.lt.s32.totalorder %s17, 1
      %s922 = scalar_select %p921, %s17, 1
      %s923 = scalar_lea.vmem %s4, %s922
      %p924 = scmp.lt.s32.totalorder %s17, 1
      %s925 = scalar_select %p924, %s17, 1
      %s926 = scalar_lea.vmem %s5, %s925
      // Predicated region
      $region33: #{timbre_vae_forward.9} parent=31 // pred_check
        %p927 = pneg %p103
      $region34: #{timbre_vae_forward.9} parent=31 // pred_check_branch
        %929 = sbr.rel (%p927) target = $region36
      $region35: #{timbre_vae_forward.9} parent=31 // pred_region
        _
      $region36: #{timbre_vae_forward.9} parent=31 // pred_fallthru
        _
      // Predicated region
      $region37: #{timbre_vae_forward.9} parent=31 // pred_check
        %p930 = pneg %p129
      $region38: #{timbre_vae_forward.9} parent=31 // pred_check_branch
        %932 = sbr.rel (%p930) target = $region40
      $region39: #{timbre_vae_forward.9} parent=31 // pred_region
        _
      $region40: #{timbre_vae_forward.9} parent=31 // pred_fallthru
        _
      // Predicated region
      $region41: #{timbre_vae_forward.9} parent=31 // pred_check
        %p933 = pneg %p155
      $region42: #{timbre_vae_forward.9} parent=31 // pred_check_branch
        %935 = sbr.rel (%p933) target = $region44
      $region43: #{timbre_vae_forward.9} parent=31 // pred_region
        _
      $region44: #{timbre_vae_forward.9} parent=31 // pred_fallthru
        _
    $region32: #{timbre_vae_forward.9} parent=5 // pred_fallthru
      _
    %p936 = scmp.le.s32.totalorder 2, %s12
    // Predicated region
    $region45: #{timbre_vae_forward.9} parent=5 // pred_check
      %p937 = pneg %p936
    $region46: #{timbre_vae_forward.9} parent=5 // pred_check_branch
      %939 = sbr.rel (%p937) target = $region48
    $region47: #{timbre_vae_forward.9} parent=5 // pred_region
      %s940 = ssub.s32 %s12, 2
      // Predicated region
      $region49: #{timbre_vae_forward.9} parent=47 // pred_check
        %p941 = pneg %p109
      $region50: #{timbre_vae_forward.9} parent=47 // pred_check_branch
        %943 = sbr.rel (%p941) target = $region52
      $region51: #{timbre_vae_forward.9} parent=47 // pred_region
        %p944 = scmp.lt.s32.totalorder %s18, 1
        %s945 = scalar_select %p944, %s18, 1
        %s946 = smul.addr %s945, 8
        %s947 = smul.addr %s946, 2
        %s948 = scalar_lea.vmem %s3, %s947
      $region52: #{timbre_vae_forward.9} parent=47 // pred_fallthru
        _
      // Predicated region
      $region53: #{timbre_vae_forward.9} parent=47 // pred_check
        %p949 = pneg %p135
      $region54: #{timbre_vae_forward.9} parent=47 // pred_check_branch
        %951 = sbr.rel (%p949) target = $region56
      $region55: #{timbre_vae_forward.9} parent=47 // pred_region
        %p952 = scmp.lt.s32.totalorder %s18, 1
        %s953 = scalar_select %p952, %s18, 1
        %s954 = scalar_lea.vmem %s4, %s953
      $region56: #{timbre_vae_forward.9} parent=47 // pred_fallthru
        _
      // Predicated region
      $region57: #{timbre_vae_forward.9} parent=47 // pred_check
        %p955 = pneg %p161
      $region58: #{timbre_vae_forward.9} parent=47 // pred_check_branch
        %957 = sbr.rel (%p955) target = $region60
      $region59: #{timbre_vae_forward.9} parent=47 // pred_region
        %p958 = scmp.lt.s32.totalorder %s18, 1
        %s959 = scalar_select %p958, %s18, 1
        %s960 = scalar_lea.vmem %s5, %s959
      $region60: #{timbre_vae_forward.9} parent=47 // pred_fallthru
        _
    $region48: #{timbre_vae_forward.9} parent=5 // pred_fallthru
      _
  $region6: #{timbre_vae_forward.9} parent=0 // loop_footer
    %s16 = sadd.s32 1, %s12
  $region7: #{timbre_vae_forward.9} parent=0 // loop_footer_branch
    %11 = sbr.rel target = $region3
  $region8: #{timbre_vae_forward.9} parent=0 // loop_exit
    _

// kernel: timbre_vae_forward.10
$region0: #{timbre_vae_forward.10}
  #allocation0 [shape = 'u32[]', space=smem, size = 0x4, offset = 0x4, fixed_abs, tag = 'smem constant byte address 0x4 - core index']
  #allocation1 [shape = 'u32[144,128]{1,0:T(1,128)}', space=vmem, size = 0x12000, scoped, tag = 'internal scratch']
  %s0 = inlined_call_operand.vmem [shape: bf16[2,5,9,32], index: 0, kind: input, shape index: {}]
  %s1 = inlined_call_operand.vmem [shape: bf16[4,32,128], index: 1, kind: input, shape index: {}]
  %s2 = inlined_call_operand.vmem [shape: f32[1,128], index: 2, kind: input, shape index: {}]
  %s3 = inlined_call_operand.vmem [shape: f32[1,32], index: 3, kind: input, shape index: {}]
  %s4 = inlined_call_operand.vmem [shape: f32[1,32], index: 4, kind: input, shape index: {}]
  %s5 = inlined_call_operand.vmem [shape: bf16[2,4,2,128], index: 5, kind: output, shape index: {0}]
  %s6 = inlined_call_operand.vmem [shape: f32[2,1,128], index: 6, kind: output, shape index: {1}]
  %s7 = inlined_call_operand.vmem [shape: f32[2,1,128], index: 7, kind: output, shape index: {2}]
  %8 = xla_tuple %s5, %s6, %s7
  %s9 = sld [smem:[#allocation0]]
  $region69: #{timbre_vae_forward.10} parent=0
    _
  %s11 = ssub.s32 1, %s9
  %s12 = scalar_select 0, %s11, %s9
  loop: start=0, step=1, limit=4
  $region2: #{timbre_vae_forward.10} parent=0 // loop_pre_header
    _
  $region3: #{timbre_vae_forward.10} parent=0 // loop_header
    %s14 = sphi 0, %s18
    %p15 = scmp.ge.s32.totalorder %s14, 4
    %s24 = sphi 0, %s26
    %s27 = sphi 0, %s24
    %s28 = sphi 0, %s27
    %s44 = sphi 0, %s28
    %s48 = sphi 0, %s48
    %s50 = sphi 0, %s48
    %s51 = sphi 0, %s50
    %s65 = sphi 0, %s51
    %s69 = sphi 0, %s69
    %s71 = sphi 0, %s69
    %s72 = sphi 0, %s71
    %s86 = sphi 0, %s72
    %s90 = sphi 0, %s90
    %s92 = sphi 0, %s90
    %s93 = sphi 0, %s92
    %s107 = sphi 0, %s93
    %s111 = sphi 0, %s111
    %s113 = sphi 0, %s111
    %s114 = sphi 0, %s113
    %s128 = sphi 0, %s114
    %s134 = sphi 0, %s136
    %s137 = sphi 0, %s134
    %s138 = sphi 0, %s137
    %s154 = sphi 0, %s138
    %s160 = sphi 0, %s162
    %s163 = sphi 0, %s160
    %s164 = sphi 0, %s163
    %s180 = sphi 0, %s164
    %s186 = sphi 0, %s188
    %s189 = sphi 0, %s186
    %s190 = sphi 0, %s189
    %s206 = sphi 0, %s190
  $region4: #{timbre_vae_forward.10} parent=0 // loop_header_branch
    %17 = sbr.rel (%p15) target = $region8
  $region5: #{timbre_vae_forward.10} parent=0 // loop_body
    %s19 = ssub.s32 %s14, 1
    %s20 = ssub.s32 %s14, 2
    %s21 = sadd.s32 %s14, 1
    %s22 = ssub.s32 %s14, %s21
    %p23 = scmp.eq.s32.totalorder %s22, 0
    %s25 = sadd.s32 %s24, 1
    %s26 = scalar_select %p23, %s24, %s25
    %p29 = pneg %p23
    %p30 = scmp.eq.s32.totalorder %s14, 1
    %p31 = por %p29, %p30
    %p32 = scmp.ne.s32.totalorder %s24, %s27
    %p33 = scmp.eq.s32.totalorder %s14, 0
    %p34 = por %p32, %p33
    %p35 = scmp.ne.s32.totalorder %s24, %s27
    %p36 = scmp.eq.s32.totalorder %s19, 1
    %p37 = por %p35, %p36
    %p38 = scmp.ne.s32.totalorder %s27, %s28
    %p39 = scmp.eq.s32.totalorder %s19, 0
    %p40 = por %p38, %p39
    %p41 = scmp.ne.s32.totalorder %s27, %s28
    %p42 = scmp.eq.s32.totalorder %s20, 1
    %p43 = por %p41, %p42
    %p45 = scmp.ne.s32.totalorder %s28, %s44
    %p46 = scmp.eq.s32.totalorder %s20, 0
    %p47 = por %p45, %p46
    %s49 = sadd.s32 %s48, 1
    %p52 = scmp.eq.s32.totalorder %s14, 1
    %p53 = scmp.ne.s32.totalorder %s48, %s50
    %p54 = scmp.eq.s32.totalorder %s14, 0
    %p55 = por %p53, %p54
    %p56 = scmp.ne.s32.totalorder %s48, %s50
    %p57 = scmp.eq.s32.totalorder %s19, 1
    %p58 = por %p56, %p57
    %p59 = scmp.ne.s32.totalorder %s50, %s51
    %p60 = scmp.eq.s32.totalorder %s19, 0
    %p61 = por %p59, %p60
    %p62 = scmp.ne.s32.totalorder %s50, %s51
    %p63 = scmp.eq.s32.totalorder %s20, 1
    %p64 = por %p62, %p63
    %p66 = scmp.ne.s32.totalorder %s51, %s65
    %p67 = scmp.eq.s32.totalorder %s20, 0
    %p68 = por %p66, %p67
    %s70 = sadd.s32 %s69, 1
    %p73 = scmp.eq.s32.totalorder %s14, 1
    %p74 = scmp.ne.s32.totalorder %s69, %s71
    %p75 = scmp.eq.s32.totalorder %s14, 0
    %p76 = por %p74, %p75
    %p77 = scmp.ne.s32.totalorder %s69, %s71
    %p78 = scmp.eq.s32.totalorder %s19, 1
    %p79 = por %p77, %p78
    %p80 = scmp.ne.s32.totalorder %s71, %s72
    %p81 = scmp.eq.s32.totalorder %s19, 0
    %p82 = por %p80, %p81
    %p83 = scmp.ne.s32.totalorder %s71, %s72
    %p84 = scmp.eq.s32.totalorder %s20, 1
    %p85 = por %p83, %p84
    %p87 = scmp.ne.s32.totalorder %s72, %s86
    %p88 = scmp.eq.s32.totalorder %s20, 0
    %p89 = por %p87, %p88
    %s91 = sadd.s32 %s90, 1
    %p94 = scmp.eq.s32.totalorder %s14, 1
    %p95 = scmp.ne.s32.totalorder %s90, %s92
    %p96 = scmp.eq.s32.totalorder %s14, 0
    %p97 = por %p95, %p96
    %p98 = scmp.ne.s32.totalorder %s90, %s92
    %p99 = scmp.eq.s32.totalorder %s19, 1
    %p100 = por %p98, %p99
    %p101 = scmp.ne.s32.totalorder %s92, %s93
    %p102 = scmp.eq.s32.totalorder %s19, 0
    %p103 = por %p101, %p102
    %p104 = scmp.ne.s32.totalorder %s92, %s93
    %p105 = scmp.eq.s32.totalorder %s20, 1
    %p106 = por %p104, %p105
    %p108 = scmp.ne.s32.totalorder %s93, %s107
    %p109 = scmp.eq.s32.totalorder %s20, 0
    %p110 = por %p108, %p109
    %s112 = sadd.s32 %s111, 1
    %p115 = scmp.eq.s32.totalorder %s14, 1
    %p116 = scmp.ne.s32.totalorder %s111, %s113
    %p117 = scmp.eq.s32.totalorder %s14, 0
    %p118 = por %p116, %p117
    %p119 = scmp.ne.s32.totalorder %s111, %s113
    %p120 = scmp.eq.s32.totalorder %s19, 1
    %p121 = por %p119, %p120
    %p122 = scmp.ne.s32.totalorder %s113, %s114
    %p123 = scmp.eq.s32.totalorder %s19, 0
    %p124 = por %p122, %p123
    %p125 = scmp.ne.s32.totalorder %s113, %s114
    %p126 = scmp.eq.s32.totalorder %s20, 1
    %p127 = por %p125, %p126
    %p129 = scmp.ne.s32.totalorder %s114, %s128
    %p130 = scmp.eq.s32.totalorder %s20, 0
    %p131 = por %p129, %p130
    %s132 = ssub.s32 %s14, %s21
    %p133 = scmp.eq.s32.totalorder %s132, 0
    %s135 = sadd.s32 %s134, 1
    %s136 = scalar_select %p133, %s134, %s135
    %p139 = pneg %p133
    %p140 = scmp.eq.s32.totalorder %s14, 1
    %p141 = por %p139, %p140
    %p142 = scmp.ne.s32.totalorder %s134, %s137
    %p143 = scmp.eq.s32.totalorder %s14, 0
    %p144 = por %p142, %p143
    %p145 = scmp.ne.s32.totalorder %s134, %s137
    %p146 = scmp.eq.s32.totalorder %s19, 1
    %p147 = por %p145, %p146
    %p148 = scmp.ne.s32.totalorder %s137, %s138
    %p149 = scmp.eq.s32.totalorder %s19, 0
    %p150 = por %p148, %p149
    %p151 = scmp.ne.s32.totalorder %s137, %s138
    %p152 = scmp.eq.s32.totalorder %s20, 1
    %p153 = por %p151, %p152
    %p155 = scmp.ne.s32.totalorder %s138, %s154
    %p156 = scmp.eq.s32.totalorder %s20, 0
    %p157 = por %p155, %p156
    %s158 = ssub.s32 %s14, %s21
    %p159 = scmp.eq.s32.totalorder %s158, 0
    %s161 = sadd.s32 %s160, 1
    %s162 = scalar_select %p159, %s160, %s161
    %p165 = pneg %p159
    %p166 = scmp.eq.s32.totalorder %s14, 1
    %p167 = por %p165, %p166
    %p168 = scmp.ne.s32.totalorder %s160, %s163
    %p169 = scmp.eq.s32.totalorder %s14, 0
    %p170 = por %p168, %p169
    %p171 = scmp.ne.s32.totalorder %s160, %s163
    %p172 = scmp.eq.s32.totalorder %s19, 1
    %p173 = por %p171, %p172
    %p174 = scmp.ne.s32.totalorder %s163, %s164
    %p175 = scmp.eq.s32.totalorder %s19, 0
    %p176 = por %p174, %p175
    %p177 = scmp.ne.s32.totalorder %s163, %s164
    %p178 = scmp.eq.s32.totalorder %s20, 1
    %p179 = por %p177, %p178
    %p181 = scmp.ne.s32.totalorder %s164, %s180
    %p182 = scmp.eq.s32.totalorder %s20, 0
    %p183 = por %p181, %p182
    %s184 = ssub.s32 %s14, %s21
    %p185 = scmp.eq.s32.totalorder %s184, 0
    %s187 = sadd.s32 %s186, 1
    %s188 = scalar_select %p185, %s186, %s187
    %p191 = pneg %p185
    %p192 = scmp.eq.s32.totalorder %s14, 1
    %p193 = por %p191, %p192
    %p194 = scmp.ne.s32.totalorder %s186, %s189
    %p195 = scmp.eq.s32.totalorder %s14, 0
    %p196 = por %p194, %p195
    %p197 = scmp.ne.s32.totalorder %s186, %s189
    %p198 = scmp.eq.s32.totalorder %s19, 1
    %p199 = por %p197, %p198
    %p200 = scmp.ne.s32.totalorder %s189, %s190
    %p201 = scmp.eq.s32.totalorder %s19, 0
    %p202 = por %p200, %p201
    %p203 = scmp.ne.s32.totalorder %s189, %s190
    %p204 = scmp.eq.s32.totalorder %s20, 1
    %p205 = por %p203, %p204
    %p207 = scmp.ne.s32.totalorder %s190, %s206
    %p208 = scmp.eq.s32.totalorder %s20, 0
    %p209 = por %p207, %p208
    %p210 = scmp.le.s32.totalorder 1, %s14
    %p211 = scmp.lt.s32.totalorder %s14, 3
    %p212 = pnand %p210, %p211
    %p213 = pneg %p212
    // Predicated region
    $region9: #{timbre_vae_forward.10} parent=5 // pred_check
      _
    $region10: #{timbre_vae_forward.10} parent=5 // pred_check_branch
      %215 = sbr.rel (%p212) target = $region12
    $region11: #{timbre_vae_forward.10} parent=5 // pred_region
      %s216 = ssub.s32 %s14, 1
      // Predicated region
      $region13: #{timbre_vae_forward.10} parent=11 // pred_check
        %p217 = pneg %p61
      $region14: #{timbre_vae_forward.10} parent=11 // pred_check_branch
        %219 = sbr.rel (%p217) target = $region16
      $region15: #{timbre_vae_forward.10} parent=11 // pred_region
        _
      $region16: #{timbre_vae_forward.10} parent=11 // pred_fallthru
        _
      // Predicated region
      $region17: #{timbre_vae_forward.10} parent=11 // pred_check
        %p220 = pneg %p82
      $region18: #{timbre_vae_forward.10} parent=11 // pred_check_branch
        %222 = sbr.rel (%p220) target = $region20
      $region19: #{timbre_vae_forward.10} parent=11 // pred_region
        _
      $region20: #{timbre_vae_forward.10} parent=11 // pred_fallthru
        _
      // Predicated region
      $region21: #{timbre_vae_forward.10} parent=11 // pred_check
        %p223 = pneg %p103
      $region22: #{timbre_vae_forward.10} parent=11 // pred_check_branch
        %225 = sbr.rel (%p223) target = $region24
      $region23: #{timbre_vae_forward.10} parent=11 // pred_region
        _
      $region24: #{timbre_vae_forward.10} parent=11 // pred_fallthru
        _
      // Predicated region
      $region25: #{timbre_vae_forward.10} parent=11 // pred_check
        %p226 = pneg %p124
      $region26: #{timbre_vae_forward.10} parent=11 // pred_check_branch
        %228 = sbr.rel (%p226) target = $region28
      $region27: #{timbre_vae_forward.10} parent=11 // pred_region
        _
      $region28: #{timbre_vae_forward.10} parent=11 // pred_fallthru
        _
    $region12: #{timbre_vae_forward.10} parent=5 // pred_fallthru
      _
    %p229 = scmp.lt.s32.totalorder %s14, 2
    // Predicated region
    $region29: #{timbre_vae_forward.10} parent=5 // pred_check
      %p230 = pneg %p229
    $region30: #{timbre_vae_forward.10} parent=5 // pred_check_branch
      %232 = sbr.rel (%p230) target = $region32
    $region31: #{timbre_vae_forward.10} parent=5 // pred_region
      // Predicated region
      $region33: #{timbre_vae_forward.10} parent=31 // pred_check
        %p233 = pneg %p34
      $region34: #{timbre_vae_forward.10} parent=31 // pred_check_branch
        %235 = sbr.rel (%p233) target = $region36
      $region35: #{timbre_vae_forward.10} parent=31 // pred_region
        %p236 = scmp.lt.s32.totalorder %s14, 1
        %s237 = scalar_select %p236, %s14, 1
        %s238 = smul.addr %s237, 10
        %s239 = smul.addr %s238, 4
        %s240 = scalar_lea.vmem %s0, %s239
      $region36: #{timbre_vae_forward.10} parent=31 // pred_fallthru
        _
    $region32: #{timbre_vae_forward.10} parent=5 // pred_fallthru
      _
    %p241 = scmp.le.s32.totalorder 1, %s14
    %p242 = scmp.lt.s32.totalorder %s14, 3
    %p243 = pnand %p241, %p242
    %p244 = pneg %p243
    // Predicated region
    $region37: #{timbre_vae_forward.10} parent=5 // pred_check
      _
    $region38: #{timbre_vae_forward.10} parent=5 // pred_check_branch
      %246 = sbr.rel (%p243) target = $region40
    $region39: #{timbre_vae_forward.10} parent=5 // pred_region
      %s247 = ssub.s32 %s14, 1
      %p248 = scmp.lt.s32.totalorder %s19, 1
      %s249 = scalar_select %p248, %s19, 1
      %s250 = smul.addr %s249, 10
      %s251 = smul.addr %s250, 4
      %s252 = scalar_lea.vmem %s0, %s251
      %p253 = pneg %p40
      %p254 = pneg %p37
      %p255 = pneg %p61
      %p256 = pneg %p58
      %p257 = pneg %p82
      %p258 = pneg %p79
      %p259 = pneg %p103
      %p260 = pneg %p100
      %p261 = pneg %p124
      %p262 = pneg %p121
      %p263 = pneg %p150
      %p264 = pneg %p147
      %p265 = scmp.lt.s32.totalorder %s19, 1
      %s266 = scalar_select %p265, %s19, 1
      %s267 = smul.addr %s266, 4
      %s268 = scalar_lea.vmem %s5, %s267
      %p269 = pneg %p176
      %p270 = pneg %p173
      %p271 = scmp.lt.s32.totalorder %s19, 1
      %s272 = scalar_select %p271, %s19, 1
      %s273 = scalar_lea.vmem %s6, %s272
      %p274 = pneg %p202
      %p275 = pneg %p199
      %p276 = scmp.lt.s32.totalorder %s19, 1
      %s277 = scalar_select %p276, %s19, 1
      %s278 = scalar_lea.vmem %s7, %s277
      %p279 = scmp.lt.s32.totalorder %s19, 1
      %s280 = scalar_select %p279, %s19, 1
      %s281 = smul.addr %s280, 10
      %s282 = smul.addr %s281, 4
      %s283 = scalar_lea.vmem %s0, %s282
      %p284 = scmp.lt.s32.totalorder %s19, 1
      %s285 = scalar_select %p284, %s19, 1
      %s286 = smul.addr %s285, 4
      %s287 = scalar_lea.vmem %s5, %s286
      %p288 = scmp.lt.s32.totalorder %s19, 1
      %s289 = scalar_select %p288, %s19, 1
      %s290 = scalar_lea.vmem %s6, %s289
      %p291 = scmp.lt.s32.totalorder %s19, 1
      %s292 = scalar_select %p291, %s19, 1
      %s293 = scalar_lea.vmem %s7, %s292
      %v295 = vld [vmem:[%s283] sm:$0xf]
      %v296 = vld [vmem:[%s283 + $0x4] sm:$0x1]
      %v297 = vld [vmem:[%s283 + $0x8] sm:$0xf]
      %v298 = vld [vmem:[%s283 + $0xc] sm:$0x1]
      %v299 = vld [vmem:[%s283 + $0x10] sm:$0xf]
      %v300 = vld [vmem:[%s283 + $0x14] sm:$0x1]
      %v301 = vld [vmem:[%s283 + $0x18] sm:$0xf]
      %v302 = vld [vmem:[%s283 + $0x1c] sm:$0x1]
      %v303 = vld [vmem:[%s283 + $0x20] sm:$0xf]
      %v304 = vld [vmem:[%s283 + $0x24] sm:$0x1]
      %v305 = vunpack.c.l.bf16 %v295
      %v306 = vunpack.c.l.bf16 %v296
      %v307 = vunpack.c.l.bf16 %v297
      %v308 = vunpack.c.l.bf16 %v298
      %v309 = vunpack.c.l.bf16 %v299
      %v310 = vunpack.c.l.bf16 %v300
      %v311 = vunpack.c.l.bf16 %v301
      %v312 = vunpack.c.l.bf16 %v302
      %v313 = vunpack.c.l.bf16 %v303
      %v314 = vunpack.c.l.bf16 %v304
      %v315 = vld [vmem:[%s3] sm:$0x1]
      %v317 = vlaneseq
      %v318 = vshrl.u32 %v317, 7
      %v319 = vsub.s32 0, %v318
      %v320 = vrot.slane %v315, %v319
      %v322 = vmul.f32 %v305, %v320
      %v323 = vmul.f32 %v306, %v320
      %v324 = vmul.f32 %v307, %v320
      %v325 = vmul.f32 %v308, %v320
      %v326 = vmul.f32 %v309, %v320
      %v327 = vmul.f32 %v310, %v320
      %v328 = vmul.f32 %v311, %v320
      %v329 = vmul.f32 %v312, %v320
      %v330 = vmul.f32 %v313, %v320
      %v331 = vmul.f32 %v314, %v320
      %v332 = vld [vmem:[%s4] sm:$0x1]
      %v334 = vlaneseq
      %v335 = vshrl.u32 %v334, 7
      %v336 = vsub.s32 0, %v335
      %v337 = vrot.slane %v332, %v336
      %v339 = vadd.f32 %v322, %v337
      %v340 = vadd.f32 %v323, %v337
      %v341 = vadd.f32 %v324, %v337
      %v342 = vadd.f32 %v325, %v337
      %v343 = vadd.f32 %v326, %v337
      %v344 = vadd.f32 %v327, %v337
      %v345 = vadd.f32 %v328, %v337
      %v346 = vadd.f32 %v329, %v337
      %v347 = vadd.f32 %v330, %v337
      %v348 = vadd.f32 %v331, %v337
      %vm349 = vcmp.gt.f32.partialorder %v339, 0.0
      %vm350 = vcmp.gt.f32.partialorder %v340, 0.0
      %vm351 = vcmp.gt.f32.partialorder %v341, 0.0
      %vm352 = vcmp.gt.f32.partialorder %v342, 0.0
      %vm353 = vcmp.gt.f32.partialorder %v343, 0.0
      %vm354 = vcmp.gt.f32.partialorder %v344, 0.0
      %vm355 = vcmp.gt.f32.partialorder %v345, 0.0
      %vm356 = vcmp.gt.f32.partialorder %v346, 0.0
      %vm357 = vcmp.gt.f32.partialorder %v347, 0.0
      %vm358 = vcmp.gt.f32.partialorder %v348, 0.0
      %v359 = vmul.f32 %v339, 0.01
      %v360 = vmul.f32 %v340, 0.01
      %v361 = vmul.f32 %v341, 0.01
      %v362 = vmul.f32 %v342, 0.01
      %v363 = vmul.f32 %v343, 0.01
      %v364 = vmul.f32 %v344, 0.01
      %v365 = vmul.f32 %v345, 0.01
      %v366 = vmul.f32 %v346, 0.01
      %v367 = vmul.f32 %v347, 0.01
      %v368 = vmul.f32 %v348, 0.01
      %v369 = vsel %vm349, %v339, %v359
      %v370 = vsel %vm350, %v340, %v360
      %v371 = vsel %vm351, %v341, %v361
      %v372 = vsel %vm352, %v342, %v362
      %v373 = vsel %vm353, %v343, %v363
      %v374 = vsel %vm354, %v344, %v364
      %v375 = vsel %vm355, %v345, %v365
      %v376 = vsel %vm356, %v346, %v366
      %v377 = vsel %vm357, %v347, %v367
      %v378 = vsel %vm358, %v348, %v368
      %v379 = vpack.c.bf16 %v371, %v369
      %v380 = vpack.c.bf16 %v375, %v373
      %v381 = vld [vmem:[%s1] sm:$0xf]
      %v382 = vld [vmem:[%s1 + $0x4] sm:$0xf]
      %v383 = vld [vmem:[%s1 + $0x8] sm:$0xf]
      %v384 = vld [vmem:[%s1 + $0xc] sm:$0xf]
      %vm393 = vcmask 1046528
      %v394 = vrot.slane %v369, 1
      %v395 = vrot.slane %v370, 1
      %v396 = vsel %vm393, %v394, %v395
      %v397 = vrot.slane %v371, 1
      %v398 = vrot.slane %v372, 1
      %v399 = vsel %vm393, %v397, %v398
      %v400 = vrot.slane %v373, 1
      %v401 = vrot.slane %v374, 1
      %v402 = vsel %vm393, %v400, %v401
      %v403 = vrot.slane %v375, 1
      %v404 = vrot.slane %v376, 1
      %v405 = vsel %vm393, %v403, %v404
      %v410 = vpack.c.bf16 %v399, %v396
      %v411 = vpack.c.bf16 %v405, %v402
      %s412 = scalar_lea.vmem %s1, 16
      %v413 = vld [vmem:[%s412] sm:$0xf]
      %v414 = vld [vmem:[%s412 + $0x4] sm:$0xf]
      %v415 = vld [vmem:[%s412 + $0x8] sm:$0xf]
      %v416 = vld [vmem:[%s412 + $0xc] sm:$0xf]
      %v421 = vunpack.c.l.b16 %v413
      %v422 = vunpack.c.l.b16 %v414
      %v423 = vunpack.c.l.b16 %v415
      %v424 = vunpack.c.l.b16 %v416
      %v425 = vpack.c.b16 %v422, %v421
      %v426 = vpack.c.b16 %v424, %v423
      %vm429 = vcmask 261120
      %v431 = vsel %vm429, %v410, 0
      %v434 = vsel %vm429, %v411, 0
      %436 = vmatprep.subr.bf16.mxu0 0
      %437 = vmatpush1.bf16.msra.mxu0 0
      %438 = vmatprep.subr.bf16.mxu0 0
      %439 = vmatpush1.bf16.msra.mxu0 0
      %440 = vmatprep.subr.bf16.mxu0 0
      %441 = vmatpush1.bf16.msra.mxu0 0
      %442 = vmatprep.subr.bf16.mxu0 0
      %443 = vmatpush1.bf16.msra.mxu0 0
      %444 = vmatprep.subr.bf16.mxu0 0
      %445 = vmatpush1.bf16.msra.mxu0 0
      %446 = vmatprep.subr.bf16.mxu0 0
      %447 = vmatpush1.bf16.msra.mxu0 0
      %448 = vmatprep.subr.bf16.mxu0 0
      %449 = vmatpush1.bf16.msra.mxu0 %v426
      %450 = vmatprep.subr.bf16.mxu0 0
      %451 = vmatpush1.bf16.msra.mxu0 %v425
      %452 = vmatprep.subr.bf16.mxu0 0
      %453 = vmatpush2.bf16.msra.mxu0 0
      %454 = vmatprep.subr.bf16.mxu0 0
      %455 = vmatpush2.bf16.msra.mxu0 0
      %456 = vmatprep.subr.bf16.mxu0 0
      %457 = vmatpush2.bf16.msra.mxu0 0
      %458 = vmatprep.subr.bf16.mxu0 0
      %459 = vmatpush2.bf16.msra.mxu0 0
      %460 = vmatprep.subr.bf16.mxu0 0
      %461 = vmatpush2.bf16.msra.mxu0 0
      %462 = vmatprep.subr.bf16.mxu0 0
      %463 = vmatpush2.bf16.msra.mxu0 0
      %464 = vmatprep.subr.bf16.mxu0 0
      %465 = vmatpush2.bf16.msra.mxu0 0
      %466 = vmatprep.subr.bf16.mxu0 0
      %467 = vmatpush2.bf16.msra.mxu0 0
      %468 = vmatprep.mubr.bf16.mxu0 0
      %469 = vmatmul.mubr.bf16.gmra.mxu0 %v431
      %v470 = vpop.f32.mrf.mxu0
      %v471 = vadd.f32 0.0, %v470
      %v472 = vpop.f32.mrf.mxu0
      %v473 = vpop.f32.mrf.mxu0
      %v474 = vadd.f32 0.0, %v473
      %v475 = vpop.f32.mrf.mxu0
      %476 = vmatprep.mubr.bf16.mxu0 0
      %477 = vmatmul.mubr.bf16.gmra.mxu0 %v434
      %v478 = vpop.f32.mrf.mxu0
      %v479 = vadd.f32 0.0, %v478
      %v480 = vpop.f32.mrf.mxu0
      %v481 = vpop.f32.mrf.mxu0
      %v482 = vadd.f32 0.0, %v481
      %v483 = vpop.f32.mrf.mxu0
      %484 = vdwg.mxu0
      %v489 = vunpack.c.l.b16 %v381
      %v490 = vunpack.c.l.b16 %v382
      %v491 = vunpack.c.l.b16 %v383
      %v492 = vunpack.c.l.b16 %v384
      %v493 = vpack.c.b16 %v490, %v489
      %v494 = vpack.c.b16 %v492, %v491
      %v498 = vsel %vm429, %v379, 0
      %v501 = vsel %vm429, %v380, 0
      %503 = vmatprep.subr.bf16.mxu0 0
      %504 = vmatpush1.bf16.msra.mxu0 0
      %505 = vmatprep.subr.bf16.mxu0 0
      %506 = vmatpush1.bf16.msra.mxu0 0
      %507 = vmatprep.subr.bf16.mxu0 0
      %508 = vmatpush1.bf16.msra.mxu0 0
      %509 = vmatprep.subr.bf16.mxu0 0
      %510 = vmatpush1.bf16.msra.mxu0 0
      %511 = vmatprep.subr.bf16.mxu0 0
      %512 = vmatpush1.bf16.msra.mxu0 0
      %513 = vmatprep.subr.bf16.mxu0 0
      %514 = vmatpush1.bf16.msra.mxu0 0
      %515 = vmatprep.subr.bf16.mxu0 0
      %516 = vmatpush1.bf16.msra.mxu0 %v494
      %517 = vmatprep.subr.bf16.mxu0 0
      %518 = vmatpush1.bf16.msra.mxu0 %v493
      %519 = vmatprep.subr.bf16.mxu0 0
      %520 = vmatpush2.bf16.msra.mxu0 0
      %521 = vmatprep.subr.bf16.mxu0 0
      %522 = vmatpush2.bf16.msra.mxu0 0
      %523 = vmatprep.subr.bf16.mxu0 0
      %524 = vmatpush2.bf16.msra.mxu0 0
      %525 = vmatprep.subr.bf16.mxu0 0
      %526 = vmatpush2.bf16.msra.mxu0 0
      %527 = vmatprep.subr.bf16.mxu0 0
      %528 = vmatpush2.bf16.msra.mxu0 0
      %529 = vmatprep.subr.bf16.mxu0 0
      %530 = vmatpush2.bf16.msra.mxu0 0
      %531 = vmatprep.subr.bf16.mxu0 0
      %532 = vmatpush2.bf16.msra.mxu0 0
      %533 = vmatprep.subr.bf16.mxu0 0
      %534 = vmatpush2.bf16.msra.mxu0 0
      %535 = vmatprep.mubr.bf16.mxu0 0
      %536 = vmatmul.mubr.bf16.gmra.mxu0 %v498
      %v537 = vpop.f32.mrf.mxu0
      %v538 = vadd.f32 %v471, %v537
      %v539 = vpop.f32.mrf.mxu0
      %v540 = vpop.f32.mrf.mxu0
      %v541 = vadd.f32 %v474, %v540
      %v542 = vpop.f32.mrf.mxu0
      %543 = vmatprep.mubr.bf16.mxu0 0
      %544 = vmatmul.mubr.bf16.gmra.mxu0 %v501
      %v545 = vpop.f32.mrf.mxu0
      %v546 = vadd.f32 %v479, %v545
      %v547 = vpop.f32.mrf.mxu0
      %v548 = vpop.f32.mrf.mxu0
      %v549 = vadd.f32 %v482, %v548
      %v550 = vpop.f32.mrf.mxu0
      %551 = vdwg.mxu0
      %v552 = vpack.c.bf16 %v373, %v371
      %v553 = vpack.c.bf16 %v377, %v375
      %s554 = scalar_lea.vmem %s1, 32
      %v555 = vld [vmem:[%s554] sm:$0xf]
      %v556 = vld [vmem:[%s554 + $0x4] sm:$0xf]
      %v557 = vld [vmem:[%s554 + $0x8] sm:$0xf]
      %v558 = vld [vmem:[%s554 + $0xc] sm:$0xf]
      %v563 = vunpack.c.l.b16 %v555
      %v564 = vunpack.c.l.b16 %v556
      %v565 = vunpack.c.l.b16 %v557
      %v566 = vunpack.c.l.b16 %v558
      %v567 = vpack.c.b16 %v564, %v563
      %v568 = vpack.c.b16 %v566, %v565
      %v572 = vsel %vm429, %v552, 0
      %v575 = vsel %vm429, %v553, 0
      %577 = vmatprep.subr.bf16.mxu0 0
      %578 = vmatpush1.bf16.msra.mxu0 0
      %579 = vmatprep.subr.bf16.mxu0 0
      %580 = vmatpush1.bf16.msra.mxu0 0
      %581 = vmatprep.subr.bf16.mxu0 0
      %582 = vmatpush1.bf16.msra.mxu0 0
      %583 = vmatprep.subr.bf16.mxu0 0
      %584 = vmatpush1.bf16.msra.mxu0 0
      %585 = vmatprep.subr.bf16.mxu0 0
      %586 = vmatpush1.bf16.msra.mxu0 0
      %587 = vmatprep.subr.bf16.mxu0 0
      %588 = vmatpush1.bf16.msra.mxu0 0
      %589 = vmatprep.subr.bf16.mxu0 0
      %590 = vmatpush1.bf16.msra.mxu0 %v568
      %591 = vmatprep.subr.bf16.mxu0 0
      %592 = vmatpush1.bf16.msra.mxu0 %v567
      %593 = vmatprep.subr.bf16.mxu0 0
      %594 = vmatpush2.bf16.msra.mxu0 0
      %595 = vmatprep.subr.bf16.mxu0 0
      %596 = vmatpush2.bf16.msra.mxu0 0
      %597 = vmatprep.subr.bf16.mxu0 0
      %598 = vmatpush2.bf16.msra.mxu0 0
      %599 = vmatprep.subr.bf16.mxu0 0
      %600 = vmatpush2.bf16.msra.mxu0 0
      %601 = vmatprep.subr.bf16.mxu0 0
      %602 = vmatpush2.bf16.msra.mxu0 0
      %603 = vmatprep.subr.bf16.mxu0 0
      %604 = vmatpush2.bf16.msra.mxu0 0
      %605 = vmatprep.subr.bf16.mxu0 0
      %606 = vmatpush2.bf16.msra.mxu0 0
      %607 = vmatprep.subr.bf16.mxu0 0
      %608 = vmatpush2.bf16.msra.mxu0 0
      %609 = vmatprep.mubr.bf16.mxu0 0
      %610 = vmatmul.mubr.bf16.gmra.mxu0 %v572
      %v611 = vpop.f32.mrf.mxu0
      %v612 = vadd.f32 0.0, %v611
      %v613 = vpop.f32.mrf.mxu0
      %v614 = vpop.f32.mrf.mxu0
      %v615 = vadd.f32 0.0, %v614
      %v616 = vpop.f32.mrf.mxu0
      %617 = vmatprep.mubr.bf16.mxu0 0
      %618 = vmatmul.mubr.bf16.gmra.mxu0 %v575
      %v619 = vpop.f32.mrf.mxu0
      %v620 = vadd.f32 0.0, %v619
      %v621 = vpop.f32.mrf.mxu0
      %v622 = vpop.f32.mrf.mxu0
      %v623 = vadd.f32 0.0, %v622
      %v624 = vpop.f32.mrf.mxu0
      %625 = vdwg.mxu0
      %v626 = vadd.f32 %v538, %v612
      %v627 = vadd.f32 %v541, %v615
      %v628 = vadd.f32 %v546, %v620
      %v629 = vadd.f32 %v549, %v623
      %v632 = vrot.slane %v377, 1
      %v633 = vrot.slane %v378, 1
      %v634 = vsel %vm393, %v632, %v633
      %v636 = vpack.c.bf16 %v402, %v399
      %v637 = vpack.c.bf16 %v634, %v405
      %s638 = scalar_lea.vmem %s1, 48
      %v639 = vld [vmem:[%s638] sm:$0xf]
      %v640 = vld [vmem:[%s638 + $0x4] sm:$0xf]
      %v641 = vld [vmem:[%s638 + $0x8] sm:$0xf]
      %v642 = vld [vmem:[%s638 + $0xc] sm:$0xf]
      %v647 = vunpack.c.l.b16 %v639
      %v648 = vunpack.c.l.b16 %v640
      %v649 = vunpack.c.l.b16 %v641
      %v650 = vunpack.c.l.b16 %v642
      %v651 = vpack.c.b16 %v648, %v647
      %v652 = vpack.c.b16 %v650, %v649
      %v656 = vsel %vm429, %v636, 0
      %v659 = vsel %vm429, %v637, 0
      %661 = vmatprep.subr.bf16.mxu0 0
      %662 = vmatpush1.bf16.msra.mxu0 0
      %663 = vmatprep.subr.bf16.mxu0 0
      %664 = vmatpush1.bf16.msra.mxu0 0
      %665 = vmatprep.subr.bf16.mxu0 0
      %666 = vmatpush1.bf16.msra.mxu0 0
      %667 = vmatprep.subr.bf16.mxu0 0
      %668 = vmatpush1.bf16.msra.mxu0 0
      %669 = vmatprep.subr.bf16.mxu0 0
      %670 = vmatpush1.bf16.msra.mxu0 0
      %671 = vmatprep.subr.bf16.mxu0 0
      %672 = vmatpush1.bf16.msra.mxu0 0
      %673 = vmatprep.subr.bf16.mxu0 0
      %674 = vmatpush1.bf16.msra.mxu0 %v652
      %675 = vmatprep.subr.bf16.mxu0 0
      %676 = vmatpush1.bf16.msra.mxu0 %v651
      %677 = vmatprep.subr.bf16.mxu0 0
      %678 = vmatpush2.bf16.msra.mxu0 0
      %679 = vmatprep.subr.bf16.mxu0 0
      %680 = vmatpush2.bf16.msra.mxu0 0
      %681 = vmatprep.subr.bf16.mxu0 0
      %682 = vmatpush2.bf16.msra.mxu0 0
      %683 = vmatprep.subr.bf16.mxu0 0
      %684 = vmatpush2.bf16.msra.mxu0 0
      %685 = vmatprep.subr.bf16.mxu0 0
      %686 = vmatpush2.bf16.msra.mxu0 0
      %687 = vmatprep.subr.bf16.mxu0 0
      %688 = vmatpush2.bf16.msra.mxu0 0
      %689 = vmatprep.subr.bf16.mxu0 0
      %690 = vmatpush2.bf16.msra.mxu0 0
      %691 = vmatprep.subr.bf16.mxu0 0
      %692 = vmatpush2.bf16.msra.mxu0 0
      %693 = vmatprep.mubr.bf16.mxu0 0
      %694 = vmatmul.mubr.bf16.gmra.mxu0 %v656
      %v695 = vpop.f32.mrf.mxu0
      %v696 = vadd.f32 0.0, %v695
      %v697 = vpop.f32.mrf.mxu0
      %v698 = vpop.f32.mrf.mxu0
      %v699 = vadd.f32 0.0, %v698
      %v700 = vpop.f32.mrf.mxu0
      %701 = vmatprep.mubr.bf16.mxu0 0
      %702 = vmatmul.mubr.bf16.gmra.mxu0 %v659
      %v703 = vpop.f32.mrf.mxu0
      %v704 = vadd.f32 0.0, %v703
      %v705 = vpop.f32.mrf.mxu0
      %v706 = vpop.f32.mrf.mxu0
      %v707 = vadd.f32 0.0, %v706
      %v708 = vpop.f32.mrf.mxu0
      %709 = vdwg.mxu0
      %v710 = vadd.f32 %v626, %v696
      %v711 = vadd.f32 %v627, %v699
      %v712 = vadd.f32 %v628, %v704
      %v713 = vadd.f32 %v629, %v707
      %v714 = vld [vmem:[%s2] sm:$0x1]
      %v716 = vlaneseq
      %v717 = vshrl.u32 %v716, 7
      %v718 = vsub.s32 0, %v717
      %v719 = vrot.slane %v714, %v718
      %v721 = vadd.f32 %v710, %v719
      %v722 = vadd.f32 %v711, %v719
      %v723 = vadd.f32 %v712, %v719
      %v724 = vadd.f32 %v713, %v719
      %v725 = vlaneseq
      %v726 = vshrl.u32 %v725, 7
      %v727 = vadd.s32 %v726, 8
      %v728 = vadd.s32 %v726, 16
      %v729 = vadd.s32 %v726, 24
      %vm730 = vcmp.lt.s32.totalorder %v726, 0
      %v731 = vsub.s32 0, %v726
      %v732 = vsel %vm730, %v731, %v726
      %v733 = vshrl.u32 %v732, 3
      %v734 = vand.u32 %v732, 7
      %v735 = vsub.s32 0, %v734
      %v736 = vsel %vm730, %v735, %v734
      %vm737 = vcmp.lt.s32.totalorder %v727, 0
      %v738 = vsub.s32 0, %v727
      %v739 = vsel %vm737, %v738, %v727
      %v740 = vshrl.u32 %v739, 3
      %v741 = vand.u32 %v739, 7
      %v742 = vsub.s32 0, %v741
      %v743 = vsel %vm737, %v742, %v741
      %vm744 = vcmp.lt.s32.totalorder %v728, 0
      %v745 = vsub.s32 0, %v728
      %v746 = vsel %vm744, %v745, %v728
      %v747 = vshrl.u32 %v746, 3
      %v748 = vand.u32 %v746, 7
      %v749 = vsub.s32 0, %v748
      %v750 = vsel %vm744, %v749, %v748
      %vm751 = vcmp.lt.s32.totalorder %v729, 0
      %v752 = vsub.s32 0, %v729
      %v753 = vsel %vm751, %v752, %v729
      %v754 = vshrl.u32 %v753, 3
      %v755 = vand.u32 %v753, 7
      %v756 = vsub.s32 0, %v755
      %v757 = vsel %vm751, %v756, %v755
      %vm758 = vcmp.ne.s32.totalorder %v736, 0
      %vm759 = vcmp.ne.s32.totalorder %v743, 0
      %vm760 = vcmp.ne.s32.totalorder %v750, 0
      %vm761 = vcmp.ne.s32.totalorder %v757, 0
      %vm762 = vcmp.lt.s32.totalorder %v736, 0
      %vm763 = vcmp.lt.s32.totalorder %v743, 0
      %vm764 = vcmp.lt.s32.totalorder %v750, 0
      %vm765 = vcmp.lt.s32.totalorder %v757, 0
      %vm766 = vmand %vm762, %vm758
      %vm767 = vmand %vm763, %vm759
      %vm768 = vmand %vm764, %vm760
      %vm769 = vmand %vm765, %vm761
      %v770 = vadd.s32 %v736, 8
      %v771 = vadd.s32 %v743, 8
      %v772 = vadd.s32 %v750, 8
      %v773 = vadd.s32 %v757, 8
      %v774 = vsel %vm766, %v770, %v736
      %v775 = vsel %vm767, %v771, %v743
      %v776 = vsel %vm768, %v772, %v750
      %v777 = vsel %vm769, %v773, %v757
      %vm778 = vcmp.lt.s32.totalorder %v774, 2
      %vm779 = vcmp.lt.s32.totalorder %v775, 2
      %vm780 = vcmp.lt.s32.totalorder %v776, 2
      %vm781 = vcmp.lt.s32.totalorder %v777, 2
      %v782 = vsel %vm778, 1, 0
      %v783 = vsel %vm779, 1, 0
      %v784 = vsel %vm780, 1, 0
      %v785 = vsel %vm781, 1, 0
      %vm786 = vcmp.eq.s32.totalorder %v782, 1
      %vm787 = vcmp.eq.s32.totalorder %v783, 1
      %vm788 = vcmp.eq.s32.totalorder %v784, 1
      %vm789 = vcmp.eq.s32.totalorder %v785, 1
      %v790 = vsel %vm786, %v721, 0.0
      %v791 = vsel %vm787, %v722, 0.0
      %v792 = vsel %vm788, %v723, 0.0
      %v793 = vsel %vm789, %v724, 0.0
      %v794 = vadd.f32 %v790, %v791
      %v795 = vadd.f32 %v794, %v792
      %v796 = vadd.f32 %v795, %v793
      %v797 = vrot.slane %v796, 4
      %v798 = vadd.f32 %v796, %v797
      %v799 = vrot.slane %v798, 2
      %v800 = vadd.f32 %v798, %v799
      %v801 = vrot.slane %v800, 1
      %v802 = vadd.f32 %v800, %v801
      %v803 = vmul.f32 %v802, 0.125
      %v804 = vsub.f32 %v721, %v803
      %v805 = vsub.f32 %v722, %v803
      %v806 = vsub.f32 %v723, %v803
      %v807 = vsub.f32 %v724, %v803
      %v808 = vsel %vm786, %v804, 0.0
      %v809 = vsel %vm787, %v805, 0.0
      %v810 = vsel %vm788, %v806, 0.0
      %v811 = vsel %vm789, %v807, 0.0
      %v812 = vmul.f32 %v808, %v808
      %v813 = vmul.f32 %v809, %v809
      %v814 = vmul.f32 %v810, %v810
      %v815 = vmul.f32 %v811, %v811
      %v816 = vadd.f32 %v812, %v813
      %v817 = vadd.f32 %v816, %v814
      %v818 = vadd.f32 %v817, %v815
      %v819 = vrot.slane %v818, 4
      %v820 = vadd.f32 %v818, %v819
      %v821 = vrot.slane %v820, 2
      %v822 = vadd.f32 %v820, %v821
      %v823 = vrot.slane %v822, 1
      %v824 = vadd.f32 %v822, %v823
      %825 = vst [vmem:[%s290] sm:$0x1] %v802
      %826 = vst [vmem:[%s293] sm:$0x1] %v824
      %v827 = vpack.c.bf16 %v721, %v721
      %v828 = vpack.c.bf16 %v722, %v722
      %v829 = vpack.c.bf16 %v723, %v723
      %v830 = vpack.c.bf16 %v724, %v724
      %831 = vst [vmem:[%s287] sm:$0x1] %v827
      %832 = vst [vmem:[%s287 + $0x1] sm:$0x1] %v828
      %833 = vst [vmem:[%s287 + $0x2] sm:$0x1] %v829
      %834 = vst [vmem:[%s287 + $0x3] sm:$0x1] %v830
      %p835 = scmp.lt.s32.totalorder %s19, 1
      %s836 = scalar_select %p835, %s19, 1
      %s837 = smul.addr %s836, 4
      %s838 = scalar_lea.vmem %s5, %s837
      %p839 = scmp.lt.s32.totalorder %s19, 1
      %s840 = scalar_select %p839, %s19, 1
      %s841 = scalar_lea.vmem %s6, %s840
      %p842 = scmp.lt.s32.totalorder %s19, 1
      %s843 = scalar_select %p842, %s19, 1
      %s844 = scalar_lea.vmem %s7, %s843
      // Predicated region
      $region41: #{timbre_vae_forward.10} parent=39 // pred_check
        %p845 = pneg %p147
      $region42: #{timbre_vae_forward.10} parent=39 // pred_check_branch
        %847 = sbr.rel (%p845) target = $region44
      $region43: #{timbre_vae_forward.10} parent=39 // pred_region
        _
      $region44: #{timbre_vae_forward.10} parent=39 // pred_fallthru
        _
      // Predicated region
      $region45: #{timbre_vae_forward.10} parent=39 // pred_check
        %p848 = pneg %p173
      $region46: #{timbre_vae_forward.10} parent=39 // pred_check_branch
        %850 = sbr.rel (%p848) target = $region48
      $region47: #{timbre_vae_forward.10} parent=39 // pred_region
        _
      $region48: #{timbre_vae_forward.10} parent=39 // pred_fallthru
        _
      // Predicated region
      $region49: #{timbre_vae_forward.10} parent=39 // pred_check
        %p851 = pneg %p199
      $region50: #{timbre_vae_forward.10} parent=39 // pred_check_branch
        %853 = sbr.rel (%p851) target = $region52
      $region51: #{timbre_vae_forward.10} parent=39 // pred_region
        _
      $region52: #{timbre_vae_forward.10} parent=39 // pred_fallthru
        _
    $region40: #{timbre_vae_forward.10} parent=5 // pred_fallthru
      _
    %p854 = scmp.le.s32.totalorder 2, %s14
    // Predicated region
    $region53: #{timbre_vae_forward.10} parent=5 // pred_check
      %p855 = pneg %p854
    $region54: #{timbre_vae_forward.10} parent=5 // pred_check_branch
      %857 = sbr.rel (%p855) target = $region56
    $region55: #{timbre_vae_forward.10} parent=5 // pred_region
      %s858 = ssub.s32 %s14, 2
      // Predicated region
      $region57: #{timbre_vae_forward.10} parent=55 // pred_check
        %p859 = pneg %p153
      $region58: #{timbre_vae_forward.10} parent=55 // pred_check_branch
        %861 = sbr.rel (%p859) target = $region60
      $region59: #{timbre_vae_forward.10} parent=55 // pred_region
        %p862 = scmp.lt.s32.totalorder %s20, 1
        %s863 = scalar_select %p862, %s20, 1
        %s864 = smul.addr %s863, 4
        %s865 = scalar_lea.vmem %s5, %s864
      $region60: #{timbre_vae_forward.10} parent=55 // pred_fallthru
        _
      // Predicated region
      $region61: #{timbre_vae_forward.10} parent=55 // pred_check
        %p866 = pneg %p179
      $region62: #{timbre_vae_forward.10} parent=55 // pred_check_branch
        %868 = sbr.rel (%p866) target = $region64
      $region63: #{timbre_vae_forward.10} parent=55 // pred_region
        %p869 = scmp.lt.s32.totalorder %s20, 1
        %s870 = scalar_select %p869, %s20, 1
        %s871 = scalar_lea.vmem %s6, %s870
      $region64: #{timbre_vae_forward.10} parent=55 // pred_fallthru
        _
      // Predicated region
      $region65: #{timbre_vae_forward.10} parent=55 // pred_check
        %p872 = pneg %p205
      $region66: #{timbre_vae_forward.10} parent=55 // pred_check_branch
        %874 = sbr.rel (%p872) target = $region68
      $region67: #{timbre_vae_forward.10} parent=55 // pred_region
        %p875 = scmp.lt.s32.totalorder %s20, 1
        %s876 = scalar_select %p875, %s20, 1
        %s877 = scalar_lea.vmem %s7, %s876
      $region68: #{timbre_vae_forward.10} parent=55 // pred_fallthru
        _
    $region56: #{timbre_vae_forward.10} parent=5 // pred_fallthru
      _
  $region6: #{timbre_vae_forward.10} parent=0 // loop_footer
    %s18 = sadd.s32 1, %s14
  $region7: #{timbre_vae_forward.10} parent=0 // loop_footer_branch
    %13 = sbr.rel target = $region3
  $region8: #{timbre_vae_forward.10} parent=0 // loop_exit
    _

// kernel: tile.33
$region0: #{tile.33}
  #allocation0 [shape = 's32[1]{0}', space=sflag, size = 0x4, scoped, tag = 'scoped memory for tile.33']
  %s0 = inlined_call_operand.vmem [shape: f32[16], index: 0, kind: input, shape index: {}]
  %s1 = inlined_call_operand.vmem [shape: f32[4,16], index: 1, kind: output, shape index: {}]
  // Predicated region
  $region2: #{tile.33} parent=0 // pred_check
    _
  $region3: #{tile.33} parent=0 // pred_check_branch
    %3 = sbr.rel (0) target = $region5
  $region4: #{tile.33} parent=0 // pred_region
    _
  $region5: #{tile.33} parent=0 // pred_fallthru
    _
  %v4 = vld [vmem:[%s0] ss:$0 sm:$0xff]
  %5 = vst [vmem:[%s1] sm:$0xf] %v4

// kernel: tile.38
$region0: #{tile.38}
  %s0 = inlined_call_operand.vmem [shape: f32[4,16], index: 0, kind: input, shape index: {}]
  %s1 = inlined_call_operand.vmem [shape: f32[1,64], index: 1, kind: output, shape index: {}]
  $region1: #{tile.38} parent=0
    #allocation0 [shape = 'u8[4096]{0}', space=vmem, size = 0x1000, scoped, tag = 'scoped mem for output reshape']
    #allocation1 [shape = 'u8[4096]{0}', space=vmem, size = 0x1000, scoped, tag = 'scoped mem for input reshape']
    %s3 = sshll.u32 1, 4
    %s4 = ssub.s32 %s3, 1
    %v5 = vld [vmem:[%s0] sm:%s4]
    %6 = vst [vmem:[#allocation1] sm:%s4] %v5
    %v7 = vld [vmem:[#allocation1] sm:$0x1]
    %vm8 = vcmask 130048
    %9 = vst.msk [vmem:[#allocation0] sm:$0x1] %vm8, %v7
    %s10 = scalar_lea.vmem [#allocation1], 3
    %v11 = vld [vmem:[%s10] sm:$0x1]
    %12 = vrot.lane.b32.xlu0 %v11, 48
    %v13 = vpop.permute.xlu0 %12
    %vm14 = vcmask 523648
    %15 = vst.msk [vmem:[#allocation0] sm:$0x1] %vm14, %v13
    %s16 = scalar_lea.vmem [#allocation1], 2
    %v17 = vld [vmem:[%s16] sm:$0x1]
    %18 = vrot.lane.b32.xlu0 %v17, 32
    %v19 = vpop.permute.xlu0 %18
    %vm20 = vcmask 392448
    %21 = vst.msk [vmem:[#allocation0] sm:$0x1] %vm20, %v19
    %s22 = scalar_lea.vmem [#allocation1], 1
    %v23 = vld [vmem:[%s22] sm:$0x1]
    %24 = vrot.lane.b32.xlu0 %v23, 16
    %v25 = vpop.permute.xlu0 %24
    %vm26 = vcmask 261248
    %27 = vst.msk [vmem:[#allocation0] sm:$0x1] %vm26, %v25
    %s29 = sshll.u32 1, 1
    %s30 = ssub.s32 %s29, 1
    %v32 = vld [vmem:[#allocation0] sm:%s30]
    %s33 = sshll.u32 1, 1
    %s34 = ssub.s32 %s33, 1
    %35 = vst [vmem:[%s1] sm:%s34] %v32

// kernel: timbre_vae_forward.11
$region0: #{timbre_vae_forward.11}
  #allocation0 [shape = 'u32[]', space=smem, size = 0x4, offset = 0x4, fixed_abs, tag = 'smem constant byte address 0x4 - core index']
  #allocation1 [shape = 'u32[144,128]{1,0:T(1,128)}', space=vmem, size = 0x12000, scoped, tag = 'internal scratch']
  %s0 = inlined_call_operand.vmem [shape: bf16[2,3,9,64], index: 0, kind: input, shape index: {}]
  %s1 = inlined_call_operand.vmem [shape: bf16[4,64,128], index: 1, kind: input, shape index: {}]
  %s2 = inlined_call_operand.vmem [shape: f32[1,128], index: 2, kind: input, shape index: {}]
  %s3 = inlined_call_operand.vmem [shape: f32[1,64], index: 3, kind: input, shape index: {}]
  %s4 = inlined_call_operand.vmem [shape: f32[1,64], index: 4, kind: input, shape index: {}]
  %s5 = inlined_call_operand.vmem [shape: bf16[2,2,1,128], index: 5, kind: output, shape index: {0}]
  %s6 = inlined_call_operand.vmem [shape: f32[2,1,128], index: 6, kind: output, shape index: {1}]
  %s7 = inlined_call_operand.vmem [shape: f32[2,1,128], index: 7, kind: output, shape index: {2}]
  %8 = xla_tuple %s5, %s6, %s7
  %s9 = sld [smem:[#allocation0]]
  $region69: #{timbre_vae_forward.11} parent=0
    _
  %s11 = ssub.s32 1, %s9
  %s12 = scalar_select 0, %s11, %s9
  loop: start=0, step=1, limit=4
  $region2: #{timbre_vae_forward.11} parent=0 // loop_pre_header
    _
  $region3: #{timbre_vae_forward.11} parent=0 // loop_header
    %s14 = sphi 0, %s18
    %p15 = scmp.ge.s32.totalorder %s14, 4
    %s24 = sphi 0, %s26
    %s27 = sphi 0, %s24
    %s28 = sphi 0, %s27
    %s44 = sphi 0, %s28
    %s48 = sphi 0, %s48
    %s50 = sphi 0, %s48
    %s51 = sphi 0, %s50
    %s65 = sphi 0, %s51
    %s69 = sphi 0, %s69
    %s71 = sphi 0, %s69
    %s72 = sphi 0, %s71
    %s86 = sphi 0, %s72
    %s90 = sphi 0, %s90
    %s92 = sphi 0, %s90
    %s93 = sphi 0, %s92
    %s107 = sphi 0, %s93
    %s111 = sphi 0, %s111
    %s113 = sphi 0, %s111
    %s114 = sphi 0, %s113
    %s128 = sphi 0, %s114
    %s134 = sphi 0, %s136
    %s137 = sphi 0, %s134
    %s138 = sphi 0, %s137
    %s154 = sphi 0, %s138
    %s160 = sphi 0, %s162
    %s163 = sphi 0, %s160
    %s164 = sphi 0, %s163
    %s180 = sphi 0, %s164
    %s186 = sphi 0, %s188
    %s189 = sphi 0, %s186
    %s190 = sphi 0, %s189
    %s206 = sphi 0, %s190
  $region4: #{timbre_vae_forward.11} parent=0 // loop_header_branch
    %17 = sbr.rel (%p15) target = $region8
  $region5: #{timbre_vae_forward.11} parent=0 // loop_body
    %s19 = ssub.s32 %s14, 1
    %s20 = ssub.s32 %s14, 2
    %s21 = sadd.s32 %s14, 1
    %s22 = ssub.s32 %s14, %s21
    %p23 = scmp.eq.s32.totalorder %s22, 0
    %s25 = sadd.s32 %s24, 1
    %s26 = scalar_select %p23, %s24, %s25
    %p29 = pneg %p23
    %p30 = scmp.eq.s32.totalorder %s14, 1
    %p31 = por %p29, %p30
    %p32 = scmp.ne.s32.totalorder %s24, %s27
    %p33 = scmp.eq.s32.totalorder %s14, 0
    %p34 = por %p32, %p33
    %p35 = scmp.ne.s32.totalorder %s24, %s27
    %p36 = scmp.eq.s32.totalorder %s19, 1
    %p37 = por %p35, %p36
    %p38 = scmp.ne.s32.totalorder %s27, %s28
    %p39 = scmp.eq.s32.totalorder %s19, 0
    %p40 = por %p38, %p39
    %p41 = scmp.ne.s32.totalorder %s27, %s28
    %p42 = scmp.eq.s32.totalorder %s20, 1
    %p43 = por %p41, %p42
    %p45 = scmp.ne.s32.totalorder %s28, %s44
    %p46 = scmp.eq.s32.totalorder %s20, 0
    %p47 = por %p45, %p46
    %s49 = sadd.s32 %s48, 1
    %p52 = scmp.eq.s32.totalorder %s14, 1
    %p53 = scmp.ne.s32.totalorder %s48, %s50
    %p54 = scmp.eq.s32.totalorder %s14, 0
    %p55 = por %p53, %p54
    %p56 = scmp.ne.s32.totalorder %s48, %s50
    %p57 = scmp.eq.s32.totalorder %s19, 1
    %p58 = por %p56, %p57
    %p59 = scmp.ne.s32.totalorder %s50, %s51
    %p60 = scmp.eq.s32.totalorder %s19, 0
    %p61 = por %p59, %p60
    %p62 = scmp.ne.s32.totalorder %s50, %s51
    %p63 = scmp.eq.s32.totalorder %s20, 1
    %p64 = por %p62, %p63
    %p66 = scmp.ne.s32.totalorder %s51, %s65
    %p67 = scmp.eq.s32.totalorder %s20, 0
    %p68 = por %p66, %p67
    %s70 = sadd.s32 %s69, 1
    %p73 = scmp.eq.s32.totalorder %s14, 1
    %p74 = scmp.ne.s32.totalorder %s69, %s71
    %p75 = scmp.eq.s32.totalorder %s14, 0
    %p76 = por %p74, %p75
    %p77 = scmp.ne.s32.totalorder %s69, %s71
    %p78 = scmp.eq.s32.totalorder %s19, 1
    %p79 = por %p77, %p78
    %p80 = scmp.ne.s32.totalorder %s71, %s72
    %p81 = scmp.eq.s32.totalorder %s19, 0
    %p82 = por %p80, %p81
    %p83 = scmp.ne.s32.totalorder %s71, %s72
    %p84 = scmp.eq.s32.totalorder %s20, 1
    %p85 = por %p83, %p84
    %p87 = scmp.ne.s32.totalorder %s72, %s86
    %p88 = scmp.eq.s32.totalorder %s20, 0
    %p89 = por %p87, %p88
    %s91 = sadd.s32 %s90, 1
    %p94 = scmp.eq.s32.totalorder %s14, 1
    %p95 = scmp.ne.s32.totalorder %s90, %s92
    %p96 = scmp.eq.s32.totalorder %s14, 0
    %p97 = por %p95, %p96
    %p98 = scmp.ne.s32.totalorder %s90, %s92
    %p99 = scmp.eq.s32.totalorder %s19, 1
    %p100 = por %p98, %p99
    %p101 = scmp.ne.s32.totalorder %s92, %s93
    %p102 = scmp.eq.s32.totalorder %s19, 0
    %p103 = por %p101, %p102
    %p104 = scmp.ne.s32.totalorder %s92, %s93
    %p105 = scmp.eq.s32.totalorder %s20, 1
    %p106 = por %p104, %p105
    %p108 = scmp.ne.s32.totalorder %s93, %s107
    %p109 = scmp.eq.s32.totalorder %s20, 0
    %p110 = por %p108, %p109
    %s112 = sadd.s32 %s111, 1
    %p115 = scmp.eq.s32.totalorder %s14, 1
    %p116 = scmp.ne.s32.totalorder %s111, %s113
    %p117 = scmp.eq.s32.totalorder %s14, 0
    %p118 = por %p116, %p117
    %p119 = scmp.ne.s32.totalorder %s111, %s113
    %p120 = scmp.eq.s32.totalorder %s19, 1
    %p121 = por %p119, %p120
    %p122 = scmp.ne.s32.totalorder %s113, %s114
    %p123 = scmp.eq.s32.totalorder %s19, 0
    %p124 = por %p122, %p123
    %p125 = scmp.ne.s32.totalorder %s113, %s114
    %p126 = scmp.eq.s32.totalorder %s20, 1
    %p127 = por %p125, %p126
    %p129 = scmp.ne.s32.totalorder %s114, %s128
    %p130 = scmp.eq.s32.totalorder %s20, 0
    %p131 = por %p129, %p130
    %s132 = ssub.s32 %s14, %s21
    %p133 = scmp.eq.s32.totalorder %s132, 0
    %s135 = sadd.s32 %s134, 1
    %s136 = scalar_select %p133, %s134, %s135
    %p139 = pneg %p133
    %p140 = scmp.eq.s32.totalorder %s14, 1
    %p141 = por %p139, %p140
    %p142 = scmp.ne.s32.totalorder %s134, %s137
    %p143 = scmp.eq.s32.totalorder %s14, 0
    %p144 = por %p142, %p143
    %p145 = scmp.ne.s32.totalorder %s134, %s137
    %p146 = scmp.eq.s32.totalorder %s19, 1
    %p147 = por %p145, %p146
    %p148 = scmp.ne.s32.totalorder %s137, %s138
    %p149 = scmp.eq.s32.totalorder %s19, 0
    %p150 = por %p148, %p149
    %p151 = scmp.ne.s32.totalorder %s137, %s138
    %p152 = scmp.eq.s32.totalorder %s20, 1
    %p153 = por %p151, %p152
    %p155 = scmp.ne.s32.totalorder %s138, %s154
    %p156 = scmp.eq.s32.totalorder %s20, 0
    %p157 = por %p155, %p156
    %s158 = ssub.s32 %s14, %s21
    %p159 = scmp.eq.s32.totalorder %s158, 0
    %s161 = sadd.s32 %s160, 1
    %s162 = scalar_select %p159, %s160, %s161
    %p165 = pneg %p159
    %p166 = scmp.eq.s32.totalorder %s14, 1
    %p167 = por %p165, %p166
    %p168 = scmp.ne.s32.totalorder %s160, %s163
    %p169 = scmp.eq.s32.totalorder %s14, 0
    %p170 = por %p168, %p169
    %p171 = scmp.ne.s32.totalorder %s160, %s163
    %p172 = scmp.eq.s32.totalorder %s19, 1
    %p173 = por %p171, %p172
    %p174 = scmp.ne.s32.totalorder %s163, %s164
    %p175 = scmp.eq.s32.totalorder %s19, 0
    %p176 = por %p174, %p175
    %p177 = scmp.ne.s32.totalorder %s163, %s164
    %p178 = scmp.eq.s32.totalorder %s20, 1
    %p179 = por %p177, %p178
    %p181 = scmp.ne.s32.totalorder %s164, %s180
    %p182 = scmp.eq.s32.totalorder %s20, 0
    %p183 = por %p181, %p182
    %s184 = ssub.s32 %s14, %s21
    %p185 = scmp.eq.s32.totalorder %s184, 0
    %s187 = sadd.s32 %s186, 1
    %s188 = scalar_select %p185, %s186, %s187
    %p191 = pneg %p185
    %p192 = scmp.eq.s32.totalorder %s14, 1
    %p193 = por %p191, %p192
    %p194 = scmp.ne.s32.totalorder %s186, %s189
    %p195 = scmp.eq.s32.totalorder %s14, 0
    %p196 = por %p194, %p195
    %p197 = scmp.ne.s32.totalorder %s186, %s189
    %p198 = scmp.eq.s32.totalorder %s19, 1
    %p199 = por %p197, %p198
    %p200 = scmp.ne.s32.totalorder %s189, %s190
    %p201 = scmp.eq.s32.totalorder %s19, 0
    %p202 = por %p200, %p201
    %p203 = scmp.ne.s32.totalorder %s189, %s190
    %p204 = scmp.eq.s32.totalorder %s20, 1
    %p205 = por %p203, %p204
    %p207 = scmp.ne.s32.totalorder %s190, %s206
    %p208 = scmp.eq.s32.totalorder %s20, 0
    %p209 = por %p207, %p208
    %p210 = scmp.le.s32.totalorder 1, %s14
    %p211 = scmp.lt.s32.totalorder %s14, 3
    %p212 = pnand %p210, %p211
    %p213 = pneg %p212
    // Predicated region
    $region9: #{timbre_vae_forward.11} parent=5 // pred_check
      _
    $region10: #{timbre_vae_forward.11} parent=5 // pred_check_branch
      %215 = sbr.rel (%p212) target = $region12
    $region11: #{timbre_vae_forward.11} parent=5 // pred_region
      %s216 = ssub.s32 %s14, 1
      // Predicated region
      $region13: #{timbre_vae_forward.11} parent=11 // pred_check
        %p217 = pneg %p61
      $region14: #{timbre_vae_forward.11} parent=11 // pred_check_branch
        %219 = sbr.rel (%p217) target = $region16
      $region15: #{timbre_vae_forward.11} parent=11 // pred_region
        _
      $region16: #{timbre_vae_forward.11} parent=11 // pred_fallthru
        _
      // Predicated region
      $region17: #{timbre_vae_forward.11} parent=11 // pred_check
        %p220 = pneg %p82
      $region18: #{timbre_vae_forward.11} parent=11 // pred_check_branch
        %222 = sbr.rel (%p220) target = $region20
      $region19: #{timbre_vae_forward.11} parent=11 // pred_region
        _
      $region20: #{timbre_vae_forward.11} parent=11 // pred_fallthru
        _
      // Predicated region
      $region21: #{timbre_vae_forward.11} parent=11 // pred_check
        %p223 = pneg %p103
      $region22: #{timbre_vae_forward.11} parent=11 // pred_check_branch
        %225 = sbr.rel (%p223) target = $region24
      $region23: #{timbre_vae_forward.11} parent=11 // pred_region
        _
      $region24: #{timbre_vae_forward.11} parent=11 // pred_fallthru
        _
      // Predicated region
      $region25: #{timbre_vae_forward.11} parent=11 // pred_check
        %p226 = pneg %p124
      $region26: #{timbre_vae_forward.11} parent=11 // pred_check_branch
        %228 = sbr.rel (%p226) target = $region28
      $region27: #{timbre_vae_forward.11} parent=11 // pred_region
        _
      $region28: #{timbre_vae_forward.11} parent=11 // pred_fallthru
        _
    $region12: #{timbre_vae_forward.11} parent=5 // pred_fallthru
      _
    %p229 = scmp.lt.s32.totalorder %s14, 2
    // Predicated region
    $region29: #{timbre_vae_forward.11} parent=5 // pred_check
      %p230 = pneg %p229
    $region30: #{timbre_vae_forward.11} parent=5 // pred_check_branch
      %232 = sbr.rel (%p230) target = $region32
    $region31: #{timbre_vae_forward.11} parent=5 // pred_region
      // Predicated region
      $region33: #{timbre_vae_forward.11} parent=31 // pred_check
        %p233 = pneg %p34
      $region34: #{timbre_vae_forward.11} parent=31 // pred_check_branch
        %235 = sbr.rel (%p233) target = $region36
      $region35: #{timbre_vae_forward.11} parent=31 // pred_region
        %p236 = scmp.lt.s32.totalorder %s14, 1
        %s237 = scalar_select %p236, %s14, 1
        %s238 = smul.addr %s237, 6
        %s239 = smul.addr %s238, 4
        %s240 = scalar_lea.vmem %s0, %s239
      $region36: #{timbre_vae_forward.11} parent=31 // pred_fallthru
        _
    $region32: #{timbre_vae_forward.11} parent=5 // pred_fallthru
      _
    %p241 = scmp.le.s32.totalorder 1, %s14
    %p242 = scmp.lt.s32.totalorder %s14, 3
    %p243 = pnand %p241, %p242
    %p244 = pneg %p243
    // Predicated region
    $region37: #{timbre_vae_forward.11} parent=5 // pred_check
      _
    $region38: #{timbre_vae_forward.11} parent=5 // pred_check_branch
      %246 = sbr.rel (%p243) target = $region40
    $region39: #{timbre_vae_forward.11} parent=5 // pred_region
      %s247 = ssub.s32 %s14, 1
      %p248 = scmp.lt.s32.totalorder %s19, 1
      %s249 = scalar_select %p248, %s19, 1
      %s250 = smul.addr %s249, 6
      %s251 = smul.addr %s250, 4
      %s252 = scalar_lea.vmem %s0, %s251
      %p253 = pneg %p40
      %p254 = pneg %p37
      %p255 = pneg %p61
      %p256 = pneg %p58
      %p257 = pneg %p82
      %p258 = pneg %p79
      %p259 = pneg %p103
      %p260 = pneg %p100
      %p261 = pneg %p124
      %p262 = pneg %p121
      %p263 = pneg %p150
      %p264 = pneg %p147
      %p265 = scmp.lt.s32.totalorder %s19, 1
      %s266 = scalar_select %p265, %s19, 1
      %s267 = smul.addr %s266, 2
      %s268 = scalar_lea.vmem %s5, %s267
      %p269 = pneg %p176
      %p270 = pneg %p173
      %p271 = scmp.lt.s32.totalorder %s19, 1
      %s272 = scalar_select %p271, %s19, 1
      %s273 = scalar_lea.vmem %s6, %s272
      %p274 = pneg %p202
      %p275 = pneg %p199
      %p276 = scmp.lt.s32.totalorder %s19, 1
      %s277 = scalar_select %p276, %s19, 1
      %s278 = scalar_lea.vmem %s7, %s277
      %p279 = scmp.lt.s32.totalorder %s19, 1
      %s280 = scalar_select %p279, %s19, 1
      %s281 = smul.addr %s280, 6
      %s282 = smul.addr %s281, 4
      %s283 = scalar_lea.vmem %s0, %s282
      %p284 = scmp.lt.s32.totalorder %s19, 1
      %s285 = scalar_select %p284, %s19, 1
      %s286 = smul.addr %s285, 2
      %s287 = scalar_lea.vmem %s5, %s286
      %p288 = scmp.lt.s32.totalorder %s19, 1
      %s289 = scalar_select %p288, %s19, 1
      %s290 = scalar_lea.vmem %s6, %s289
      %p291 = scmp.lt.s32.totalorder %s19, 1
      %s292 = scalar_select %p291, %s19, 1
      %s293 = scalar_lea.vmem %s7, %s292
      %v295 = vld [vmem:[%s283] sm:$0xf]
      %v296 = vld [vmem:[%s283 + $0x4] sm:$0x1]
      %v297 = vld [vmem:[%s283 + $0x8] sm:$0xf]
      %v298 = vld [vmem:[%s283 + $0xc] sm:$0x1]
      %v299 = vld [vmem:[%s283 + $0x10] sm:$0xf]
      %v300 = vld [vmem:[%s283 + $0x14] sm:$0x1]
      %v301 = vunpack.c.l.bf16 %v295
      %v302 = vunpack.c.l.bf16 %v296
      %v303 = vunpack.c.l.bf16 %v297
      %v304 = vunpack.c.l.bf16 %v298
      %v305 = vunpack.c.l.bf16 %v299
      %v306 = vunpack.c.l.bf16 %v300
      %v307 = vld [vmem:[%s3] sm:$0x1]
      %v309 = vlaneseq
      %v310 = vshrl.u32 %v309, 7
      %v311 = vsub.s32 0, %v310
      %v312 = vrot.slane %v307, %v311
      %v314 = vmul.f32 %v301, %v312
      %v315 = vmul.f32 %v302, %v312
      %v316 = vmul.f32 %v303, %v312
      %v317 = vmul.f32 %v304, %v312
      %v318 = vmul.f32 %v305, %v312
      %v319 = vmul.f32 %v306, %v312
      %v320 = vld [vmem:[%s4] sm:$0x1]
      %v322 = vlaneseq
      %v323 = vshrl.u32 %v322, 7
      %v324 = vsub.s32 0, %v323
      %v325 = vrot.slane %v320, %v324
      %v327 = vadd.f32 %v314, %v325
      %v328 = vadd.f32 %v315, %v325
      %v329 = vadd.f32 %v316, %v325
      %v330 = vadd.f32 %v317, %v325
      %v331 = vadd.f32 %v318, %v325
      %v332 = vadd.f32 %v319, %v325
      %vm333 = vcmp.gt.f32.partialorder %v327, 0.0
      %vm334 = vcmp.gt.f32.partialorder %v328, 0.0
      %vm335 = vcmp.gt.f32.partialorder %v329, 0.0
      %vm336 = vcmp.gt.f32.partialorder %v330, 0.0
      %vm337 = vcmp.gt.f32.partialorder %v331, 0.0
      %vm338 = vcmp.gt.f32.partialorder %v332, 0.0
      %v339 = vmul.f32 %v327, 0.01
      %v340 = vmul.f32 %v328, 0.01
      %v341 = vmul.f32 %v329, 0.01
      %v342 = vmul.f32 %v330, 0.01
      %v343 = vmul.f32 %v331, 0.01
      %v344 = vmul.f32 %v332, 0.01
      %v345 = vsel %vm333, %v327, %v339
      %v346 = vsel %vm334, %v328, %v340
      %v347 = vsel %vm335, %v329, %v341
      %v348 = vsel %vm336, %v330, %v342
      %v349 = vsel %vm337, %v331, %v343
      %v350 = vsel %vm338, %v332, %v344
      %v351 = vpack.c.bf16 %v347, %v345
      %v352 = vld [vmem:[%s1] sm:$0xf]
      %v353 = vld [vmem:[%s1 + $0x4] sm:$0xf]
      %v354 = vld [vmem:[%s1 + $0x8] sm:$0xf]
      %v355 = vld [vmem:[%s1 + $0xc] sm:$0xf]
      %v356 = vld [vmem:[%s1 + $0x10] sm:$0xf]
      %v357 = vld [vmem:[%s1 + $0x14] sm:$0xf]
      %v358 = vld [vmem:[%s1 + $0x18] sm:$0xf]
      %v359 = vld [vmem:[%s1 + $0x1c] sm:$0xf]
      %vm364 = vcmask 1046528
      %v365 = vrot.slane %v345, 1
      %v366 = vrot.slane %v346, 1
      %v367 = vsel %vm364, %v365, %v366
      %v368 = vrot.slane %v347, 1
      %v369 = vrot.slane %v348, 1
      %v370 = vsel %vm364, %v368, %v369
      %v373 = vpack.c.bf16 %v370, %v367
      %s374 = scalar_lea.vmem %s1, 32
      %v375 = vld [vmem:[%s374] sm:$0xf]
      %v376 = vld [vmem:[%s374 + $0x4] sm:$0xf]
      %v377 = vld [vmem:[%s374 + $0x8] sm:$0xf]
      %v378 = vld [vmem:[%s374 + $0xc] sm:$0xf]
      %v379 = vld [vmem:[%s374 + $0x10] sm:$0xf]
      %v380 = vld [vmem:[%s374 + $0x14] sm:$0xf]
      %v381 = vld [vmem:[%s374 + $0x18] sm:$0xf]
      %v382 = vld [vmem:[%s374 + $0x1c] sm:$0xf]
      %v391 = vunpack.c.l.b16 %v375
      %v392 = vunpack.c.l.b16 %v376
      %v393 = vunpack.c.l.b16 %v377
      %v394 = vunpack.c.l.b16 %v378
      %v395 = vunpack.c.l.b16 %v379
      %v396 = vunpack.c.l.b16 %v380
      %v397 = vunpack.c.l.b16 %v381
      %v398 = vunpack.c.l.b16 %v382
      %v399 = vpack.c.b16 %v392, %v391
      %v400 = vpack.c.b16 %v394, %v393
      %v401 = vpack.c.b16 %v396, %v395
      %v402 = vpack.c.b16 %v398, %v397
      %vm407 = vcmask 523264
      %v409 = vsel %vm407, %v373, 0
      %411 = vmatprep.subr.bf16.mxu0 0
      %412 = vmatpush1.bf16.msra.mxu0 0
      %413 = vmatprep.subr.bf16.mxu0 0
      %414 = vmatpush1.bf16.msra.mxu0 0
      %415 = vmatprep.subr.bf16.mxu0 0
      %416 = vmatpush1.bf16.msra.mxu0 0
      %417 = vmatprep.subr.bf16.mxu0 0
      %418 = vmatpush1.bf16.msra.mxu0 0
      %419 = vmatprep.subr.bf16.mxu0 0
      %420 = vmatpush1.bf16.msra.mxu0 %v402
      %421 = vmatprep.subr.bf16.mxu0 0
      %422 = vmatpush1.bf16.msra.mxu0 %v401
      %423 = vmatprep.subr.bf16.mxu0 0
      %424 = vmatpush1.bf16.msra.mxu0 %v400
      %425 = vmatprep.subr.bf16.mxu0 0
      %426 = vmatpush1.bf16.msra.mxu0 %v399
      %427 = vmatprep.subr.bf16.mxu0 0
      %428 = vmatpush2.bf16.msra.mxu0 0
      %429 = vmatprep.subr.bf16.mxu0 0
      %430 = vmatpush2.bf16.msra.mxu0 0
      %431 = vmatprep.subr.bf16.mxu0 0
      %432 = vmatpush2.bf16.msra.mxu0 0
      %433 = vmatprep.subr.bf16.mxu0 0
      %434 = vmatpush2.bf16.msra.mxu0 0
      %435 = vmatprep.subr.bf16.mxu0 0
      %436 = vmatpush2.bf16.msra.mxu0 0
      %437 = vmatprep.subr.bf16.mxu0 0
      %438 = vmatpush2.bf16.msra.mxu0 0
      %439 = vmatprep.subr.bf16.mxu0 0
      %440 = vmatpush2.bf16.msra.mxu0 0
      %441 = vmatprep.subr.bf16.mxu0 0
      %442 = vmatpush2.bf16.msra.mxu0 0
      %443 = vmatprep.mubr.bf16.mxu0 0
      %444 = vmatmul.mubr.bf16.gmra.mxu0 %v409
      %v445 = vpop.f32.mrf.mxu0
      %v446 = vadd.f32 0.0, %v445
      %v447 = vpop.f32.mrf.mxu0
      %v448 = vpop.f32.mrf.mxu0
      %v449 = vadd.f32 0.0, %v448
      %v450 = vpop.f32.mrf.mxu0
      %451 = vdwg.mxu0
      %v460 = vunpack.c.l.b16 %v352
      %v461 = vunpack.c.l.b16 %v353
      %v462 = vunpack.c.l.b16 %v354
      %v463 = vunpack.c.l.b16 %v355
      %v464 = vunpack.c.l.b16 %v356
      %v465 = vunpack.c.l.b16 %v357
      %v466 = vunpack.c.l.b16 %v358
      %v467 = vunpack.c.l.b16 %v359
      %v468 = vpack.c.b16 %v461, %v460
      %v469 = vpack.c.b16 %v463, %v462
      %v470 = vpack.c.b16 %v465, %v464
      %v471 = vpack.c.b16 %v467, %v466
      %v477 = vsel %vm407, %v351, 0
      %479 = vmatprep.subr.bf16.mxu0 0
      %480 = vmatpush1.bf16.msra.mxu0 0
      %481 = vmatprep.subr.bf16.mxu0 0
      %482 = vmatpush1.bf16.msra.mxu0 0
      %483 = vmatprep.subr.bf16.mxu0 0
      %484 = vmatpush1.bf16.msra.mxu0 0
      %485 = vmatprep.subr.bf16.mxu0 0
      %486 = vmatpush1.bf16.msra.mxu0 0
      %487 = vmatprep.subr.bf16.mxu0 0
      %488 = vmatpush1.bf16.msra.mxu0 %v471
      %489 = vmatprep.subr.bf16.mxu0 0
      %490 = vmatpush1.bf16.msra.mxu0 %v470
      %491 = vmatprep.subr.bf16.mxu0 0
      %492 = vmatpush1.bf16.msra.mxu0 %v469
      %493 = vmatprep.subr.bf16.mxu0 0
      %494 = vmatpush1.bf16.msra.mxu0 %v468
      %495 = vmatprep.subr.bf16.mxu0 0
      %496 = vmatpush2.bf16.msra.mxu0 0
      %497 = vmatprep.subr.bf16.mxu0 0
      %498 = vmatpush2.bf16.msra.mxu0 0
      %499 = vmatprep.subr.bf16.mxu0 0
      %500 = vmatpush2.bf16.msra.mxu0 0
      %501 = vmatprep.subr.bf16.mxu0 0
      %502 = vmatpush2.bf16.msra.mxu0 0
      %503 = vmatprep.subr.bf16.mxu0 0
      %504 = vmatpush2.bf16.msra.mxu0 0
      %505 = vmatprep.subr.bf16.mxu0 0
      %506 = vmatpush2.bf16.msra.mxu0 0
      %507 = vmatprep.subr.bf16.mxu0 0
      %508 = vmatpush2.bf16.msra.mxu0 0
      %509 = vmatprep.subr.bf16.mxu0 0
      %510 = vmatpush2.bf16.msra.mxu0 0
      %511 = vmatprep.mubr.bf16.mxu0 0
      %512 = vmatmul.mubr.bf16.gmra.mxu0 %v477
      %v513 = vpop.f32.mrf.mxu0
      %v514 = vadd.f32 %v446, %v513
      %v515 = vpop.f32.mrf.mxu0
      %v516 = vpop.f32.mrf.mxu0
      %v517 = vadd.f32 %v449, %v516
      %v518 = vpop.f32.mrf.mxu0
      %519 = vdwg.mxu0
      %v520 = vpack.c.bf16 %v349, %v347
      %s521 = scalar_lea.vmem %s1, 64
      %v522 = vld [vmem:[%s521] sm:$0xf]
      %v523 = vld [vmem:[%s521 + $0x4] sm:$0xf]
      %v524 = vld [vmem:[%s521 + $0x8] sm:$0xf]
      %v525 = vld [vmem:[%s521 + $0xc] sm:$0xf]
      %v526 = vld [vmem:[%s521 + $0x10] sm:$0xf]
      %v527 = vld [vmem:[%s521 + $0x14] sm:$0xf]
      %v528 = vld [vmem:[%s521 + $0x18] sm:$0xf]
      %v529 = vld [vmem:[%s521 + $0x1c] sm:$0xf]
      %v538 = vunpack.c.l.b16 %v522
      %v539 = vunpack.c.l.b16 %v523
      %v540 = vunpack.c.l.b16 %v524
      %v541 = vunpack.c.l.b16 %v525
      %v542 = vunpack.c.l.b16 %v526
      %v543 = vunpack.c.l.b16 %v527
      %v544 = vunpack.c.l.b16 %v528
      %v545 = vunpack.c.l.b16 %v529
      %v546 = vpack.c.b16 %v539, %v538
      %v547 = vpack.c.b16 %v541, %v540
      %v548 = vpack.c.b16 %v543, %v542
      %v549 = vpack.c.b16 %v545, %v544
      %v555 = vsel %vm407, %v520, 0
      %557 = vmatprep.subr.bf16.mxu0 0
      %558 = vmatpush1.bf16.msra.mxu0 0
      %559 = vmatprep.subr.bf16.mxu0 0
      %560 = vmatpush1.bf16.msra.mxu0 0
      %561 = vmatprep.subr.bf16.mxu0 0
      %562 = vmatpush1.bf16.msra.mxu0 0
      %563 = vmatprep.subr.bf16.mxu0 0
      %564 = vmatpush1.bf16.msra.mxu0 0
      %565 = vmatprep.subr.bf16.mxu0 0
      %566 = vmatpush1.bf16.msra.mxu0 %v549
      %567 = vmatprep.subr.bf16.mxu0 0
      %568 = vmatpush1.bf16.msra.mxu0 %v548
      %569 = vmatprep.subr.bf16.mxu0 0
      %570 = vmatpush1.bf16.msra.mxu0 %v547
      %571 = vmatprep.subr.bf16.mxu0 0
      %572 = vmatpush1.bf16.msra.mxu0 %v546
      %573 = vmatprep.subr.bf16.mxu0 0
      %574 = vmatpush2.bf16.msra.mxu0 0
      %575 = vmatprep.subr.bf16.mxu0 0
      %576 = vmatpush2.bf16.msra.mxu0 0
      %577 = vmatprep.subr.bf16.mxu0 0
      %578 = vmatpush2.bf16.msra.mxu0 0
      %579 = vmatprep.subr.bf16.mxu0 0
      %580 = vmatpush2.bf16.msra.mxu0 0
      %581 = vmatprep.subr.bf16.mxu0 0
      %582 = vmatpush2.bf16.msra.mxu0 0
      %583 = vmatprep.subr.bf16.mxu0 0
      %584 = vmatpush2.bf16.msra.mxu0 0
      %585 = vmatprep.subr.bf16.mxu0 0
      %586 = vmatpush2.bf16.msra.mxu0 0
      %587 = vmatprep.subr.bf16.mxu0 0
      %588 = vmatpush2.bf16.msra.mxu0 0
      %589 = vmatprep.mubr.bf16.mxu0 0
      %590 = vmatmul.mubr.bf16.gmra.mxu0 %v555
      %v591 = vpop.f32.mrf.mxu0
      %v592 = vadd.f32 0.0, %v591
      %v593 = vpop.f32.mrf.mxu0
      %v594 = vpop.f32.mrf.mxu0
      %v595 = vadd.f32 0.0, %v594
      %v596 = vpop.f32.mrf.mxu0
      %597 = vdwg.mxu0
      %v598 = vadd.f32 %v514, %v592
      %v599 = vadd.f32 %v517, %v595
      %v602 = vrot.slane %v349, 1
      %v603 = vrot.slane %v350, 1
      %v604 = vsel %vm364, %v602, %v603
      %v606 = vpack.c.bf16 %v604, %v370
      %s607 = scalar_lea.vmem %s1, 96
      %v608 = vld [vmem:[%s607] sm:$0xf]
      %v609 = vld [vmem:[%s607 + $0x4] sm:$0xf]
      %v610 = vld [vmem:[%s607 + $0x8] sm:$0xf]
      %v611 = vld [vmem:[%s607 + $0xc] sm:$0xf]
      %v612 = vld [vmem:[%s607 + $0x10] sm:$0xf]
      %v613 = vld [vmem:[%s607 + $0x14] sm:$0xf]
      %v614 = vld [vmem:[%s607 + $0x18] sm:$0xf]
      %v615 = vld [vmem:[%s607 + $0x1c] sm:$0xf]
      %v624 = vunpack.c.l.b16 %v608
      %v625 = vunpack.c.l.b16 %v609
      %v626 = vunpack.c.l.b16 %v610
      %v627 = vunpack.c.l.b16 %v611
      %v628 = vunpack.c.l.b16 %v612
      %v629 = vunpack.c.l.b16 %v613
      %v630 = vunpack.c.l.b16 %v614
      %v631 = vunpack.c.l.b16 %v615
      %v632 = vpack.c.b16 %v625, %v624
      %v633 = vpack.c.b16 %v627, %v626
      %v634 = vpack.c.b16 %v629, %v628
      %v635 = vpack.c.b16 %v631, %v630
      %v641 = vsel %vm407, %v606, 0
      %643 = vmatprep.subr.bf16.mxu0 0
      %644 = vmatpush1.bf16.msra.mxu0 0
      %645 = vmatprep.subr.bf16.mxu0 0
      %646 = vmatpush1.bf16.msra.mxu0 0
      %647 = vmatprep.subr.bf16.mxu0 0
      %648 = vmatpush1.bf16.msra.mxu0 0
      %649 = vmatprep.subr.bf16.mxu0 0
      %650 = vmatpush1.bf16.msra.mxu0 0
      %651 = vmatprep.subr.bf16.mxu0 0
      %652 = vmatpush1.bf16.msra.mxu0 %v635
      %653 = vmatprep.subr.bf16.mxu0 0
      %654 = vmatpush1.bf16.msra.mxu0 %v634
      %655 = vmatprep.subr.bf16.mxu0 0
      %656 = vmatpush1.bf16.msra.mxu0 %v633
      %657 = vmatprep.subr.bf16.mxu0 0
      %658 = vmatpush1.bf16.msra.mxu0 %v632
      %659 = vmatprep.subr.bf16.mxu0 0
      %660 = vmatpush2.bf16.msra.mxu0 0
      %661 = vmatprep.subr.bf16.mxu0 0
      %662 = vmatpush2.bf16.msra.mxu0 0
      %663 = vmatprep.subr.bf16.mxu0 0
      %664 = vmatpush2.bf16.msra.mxu0 0
      %665 = vmatprep.subr.bf16.mxu0 0
      %666 = vmatpush2.bf16.msra.mxu0 0
      %667 = vmatprep.subr.bf16.mxu0 0
      %668 = vmatpush2.bf16.msra.mxu0 0
      %669 = vmatprep.subr.bf16.mxu0 0
      %670 = vmatpush2.bf16.msra.mxu0 0
      %671 = vmatprep.subr.bf16.mxu0 0
      %672 = vmatpush2.bf16.msra.mxu0 0
      %673 = vmatprep.subr.bf16.mxu0 0
      %674 = vmatpush2.bf16.msra.mxu0 0
      %675 = vmatprep.mubr.bf16.mxu0 0
      %676 = vmatmul.mubr.bf16.gmra.mxu0 %v641
      %v677 = vpop.f32.mrf.mxu0
      %v678 = vadd.f32 0.0, %v677
      %v679 = vpop.f32.mrf.mxu0
      %v680 = vpop.f32.mrf.mxu0
      %v681 = vadd.f32 0.0, %v680
      %v682 = vpop.f32.mrf.mxu0
      %683 = vdwg.mxu0
      %v684 = vadd.f32 %v598, %v678
      %v685 = vadd.f32 %v599, %v681
      %v686 = vld [vmem:[%s2] sm:$0x1]
      %v688 = vlaneseq
      %v689 = vshrl.u32 %v688, 7
      %v690 = vsub.s32 0, %v689
      %v691 = vrot.slane %v686, %v690
      %v693 = vadd.f32 %v684, %v691
      %v694 = vadd.f32 %v685, %v691
      %v695 = vlaneseq
      %v696 = vshrl.u32 %v695, 7
      %v697 = vadd.s32 %v696, 8
      %vm698 = vcmp.lt.s32.totalorder %v696, 0
      %v699 = vsub.s32 0, %v696
      %v700 = vsel %vm698, %v699, %v696
      %v701 = vshrl.u32 %v700, 3
      %v702 = vand.u32 %v700, 7
      %v703 = vsub.s32 0, %v702
      %v704 = vsel %vm698, %v703, %v702
      %vm705 = vcmp.lt.s32.totalorder %v697, 0
      %v706 = vsub.s32 0, %v697
      %v707 = vsel %vm705, %v706, %v697
      %v708 = vshrl.u32 %v707, 3
      %v709 = vand.u32 %v707, 7
      %v710 = vsub.s32 0, %v709
      %v711 = vsel %vm705, %v710, %v709
      %vm712 = vcmp.ne.s32.totalorder %v704, 0
      %vm713 = vcmp.ne.s32.totalorder %v711, 0
      %vm714 = vcmp.lt.s32.totalorder %v704, 0
      %vm715 = vcmp.lt.s32.totalorder %v711, 0
      %vm716 = vmand %vm714, %vm712
      %vm717 = vmand %vm715, %vm713
      %v718 = vadd.s32 %v704, 8
      %v719 = vadd.s32 %v711, 8
      %v720 = vsel %vm716, %v718, %v704
      %v721 = vsel %vm717, %v719, %v711
      %vm722 = vcmp.lt.s32.totalorder %v720, 1
      %vm723 = vcmp.lt.s32.totalorder %v721, 1
      %v724 = vsel %vm722, 1, 0
      %v725 = vsel %vm723, 1, 0
      %vm726 = vcmp.eq.s32.totalorder %v724, 1
      %vm727 = vcmp.eq.s32.totalorder %v725, 1
      %v728 = vsel %vm726, %v693, 0.0
      %v729 = vsel %vm727, %v694, 0.0
      %v730 = vadd.f32 %v728, %v729
      %v731 = vrot.slane %v730, 4
      %v732 = vadd.f32 %v730, %v731
      %v733 = vrot.slane %v732, 2
      %v734 = vadd.f32 %v732, %v733
      %v735 = vrot.slane %v734, 1
      %v736 = vadd.f32 %v734, %v735
      %v737 = vmul.f32 %v736, 0.5
      %v738 = vsub.f32 %v693, %v737
      %v739 = vsub.f32 %v694, %v737
      %v740 = vsel %vm726, %v738, 0.0
      %v741 = vsel %vm727, %v739, 0.0
      %v742 = vmul.f32 %v740, %v740
      %v743 = vmul.f32 %v741, %v741
      %v744 = vadd.f32 %v742, %v743
      %v745 = vrot.slane %v744, 4
      %v746 = vadd.f32 %v744, %v745
      %v747 = vrot.slane %v746, 2
      %v748 = vadd.f32 %v746, %v747
      %v749 = vrot.slane %v748, 1
      %v750 = vadd.f32 %v748, %v749
      %751 = vst [vmem:[%s290] sm:$0x1] %v736
      %752 = vst [vmem:[%s293] sm:$0x1] %v750
      %v753 = vpack.c.bf16 %v693, %v693
      %v754 = vpack.c.bf16 %v694, %v694
      %vm755 = vcmask 1040384
      %vm756 = vsmask.f32 256
      %vm757 = vmand %vm755, %vm756
      %v758 = vld [vmem:[%s287] sm:$0x1]
      %v759 = vsel %vm757, %v753, %v758
      %760 = vst [vmem:[%s287] sm:$0x1] %v759
      %v761 = vld [vmem:[%s287 + $0x1] sm:$0x1]
      %v762 = vsel %vm757, %v754, %v761
      %763 = vst [vmem:[%s287 + $0x1] sm:$0x1] %v762
      %p764 = scmp.lt.s32.totalorder %s19, 1
      %s765 = scalar_select %p764, %s19, 1
      %s766 = smul.addr %s765, 2
      %s767 = scalar_lea.vmem %s5, %s766
      %p768 = scmp.lt.s32.totalorder %s19, 1
      %s769 = scalar_select %p768, %s19, 1
      %s770 = scalar_lea.vmem %s6, %s769
      %p771 = scmp.lt.s32.totalorder %s19, 1
      %s772 = scalar_select %p771, %s19, 1
      %s773 = scalar_lea.vmem %s7, %s772
      // Predicated region
      $region41: #{timbre_vae_forward.11} parent=39 // pred_check
        %p774 = pneg %p147
      $region42: #{timbre_vae_forward.11} parent=39 // pred_check_branch
        %776 = sbr.rel (%p774) target = $region44
      $region43: #{timbre_vae_forward.11} parent=39 // pred_region
        _
      $region44: #{timbre_vae_forward.11} parent=39 // pred_fallthru
        _
      // Predicated region
      $region45: #{timbre_vae_forward.11} parent=39 // pred_check
        %p777 = pneg %p173
      $region46: #{timbre_vae_forward.11} parent=39 // pred_check_branch
        %779 = sbr.rel (%p777) target = $region48
      $region47: #{timbre_vae_forward.11} parent=39 // pred_region
        _
      $region48: #{timbre_vae_forward.11} parent=39 // pred_fallthru
        _
      // Predicated region
      $region49: #{timbre_vae_forward.11} parent=39 // pred_check
        %p780 = pneg %p199
      $region50: #{timbre_vae_forward.11} parent=39 // pred_check_branch
        %782 = sbr.rel (%p780) target = $region52
      $region51: #{timbre_vae_forward.11} parent=39 // pred_region
        _
      $region52: #{timbre_vae_forward.11} parent=39 // pred_fallthru
        _
    $region40: #{timbre_vae_forward.11} parent=5 // pred_fallthru
      _
    %p783 = scmp.le.s32.totalorder 2, %s14
    // Predicated region
    $region53: #{timbre_vae_forward.11} parent=5 // pred_check
      %p784 = pneg %p783
    $region54: #{timbre_vae_forward.11} parent=5 // pred_check_branch
      %786 = sbr.rel (%p784) target = $region56
    $region55: #{timbre_vae_forward.11} parent=5 // pred_region
      %s787 = ssub.s32 %s14, 2
      // Predicated region
      $region57: #{timbre_vae_forward.11} parent=55 // pred_check
        %p788 = pneg %p153
      $region58: #{timbre_vae_forward.11} parent=55 // pred_check_branch
        %790 = sbr.rel (%p788) target = $region60
      $region59: #{timbre_vae_forward.11} parent=55 // pred_region
        %p791 = scmp.lt.s32.totalorder %s20, 1
        %s792 = scalar_select %p791, %s20, 1
        %s793 = smul.addr %s792, 2
        %s794 = scalar_lea.vmem %s5, %s793
      $region60: #{timbre_vae_forward.11} parent=55 // pred_fallthru
        _
      // Predicated region
      $region61: #{timbre_vae_forward.11} parent=55 // pred_check
        %p795 = pneg %p179
      $region62: #{timbre_vae_forward.11} parent=55 // pred_check_branch
        %797 = sbr.rel (%p795) target = $region64
      $region63: #{timbre_vae_forward.11} parent=55 // pred_region
        %p798 = scmp.lt.s32.totalorder %s20, 1
        %s799 = scalar_select %p798, %s20, 1
        %s800 = scalar_lea.vmem %s6, %s799
      $region64: #{timbre_vae_forward.11} parent=55 // pred_fallthru
        _
      // Predicated region
      $region65: #{timbre_vae_forward.11} parent=55 // pred_check
        %p801 = pneg %p205
      $region66: #{timbre_vae_forward.11} parent=55 // pred_check_branch
        %803 = sbr.rel (%p801) target = $region68
      $region67: #{timbre_vae_forward.11} parent=55 // pred_region
        %p804 = scmp.lt.s32.totalorder %s20, 1
        %s805 = scalar_select %p804, %s20, 1
        %s806 = scalar_lea.vmem %s7, %s805
      $region68: #{timbre_vae_forward.11} parent=55 // pred_fallthru
        _
    $region56: #{timbre_vae_forward.11} parent=5 // pred_fallthru
      _
  $region6: #{timbre_vae_forward.11} parent=0 // loop_footer
    %s18 = sadd.s32 1, %s14
  $region7: #{timbre_vae_forward.11} parent=0 // loop_footer_branch
    %13 = sbr.rel target = $region3
  $region8: #{timbre_vae_forward.11} parent=0 // loop_exit
    _

// kernel: timbre_vae_forward.12
$region0: #{timbre_vae_forward.12}
  #allocation0 [shape = 'u32[]', space=smem, size = 0x4, offset = 0x4, fixed_abs, tag = 'smem constant byte address 0x4 - core index']
  #allocation1 [shape = 'u32[144,128]{1,0:T(1,128)}', space=vmem, size = 0x12000, scoped, tag = 'internal scratch']
  %s0 = inlined_call_operand.vmem [shape: bf16[2,64], index: 0, kind: input, shape index: {}]
  %s1 = inlined_call_operand.vmem [shape: bf16[64,256], index: 1, kind: input, shape index: {}]
  %s2 = inlined_call_operand.vmem [shape: f32[1,256], index: 2, kind: input, shape index: {}]
  %s3 = inlined_call_operand.vmem [shape: f32[1,64], index: 3, kind: input, shape index: {}]
  %s4 = inlined_call_operand.vmem [shape: f32[1,64], index: 4, kind: input, shape index: {}]
  %s5 = inlined_call_operand.vmem [shape: f32[2,128], index: 5, kind: input, shape index: {}]
  %s6 = inlined_call_operand.hbm [shape: f32[2,128], index: 6, kind: output, shape index: {0}]
  %s7 = inlined_call_operand.hbm [shape: f32[2,128], index: 7, kind: output, shape index: {1}]
  %s8 = inlined_call_operand.vmem [shape: f32[2,128], index: 8, kind: output, shape index: {2}]
  %9 = xla_tuple %s6, %s7, %s8
  %s10 = sld [smem:[#allocation0]]
  $region50: #{timbre_vae_forward.12} parent=0
    _
  %s12 = ssub.s32 1, %s10
  %s13 = scalar_select 0, %s12, %s10
  $region1: #{timbre_vae_forward.12} parent=0
    #allocation2 [shape = 'u8[1024]{0}', space=vmem, size = 0x400, scoped, tag = 'output window, operand 0, single buffered']
    #allocation3 [shape = 's32[1]{0}', space=sflag, size = 0x4, scoped, tag = 'scoped memory for timbre_vae_forward.12']
    #allocation4 [shape = 'u8[1024]{0}', space=vmem, size = 0x400, scoped, tag = 'output window, operand 1, single buffered']
    #allocation5 [shape = 's32[1]{0}', space=sflag, size = 0x4, scoped, tag = 'scoped memory for timbre_vae_forward.12']
    %14 = vsyncpa [#allocation3], 0
    %15 = vsyncpa [#allocation5], 0
    // Predicated region
    $region2: #{timbre_vae_forward.12} parent=1 // pred_check
      _
    $region3: #{timbre_vae_forward.12} parent=1 // pred_check_branch
      %17 = sbr.rel (0) target = $region5
    $region4: #{timbre_vae_forward.12} parent=1 // pred_region
      _
    $region5: #{timbre_vae_forward.12} parent=1 // pred_fallthru
      _
    // Predicated region
    $region6: #{timbre_vae_forward.12} parent=1 // pred_check
      _
    $region7: #{timbre_vae_forward.12} parent=1 // pred_check_branch
      %19 = sbr.rel (0) target = $region9
    $region8: #{timbre_vae_forward.12} parent=1 // pred_region
      _
    $region9: #{timbre_vae_forward.12} parent=1 // pred_fallthru
      _
    // Predicated region
    $region10: #{timbre_vae_forward.12} parent=1 // pred_check
      _
    $region11: #{timbre_vae_forward.12} parent=1 // pred_check_branch
      %21 = sbr.rel (0) target = $region13
    $region12: #{timbre_vae_forward.12} parent=1 // pred_region
      _
    $region13: #{timbre_vae_forward.12} parent=1 // pred_fallthru
      _
    // Predicated region
    $region14: #{timbre_vae_forward.12} parent=1 // pred_check
      _
    $region15: #{timbre_vae_forward.12} parent=1 // pred_check_branch
      %23 = sbr.rel (0) target = $region17
    $region16: #{timbre_vae_forward.12} parent=1 // pred_region
      _
    $region17: #{timbre_vae_forward.12} parent=1 // pred_fallthru
      _
    // Predicated region
    $region18: #{timbre_vae_forward.12} parent=1 // pred_check
      _
    $region19: #{timbre_vae_forward.12} parent=1 // pred_check_branch
      %25 = sbr.rel (0) target = $region21
    $region20: #{timbre_vae_forward.12} parent=1 // pred_region
      _
    $region21: #{timbre_vae_forward.12} parent=1 // pred_fallthru
      _
    // Predicated region
    $region22: #{timbre_vae_forward.12} parent=1 // pred_check
      _
    $region23: #{timbre_vae_forward.12} parent=1 // pred_check_branch
      %27 = sbr.rel (0) target = $region25
    $region24: #{timbre_vae_forward.12} parent=1 // pred_region
      _
    $region25: #{timbre_vae_forward.12} parent=1 // pred_fallthru
      _
    %v29 = vld [vmem:[%s0] sm:$0x1]
    %v30 = vunpack.c.l.bf16 %v29
    %v31 = vld [vmem:[%s3] sm:$0x1]
    %v33 = vlaneseq
    %v34 = vshrl.u32 %v33, 7
    %v35 = vsub.s32 0, %v34
    %v36 = vrot.slane %v31, %v35
    %v38 = vmul.f32 %v30, %v36
    %v39 = vld [vmem:[%s4] sm:$0x1]
    %v41 = vlaneseq
    %v42 = vshrl.u32 %v41, 7
    %v43 = vsub.s32 0, %v42
    %v44 = vrot.slane %v39, %v43
    %v46 = vadd.f32 %v38, %v44
    %vm47 = vcmp.gt.f32.partialorder %v46, 0.0
    %v48 = vmul.f32 %v46, 0.01
    %v49 = vsel %vm47, %v46, %v48
    %v50 = vpack.c.bf16 %v49, %v49
    %v51 = vld [vmem:[%s1] sm:$0xff]
    %v52 = vld [vmem:[%s1 + $0x8] sm:$0xff]
    %v53 = vld [vmem:[%s1 + $0x10] sm:$0xff]
    %v54 = vld [vmem:[%s1 + $0x18] sm:$0xff]
    %v55 = vld [vmem:[%s1 + $0x20] sm:$0xff]
    %v56 = vld [vmem:[%s1 + $0x28] sm:$0xff]
    %v57 = vld [vmem:[%s1 + $0x30] sm:$0xff]
    %v58 = vld [vmem:[%s1 + $0x38] sm:$0xff]
    %v59 = vld [vmem:[%s2] sm:$0x3]
    %v61 = vlaneseq
    %v62 = vshrl.u32 %v61, 7
    %v63 = vsub.s32 0, %v62
    %v64 = vrot.slane %v59, %v63
    %v65 = vlaneseq
    %v66 = vshrl.u32 %v65, 7
    %v67 = vsub.s32 1, %v66
    %v68 = vrot.slane %v59, %v67
    %v79 = vunpack.c.l.b16 %v51
    %v80 = vunpack.c.h.b16 %v51
    %v81 = vunpack.c.l.b16 %v52
    %v82 = vunpack.c.h.b16 %v52
    %v83 = vunpack.c.l.b16 %v53
    %v84 = vunpack.c.h.b16 %v53
    %v85 = vunpack.c.l.b16 %v54
    %v86 = vunpack.c.h.b16 %v54
    %v87 = vunpack.c.l.b16 %v55
    %v88 = vunpack.c.h.b16 %v55
    %v89 = vunpack.c.l.b16 %v56
    %v90 = vunpack.c.h.b16 %v56
    %v91 = vunpack.c.l.b16 %v57
    %v92 = vunpack.c.h.b16 %v57
    %v93 = vunpack.c.l.b16 %v58
    %v94 = vunpack.c.h.b16 %v58
    %v95 = vpack.c.b16 %v81, %v79
    %v96 = vpack.c.b16 %v82, %v80
    %v97 = vpack.c.b16 %v85, %v83
    %v98 = vpack.c.b16 %v86, %v84
    %v99 = vpack.c.b16 %v89, %v87
    %v100 = vpack.c.b16 %v90, %v88
    %v101 = vpack.c.b16 %v93, %v91
    %v102 = vpack.c.b16 %v94, %v92
    %vm111 = vcmask 523264
    %v113 = vsel %vm111, %v50, 0
    %115 = vmatprep.subr.bf16.mxu0 0
    %116 = vmatpush1.bf16.msra.mxu0 0
    %117 = vmatprep.subr.bf16.mxu0 0
    %118 = vmatpush1.bf16.msra.mxu0 0
    %119 = vmatprep.subr.bf16.mxu0 0
    %120 = vmatpush1.bf16.msra.mxu0 0
    %121 = vmatprep.subr.bf16.mxu0 0
    %122 = vmatpush1.bf16.msra.mxu0 0
    %123 = vmatprep.subr.bf16.mxu0 %v102
    %124 = vmatpush1.bf16.msra.mxu0 %v101
    %125 = vmatprep.subr.bf16.mxu0 %v100
    %126 = vmatpush1.bf16.msra.mxu0 %v99
    %127 = vmatprep.subr.bf16.mxu0 %v98
    %128 = vmatpush1.bf16.msra.mxu0 %v97
    %129 = vmatprep.subr.bf16.mxu0 %v96
    %130 = vmatpush1.bf16.msra.mxu0 %v95
    %131 = vmatprep.subr.bf16.mxu0 0
    %132 = vmatpush2.bf16.msra.mxu0 0
    %133 = vmatprep.subr.bf16.mxu0 0
    %134 = vmatpush2.bf16.msra.mxu0 0
    %135 = vmatprep.subr.bf16.mxu0 0
    %136 = vmatpush2.bf16.msra.mxu0 0
    %137 = vmatprep.subr.bf16.mxu0 0
    %138 = vmatpush2.bf16.msra.mxu0 0
    %139 = vmatprep.subr.bf16.mxu0 0
    %140 = vmatpush2.bf16.msra.mxu0 0
    %141 = vmatprep.subr.bf16.mxu0 0
    %142 = vmatpush2.bf16.msra.mxu0 0
    %143 = vmatprep.subr.bf16.mxu0 0
    %144 = vmatpush2.bf16.msra.mxu0 0
    %145 = vmatprep.subr.bf16.mxu0 0
    %146 = vmatpush2.bf16.msra.mxu0 0
    %147 = vmatprep.mubr.bf16.mxu0 0
    %148 = vmatmul.mubr.bf16.gmra.mxu0 %v113
    %v149 = vpop.f32.mrf.mxu0
    %v150 = vadd.f32 %v64, %v149
    %v151 = vpop.f32.mrf.mxu0
    %v152 = vadd.f32 %v68, %v151
    %v153 = vpop.f32.mrf.mxu0
    %v154 = vpop.f32.mrf.mxu0
    %155 = vdwg.mxu0
    %156 = vst [vmem:[#allocation2] sm:$0x3] %v150
    %157 = vst [vmem:[#allocation4] sm:$0x3] %v152
    %v158 = vld [vmem:[%s5] sm:$0x3]
    %v159 = vmul.f32 %v152, 0.5
    %v160 = vmul.f32 %v159, 1.442695
    %v161 = vpow.pop %v160
    %v162 = vmul.f32 %v158, %v161
    %v163 = vadd.f32 %v162, %v150
    %164 = vst [vmem:[%s8] sm:$0x3] %v163
    // Predicated region
    $region26: #{timbre_vae_forward.12} parent=1 // pred_check
      _
    $region27: #{timbre_vae_forward.12} parent=1 // pred_check_branch
      %166 = sbr.rel (0) target = $region29
    $region28: #{timbre_vae_forward.12} parent=1 // pred_region
      %s168 = ssub.s32 32, 32
      %169 = vsyncadd [#allocation3], %s168
      %s171 = sshll.u32 [#allocation2], 4
      %s172 = int_to_ptr.vmem [resolvable:$true] %s171
      %174 = dma.vmem_to_hbm [thread:$0]  %s172, 32, %s6, [#allocation3]
    $region29: #{timbre_vae_forward.12} parent=1 // pred_fallthru
      _
    // Predicated region
    $region30: #{timbre_vae_forward.12} parent=1 // pred_check
      _
    $region31: #{timbre_vae_forward.12} parent=1 // pred_check_branch
      %176 = sbr.rel (0) target = $region33
    $region32: #{timbre_vae_forward.12} parent=1 // pred_region
      %s178 = ssub.s32 32, 32
      %179 = vsyncadd [#allocation5], %s178
      %s181 = sshll.u32 [#allocation4], 4
      %s182 = int_to_ptr.vmem [resolvable:$true] %s181
      %184 = dma.vmem_to_hbm [thread:$0]  %s182, 32, %s7, [#allocation5]
    $region33: #{timbre_vae_forward.12} parent=1 // pred_fallthru
      _
    // Predicated region
    $region34: #{timbre_vae_forward.12} parent=1 // pred_check
      _
    $region35: #{timbre_vae_forward.12} parent=1 // pred_check_branch
      %186 = sbr.rel (0) target = $region37
    $region36: #{timbre_vae_forward.12} parent=1 // pred_region
      _
    $region37: #{timbre_vae_forward.12} parent=1 // pred_fallthru
      _
    // Predicated region
    $region38: #{timbre_vae_forward.12} parent=1 // pred_check
      _
    $region39: #{timbre_vae_forward.12} parent=1 // pred_check_branch
      %188 = sbr.rel (0) target = $region41
    $region40: #{timbre_vae_forward.12} parent=1 // pred_region
      %189 = dma.done [#allocation3], 32
    $region41: #{timbre_vae_forward.12} parent=1 // pred_fallthru
      _
    // Predicated region
    $region42: #{timbre_vae_forward.12} parent=1 // pred_check
      _
    $region43: #{timbre_vae_forward.12} parent=1 // pred_check_branch
      %191 = sbr.rel (0) target = $region45
    $region44: #{timbre_vae_forward.12} parent=1 // pred_region
      %192 = dma.done [#allocation5], 32
    $region45: #{timbre_vae_forward.12} parent=1 // pred_fallthru
      _
    // Predicated region
    $region46: #{timbre_vae_forward.12} parent=1 // pred_check
      _
    $region47: #{timbre_vae_forward.12} parent=1 // pred_check_branch
      %194 = sbr.rel (0) target = $region49
    $region48: #{timbre_vae_forward.12} parent=1 // pred_region
      _
    $region49: #{timbre_vae_forward.12} parent=1 // pred_fallthru
      _
    %195 = vsyncpa [#allocation3], 1
    %196 = vsyncpa [#allocation5], 1

// kernel: timbre_vae_forward.13
$region0: #{timbre_vae_forward.13}
  #allocation0 [shape = 'u32[]', space=smem, size = 0x4, offset = 0x4, fixed_abs, tag = 'smem constant byte address 0x4 - core index']
  #allocation1 [shape = 'u32[144,128]{1,0:T(1,128)}', space=vmem, size = 0x12000, scoped, tag = 'internal scratch']
  %s0 = inlined_call_operand.vmem [shape: bf16[2,12], index: 0, kind: input, shape index: {}]
  %s1 = inlined_call_operand.vmem [shape: bf16[12,128], index: 1, kind: input, shape index: {}]
  %s2 = inlined_call_operand.vmem [shape: f32[1,128], index: 2, kind: input, shape index: {}]
  %s3 = inlined_call_operand.vmem [shape: bf16[2,128], index: 3, kind: output, shape index: {}]
  %s4 = sld [smem:[#allocation0]]
  $region22: #{timbre_vae_forward.13} parent=0
    _
  %s6 = ssub.s32 1, %s4
  %s7 = scalar_select 0, %s6, %s4
  // Predicated region
  $region2: #{timbre_vae_forward.13} parent=0 // pred_check
    _
  $region3: #{timbre_vae_forward.13} parent=0 // pred_check_branch
    %9 = sbr.rel (0) target = $region5
  $region4: #{timbre_vae_forward.13} parent=0 // pred_region
    _
  $region5: #{timbre_vae_forward.13} parent=0 // pred_fallthru
    _
  // Predicated region
  $region6: #{timbre_vae_forward.13} parent=0 // pred_check
    _
  $region7: #{timbre_vae_forward.13} parent=0 // pred_check_branch
    %11 = sbr.rel (0) target = $region9
  $region8: #{timbre_vae_forward.13} parent=0 // pred_region
    _
  $region9: #{timbre_vae_forward.13} parent=0 // pred_fallthru
    _
  // Predicated region
  $region10: #{timbre_vae_forward.13} parent=0 // pred_check
    _
  $region11: #{timbre_vae_forward.13} parent=0 // pred_check_branch
    %13 = sbr.rel (0) target = $region13
  $region12: #{timbre_vae_forward.13} parent=0 // pred_region
    _
  $region13: #{timbre_vae_forward.13} parent=0 // pred_fallthru
    _
  %v15 = vld [vmem:[%s0] sm:$0x1]
  %v16 = vld [vmem:[%s1] sm:$0xf]
  %v17 = vld [vmem:[%s1 + $0x4] sm:$0x3]
  %v18 = vld [vmem:[%s2] sm:$0x1]
  %v20 = vlaneseq
  %v21 = vshrl.u32 %v20, 7
  %v22 = vsub.s32 0, %v21
  %v23 = vrot.slane %v18, %v22
  %v27 = vunpack.c.l.b16 %v16
  %v28 = vunpack.c.l.b16 %v17
  %v29 = vpack.c.b16 %v28, %v27
  %vm30 = vcmask 97280
  %v32 = vsel %vm30, %v15, 0
  %vm34 = vcmask 1045504
  %v36 = vsel %vm34, %v29, 0
  %38 = vmatprep.subr.bf16.mxu0 0
  %39 = vmatpush1.bf16.msra.mxu0 0
  %40 = vmatprep.subr.bf16.mxu0 0
  %41 = vmatpush1.bf16.msra.mxu0 0
  %42 = vmatprep.subr.bf16.mxu0 0
  %43 = vmatpush1.bf16.msra.mxu0 0
  %44 = vmatprep.subr.bf16.mxu0 0
  %45 = vmatpush1.bf16.msra.mxu0 0
  %46 = vmatprep.subr.bf16.mxu0 0
  %47 = vmatpush1.bf16.msra.mxu0 0
  %48 = vmatprep.subr.bf16.mxu0 0
  %49 = vmatpush1.bf16.msra.mxu0 0
  %50 = vmatprep.subr.bf16.mxu0 0
  %51 = vmatpush1.bf16.msra.mxu0 0
  %52 = vmatprep.subr.bf16.mxu0 0
  %53 = vmatpush1.bf16.msra.mxu0 %v36
  %54 = vmatprep.subr.bf16.mxu0 0
  %55 = vmatpush2.bf16.msra.mxu0 0
  %56 = vmatprep.subr.bf16.mxu0 0
  %57 = vmatpush2.bf16.msra.mxu0 0
  %58 = vmatprep.subr.bf16.mxu0 0
  %59 = vmatpush2.bf16.msra.mxu0 0
  %60 = vmatprep.subr.bf16.mxu0 0
  %61 = vmatpush2.bf16.msra.mxu0 0
  %62 = vmatprep.subr.bf16.mxu0 0
  %63 = vmatpush2.bf16.msra.mxu0 0
  %64 = vmatprep.subr.bf16.mxu0 0
  %65 = vmatpush2.bf16.msra.mxu0 0
  %66 = vmatprep.subr.bf16.mxu0 0
  %67 = vmatpush2.bf16.msra.mxu0 0
  %68 = vmatprep.subr.bf16.mxu0 0
  %69 = vmatpush2.bf16.msra.mxu0 0
  %70 = vmatprep.mubr.bf16.mxu0 0
  %71 = vmatmul.mubr.bf16.gmra.mxu0 %v32
  %v72 = vpop.f32.mrf.mxu0
  %v73 = vadd.f32 %v23, %v72
  %v74 = vpop.f32.mrf.mxu0
  %v75 = vpop.f32.mrf.mxu0
  %v76 = vpop.f32.mrf.mxu0
  %77 = vdwg.mxu0
  %v78 = vpack.c.bf16 %v73, %v73
  %79 = vst [vmem:[%s3] sm:$0x1] %v78
  // Predicated region
  $region14: #{timbre_vae_forward.13} parent=0 // pred_check
    _
  $region15: #{timbre_vae_forward.13} parent=0 // pred_check_branch
    %81 = sbr.rel (0) target = $region17
  $region16: #{timbre_vae_forward.13} parent=0 // pred_region
    _
  $region17: #{timbre_vae_forward.13} parent=0 // pred_fallthru
    _
  // Predicated region
  $region18: #{timbre_vae_forward.13} parent=0 // pred_check
    _
  $region19: #{timbre_vae_forward.13} parent=0 // pred_check_branch
    %83 = sbr.rel (0) target = $region21
  $region20: #{timbre_vae_forward.13} parent=0 // pred_region
    _
  $region21: #{timbre_vae_forward.13} parent=0 // pred_fallthru
    _

// kernel: squeeze.18
$region0: #{squeeze.18}
  %s0 = inlined_call_operand.vmem [shape: f32[2,64], index: 0, kind: input, shape index: {}]
  %s1 = inlined_call_operand.vmem [shape: f32[8,16], index: 1, kind: output, shape index: {}]
  $region1: #{squeeze.18} parent=0
    #allocation0 [shape = 'u8[4096]{0}', space=vmem, size = 0x1000, scoped, tag = 'scoped mem for input reshape']
    %s3 = sshll.u32 1, 2
    %s4 = ssub.s32 %s3, 1
    %v5 = vld [vmem:[%s0] sm:%s4]
    %6 = vst [vmem:[#allocation0] sm:%s4] %v5
    %v7 = vld [vmem:[#allocation0] sm:$0x3]
    %vm8 = vcmask 130048
    %9 = vst.msk [vmem:[%s1] ss:$4 sm:$0x3] %vm8, %v7
    %v10 = vld [vmem:[#allocation0] sm:$0x3]
    %11 = vrot.lane.b32.xlu0 %v10, 112
    %v12 = vpop.permute.xlu0 %11
    %vm13 = vcmask 130048
    %s14 = scalar_lea.vmem %s1, 1
    %15 = vst.msk [vmem:[%s14] ss:$4 sm:$0x3] %vm13, %v12
    %v16 = vld [vmem:[#allocation0] sm:$0x3]
    %17 = vrot.lane.b32.xlu0 %v16, 96
    %v18 = vpop.permute.xlu0 %17
    %vm19 = vcmask 130048
    %s20 = scalar_lea.vmem %s1, 2
    %21 = vst.msk [vmem:[%s20] ss:$4 sm:$0x3] %vm19, %v18
    %v22 = vld [vmem:[#allocation0] sm:$0x3]
    %23 = vrot.lane.b32.xlu0 %v22, 80
    %v24 = vpop.permute.xlu0 %23
    %vm25 = vcmask 130048
    %s26 = scalar_lea.vmem %s1, 3
    %27 = vst.msk [vmem:[%s26] ss:$4 sm:$0x3] %vm25, %v24

// kernel: squeeze.20
$region0: #{squeeze.20}
  %s0 = inlined_call_operand.vmem [shape: f32[2,32], index: 0, kind: input, shape index: {}]
  %s1 = inlined_call_operand.vmem [shape: f32[8,8], index: 1, kind: output, shape index: {}]
  $region1: #{squeeze.20} parent=0
    #allocation0 [shape = 'u8[4096]{0}', space=vmem, size = 0x1000, scoped, tag = 'scoped mem for input reshape']
    %s3 = sshll.u32 1, 2
    %s4 = ssub.s32 %s3, 1
    %v5 = vld [vmem:[%s0] sm:%s4]
    %6 = vst [vmem:[#allocation0] sm:%s4] %v5
    %v7 = vld [vmem:[#allocation0] sm:$0x3]
    %vm8 = vcmask 64512
    %9 = vst.msk [vmem:[%s1] ss:$4 sm:$0x3] %vm8, %v7
    %v10 = vld [vmem:[#allocation0] sm:$0x3]
    %11 = vrot.lane.b32.xlu0 %v10, 120
    %v12 = vpop.permute.xlu0 %11
    %vm13 = vcmask 64512
    %s14 = scalar_lea.vmem %s1, 1
    %15 = vst.msk [vmem:[%s14] ss:$4 sm:$0x3] %vm13, %v12
    %v16 = vld [vmem:[#allocation0] sm:$0x3]
    %17 = vrot.lane.b32.xlu0 %v16, 112
    %v18 = vpop.permute.xlu0 %17
    %vm19 = vcmask 64512
    %s20 = scalar_lea.vmem %s1, 2
    %21 = vst.msk [vmem:[%s20] ss:$4 sm:$0x3] %vm19, %v18
    %v22 = vld [vmem:[#allocation0] sm:$0x3]
    %23 = vrot.lane.b32.xlu0 %v22, 104
    %v24 = vpop.permute.xlu0 %23
    %vm25 = vcmask 64512
    %s26 = scalar_lea.vmem %s1, 3
    %27 = vst.msk [vmem:[%s26] ss:$4 sm:$0x3] %vm25, %v24

// kernel: timbre_vae_forward.14
$region0: #{timbre_vae_forward.14}
  #allocation0 [shape = 'u32[]', space=smem, size = 0x4, offset = 0x4, fixed_abs, tag = 'smem constant byte address 0x4 - core index']
  #allocation1 [shape = 'u32[144,128]{1,0:T(1,128)}', space=vmem, size = 0x12000, scoped, tag = 'internal scratch']
  %s0 = inlined_call_operand.vmem [shape: bf16[2,3,9,32], index: 0, kind: input, shape index: {}]
  %s1 = inlined_call_operand.vmem [shape: bf16[4,32,128], index: 1, kind: input, shape index: {}]
  %s2 = inlined_call_operand.vmem [shape: f32[1,128], index: 2, kind: input, shape index: {}]
  %s3 = inlined_call_operand.vmem [shape: bf16[2,2,1,128], index: 3, kind: output, shape index: {0}]
  %s4 = inlined_call_operand.vmem [shape: f32[2,1,128], index: 4, kind: output, shape index: {1}]
  %s5 = inlined_call_operand.vmem [shape: f32[2,1,128], index: 5, kind: output, shape index: {2}]
  %6 = xla_tuple %s3, %s4, %s5
  %s7 = sld [smem:[#allocation0]]
  $region61: #{timbre_vae_forward.14} parent=0
    _
  %s9 = ssub.s32 1, %s7
  %s10 = scalar_select 0, %s9, %s7
  loop: start=0, step=1, limit=4
  $region2: #{timbre_vae_forward.14} parent=0 // loop_pre_header
    _
  $region3: #{timbre_vae_forward.14} parent=0 // loop_header
    %s12 = sphi 0, %s16
    %p13 = scmp.ge.s32.totalorder %s12, 4
    %s22 = sphi 0, %s24
    %s25 = sphi 0, %s22
    %s26 = sphi 0, %s25
    %s42 = sphi 0, %s26
    %s46 = sphi 0, %s46
    %s48 = sphi 0, %s46
    %s49 = sphi 0, %s48
    %s63 = sphi 0, %s49
    %s67 = sphi 0, %s67
    %s69 = sphi 0, %s67
    %s70 = sphi 0, %s69
    %s84 = sphi 0, %s70
    %s90 = sphi 0, %s92
    %s93 = sphi 0, %s90
    %s94 = sphi 0, %s93
    %s110 = sphi 0, %s94
    %s116 = sphi 0, %s118
    %s119 = sphi 0, %s116
    %s120 = sphi 0, %s119
    %s136 = sphi 0, %s120
    %s142 = sphi 0, %s144
    %s145 = sphi 0, %s142
    %s146 = sphi 0, %s145
    %s162 = sphi 0, %s146
  $region4: #{timbre_vae_forward.14} parent=0 // loop_header_branch
    %15 = sbr.rel (%p13) target = $region8
  $region5: #{timbre_vae_forward.14} parent=0 // loop_body
    %s17 = ssub.s32 %s12, 1
    %s18 = ssub.s32 %s12, 2
    %s19 = sadd.s32 %s12, 1
    %s20 = ssub.s32 %s12, %s19
    %p21 = scmp.eq.s32.totalorder %s20, 0
    %s23 = sadd.s32 %s22, 1
    %s24 = scalar_select %p21, %s22, %s23
    %p27 = pneg %p21
    %p28 = scmp.eq.s32.totalorder %s12, 1
    %p29 = por %p27, %p28
    %p30 = scmp.ne.s32.totalorder %s22, %s25
    %p31 = scmp.eq.s32.totalorder %s12, 0
    %p32 = por %p30, %p31
    %p33 = scmp.ne.s32.totalorder %s22, %s25
    %p34 = scmp.eq.s32.totalorder %s17, 1
    %p35 = por %p33, %p34
    %p36 = scmp.ne.s32.totalorder %s25, %s26
    %p37 = scmp.eq.s32.totalorder %s17, 0
    %p38 = por %p36, %p37
    %p39 = scmp.ne.s32.totalorder %s25, %s26
    %p40 = scmp.eq.s32.totalorder %s18, 1
    %p41 = por %p39, %p40
    %p43 = scmp.ne.s32.totalorder %s26, %s42
    %p44 = scmp.eq.s32.totalorder %s18, 0
    %p45 = por %p43, %p44
    %s47 = sadd.s32 %s46, 1
    %p50 = scmp.eq.s32.totalorder %s12, 1
    %p51 = scmp.ne.s32.totalorder %s46, %s48
    %p52 = scmp.eq.s32.totalorder %s12, 0
    %p53 = por %p51, %p52
    %p54 = scmp.ne.s32.totalorder %s46, %s48
    %p55 = scmp.eq.s32.totalorder %s17, 1
    %p56 = por %p54, %p55
    %p57 = scmp.ne.s32.totalorder %s48, %s49
    %p58 = scmp.eq.s32.totalorder %s17, 0
    %p59 = por %p57, %p58
    %p60 = scmp.ne.s32.totalorder %s48, %s49
    %p61 = scmp.eq.s32.totalorder %s18, 1
    %p62 = por %p60, %p61
    %p64 = scmp.ne.s32.totalorder %s49, %s63
    %p65 = scmp.eq.s32.totalorder %s18, 0
    %p66 = por %p64, %p65
    %s68 = sadd.s32 %s67, 1
    %p71 = scmp.eq.s32.totalorder %s12, 1
    %p72 = scmp.ne.s32.totalorder %s67, %s69
    %p73 = scmp.eq.s32.totalorder %s12, 0
    %p74 = por %p72, %p73
    %p75 = scmp.ne.s32.totalorder %s67, %s69
    %p76 = scmp.eq.s32.totalorder %s17, 1
    %p77 = por %p75, %p76
    %p78 = scmp.ne.s32.totalorder %s69, %s70
    %p79 = scmp.eq.s32.totalorder %s17, 0
    %p80 = por %p78, %p79
    %p81 = scmp.ne.s32.totalorder %s69, %s70
    %p82 = scmp.eq.s32.totalorder %s18, 1
    %p83 = por %p81, %p82
    %p85 = scmp.ne.s32.totalorder %s70, %s84
    %p86 = scmp.eq.s32.totalorder %s18, 0
    %p87 = por %p85, %p86
    %s88 = ssub.s32 %s12, %s19
    %p89 = scmp.eq.s32.totalorder %s88, 0
    %s91 = sadd.s32 %s90, 1
    %s92 = scalar_select %p89, %s90, %s91
    %p95 = pneg %p89
    %p96 = scmp.eq.s32.totalorder %s12, 1
    %p97 = por %p95, %p96
    %p98 = scmp.ne.s32.totalorder %s90, %s93
    %p99 = scmp.eq.s32.totalorder %s12, 0
    %p100 = por %p98, %p99
    %p101 = scmp.ne.s32.totalorder %s90, %s93
    %p102 = scmp.eq.s32.totalorder %s17, 1
    %p103 = por %p101, %p102
    %p104 = scmp.ne.s32.totalorder %s93, %s94
    %p105 = scmp.eq.s32.totalorder %s17, 0
    %p106 = por %p104, %p105
    %p107 = scmp.ne.s32.totalorder %s93, %s94
    %p108 = scmp.eq.s32.totalorder %s18, 1
    %p109 = por %p107, %p108
    %p111 = scmp.ne.s32.totalorder %s94, %s110
    %p112 = scmp.eq.s32.totalorder %s18, 0
    %p113 = por %p111, %p112
    %s114 = ssub.s32 %s12, %s19
    %p115 = scmp.eq.s32.totalorder %s114, 0
    %s117 = sadd.s32 %s116, 1
    %s118 = scalar_select %p115, %s116, %s117
    %p121 = pneg %p115
    %p122 = scmp.eq.s32.totalorder %s12, 1
    %p123 = por %p121, %p122
    %p124 = scmp.ne.s32.totalorder %s116, %s119
    %p125 = scmp.eq.s32.totalorder %s12, 0
    %p126 = por %p124, %p125
    %p127 = scmp.ne.s32.totalorder %s116, %s119
    %p128 = scmp.eq.s32.totalorder %s17, 1
    %p129 = por %p127, %p128
    %p130 = scmp.ne.s32.totalorder %s119, %s120
    %p131 = scmp.eq.s32.totalorder %s17, 0
    %p132 = por %p130, %p131
    %p133 = scmp.ne.s32.totalorder %s119, %s120
    %p134 = scmp.eq.s32.totalorder %s18, 1
    %p135 = por %p133, %p134
    %p137 = scmp.ne.s32.totalorder %s120, %s136
    %p138 = scmp.eq.s32.totalorder %s18, 0
    %p139 = por %p137, %p138
    %s140 = ssub.s32 %s12, %s19
    %p141 = scmp.eq.s32.totalorder %s140, 0
    %s143 = sadd.s32 %s142, 1
    %s144 = scalar_select %p141, %s142, %s143
    %p147 = pneg %p141
    %p148 = scmp.eq.s32.totalorder %s12, 1
    %p149 = por %p147, %p148
    %p150 = scmp.ne.s32.totalorder %s142, %s145
    %p151 = scmp.eq.s32.totalorder %s12, 0
    %p152 = por %p150, %p151
    %p153 = scmp.ne.s32.totalorder %s142, %s145
    %p154 = scmp.eq.s32.totalorder %s17, 1
    %p155 = por %p153, %p154
    %p156 = scmp.ne.s32.totalorder %s145, %s146
    %p157 = scmp.eq.s32.totalorder %s17, 0
    %p158 = por %p156, %p157
    %p159 = scmp.ne.s32.totalorder %s145, %s146
    %p160 = scmp.eq.s32.totalorder %s18, 1
    %p161 = por %p159, %p160
    %p163 = scmp.ne.s32.totalorder %s146, %s162
    %p164 = scmp.eq.s32.totalorder %s18, 0
    %p165 = por %p163, %p164
    %p166 = scmp.le.s32.totalorder 1, %s12
    %p167 = scmp.lt.s32.totalorder %s12, 3
    %p168 = pnand %p166, %p167
    %p169 = pneg %p168
    // Predicated region
    $region9: #{timbre_vae_forward.14} parent=5 // pred_check
      _
    $region10: #{timbre_vae_forward.14} parent=5 // pred_check_branch
      %171 = sbr.rel (%p168) target = $region12
    $region11: #{timbre_vae_forward.14} parent=5 // pred_region
      %s172 = ssub.s32 %s12, 1
      // Predicated region
      $region13: #{timbre_vae_forward.14} parent=11 // pred_check
        %p173 = pneg %p59
      $region14: #{timbre_vae_forward.14} parent=11 // pred_check_branch
        %175 = sbr.rel (%p173) target = $region16
      $region15: #{timbre_vae_forward.14} parent=11 // pred_region
        _
      $region16: #{timbre_vae_forward.14} parent=11 // pred_fallthru
        _
      // Predicated region
      $region17: #{timbre_vae_forward.14} parent=11 // pred_check
        %p176 = pneg %p80
      $region18: #{timbre_vae_forward.14} parent=11 // pred_check_branch
        %178 = sbr.rel (%p176) target = $region20
      $region19: #{timbre_vae_forward.14} parent=11 // pred_region
        _
      $region20: #{timbre_vae_forward.14} parent=11 // pred_fallthru
        _
    $region12: #{timbre_vae_forward.14} parent=5 // pred_fallthru
      _
    %p179 = scmp.lt.s32.totalorder %s12, 2
    // Predicated region
    $region21: #{timbre_vae_forward.14} parent=5 // pred_check
      %p180 = pneg %p179
    $region22: #{timbre_vae_forward.14} parent=5 // pred_check_branch
      %182 = sbr.rel (%p180) target = $region24
    $region23: #{timbre_vae_forward.14} parent=5 // pred_region
      // Predicated region
      $region25: #{timbre_vae_forward.14} parent=23 // pred_check
        %p183 = pneg %p32
      $region26: #{timbre_vae_forward.14} parent=23 // pred_check_branch
        %185 = sbr.rel (%p183) target = $region28
      $region27: #{timbre_vae_forward.14} parent=23 // pred_region
        %p186 = scmp.lt.s32.totalorder %s12, 1
        %s187 = scalar_select %p186, %s12, 1
        %s188 = smul.addr %s187, 6
        %s189 = smul.addr %s188, 4
        %s190 = scalar_lea.vmem %s0, %s189
      $region28: #{timbre_vae_forward.14} parent=23 // pred_fallthru
        _
    $region24: #{timbre_vae_forward.14} parent=5 // pred_fallthru
      _
    %p191 = scmp.le.s32.totalorder 1, %s12
    %p192 = scmp.lt.s32.totalorder %s12, 3
    %p193 = pnand %p191, %p192
    %p194 = pneg %p193
    // Predicated region
    $region29: #{timbre_vae_forward.14} parent=5 // pred_check
      _
    $region30: #{timbre_vae_forward.14} parent=5 // pred_check_branch
      %196 = sbr.rel (%p193) target = $region32
    $region31: #{timbre_vae_forward.14} parent=5 // pred_region
      %s197 = ssub.s32 %s12, 1
      %p198 = scmp.lt.s32.totalorder %s17, 1
      %s199 = scalar_select %p198, %s17, 1
      %s200 = smul.addr %s199, 6
      %s201 = smul.addr %s200, 4
      %s202 = scalar_lea.vmem %s0, %s201
      %p203 = pneg %p38
      %p204 = pneg %p35
      %p205 = pneg %p59
      %p206 = pneg %p56
      %p207 = pneg %p80
      %p208 = pneg %p77
      %p209 = pneg %p106
      %p210 = pneg %p103
      %p211 = scmp.lt.s32.totalorder %s17, 1
      %s212 = scalar_select %p211, %s17, 1
      %s213 = smul.addr %s212, 2
      %s214 = scalar_lea.vmem %s3, %s213
      %p215 = pneg %p132
      %p216 = pneg %p129
      %p217 = scmp.lt.s32.totalorder %s17, 1
      %s218 = scalar_select %p217, %s17, 1
      %s219 = scalar_lea.vmem %s4, %s218
      %p220 = pneg %p158
      %p221 = pneg %p155
      %p222 = scmp.lt.s32.totalorder %s17, 1
      %s223 = scalar_select %p222, %s17, 1
      %s224 = scalar_lea.vmem %s5, %s223
      %p225 = scmp.lt.s32.totalorder %s17, 1
      %s226 = scalar_select %p225, %s17, 1
      %s227 = smul.addr %s226, 6
      %s228 = smul.addr %s227, 4
      %s229 = scalar_lea.vmem %s0, %s228
      %p230 = scmp.lt.s32.totalorder %s17, 1
      %s231 = scalar_select %p230, %s17, 1
      %s232 = smul.addr %s231, 2
      %s233 = scalar_lea.vmem %s3, %s232
      %p234 = scmp.lt.s32.totalorder %s17, 1
      %s235 = scalar_select %p234, %s17, 1
      %s236 = scalar_lea.vmem %s4, %s235
      %p237 = scmp.lt.s32.totalorder %s17, 1
      %s238 = scalar_select %p237, %s17, 1
      %s239 = scalar_lea.vmem %s5, %s238
      %v241 = vld [vmem:[%s229] sm:$0xf]
      %v242 = vld [vmem:[%s229 + $0x4] sm:$0x1]
      %v243 = vld [vmem:[%s229 + $0x8] sm:$0xf]
      %v244 = vld [vmem:[%s229 + $0xc] sm:$0x1]
      %v245 = vld [vmem:[%s229 + $0x10] sm:$0xf]
      %v246 = vld [vmem:[%s229 + $0x14] sm:$0x1]
      %v247 = vunpack.c.l.bf16 %v241
      %v248 = vunpack.c.l.bf16 %v242
      %v249 = vunpack.c.l.bf16 %v243
      %v250 = vunpack.c.l.bf16 %v244
      %v251 = vunpack.c.l.bf16 %v245
      %v252 = vunpack.c.l.bf16 %v246
      %v253 = vpack.c.bf16 %v249, %v247
      %v254 = vld [vmem:[%s1] sm:$0xf]
      %v255 = vld [vmem:[%s1 + $0x4] sm:$0xf]
      %v256 = vld [vmem:[%s1 + $0x8] sm:$0xf]
      %v257 = vld [vmem:[%s1 + $0xc] sm:$0xf]
      %vm262 = vcmask 1046528
      %v263 = vrot.slane %v247, 1
      %v264 = vrot.slane %v248, 1
      %v265 = vsel %vm262, %v263, %v264
      %v266 = vrot.slane %v249, 1
      %v267 = vrot.slane %v250, 1
      %v268 = vsel %vm262, %v266, %v267
      %v271 = vpack.c.bf16 %v268, %v265
      %s272 = scalar_lea.vmem %s1, 16
      %v273 = vld [vmem:[%s272] sm:$0xf]
      %v274 = vld [vmem:[%s272 + $0x4] sm:$0xf]
      %v275 = vld [vmem:[%s272 + $0x8] sm:$0xf]
      %v276 = vld [vmem:[%s272 + $0xc] sm:$0xf]
      %v281 = vunpack.c.l.b16 %v273
      %v282 = vunpack.c.l.b16 %v274
      %v283 = vunpack.c.l.b16 %v275
      %v284 = vunpack.c.l.b16 %v276
      %v285 = vpack.c.b16 %v282, %v281
      %v286 = vpack.c.b16 %v284, %v283
      %vm289 = vcmask 261120
      %v291 = vsel %vm289, %v271, 0
      %293 = vmatprep.subr.bf16.mxu0 0
      %294 = vmatpush1.bf16.msra.mxu0 0
      %295 = vmatprep.subr.bf16.mxu0 0
      %296 = vmatpush1.bf16.msra.mxu0 0
      %297 = vmatprep.subr.bf16.mxu0 0
      %298 = vmatpush1.bf16.msra.mxu0 0
      %299 = vmatprep.subr.bf16.mxu0 0
      %300 = vmatpush1.bf16.msra.mxu0 0
      %301 = vmatprep.subr.bf16.mxu0 0
      %302 = vmatpush1.bf16.msra.mxu0 0
      %303 = vmatprep.subr.bf16.mxu0 0
      %304 = vmatpush1.bf16.msra.mxu0 0
      %305 = vmatprep.subr.bf16.mxu0 0
      %306 = vmatpush1.bf16.msra.mxu0 %v286
      %307 = vmatprep.subr.bf16.mxu0 0
      %308 = vmatpush1.bf16.msra.mxu0 %v285
      %309 = vmatprep.subr.bf16.mxu0 0
      %310 = vmatpush2.bf16.msra.mxu0 0
      %311 = vmatprep.subr.bf16.mxu0 0
      %312 = vmatpush2.bf16.msra.mxu0 0
      %313 = vmatprep.subr.bf16.mxu0 0
      %314 = vmatpush2.bf16.msra.mxu0 0
      %315 = vmatprep.subr.bf16.mxu0 0
      %316 = vmatpush2.bf16.msra.mxu0 0
      %317 = vmatprep.subr.bf16.mxu0 0
      %318 = vmatpush2.bf16.msra.mxu0 0
      %319 = vmatprep.subr.bf16.mxu0 0
      %320 = vmatpush2.bf16.msra.mxu0 0
      %321 = vmatprep.subr.bf16.mxu0 0
      %322 = vmatpush2.bf16.msra.mxu0 0
      %323 = vmatprep.subr.bf16.mxu0 0
      %324 = vmatpush2.bf16.msra.mxu0 0
      %325 = vmatprep.mubr.bf16.mxu0 0
      %326 = vmatmul.mubr.bf16.gmra.mxu0 %v291
      %v327 = vpop.f32.mrf.mxu0
      %v328 = vadd.f32 0.0, %v327
      %v329 = vpop.f32.mrf.mxu0
      %v330 = vpop.f32.mrf.mxu0
      %v331 = vadd.f32 0.0, %v330
      %v332 = vpop.f32.mrf.mxu0
      %333 = vdwg.mxu0
      %v338 = vunpack.c.l.b16 %v254
      %v339 = vunpack.c.l.b16 %v255
      %v340 = vunpack.c.l.b16 %v256
      %v341 = vunpack.c.l.b16 %v257
      %v342 = vpack.c.b16 %v339, %v338
      %v343 = vpack.c.b16 %v341, %v340
      %v347 = vsel %vm289, %v253, 0
      %349 = vmatprep.subr.bf16.mxu0 0
      %350 = vmatpush1.bf16.msra.mxu0 0
      %351 = vmatprep.subr.bf16.mxu0 0
      %352 = vmatpush1.bf16.msra.mxu0 0
      %353 = vmatprep.subr.bf16.mxu0 0
      %354 = vmatpush1.bf16.msra.mxu0 0
      %355 = vmatprep.subr.bf16.mxu0 0
      %356 = vmatpush1.bf16.msra.mxu0 0
      %357 = vmatprep.subr.bf16.mxu0 0
      %358 = vmatpush1.bf16.msra.mxu0 0
      %359 = vmatprep.subr.bf16.mxu0 0
      %360 = vmatpush1.bf16.msra.mxu0 0
      %361 = vmatprep.subr.bf16.mxu0 0
      %362 = vmatpush1.bf16.msra.mxu0 %v343
      %363 = vmatprep.subr.bf16.mxu0 0
      %364 = vmatpush1.bf16.msra.mxu0 %v342
      %365 = vmatprep.subr.bf16.mxu0 0
      %366 = vmatpush2.bf16.msra.mxu0 0
      %367 = vmatprep.subr.bf16.mxu0 0
      %368 = vmatpush2.bf16.msra.mxu0 0
      %369 = vmatprep.subr.bf16.mxu0 0
      %370 = vmatpush2.bf16.msra.mxu0 0
      %371 = vmatprep.subr.bf16.mxu0 0
      %372 = vmatpush2.bf16.msra.mxu0 0
      %373 = vmatprep.subr.bf16.mxu0 0
      %374 = vmatpush2.bf16.msra.mxu0 0
      %375 = vmatprep.subr.bf16.mxu0 0
      %376 = vmatpush2.bf16.msra.mxu0 0
      %377 = vmatprep.subr.bf16.mxu0 0
      %378 = vmatpush2.bf16.msra.mxu0 0
      %379 = vmatprep.subr.bf16.mxu0 0
      %380 = vmatpush2.bf16.msra.mxu0 0
      %381 = vmatprep.mubr.bf16.mxu0 0
      %382 = vmatmul.mubr.bf16.gmra.mxu0 %v347
      %v383 = vpop.f32.mrf.mxu0
      %v384 = vadd.f32 %v328, %v383
      %v385 = vpop.f32.mrf.mxu0
      %v386 = vpop.f32.mrf.mxu0
      %v387 = vadd.f32 %v331, %v386
      %v388 = vpop.f32.mrf.mxu0
      %389 = vdwg.mxu0
      %v390 = vpack.c.bf16 %v251, %v249
      %s391 = scalar_lea.vmem %s1, 32
      %v392 = vld [vmem:[%s391] sm:$0xf]
      %v393 = vld [vmem:[%s391 + $0x4] sm:$0xf]
      %v394 = vld [vmem:[%s391 + $0x8] sm:$0xf]
      %v395 = vld [vmem:[%s391 + $0xc] sm:$0xf]
      %v400 = vunpack.c.l.b16 %v392
      %v401 = vunpack.c.l.b16 %v393
      %v402 = vunpack.c.l.b16 %v394
      %v403 = vunpack.c.l.b16 %v395
      %v404 = vpack.c.b16 %v401, %v400
      %v405 = vpack.c.b16 %v403, %v402
      %v409 = vsel %vm289, %v390, 0
      %411 = vmatprep.subr.bf16.mxu0 0
      %412 = vmatpush1.bf16.msra.mxu0 0
      %413 = vmatprep.subr.bf16.mxu0 0
      %414 = vmatpush1.bf16.msra.mxu0 0
      %415 = vmatprep.subr.bf16.mxu0 0
      %416 = vmatpush1.bf16.msra.mxu0 0
      %417 = vmatprep.subr.bf16.mxu0 0
      %418 = vmatpush1.bf16.msra.mxu0 0
      %419 = vmatprep.subr.bf16.mxu0 0
      %420 = vmatpush1.bf16.msra.mxu0 0
      %421 = vmatprep.subr.bf16.mxu0 0
      %422 = vmatpush1.bf16.msra.mxu0 0
      %423 = vmatprep.subr.bf16.mxu0 0
      %424 = vmatpush1.bf16.msra.mxu0 %v405
      %425 = vmatprep.subr.bf16.mxu0 0
      %426 = vmatpush1.bf16.msra.mxu0 %v404
      %427 = vmatprep.subr.bf16.mxu0 0
      %428 = vmatpush2.bf16.msra.mxu0 0
      %429 = vmatprep.subr.bf16.mxu0 0
      %430 = vmatpush2.bf16.msra.mxu0 0
      %431 = vmatprep.subr.bf16.mxu0 0
      %432 = vmatpush2.bf16.msra.mxu0 0
      %433 = vmatprep.subr.bf16.mxu0 0
      %434 = vmatpush2.bf16.msra.mxu0 0
      %435 = vmatprep.subr.bf16.mxu0 0
      %436 = vmatpush2.bf16.msra.mxu0 0
      %437 = vmatprep.subr.bf16.mxu0 0
      %438 = vmatpush2.bf16.msra.mxu0 0
      %439 = vmatprep.subr.bf16.mxu0 0
      %440 = vmatpush2.bf16.msra.mxu0 0
      %441 = vmatprep.subr.bf16.mxu0 0
      %442 = vmatpush2.bf16.msra.mxu0 0
      %443 = vmatprep.mubr.bf16.mxu0 0
      %444 = vmatmul.mubr.bf16.gmra.mxu0 %v409
      %v445 = vpop.f32.mrf.mxu0
      %v446 = vadd.f32 0.0, %v445
      %v447 = vpop.f32.mrf.mxu0
      %v448 = vpop.f32.mrf.mxu0
      %v449 = vadd.f32 0.0, %v448
      %v450 = vpop.f32.mrf.mxu0
      %451 = vdwg.mxu0
      %v452 = vadd.f32 %v384, %v446
      %v453 = vadd.f32 %v387, %v449
      %v456 = vrot.slane %v251, 1
      %v457 = vrot.slane %v252, 1
      %v458 = vsel %vm262, %v456, %v457
      %v460 = vpack.c.bf16 %v458, %v268
      %s461 = scalar_lea.vmem %s1, 48
      %v462 = vld [vmem:[%s461] sm:$0xf]
      %v463 = vld [vmem:[%s461 + $0x4] sm:$0xf]
      %v464 = vld [vmem:[%s461 + $0x8] sm:$0xf]
      %v465 = vld [vmem:[%s461 + $0xc] sm:$0xf]
      %v470 = vunpack.c.l.b16 %v462
      %v471 = vunpack.c.l.b16 %v463
      %v472 = vunpack.c.l.b16 %v464
      %v473 = vunpack.c.l.b16 %v465
      %v474 = vpack.c.b16 %v471, %v470
      %v475 = vpack.c.b16 %v473, %v472
      %v479 = vsel %vm289, %v460, 0
      %481 = vmatprep.subr.bf16.mxu0 0
      %482 = vmatpush1.bf16.msra.mxu0 0
      %483 = vmatprep.subr.bf16.mxu0 0
      %484 = vmatpush1.bf16.msra.mxu0 0
      %485 = vmatprep.subr.bf16.mxu0 0
      %486 = vmatpush1.bf16.msra.mxu0 0
      %487 = vmatprep.subr.bf16.mxu0 0
      %488 = vmatpush1.bf16.msra.mxu0 0
      %489 = vmatprep.subr.bf16.mxu0 0
      %490 = vmatpush1.bf16.msra.mxu0 0
      %491 = vmatprep.subr.bf16.mxu0 0
      %492 = vmatpush1.bf16.msra.mxu0 0
      %493 = vmatprep.subr.bf16.mxu0 0
      %494 = vmatpush1.bf16.msra.mxu0 %v475
      %495 = vmatprep.subr.bf16.mxu0 0
      %496 = vmatpush1.bf16.msra.mxu0 %v474
      %497 = vmatprep.subr.bf16.mxu0 0
      %498 = vmatpush2.bf16.msra.mxu0 0
      %499 = vmatprep.subr.bf16.mxu0 0
      %500 = vmatpush2.bf16.msra.mxu0 0
      %501 = vmatprep.subr.bf16.mxu0 0
      %502 = vmatpush2.bf16.msra.mxu0 0
      %503 = vmatprep.subr.bf16.mxu0 0
      %504 = vmatpush2.bf16.msra.mxu0 0
      %505 = vmatprep.subr.bf16.mxu0 0
      %506 = vmatpush2.bf16.msra.mxu0 0
      %507 = vmatprep.subr.bf16.mxu0 0
      %508 = vmatpush2.bf16.msra.mxu0 0
      %509 = vmatprep.subr.bf16.mxu0 0
      %510 = vmatpush2.bf16.msra.mxu0 0
      %511 = vmatprep.subr.bf16.mxu0 0
      %512 = vmatpush2.bf16.msra.mxu0 0
      %513 = vmatprep.mubr.bf16.mxu0 0
      %514 = vmatmul.mubr.bf16.gmra.mxu0 %v479
      %v515 = vpop.f32.mrf.mxu0
      %v516 = vadd.f32 0.0, %v515
      %v517 = vpop.f32.mrf.mxu0
      %v518 = vpop.f32.mrf.mxu0
      %v519 = vadd.f32 0.0, %v518
      %v520 = vpop.f32.mrf.mxu0
      %521 = vdwg.mxu0
      %v522 = vadd.f32 %v452, %v516
      %v523 = vadd.f32 %v453, %v519
      %v524 = vld [vmem:[%s2] sm:$0x1]
      %v526 = vlaneseq
      %v527 = vshrl.u32 %v526, 7
      %v528 = vsub.s32 0, %v527
      %v529 = vrot.slane %v524, %v528
      %v531 = vadd.f32 %v522, %v529
      %v532 = vadd.f32 %v523, %v529
      %v533 = vlaneseq
      %v534 = vshrl.u32 %v533, 7
      %v535 = vadd.s32 %v534, 8
      %vm536 = vcmp.lt.s32.totalorder %v534, 0
      %v537 = vsub.s32 0, %v534
      %v538 = vsel %vm536, %v537, %v534
      %v539 = vshrl.u32 %v538, 3
      %v540 = vand.u32 %v538, 7
      %v541 = vsub.s32 0, %v540
      %v542 = vsel %vm536, %v541, %v540
      %vm543 = vcmp.lt.s32.totalorder %v535, 0
      %v544 = vsub.s32 0, %v535
      %v545 = vsel %vm543, %v544, %v535
      %v546 = vshrl.u32 %v545, 3
      %v547 = vand.u32 %v545, 7
      %v548 = vsub.s32 0, %v547
      %v549 = vsel %vm543, %v548, %v547
      %vm550 = vcmp.ne.s32.totalorder %v542, 0
      %vm551 = vcmp.ne.s32.totalorder %v549, 0
      %vm552 = vcmp.lt.s32.totalorder %v542, 0
      %vm553 = vcmp.lt.s32.totalorder %v549, 0
      %vm554 = vmand %vm552, %vm550
      %vm555 = vmand %vm553, %vm551
      %v556 = vadd.s32 %v542, 8
      %v557 = vadd.s32 %v549, 8
      %v558 = vsel %vm554, %v556, %v542
      %v559 = vsel %vm555, %v557, %v549
      %vm560 = vcmp.lt.s32.totalorder %v558, 1
      %vm561 = vcmp.lt.s32.totalorder %v559, 1
      %v562 = vsel %vm560, 1, 0
      %v563 = vsel %vm561, 1, 0
      %vm564 = vcmp.eq.s32.totalorder %v562, 1
      %vm565 = vcmp.eq.s32.totalorder %v563, 1
      %v566 = vsel %vm564, %v531, 0.0
      %v567 = vsel %vm565, %v532, 0.0
      %v568 = vadd.f32 %v566, %v567
      %v569 = vrot.slane %v568, 4
      %v570 = vadd.f32 %v568, %v569
      %v571 = vrot.slane %v570, 2
      %v572 = vadd.f32 %v570, %v571
      %v573 = vrot.slane %v572, 1
      %v574 = vadd.f32 %v572, %v573
      %v575 = vmul.f32 %v574, 0.5
      %v576 = vsub.f32 %v531, %v575
      %v577 = vsub.f32 %v532, %v575
      %v578 = vsel %vm564, %v576, 0.0
      %v579 = vsel %vm565, %v577, 0.0
      %v580 = vmul.f32 %v578, %v578
      %v581 = vmul.f32 %v579, %v579
      %v582 = vadd.f32 %v580, %v581
      %v583 = vrot.slane %v582, 4
      %v584 = vadd.f32 %v582, %v583
      %v585 = vrot.slane %v584, 2
      %v586 = vadd.f32 %v584, %v585
      %v587 = vrot.slane %v586, 1
      %v588 = vadd.f32 %v586, %v587
      %589 = vst [vmem:[%s236] sm:$0x1] %v574
      %590 = vst [vmem:[%s239] sm:$0x1] %v588
      %v591 = vpack.c.bf16 %v531, %v531
      %v592 = vpack.c.bf16 %v532, %v532
      %vm593 = vcmask 1040384
      %vm594 = vsmask.f32 256
      %vm595 = vmand %vm593, %vm594
      %v596 = vld [vmem:[%s233] sm:$0x1]
      %v597 = vsel %vm595, %v591, %v596
      %598 = vst [vmem:[%s233] sm:$0x1] %v597
      %v599 = vld [vmem:[%s233 + $0x1] sm:$0x1]
      %v600 = vsel %vm595, %v592, %v599
      %601 = vst [vmem:[%s233 + $0x1] sm:$0x1] %v600
      %p602 = scmp.lt.s32.totalorder %s17, 1
      %s603 = scalar_select %p602, %s17, 1
      %s604 = smul.addr %s603, 2
      %s605 = scalar_lea.vmem %s3, %s604
      %p606 = scmp.lt.s32.totalorder %s17, 1
      %s607 = scalar_select %p606, %s17, 1
      %s608 = scalar_lea.vmem %s4, %s607
      %p609 = scmp.lt.s32.totalorder %s17, 1
      %s610 = scalar_select %p609, %s17, 1
      %s611 = scalar_lea.vmem %s5, %s610
      // Predicated region
      $region33: #{timbre_vae_forward.14} parent=31 // pred_check
        %p612 = pneg %p103
      $region34: #{timbre_vae_forward.14} parent=31 // pred_check_branch
        %614 = sbr.rel (%p612) target = $region36
      $region35: #{timbre_vae_forward.14} parent=31 // pred_region
        _
      $region36: #{timbre_vae_forward.14} parent=31 // pred_fallthru
        _
      // Predicated region
      $region37: #{timbre_vae_forward.14} parent=31 // pred_check
        %p615 = pneg %p129
      $region38: #{timbre_vae_forward.14} parent=31 // pred_check_branch
        %617 = sbr.rel (%p615) target = $region40
      $region39: #{timbre_vae_forward.14} parent=31 // pred_region
        _
      $region40: #{timbre_vae_forward.14} parent=31 // pred_fallthru
        _
      // Predicated region
      $region41: #{timbre_vae_forward.14} parent=31 // pred_check
        %p618 = pneg %p155
      $region42: #{timbre_vae_forward.14} parent=31 // pred_check_branch
        %620 = sbr.rel (%p618) target = $region44
      $region43: #{timbre_vae_forward.14} parent=31 // pred_region
        _
      $region44: #{timbre_vae_forward.14} parent=31 // pred_fallthru
        _
    $region32: #{timbre_vae_forward.14} parent=5 // pred_fallthru
      _
    %p621 = scmp.le.s32.totalorder 2, %s12
    // Predicated region
    $region45: #{timbre_vae_forward.14} parent=5 // pred_check
      %p622 = pneg %p621
    $region46: #{timbre_vae_forward.14} parent=5 // pred_check_branch
      %624 = sbr.rel (%p622) target = $region48
    $region47: #{timbre_vae_forward.14} parent=5 // pred_region
      %s625 = ssub.s32 %s12, 2
      // Predicated region
      $region49: #{timbre_vae_forward.14} parent=47 // pred_check
        %p626 = pneg %p109
      $region50: #{timbre_vae_forward.14} parent=47 // pred_check_branch
        %628 = sbr.rel (%p626) target = $region52
      $region51: #{timbre_vae_forward.14} parent=47 // pred_region
        %p629 = scmp.lt.s32.totalorder %s18, 1
        %s630 = scalar_select %p629, %s18, 1
        %s631 = smul.addr %s630, 2
        %s632 = scalar_lea.vmem %s3, %s631
      $region52: #{timbre_vae_forward.14} parent=47 // pred_fallthru
        _
      // Predicated region
      $region53: #{timbre_vae_forward.14} parent=47 // pred_check
        %p633 = pneg %p135
      $region54: #{timbre_vae_forward.14} parent=47 // pred_check_branch
        %635 = sbr.rel (%p633) target = $region56
      $region55: #{timbre_vae_forward.14} parent=47 // pred_region
        %p636 = scmp.lt.s32.totalorder %s18, 1
        %s637 = scalar_select %p636, %s18, 1
        %s638 = scalar_lea.vmem %s4, %s637
      $region56: #{timbre_vae_forward.14} parent=47 // pred_fallthru
        _
      // Predicated region
      $region57: #{timbre_vae_forward.14} parent=47 // pred_check
        %p639 = pneg %p161
      $region58: #{timbre_vae_forward.14} parent=47 // pred_check_branch
        %641 = sbr.rel (%p639) target = $region60
      $region59: #{timbre_vae_forward.14} parent=47 // pred_region
        %p642 = scmp.lt.s32.totalorder %s18, 1
        %s643 = scalar_select %p642, %s18, 1
        %s644 = scalar_lea.vmem %s5, %s643
      $region60: #{timbre_vae_forward.14} parent=47 // pred_fallthru
        _
    $region48: #{timbre_vae_forward.14} parent=5 // pred_fallthru
      _
  $region6: #{timbre_vae_forward.14} parent=0 // loop_footer
    %s16 = sadd.s32 1, %s12
  $region7: #{timbre_vae_forward.14} parent=0 // loop_footer_branch
    %11 = sbr.rel target = $region3
  $region8: #{timbre_vae_forward.14} parent=0 // loop_exit
    _

// kernel: timbre_vae_forward.15
$region0: #{timbre_vae_forward.15}
  #allocation0 [shape = 'u32[]', space=smem, size = 0x4, offset = 0x4, fixed_abs, tag = 'smem constant byte address 0x4 - core index']
  #allocation1 [shape = 'u32[144,128]{1,0:T(1,128)}', space=vmem, size = 0x12000, scoped, tag = 'internal scratch']
  %s0 = inlined_call_operand.vmem [shape: bf16[2,5,9,16], index: 0, kind: input, shape index: {}]
  %s1 = inlined_call_operand.vmem [shape: bf16[4,16,128], index: 1, kind: input, shape index: {}]
  %s2 = inlined_call_operand.vmem [shape: f32[1,128], index: 2, kind: input, shape index: {}]
  %s3 = inlined_call_operand.vmem [shape: f32[1,16], index: 3, kind: input, shape index: {}]
  %s4 = inlined_call_operand.vmem [shape: f32[1,16], index: 4, kind: input, shape index: {}]
  %s5 = inlined_call_operand.vmem [shape: bf16[2,4,2,128], index: 5, kind: output, shape index: {0}]
  %s6 = inlined_call_operand.vmem [shape: f32[2,1,128], index: 6, kind: output, shape index: {1}]
  %s7 = inlined_call_operand.vmem [shape: f32[2,1,128], index: 7, kind: output, shape index: {2}]
  %8 = xla_tuple %s5, %s6, %s7
  %s9 = sld [smem:[#allocation0]]
  $region69: #{timbre_vae_forward.15} parent=0
    _
  %s11 = ssub.s32 1, %s9
  %s12 = scalar_select 0, %s11, %s9
  loop: start=0, step=1, limit=4
  $region2: #{timbre_vae_forward.15} parent=0 // loop_pre_header
    _
  $region3: #{timbre_vae_forward.15} parent=0 // loop_header
    %s14 = sphi 0, %s18
    %p15 = scmp.ge.s32.totalorder %s14, 4
    %s24 = sphi 0, %s26
    %s27 = sphi 0, %s24
    %s28 = sphi 0, %s27
    %s44 = sphi 0, %s28
    %s48 = sphi 0, %s48
    %s50 = sphi 0, %s48
    %s51 = sphi 0, %s50
    %s65 = sphi 0, %s51
    %s69 = sphi 0, %s69
    %s71 = sphi 0, %s69
    %s72 = sphi 0, %s71
    %s86 = sphi 0, %s72
    %s90 = sphi 0, %s90
    %s92 = sphi 0, %s90
    %s93 = sphi 0, %s92
    %s107 = sphi 0, %s93
    %s111 = sphi 0, %s111
    %s113 = sphi 0, %s111
    %s114 = sphi 0, %s113
    %s128 = sphi 0, %s114
    %s134 = sphi 0, %s136
    %s137 = sphi 0, %s134
    %s138 = sphi 0, %s137
    %s154 = sphi 0, %s138
    %s160 = sphi 0, %s162
    %s163 = sphi 0, %s160
    %s164 = sphi 0, %s163
    %s180 = sphi 0, %s164
    %s186 = sphi 0, %s188
    %s189 = sphi 0, %s186
    %s190 = sphi 0, %s189
    %s206 = sphi 0, %s190
  $region4: #{timbre_vae_forward.15} parent=0 // loop_header_branch
    %17 = sbr.rel (%p15) target = $region8
  $region5: #{timbre_vae_forward.15} parent=0 // loop_body
    %s19 = ssub.s32 %s14, 1
    %s20 = ssub.s32 %s14, 2
    %s21 = sadd.s32 %s14, 1
    %s22 = ssub.s32 %s14, %s21
    %p23 = scmp.eq.s32.totalorder %s22, 0
    %s25 = sadd.s32 %s24, 1
    %s26 = scalar_select %p23, %s24, %s25
    %p29 = pneg %p23
    %p30 = scmp.eq.s32.totalorder %s14, 1
    %p31 = por %p29, %p30
    %p32 = scmp.ne.s32.totalorder %s24, %s27
    %p33 = scmp.eq.s32.totalorder %s14, 0
    %p34 = por %p32, %p33
    %p35 = scmp.ne.s32.totalorder %s24, %s27
    %p36 = scmp.eq.s32.totalorder %s19, 1
    %p37 = por %p35, %p36
    %p38 = scmp.ne.s32.totalorder %s27, %s28
    %p39 = scmp.eq.s32.totalorder %s19, 0
    %p40 = por %p38, %p39
    %p41 = scmp.ne.s32.totalorder %s27, %s28
    %p42 = scmp.eq.s32.totalorder %s20, 1
    %p43 = por %p41, %p42
    %p45 = scmp.ne.s32.totalorder %s28, %s44
    %p46 = scmp.eq.s32.totalorder %s20, 0
    %p47 = por %p45, %p46
    %s49 = sadd.s32 %s48, 1
    %p52 = scmp.eq.s32.totalorder %s14, 1
    %p53 = scmp.ne.s32.totalorder %s48, %s50
    %p54 = scmp.eq.s32.totalorder %s14, 0
    %p55 = por %p53, %p54
    %p56 = scmp.ne.s32.totalorder %s48, %s50
    %p57 = scmp.eq.s32.totalorder %s19, 1
    %p58 = por %p56, %p57
    %p59 = scmp.ne.s32.totalorder %s50, %s51
    %p60 = scmp.eq.s32.totalorder %s19, 0
    %p61 = por %p59, %p60
    %p62 = scmp.ne.s32.totalorder %s50, %s51
    %p63 = scmp.eq.s32.totalorder %s20, 1
    %p64 = por %p62, %p63
    %p66 = scmp.ne.s32.totalorder %s51, %s65
    %p67 = scmp.eq.s32.totalorder %s20, 0
    %p68 = por %p66, %p67
    %s70 = sadd.s32 %s69, 1
    %p73 = scmp.eq.s32.totalorder %s14, 1
    %p74 = scmp.ne.s32.totalorder %s69, %s71
    %p75 = scmp.eq.s32.totalorder %s14, 0
    %p76 = por %p74, %p75
    %p77 = scmp.ne.s32.totalorder %s69, %s71
    %p78 = scmp.eq.s32.totalorder %s19, 1
    %p79 = por %p77, %p78
    %p80 = scmp.ne.s32.totalorder %s71, %s72
    %p81 = scmp.eq.s32.totalorder %s19, 0
    %p82 = por %p80, %p81
    %p83 = scmp.ne.s32.totalorder %s71, %s72
    %p84 = scmp.eq.s32.totalorder %s20, 1
    %p85 = por %p83, %p84
    %p87 = scmp.ne.s32.totalorder %s72, %s86
    %p88 = scmp.eq.s32.totalorder %s20, 0
    %p89 = por %p87, %p88
    %s91 = sadd.s32 %s90, 1
    %p94 = scmp.eq.s32.totalorder %s14, 1
    %p95 = scmp.ne.s32.totalorder %s90, %s92
    %p96 = scmp.eq.s32.totalorder %s14, 0
    %p97 = por %p95, %p96
    %p98 = scmp.ne.s32.totalorder %s90, %s92
    %p99 = scmp.eq.s32.totalorder %s19, 1
    %p100 = por %p98, %p99
    %p101 = scmp.ne.s32.totalorder %s92, %s93
    %p102 = scmp.eq.s32.totalorder %s19, 0
    %p103 = por %p101, %p102
    %p104 = scmp.ne.s32.totalorder %s92, %s93
    %p105 = scmp.eq.s32.totalorder %s20, 1
    %p106 = por %p104, %p105
    %p108 = scmp.ne.s32.totalorder %s93, %s107
    %p109 = scmp.eq.s32.totalorder %s20, 0
    %p110 = por %p108, %p109
    %s112 = sadd.s32 %s111, 1
    %p115 = scmp.eq.s32.totalorder %s14, 1
    %p116 = scmp.ne.s32.totalorder %s111, %s113
    %p117 = scmp.eq.s32.totalorder %s14, 0
    %p118 = por %p116, %p117
    %p119 = scmp.ne.s32.totalorder %s111, %s113
    %p120 = scmp.eq.s32.totalorder %s19, 1
    %p121 = por %p119, %p120
    %p122 = scmp.ne.s32.totalorder %s113, %s114
    %p123 = scmp.eq.s32.totalorder %s19, 0
    %p124 = por %p122, %p123
    %p125 = scmp.ne.s32.totalorder %s113, %s114
    %p126 = scmp.eq.s32.totalorder %s20, 1
    %p127 = por %p125, %p126
    %p129 = scmp.ne.s32.totalorder %s114, %s128
    %p130 = scmp.eq.s32.totalorder %s20, 0
    %p131 = por %p129, %p130
    %s132 = ssub.s32 %s14, %s21
    %p133 = scmp.eq.s32.totalorder %s132, 0
    %s135 = sadd.s32 %s134, 1
    %s136 = scalar_select %p133, %s134, %s135
    %p139 = pneg %p133
    %p140 = scmp.eq.s32.totalorder %s14, 1
    %p141 = por %p139, %p140
    %p142 = scmp.ne.s32.totalorder %s134, %s137
    %p143 = scmp.eq.s32.totalorder %s14, 0
    %p144 = por %p142, %p143
    %p145 = scmp.ne.s32.totalorder %s134, %s137
    %p146 = scmp.eq.s32.totalorder %s19, 1
    %p147 = por %p145, %p146
    %p148 = scmp.ne.s32.totalorder %s137, %s138
    %p149 = scmp.eq.s32.totalorder %s19, 0
    %p150 = por %p148, %p149
    %p151 = scmp.ne.s32.totalorder %s137, %s138
    %p152 = scmp.eq.s32.totalorder %s20, 1
    %p153 = por %p151, %p152
    %p155 = scmp.ne.s32.totalorder %s138, %s154
    %p156 = scmp.eq.s32.totalorder %s20, 0
    %p157 = por %p155, %p156
    %s158 = ssub.s32 %s14, %s21
    %p159 = scmp.eq.s32.totalorder %s158, 0
    %s161 = sadd.s32 %s160, 1
    %s162 = scalar_select %p159, %s160, %s161
    %p165 = pneg %p159
    %p166 = scmp.eq.s32.totalorder %s14, 1
    %p167 = por %p165, %p166
    %p168 = scmp.ne.s32.totalorder %s160, %s163
    %p169 = scmp.eq.s32.totalorder %s14, 0
    %p170 = por %p168, %p169
    %p171 = scmp.ne.s32.totalorder %s160, %s163
    %p172 = scmp.eq.s32.totalorder %s19, 1
    %p173 = por %p171, %p172
    %p174 = scmp.ne.s32.totalorder %s163, %s164
    %p175 = scmp.eq.s32.totalorder %s19, 0
    %p176 = por %p174, %p175
    %p177 = scmp.ne.s32.totalorder %s163, %s164
    %p178 = scmp.eq.s32.totalorder %s20, 1
    %p179 = por %p177, %p178
    %p181 = scmp.ne.s32.totalorder %s164, %s180
    %p182 = scmp.eq.s32.totalorder %s20, 0
    %p183 = por %p181, %p182
    %s184 = ssub.s32 %s14, %s21
    %p185 = scmp.eq.s32.totalorder %s184, 0
    %s187 = sadd.s32 %s186, 1
    %s188 = scalar_select %p185, %s186, %s187
    %p191 = pneg %p185
    %p192 = scmp.eq.s32.totalorder %s14, 1
    %p193 = por %p191, %p192
    %p194 = scmp.ne.s32.totalorder %s186, %s189
    %p195 = scmp.eq.s32.totalorder %s14, 0
    %p196 = por %p194, %p195
    %p197 = scmp.ne.s32.totalorder %s186, %s189
    %p198 = scmp.eq.s32.totalorder %s19, 1
    %p199 = por %p197, %p198
    %p200 = scmp.ne.s32.totalorder %s189, %s190
    %p201 = scmp.eq.s32.totalorder %s19, 0
    %p202 = por %p200, %p201
    %p203 = scmp.ne.s32.totalorder %s189, %s190
    %p204 = scmp.eq.s32.totalorder %s20, 1
    %p205 = por %p203, %p204
    %p207 = scmp.ne.s32.totalorder %s190, %s206
    %p208 = scmp.eq.s32.totalorder %s20, 0
    %p209 = por %p207, %p208
    %p210 = scmp.le.s32.totalorder 1, %s14
    %p211 = scmp.lt.s32.totalorder %s14, 3
    %p212 = pnand %p210, %p211
    %p213 = pneg %p212
    // Predicated region
    $region9: #{timbre_vae_forward.15} parent=5 // pred_check
      _
    $region10: #{timbre_vae_forward.15} parent=5 // pred_check_branch
      %215 = sbr.rel (%p212) target = $region12
    $region11: #{timbre_vae_forward.15} parent=5 // pred_region
      %s216 = ssub.s32 %s14, 1
      // Predicated region
      $region13: #{timbre_vae_forward.15} parent=11 // pred_check
        %p217 = pneg %p61
      $region14: #{timbre_vae_forward.15} parent=11 // pred_check_branch
        %219 = sbr.rel (%p217) target = $region16
      $region15: #{timbre_vae_forward.15} parent=11 // pred_region
        _
      $region16: #{timbre_vae_forward.15} parent=11 // pred_fallthru
        _
      // Predicated region
      $region17: #{timbre_vae_forward.15} parent=11 // pred_check
        %p220 = pneg %p82
      $region18: #{timbre_vae_forward.15} parent=11 // pred_check_branch
        %222 = sbr.rel (%p220) target = $region20
      $region19: #{timbre_vae_forward.15} parent=11 // pred_region
        _
      $region20: #{timbre_vae_forward.15} parent=11 // pred_fallthru
        _
      // Predicated region
      $region21: #{timbre_vae_forward.15} parent=11 // pred_check
        %p223 = pneg %p103
      $region22: #{timbre_vae_forward.15} parent=11 // pred_check_branch
        %225 = sbr.rel (%p223) target = $region24
      $region23: #{timbre_vae_forward.15} parent=11 // pred_region
        _
      $region24: #{timbre_vae_forward.15} parent=11 // pred_fallthru
        _
      // Predicated region
      $region25: #{timbre_vae_forward.15} parent=11 // pred_check
        %p226 = pneg %p124
      $region26: #{timbre_vae_forward.15} parent=11 // pred_check_branch
        %228 = sbr.rel (%p226) target = $region28
      $region27: #{timbre_vae_forward.15} parent=11 // pred_region
        _
      $region28: #{timbre_vae_forward.15} parent=11 // pred_fallthru
        _
    $region12: #{timbre_vae_forward.15} parent=5 // pred_fallthru
      _
    %p229 = scmp.lt.s32.totalorder %s14, 2
    // Predicated region
    $region29: #{timbre_vae_forward.15} parent=5 // pred_check
      %p230 = pneg %p229
    $region30: #{timbre_vae_forward.15} parent=5 // pred_check_branch
      %232 = sbr.rel (%p230) target = $region32
    $region31: #{timbre_vae_forward.15} parent=5 // pred_region
      // Predicated region
      $region33: #{timbre_vae_forward.15} parent=31 // pred_check
        %p233 = pneg %p34
      $region34: #{timbre_vae_forward.15} parent=31 // pred_check_branch
        %235 = sbr.rel (%p233) target = $region36
      $region35: #{timbre_vae_forward.15} parent=31 // pred_region
        %p236 = scmp.lt.s32.totalorder %s14, 1
        %s237 = scalar_select %p236, %s14, 1
        %s238 = smul.addr %s237, 10
        %s239 = smul.addr %s238, 4
        %s240 = scalar_lea.vmem %s0, %s239
      $region36: #{timbre_vae_forward.15} parent=31 // pred_fallthru
        _
    $region32: #{timbre_vae_forward.15} parent=5 // pred_fallthru
      _
    %p241 = scmp.le.s32.totalorder 1, %s14
    %p242 = scmp.lt.s32.totalorder %s14, 3
    %p243 = pnand %p241, %p242
    %p244 = pneg %p243
    // Predicated region
    $region37: #{timbre_vae_forward.15} parent=5 // pred_check
      _
    $region38: #{timbre_vae_forward.15} parent=5 // pred_check_branch
      %246 = sbr.rel (%p243) target = $region40
    $region39: #{timbre_vae_forward.15} parent=5 // pred_region
      %s247 = ssub.s32 %s14, 1
      %p248 = scmp.lt.s32.totalorder %s19, 1
      %s249 = scalar_select %p248, %s19, 1
      %s250 = smul.addr %s249, 10
      %s251 = smul.addr %s250, 4
      %s252 = scalar_lea.vmem %s0, %s251
      %p253 = pneg %p40
      %p254 = pneg %p37
      %p255 = pneg %p61
      %p256 = pneg %p58
      %p257 = pneg %p82
      %p258 = pneg %p79
      %p259 = pneg %p103
      %p260 = pneg %p100
      %p261 = pneg %p124
      %p262 = pneg %p121
      %p263 = pneg %p150
      %p264 = pneg %p147
      %p265 = scmp.lt.s32.totalorder %s19, 1
      %s266 = scalar_select %p265, %s19, 1
      %s267 = smul.addr %s266, 4
      %s268 = scalar_lea.vmem %s5, %s267
      %p269 = pneg %p176
      %p270 = pneg %p173
      %p271 = scmp.lt.s32.totalorder %s19, 1
      %s272 = scalar_select %p271, %s19, 1
      %s273 = scalar_lea.vmem %s6, %s272
      %p274 = pneg %p202
      %p275 = pneg %p199
      %p276 = scmp.lt.s32.totalorder %s19, 1
      %s277 = scalar_select %p276, %s19, 1
      %s278 = scalar_lea.vmem %s7, %s277
      %p279 = scmp.lt.s32.totalorder %s19, 1
      %s280 = scalar_select %p279, %s19, 1
      %s281 = smul.addr %s280, 10
      %s282 = smul.addr %s281, 4
      %s283 = scalar_lea.vmem %s0, %s282
      %p284 = scmp.lt.s32.totalorder %s19, 1
      %s285 = scalar_select %p284, %s19, 1
      %s286 = smul.addr %s285, 4
      %s287 = scalar_lea.vmem %s5, %s286
      %p288 = scmp.lt.s32.totalorder %s19, 1
      %s289 = scalar_select %p288, %s19, 1
      %s290 = scalar_lea.vmem %s6, %s289
      %p291 = scmp.lt.s32.totalorder %s19, 1
      %s292 = scalar_select %p291, %s19, 1
      %s293 = scalar_lea.vmem %s7, %s292
      %v295 = vld [vmem:[%s283] sm:$0xf]
      %v296 = vld [vmem:[%s283 + $0x4] sm:$0x1]
      %v297 = vld [vmem:[%s283 + $0x8] sm:$0xf]
      %v298 = vld [vmem:[%s283 + $0xc] sm:$0x1]
      %v299 = vld [vmem:[%s283 + $0x10] sm:$0xf]
      %v300 = vld [vmem:[%s283 + $0x14] sm:$0x1]
      %v301 = vld [vmem:[%s283 + $0x18] sm:$0xf]
      %v302 = vld [vmem:[%s283 + $0x1c] sm:$0x1]
      %v303 = vld [vmem:[%s283 + $0x20] sm:$0xf]
      %v304 = vld [vmem:[%s283 + $0x24] sm:$0x1]
      %v305 = vunpack.c.l.bf16 %v295
      %v306 = vunpack.c.l.bf16 %v296
      %v307 = vunpack.c.l.bf16 %v297
      %v308 = vunpack.c.l.bf16 %v298
      %v309 = vunpack.c.l.bf16 %v299
      %v310 = vunpack.c.l.bf16 %v300
      %v311 = vunpack.c.l.bf16 %v301
      %v312 = vunpack.c.l.bf16 %v302
      %v313 = vunpack.c.l.bf16 %v303
      %v314 = vunpack.c.l.bf16 %v304
      %v315 = vld [vmem:[%s3] sm:$0x1]
      %v317 = vlaneseq
      %v318 = vshrl.u32 %v317, 7
      %v319 = vsub.s32 0, %v318
      %v320 = vrot.slane %v315, %v319
      %v322 = vmul.f32 %v305, %v320
      %v323 = vmul.f32 %v306, %v320
      %v324 = vmul.f32 %v307, %v320
      %v325 = vmul.f32 %v308, %v320
      %v326 = vmul.f32 %v309, %v320
      %v327 = vmul.f32 %v310, %v320
      %v328 = vmul.f32 %v311, %v320
      %v329 = vmul.f32 %v312, %v320
      %v330 = vmul.f32 %v313, %v320
      %v331 = vmul.f32 %v314, %v320
      %v332 = vld [vmem:[%s4] sm:$0x1]
      %v334 = vlaneseq
      %v335 = vshrl.u32 %v334, 7
      %v336 = vsub.s32 0, %v335
      %v337 = vrot.slane %v332, %v336
      %v339 = vadd.f32 %v322, %v337
      %v340 = vadd.f32 %v323, %v337
      %v341 = vadd.f32 %v324, %v337
      %v342 = vadd.f32 %v325, %v337
      %v343 = vadd.f32 %v326, %v337
      %v344 = vadd.f32 %v327, %v337
      %v345 = vadd.f32 %v328, %v337
      %v346 = vadd.f32 %v329, %v337
      %v347 = vadd.f32 %v330, %v337
      %v348 = vadd.f32 %v331, %v337
      %vm349 = vcmp.gt.f32.partialorder %v339, 0.0
      %vm350 = vcmp.gt.f32.partialorder %v340, 0.0
      %vm351 = vcmp.gt.f32.partialorder %v341, 0.0
      %vm352 = vcmp.gt.f32.partialorder %v342, 0.0
      %vm353 = vcmp.gt.f32.partialorder %v343, 0.0
      %vm354 = vcmp.gt.f32.partialorder %v344, 0.0
      %vm355 = vcmp.gt.f32.partialorder %v345, 0.0
      %vm356 = vcmp.gt.f32.partialorder %v346, 0.0
      %vm357 = vcmp.gt.f32.partialorder %v347, 0.0
      %vm358 = vcmp.gt.f32.partialorder %v348, 0.0
      %v359 = vmul.f32 %v339, 0.01
      %v360 = vmul.f32 %v340, 0.01
      %v361 = vmul.f32 %v341, 0.01
      %v362 = vmul.f32 %v342, 0.01
      %v363 = vmul.f32 %v343, 0.01
      %v364 = vmul.f32 %v344, 0.01
      %v365 = vmul.f32 %v345, 0.01
      %v366 = vmul.f32 %v346, 0.01
      %v367 = vmul.f32 %v347, 0.01
      %v368 = vmul.f32 %v348, 0.01
      %v369 = vsel %vm349, %v339, %v359
      %v370 = vsel %vm350, %v340, %v360
      %v371 = vsel %vm351, %v341, %v361
      %v372 = vsel %vm352, %v342, %v362
      %v373 = vsel %vm353, %v343, %v363
      %v374 = vsel %vm354, %v344, %v364
      %v375 = vsel %vm355, %v345, %v365
      %v376 = vsel %vm356, %v346, %v366
      %v377 = vsel %vm357, %v347, %v367
      %v378 = vsel %vm358, %v348, %v368
      %v379 = vpack.c.bf16 %v371, %v369
      %v380 = vpack.c.bf16 %v375, %v373
      %v381 = vld [vmem:[%s1] sm:$0xf]
      %v382 = vld [vmem:[%s1 + $0x4] sm:$0xf]
      %vm391 = vcmask 1046528
      %v392 = vrot.slane %v369, 1
      %v393 = vrot.slane %v370, 1
      %v394 = vsel %vm391, %v392, %v393
      %v395 = vrot.slane %v371, 1
      %v396 = vrot.slane %v372, 1
      %v397 = vsel %vm391, %v395, %v396
      %v398 = vrot.slane %v373, 1
      %v399 = vrot.slane %v374, 1
      %v400 = vsel %vm391, %v398, %v399
      %v401 = vrot.slane %v375, 1
      %v402 = vrot.slane %v376, 1
      %v403 = vsel %vm391, %v401, %v402
      %v408 = vpack.c.bf16 %v397, %v394
      %v409 = vpack.c.bf16 %v403, %v400
      %s410 = scalar_lea.vmem %s1, 8
      %v411 = vld [vmem:[%s410] sm:$0xf]
      %v412 = vld [vmem:[%s410 + $0x4] sm:$0xf]
      %v415 = vunpack.c.l.b16 %v411
      %v416 = vunpack.c.l.b16 %v412
      %v417 = vpack.c.b16 %v416, %v415
      %vm419 = vcmask 130048
      %v421 = vsel %vm419, %v408, 0
      %v424 = vsel %vm419, %v409, 0
      %426 = vmatprep.subr.bf16.mxu0 0
      %427 = vmatpush1.bf16.msra.mxu0 0
      %428 = vmatprep.subr.bf16.mxu0 0
      %429 = vmatpush1.bf16.msra.mxu0 0
      %430 = vmatprep.subr.bf16.mxu0 0
      %431 = vmatpush1.bf16.msra.mxu0 0
      %432 = vmatprep.subr.bf16.mxu0 0
      %433 = vmatpush1.bf16.msra.mxu0 0
      %434 = vmatprep.subr.bf16.mxu0 0
      %435 = vmatpush1.bf16.msra.mxu0 0
      %436 = vmatprep.subr.bf16.mxu0 0
      %437 = vmatpush1.bf16.msra.mxu0 0
      %438 = vmatprep.subr.bf16.mxu0 0
      %439 = vmatpush1.bf16.msra.mxu0 0
      %440 = vmatprep.subr.bf16.mxu0 0
      %441 = vmatpush1.bf16.msra.mxu0 %v417
      %442 = vmatprep.subr.bf16.mxu0 0
      %443 = vmatpush2.bf16.msra.mxu0 0
      %444 = vmatprep.subr.bf16.mxu0 0
      %445 = vmatpush2.bf16.msra.mxu0 0
      %446 = vmatprep.subr.bf16.mxu0 0
      %447 = vmatpush2.bf16.msra.mxu0 0
      %448 = vmatprep.subr.bf16.mxu0 0
      %449 = vmatpush2.bf16.msra.mxu0 0
      %450 = vmatprep.subr.bf16.mxu0 0
      %451 = vmatpush2.bf16.msra.mxu0 0
      %452 = vmatprep.subr.bf16.mxu0 0
      %453 = vmatpush2.bf16.msra.mxu0 0
      %454 = vmatprep.subr.bf16.mxu0 0
      %455 = vmatpush2.bf16.msra.mxu0 0
      %456 = vmatprep.subr.bf16.mxu0 0
      %457 = vmatpush2.bf16.msra.mxu0 0
      %458 = vmatprep.mubr.bf16.mxu0 0
      %459 = vmatmul.mubr.bf16.gmra.mxu0 %v421
      %v460 = vpop.f32.mrf.mxu0
      %v461 = vadd.f32 0.0, %v460
      %v462 = vpop.f32.mrf.mxu0
      %v463 = vpop.f32.mrf.mxu0
      %v464 = vadd.f32 0.0, %v463
      %v465 = vpop.f32.mrf.mxu0
      %466 = vmatprep.mubr.bf16.mxu0 0
      %467 = vmatmul.mubr.bf16.gmra.mxu0 %v424
      %v468 = vpop.f32.mrf.mxu0
      %v469 = vadd.f32 0.0, %v468
      %v470 = vpop.f32.mrf.mxu0
      %v471 = vpop.f32.mrf.mxu0
      %v472 = vadd.f32 0.0, %v471
      %v473 = vpop.f32.mrf.mxu0
      %474 = vdwg.mxu0
      %v477 = vunpack.c.l.b16 %v381
      %v478 = vunpack.c.l.b16 %v382
      %v479 = vpack.c.b16 %v478, %v477
      %v482 = vsel %vm419, %v379, 0
      %v485 = vsel %vm419, %v380, 0
      %487 = vmatprep.subr.bf16.mxu0 0
      %488 = vmatpush1.bf16.msra.mxu0 0
      %489 = vmatprep.subr.bf16.mxu0 0
      %490 = vmatpush1.bf16.msra.mxu0 0
      %491 = vmatprep.subr.bf16.mxu0 0
      %492 = vmatpush1.bf16.msra.mxu0 0
      %493 = vmatprep.subr.bf16.mxu0 0
      %494 = vmatpush1.bf16.msra.mxu0 0
      %495 = vmatprep.subr.bf16.mxu0 0
      %496 = vmatpush1.bf16.msra.mxu0 0
      %497 = vmatprep.subr.bf16.mxu0 0
      %498 = vmatpush1.bf16.msra.mxu0 0
      %499 = vmatprep.subr.bf16.mxu0 0
      %500 = vmatpush1.bf16.msra.mxu0 0
      %501 = vmatprep.subr.bf16.mxu0 0
      %502 = vmatpush1.bf16.msra.mxu0 %v479
      %503 = vmatprep.subr.bf16.mxu0 0
      %504 = vmatpush2.bf16.msra.mxu0 0
      %505 = vmatprep.subr.bf16.mxu0 0
      %506 = vmatpush2.bf16.msra.mxu0 0
      %507 = vmatprep.subr.bf16.mxu0 0
      %508 = vmatpush2.bf16.msra.mxu0 0
      %509 = vmatprep.subr.bf16.mxu0 0
      %510 = vmatpush2.bf16.msra.mxu0 0
      %511 = vmatprep.subr.bf16.mxu0 0
      %512 = vmatpush2.bf16.msra.mxu0 0
      %513 = vmatprep.subr.bf16.mxu0 0
      %514 = vmatpush2.bf16.msra.mxu0 0
      %515 = vmatprep.subr.bf16.mxu0 0
      %516 = vmatpush2.bf16.msra.mxu0 0
      %517 = vmatprep.subr.bf16.mxu0 0
      %518 = vmatpush2.bf16.msra.mxu0 0
      %519 = vmatprep.mubr.bf16.mxu0 0
      %520 = vmatmul.mubr.bf16.gmra.mxu0 %v482
      %v521 = vpop.f32.mrf.mxu0
      %v522 = vadd.f32 %v461, %v521
      %v523 = vpop.f32.mrf.mxu0
      %v524 = vpop.f32.mrf.mxu0
      %v525 = vadd.f32 %v464, %v524
      %v526 = vpop.f32.mrf.mxu0
      %527 = vmatprep.mubr.bf16.mxu0 0
      %528 = vmatmul.mubr.bf16.gmra.mxu0 %v485
      %v529 = vpop.f32.mrf.mxu0
      %v530 = vadd.f32 %v469, %v529
      %v531 = vpop.f32.mrf.mxu0
      %v532 = vpop.f32.mrf.mxu0
      %v533 = vadd.f32 %v472, %v532
      %v534 = vpop.f32.mrf.mxu0
      %535 = vdwg.mxu0
      %v536 = vpack.c.bf16 %v373, %v371
      %v537 = vpack.c.bf16 %v377, %v375
      %s538 = scalar_lea.vmem %s1, 16
      %v539 = vld [vmem:[%s538] sm:$0xf]
      %v540 = vld [vmem:[%s538 + $0x4] sm:$0xf]
      %v543 = vunpack.c.l.b16 %v539
      %v544 = vunpack.c.l.b16 %v540
      %v545 = vpack.c.b16 %v544, %v543
      %v548 = vsel %vm419, %v536, 0
      %v551 = vsel %vm419, %v537, 0
      %553 = vmatprep.subr.bf16.mxu0 0
      %554 = vmatpush1.bf16.msra.mxu0 0
      %555 = vmatprep.subr.bf16.mxu0 0
      %556 = vmatpush1.bf16.msra.mxu0 0
      %557 = vmatprep.subr.bf16.mxu0 0
      %558 = vmatpush1.bf16.msra.mxu0 0
      %559 = vmatprep.subr.bf16.mxu0 0
      %560 = vmatpush1.bf16.msra.mxu0 0
      %561 = vmatprep.subr.bf16.mxu0 0
      %562 = vmatpush1.bf16.msra.mxu0 0
      %563 = vmatprep.subr.bf16.mxu0 0
      %564 = vmatpush1.bf16.msra.mxu0 0
      %565 = vmatprep.subr.bf16.mxu0 0
      %566 = vmatpush1.bf16.msra.mxu0 0
      %567 = vmatprep.subr.bf16.mxu0 0
      %568 = vmatpush1.bf16.msra.mxu0 %v545
      %569 = vmatprep.subr.bf16.mxu0 0
      %570 = vmatpush2.bf16.msra.mxu0 0
      %571 = vmatprep.subr.bf16.mxu0 0
      %572 = vmatpush2.bf16.msra.mxu0 0
      %573 = vmatprep.subr.bf16.mxu0 0
      %574 = vmatpush2.bf16.msra.mxu0 0
      %575 = vmatprep.subr.bf16.mxu0 0
      %576 = vmatpush2.bf16.msra.mxu0 0
      %577 = vmatprep.subr.bf16.mxu0 0
      %578 = vmatpush2.bf16.msra.mxu0 0
      %579 = vmatprep.subr.bf16.mxu0 0
      %580 = vmatpush2.bf16.msra.mxu0 0
      %581 = vmatprep.subr.bf16.mxu0 0
      %582 = vmatpush2.bf16.msra.mxu0 0
      %583 = vmatprep.subr.bf16.mxu0 0
      %584 = vmatpush2.bf16.msra.mxu0 0
      %585 = vmatprep.mubr.bf16.mxu0 0
      %586 = vmatmul.mubr.bf16.gmra.mxu0 %v548
      %v587 = vpop.f32.mrf.mxu0
      %v588 = vadd.f32 0.0, %v587
      %v589 = vpop.f32.mrf.mxu0
      %v590 = vpop.f32.mrf.mxu0
      %v591 = vadd.f32 0.0, %v590
      %v592 = vpop.f32.mrf.mxu0
      %593 = vmatprep.mubr.bf16.mxu0 0
      %594 = vmatmul.mubr.bf16.gmra.mxu0 %v551
      %v595 = vpop.f32.mrf.mxu0
      %v596 = vadd.f32 0.0, %v595
      %v597 = vpop.f32.mrf.mxu0
      %v598 = vpop.f32.mrf.mxu0
      %v599 = vadd.f32 0.0, %v598
      %v600 = vpop.f32.mrf.mxu0
      %601 = vdwg.mxu0
      %v602 = vadd.f32 %v522, %v588
      %v603 = vadd.f32 %v525, %v591
      %v604 = vadd.f32 %v530, %v596
      %v605 = vadd.f32 %v533, %v599
      %v608 = vrot.slane %v377, 1
      %v609 = vrot.slane %v378, 1
      %v610 = vsel %vm391, %v608, %v609
      %v612 = vpack.c.bf16 %v400, %v397
      %v613 = vpack.c.bf16 %v610, %v403
      %s614 = scalar_lea.vmem %s1, 24
      %v615 = vld [vmem:[%s614] sm:$0xf]
      %v616 = vld [vmem:[%s614 + $0x4] sm:$0xf]
      %v619 = vunpack.c.l.b16 %v615
      %v620 = vunpack.c.l.b16 %v616
      %v621 = vpack.c.b16 %v620, %v619
      %v624 = vsel %vm419, %v612, 0
      %v627 = vsel %vm419, %v613, 0
      %629 = vmatprep.subr.bf16.mxu0 0
      %630 = vmatpush1.bf16.msra.mxu0 0
      %631 = vmatprep.subr.bf16.mxu0 0
      %632 = vmatpush1.bf16.msra.mxu0 0
      %633 = vmatprep.subr.bf16.mxu0 0
      %634 = vmatpush1.bf16.msra.mxu0 0
      %635 = vmatprep.subr.bf16.mxu0 0
      %636 = vmatpush1.bf16.msra.mxu0 0
      %637 = vmatprep.subr.bf16.mxu0 0
      %638 = vmatpush1.bf16.msra.mxu0 0
      %639 = vmatprep.subr.bf16.mxu0 0
      %640 = vmatpush1.bf16.msra.mxu0 0
      %641 = vmatprep.subr.bf16.mxu0 0
      %642 = vmatpush1.bf16.msra.mxu0 0
      %643 = vmatprep.subr.bf16.mxu0 0
      %644 = vmatpush1.bf16.msra.mxu0 %v621
      %645 = vmatprep.subr.bf16.mxu0 0
      %646 = vmatpush2.bf16.msra.mxu0 0
      %647 = vmatprep.subr.bf16.mxu0 0
      %648 = vmatpush2.bf16.msra.mxu0 0
      %649 = vmatprep.subr.bf16.mxu0 0
      %650 = vmatpush2.bf16.msra.mxu0 0
      %651 = vmatprep.subr.bf16.mxu0 0
      %652 = vmatpush2.bf16.msra.mxu0 0
      %653 = vmatprep.subr.bf16.mxu0 0
      %654 = vmatpush2.bf16.msra.mxu0 0
      %655 = vmatprep.subr.bf16.mxu0 0
      %656 = vmatpush2.bf16.msra.mxu0 0
      %657 = vmatprep.subr.bf16.mxu0 0
      %658 = vmatpush2.bf16.msra.mxu0 0
      %659 = vmatprep.subr.bf16.mxu0 0
      %660 = vmatpush2.bf16.msra.mxu0 0
      %661 = vmatprep.mubr.bf16.mxu0 0
      %662 = vmatmul.mubr.bf16.gmra.mxu0 %v624
      %v663 = vpop.f32.mrf.mxu0
      %v664 = vadd.f32 0.0, %v663
      %v665 = vpop.f32.mrf.mxu0
      %v666 = vpop.f32.mrf.mxu0
      %v667 = vadd.f32 0.0, %v666
      %v668 = vpop.f32.mrf.mxu0
      %669 = vmatprep.mubr.bf16.mxu0 0
      %670 = vmatmul.mubr.bf16.gmra.mxu0 %v627
      %v671 = vpop.f32.mrf.mxu0
      %v672 = vadd.f32 0.0, %v671
      %v673 = vpop.f32.mrf.mxu0
      %v674 = vpop.f32.mrf.mxu0
      %v675 = vadd.f32 0.0, %v674
      %v676 = vpop.f32.mrf.mxu0
      %677 = vdwg.mxu0
      %v678 = vadd.f32 %v602, %v664
      %v679 = vadd.f32 %v603, %v667
      %v680 = vadd.f32 %v604, %v672
      %v681 = vadd.f32 %v605, %v675
      %v682 = vld [vmem:[%s2] sm:$0x1]
      %v684 = vlaneseq
      %v685 = vshrl.u32 %v684, 7
      %v686 = vsub.s32 0, %v685
      %v687 = vrot.slane %v682, %v686
      %v689 = vadd.f32 %v678, %v687
      %v690 = vadd.f32 %v679, %v687
      %v691 = vadd.f32 %v680, %v687
      %v692 = vadd.f32 %v681, %v687
      %v693 = vlaneseq
      %v694 = vshrl.u32 %v693, 7
      %v695 = vadd.s32 %v694, 8
      %v696 = vadd.s32 %v694, 16
      %v697 = vadd.s32 %v694, 24
      %vm698 = vcmp.lt.s32.totalorder %v694, 0
      %v699 = vsub.s32 0, %v694
      %v700 = vsel %vm698, %v699, %v694
      %v701 = vshrl.u32 %v700, 3
      %v702 = vand.u32 %v700, 7
      %v703 = vsub.s32 0, %v702
      %v704 = vsel %vm698, %v703, %v702
      %vm705 = vcmp.lt.s32.totalorder %v695, 0
      %v706 = vsub.s32 0, %v695
      %v707 = vsel %vm705, %v706, %v695
      %v708 = vshrl.u32 %v707, 3
      %v709 = vand.u32 %v707, 7
      %v710 = vsub.s32 0, %v709
      %v711 = vsel %vm705, %v710, %v709
      %vm712 = vcmp.lt.s32.totalorder %v696, 0
      %v713 = vsub.s32 0, %v696
      %v714 = vsel %vm712, %v713, %v696
      %v715 = vshrl.u32 %v714, 3
      %v716 = vand.u32 %v714, 7
      %v717 = vsub.s32 0, %v716
      %v718 = vsel %vm712, %v717, %v716
      %vm719 = vcmp.lt.s32.totalorder %v697, 0
      %v720 = vsub.s32 0, %v697
      %v721 = vsel %vm719, %v720, %v697
      %v722 = vshrl.u32 %v721, 3
      %v723 = vand.u32 %v721, 7
      %v724 = vsub.s32 0, %v723
      %v725 = vsel %vm719, %v724, %v723
      %vm726 = vcmp.ne.s32.totalorder %v704, 0
      %vm727 = vcmp.ne.s32.totalorder %v711, 0
      %vm728 = vcmp.ne.s32.totalorder %v718, 0
      %vm729 = vcmp.ne.s32.totalorder %v725, 0
      %vm730 = vcmp.lt.s32.totalorder %v704, 0
      %vm731 = vcmp.lt.s32.totalorder %v711, 0
      %vm732 = vcmp.lt.s32.totalorder %v718, 0
      %vm733 = vcmp.lt.s32.totalorder %v725, 0
      %vm734 = vmand %vm730, %vm726
      %vm735 = vmand %vm731, %vm727
      %vm736 = vmand %vm732, %vm728
      %vm737 = vmand %vm733, %vm729
      %v738 = vadd.s32 %v704, 8
      %v739 = vadd.s32 %v711, 8
      %v740 = vadd.s32 %v718, 8
      %v741 = vadd.s32 %v725, 8
      %v742 = vsel %vm734, %v738, %v704
      %v743 = vsel %vm735, %v739, %v711
      %v744 = vsel %vm736, %v740, %v718
      %v745 = vsel %vm737, %v741, %v725
      %vm746 = vcmp.lt.s32.totalorder %v742, 2
      %vm747 = vcmp.lt.s32.totalorder %v743, 2
      %vm748 = vcmp.lt.s32.totalorder %v744, 2
      %vm749 = vcmp.lt.s32.totalorder %v745, 2
      %v750 = vsel %vm746, 1, 0
      %v751 = vsel %vm747, 1, 0
      %v752 = vsel %vm748, 1, 0
      %v753 = vsel %vm749, 1, 0
      %vm754 = vcmp.eq.s32.totalorder %v750, 1
      %vm755 = vcmp.eq.s32.totalorder %v751, 1
      %vm756 = vcmp.eq.s32.totalorder %v752, 1
      %vm757 = vcmp.eq.s32.totalorder %v753, 1
      %v758 = vsel %vm754, %v689, 0.0
      %v759 = vsel %vm755, %v690, 0.0
      %v760 = vsel %vm756, %v691, 0.0
      %v761 = vsel %vm757, %v692, 0.0
      %v762 = vadd.f32 %v758, %v759
      %v763 = vadd.f32 %v762, %v760
      %v764 = vadd.f32 %v763, %v761
      %v765 = vrot.slane %v764, 4
      %v766 = vadd.f32 %v764, %v765
      %v767 = vrot.slane %v766, 2
      %v768 = vadd.f32 %v766, %v767
      %v769 = vrot.slane %v768, 1
      %v770 = vadd.f32 %v768, %v769
      %v771 = vmul.f32 %v770, 0.125
      %v772 = vsub.f32 %v689, %v771
      %v773 = vsub.f32 %v690, %v771
      %v774 = vsub.f32 %v691, %v771
      %v775 = vsub.f32 %v692, %v771
      %v776 = vsel %vm754, %v772, 0.0
      %v777 = vsel %vm755, %v773, 0.0
      %v778 = vsel %vm756, %v774, 0.0
      %v779 = vsel %vm757, %v775, 0.0
      %v780 = vmul.f32 %v776, %v776
      %v781 = vmul.f32 %v777, %v777
      %v782 = vmul.f32 %v778, %v778
      %v783 = vmul.f32 %v779, %v779
      %v784 = vadd.f32 %v780, %v781
      %v785 = vadd.f32 %v784, %v782
      %v786 = vadd.f32 %v785, %v783
      %v787 = vrot.slane %v786, 4
      %v788 = vadd.f32 %v786, %v787
      %v789 = vrot.slane %v788, 2
      %v790 = vadd.f32 %v788, %v789
      %v791 = vrot.slane %v790, 1
      %v792 = vadd.f32 %v790, %v791
      %793 = vst [vmem:[%s290] sm:$0x1] %v770
      %794 = vst [vmem:[%s293] sm:$0x1] %v792
      %v795 = vpack.c.bf16 %v689, %v689
      %v796 = vpack.c.bf16 %v690, %v690
      %v797 = vpack.c.bf16 %v691, %v691
      %v798 = vpack.c.bf16 %v692, %v692
      %799 = vst [vmem:[%s287] sm:$0x1] %v795
      %800 = vst [vmem:[%s287 + $0x1] sm:$0x1] %v796
      %801 = vst [vmem:[%s287 + $0x2] sm:$0x1] %v797
      %802 = vst [vmem:[%s287 + $0x3] sm:$0x1] %v798
      %p803 = scmp.lt.s32.totalorder %s19, 1
      %s804 = scalar_select %p803, %s19, 1
      %s805 = smul.addr %s804, 4
      %s806 = scalar_lea.vmem %s5, %s805
      %p807 = scmp.lt.s32.totalorder %s19, 1
      %s808 = scalar_select %p807, %s19, 1
      %s809 = scalar_lea.vmem %s6, %s808
      %p810 = scmp.lt.s32.totalorder %s19, 1
      %s811 = scalar_select %p810, %s19, 1
      %s812 = scalar_lea.vmem %s7, %s811
      // Predicated region
      $region41: #{timbre_vae_forward.15} parent=39 // pred_check
        %p813 = pneg %p147
      $region42: #{timbre_vae_forward.15} parent=39 // pred_check_branch
        %815 = sbr.rel (%p813) target = $region44
      $region43: #{timbre_vae_forward.15} parent=39 // pred_region
        _
      $region44: #{timbre_vae_forward.15} parent=39 // pred_fallthru
        _
      // Predicated region
      $region45: #{timbre_vae_forward.15} parent=39 // pred_check
        %p816 = pneg %p173
      $region46: #{timbre_vae_forward.15} parent=39 // pred_check_branch
        %818 = sbr.rel (%p816) target = $region48
      $region47: #{timbre_vae_forward.15} parent=39 // pred_region
        _
      $region48: #{timbre_vae_forward.15} parent=39 // pred_fallthru
        _
      // Predicated region
      $region49: #{timbre_vae_forward.15} parent=39 // pred_check
        %p819 = pneg %p199
      $region50: #{timbre_vae_forward.15} parent=39 // pred_check_branch
        %821 = sbr.rel (%p819) target = $region52
      $region51: #{timbre_vae_forward.15} parent=39 // pred_region
        _
      $region52: #{timbre_vae_forward.15} parent=39 // pred_fallthru
        _
    $region40: #{timbre_vae_forward.15} parent=5 // pred_fallthru
      _
    %p822 = scmp.le.s32.totalorder 2, %s14
    // Predicated region
    $region53: #{timbre_vae_forward.15} parent=5 // pred_check
      %p823 = pneg %p822
    $region54: #{timbre_vae_forward.15} parent=5 // pred_check_branch
      %825 = sbr.rel (%p823) target = $region56
    $region55: #{timbre_vae_forward.15} parent=5 // pred_region
      %s826 = ssub.s32 %s14, 2
      // Predicated region
      $region57: #{timbre_vae_forward.15} parent=55 // pred_check
        %p827 = pneg %p153
      $region58: #{timbre_vae_forward.15} parent=55 // pred_check_branch
        %829 = sbr.rel (%p827) target = $region60
      $region59: #{timbre_vae_forward.15} parent=55 // pred_region
        %p830 = scmp.lt.s32.totalorder %s20, 1
        %s831 = scalar_select %p830, %s20, 1
        %s832 = smul.addr %s831, 4
        %s833 = scalar_lea.vmem %s5, %s832
      $region60: #{timbre_vae_forward.15} parent=55 // pred_fallthru
        _
      // Predicated region
      $region61: #{timbre_vae_forward.15} parent=55 // pred_check
        %p834 = pneg %p179
      $region62: #{timbre_vae_forward.15} parent=55 // pred_check_branch
        %836 = sbr.rel (%p834) target = $region64
      $region63: #{timbre_vae_forward.15} parent=55 // pred_region
        %p837 = scmp.lt.s32.totalorder %s20, 1
        %s838 = scalar_select %p837, %s20, 1
        %s839 = scalar_lea.vmem %s6, %s838
      $region64: #{timbre_vae_forward.15} parent=55 // pred_fallthru
        _
      // Predicated region
      $region65: #{timbre_vae_forward.15} parent=55 // pred_check
        %p840 = pneg %p205
      $region66: #{timbre_vae_forward.15} parent=55 // pred_check_branch
        %842 = sbr.rel (%p840) target = $region68
      $region67: #{timbre_vae_forward.15} parent=55 // pred_region
        %p843 = scmp.lt.s32.totalorder %s20, 1
        %s844 = scalar_select %p843, %s20, 1
        %s845 = scalar_lea.vmem %s7, %s844
      $region68: #{timbre_vae_forward.15} parent=55 // pred_fallthru
        _
    $region56: #{timbre_vae_forward.15} parent=5 // pred_fallthru
      _
  $region6: #{timbre_vae_forward.15} parent=0 // loop_footer
    %s18 = sadd.s32 1, %s14
  $region7: #{timbre_vae_forward.15} parent=0 // loop_footer_branch
    %13 = sbr.rel target = $region3
  $region8: #{timbre_vae_forward.15} parent=0 // loop_exit
    _

// kernel: timbre_vae_forward.16
$region0: #{timbre_vae_forward.16}
  #allocation0 [shape = 'u32[]', space=smem, size = 0x4, offset = 0x4, fixed_abs, tag = 'smem constant byte address 0x4 - core index']
  #allocation1 [shape = 'u32[144,128]{1,0:T(1,128)}', space=vmem, size = 0x12000, scoped, tag = 'internal scratch']
  %s0 = inlined_call_operand.vmem [shape: bf16[2,9,9,8], index: 0, kind: input, shape index: {}]
  %s1 = inlined_call_operand.vmem [shape: bf16[4,8,128], index: 1, kind: input, shape index: {}]
  %s2 = inlined_call_operand.vmem [shape: f32[1,128], index: 2, kind: input, shape index: {}]
  %s3 = inlined_call_operand.vmem [shape: f32[1,8], index: 3, kind: input, shape index: {}]
  %s4 = inlined_call_operand.vmem [shape: f32[1,8], index: 4, kind: input, shape index: {}]
  %s5 = inlined_call_operand.vmem [shape: bf16[2,8,4,128], index: 5, kind: output, shape index: {0}]
  %s6 = inlined_call_operand.vmem [shape: f32[2,1,128], index: 6, kind: output, shape index: {1}]
  %s7 = inlined_call_operand.vmem [shape: f32[2,1,128], index: 7, kind: output, shape index: {2}]
  %8 = xla_tuple %s5, %s6, %s7
  %s9 = sld [smem:[#allocation0]]
  $region69: #{timbre_vae_forward.16} parent=0
    _
  %s11 = ssub.s32 1, %s9
  %s12 = scalar_select 0, %s11, %s9
  loop: start=0, step=1, limit=4
  $region2: #{timbre_vae_forward.16} parent=0 // loop_pre_header
    _
  $region3: #{timbre_vae_forward.16} parent=0 // loop_header
    %s14 = sphi 0, %s18
    %p15 = scmp.ge.s32.totalorder %s14, 4
    %s24 = sphi 0, %s26
    %s27 = sphi 0, %s24
    %s28 = sphi 0, %s27
    %s44 = sphi 0, %s28
    %s48 = sphi 0, %s48
    %s50 = sphi 0, %s48
    %s51 = sphi 0, %s50
    %s65 = sphi 0, %s51
    %s69 = sphi 0, %s69
    %s71 = sphi 0, %s69
    %s72 = sphi 0, %s71
    %s86 = sphi 0, %s72
    %s90 = sphi 0, %s90
    %s92 = sphi 0, %s90
    %s93 = sphi 0, %s92
    %s107 = sphi 0, %s93
    %s111 = sphi 0, %s111
    %s113 = sphi 0, %s111
    %s114 = sphi 0, %s113
    %s128 = sphi 0, %s114
    %s134 = sphi 0, %s136
    %s137 = sphi 0, %s134
    %s138 = sphi 0, %s137
    %s154 = sphi 0, %s138
    %s160 = sphi 0, %s162
    %s163 = sphi 0, %s160
    %s164 = sphi 0, %s163
    %s180 = sphi 0, %s164
    %s186 = sphi 0, %s188
    %s189 = sphi 0, %s186
    %s190 = sphi 0, %s189
    %s206 = sphi 0, %s190
  $region4: #{timbre_vae_forward.16} parent=0 // loop_header_branch
    %17 = sbr.rel (%p15) target = $region8
  $region5: #{timbre_vae_forward.16} parent=0 // loop_body
    %s19 = ssub.s32 %s14, 1
    %s20 = ssub.s32 %s14, 2
    %s21 = sadd.s32 %s14, 1
    %s22 = ssub.s32 %s14, %s21
    %p23 = scmp.eq.s32.totalorder %s22, 0
    %s25 = sadd.s32 %s24, 1
    %s26 = scalar_select %p23, %s24, %s25
    %p29 = pneg %p23
    %p30 = scmp.eq.s32.totalorder %s14, 1
    %p31 = por %p29, %p30
    %p32 = scmp.ne.s32.totalorder %s24, %s27
    %p33 = scmp.eq.s32.totalorder %s14, 0
    %p34 = por %p32, %p33
    %p35 = scmp.ne.s32.totalorder %s24, %s27
    %p36 = scmp.eq.s32.totalorder %s19, 1
    %p37 = por %p35, %p36
    %p38 = scmp.ne.s32.totalorder %s27, %s28
    %p39 = scmp.eq.s32.totalorder %s19, 0
    %p40 = por %p38, %p39
    %p41 = scmp.ne.s32.totalorder %s27, %s28
    %p42 = scmp.eq.s32.totalorder %s20, 1
    %p43 = por %p41, %p42
    %p45 = scmp.ne.s32.totalorder %s28, %s44
    %p46 = scmp.eq.s32.totalorder %s20, 0
    %p47 = por %p45, %p46
    %s49 = sadd.s32 %s48, 1
    %p52 = scmp.eq.s32.totalorder %s14, 1
    %p53 = scmp.ne.s32.totalorder %s48, %s50
    %p54 = scmp.eq.s32.totalorder %s14, 0
    %p55 = por %p53, %p54
    %p56 = scmp.ne.s32.totalorder %s48, %s50
    %p57 = scmp.eq.s32.totalorder %s19, 1
    %p58 = por %p56, %p57
    %p59 = scmp.ne.s32.totalorder %s50, %s51
    %p60 = scmp.eq.s32.totalorder %s19, 0
    %p61 = por %p59, %p60
    %p62 = scmp.ne.s32.totalorder %s50, %s51
    %p63 = scmp.eq.s32.totalorder %s20, 1
    %p64 = por %p62, %p63
    %p66 = scmp.ne.s32.totalorder %s51, %s65
    %p67 = scmp.eq.s32.totalorder %s20, 0
    %p68 = por %p66, %p67
    %s70 = sadd.s32 %s69, 1
    %p73 = scmp.eq.s32.totalorder %s14, 1
    %p74 = scmp.ne.s32.totalorder %s69, %s71
    %p75 = scmp.eq.s32.totalorder %s14, 0
    %p76 = por %p74, %p75
    %p77 = scmp.ne.s32.totalorder %s69, %s71
    %p78 = scmp.eq.s32.totalorder %s19, 1
    %p79 = por %p77, %p78
    %p80 = scmp.ne.s32.totalorder %s71, %s72
    %p81 = scmp.eq.s32.totalorder %s19, 0
    %p82 = por %p80, %p81
    %p83 = scmp.ne.s32.totalorder %s71, %s72
    %p84 = scmp.eq.s32.totalorder %s20, 1
    %p85 = por %p83, %p84
    %p87 = scmp.ne.s32.totalorder %s72, %s86
    %p88 = scmp.eq.s32.totalorder %s20, 0
    %p89 = por %p87, %p88
    %s91 = sadd.s32 %s90, 1
    %p94 = scmp.eq.s32.totalorder %s14, 1
    %p95 = scmp.ne.s32.totalorder %s90, %s92
    %p96 = scmp.eq.s32.totalorder %s14, 0
    %p97 = por %p95, %p96
    %p98 = scmp.ne.s32.totalorder %s90, %s92
    %p99 = scmp.eq.s32.totalorder %s19, 1
    %p100 = por %p98, %p99
    %p101 = scmp.ne.s32.totalorder %s92, %s93
    %p102 = scmp.eq.s32.totalorder %s19, 0
    %p103 = por %p101, %p102
    %p104 = scmp.ne.s32.totalorder %s92, %s93
    %p105 = scmp.eq.s32.totalorder %s20, 1
    %p106 = por %p104, %p105
    %p108 = scmp.ne.s32.totalorder %s93, %s107
    %p109 = scmp.eq.s32.totalorder %s20, 0
    %p110 = por %p108, %p109
    %s112 = sadd.s32 %s111, 1
    %p115 = scmp.eq.s32.totalorder %s14, 1
    %p116 = scmp.ne.s32.totalorder %s111, %s113
    %p117 = scmp.eq.s32.totalorder %s14, 0
    %p118 = por %p116, %p117
    %p119 = scmp.ne.s32.totalorder %s111, %s113
    %p120 = scmp.eq.s32.totalorder %s19, 1
    %p121 = por %p119, %p120
    %p122 = scmp.ne.s32.totalorder %s113, %s114
    %p123 = scmp.eq.s32.totalorder %s19, 0
    %p124 = por %p122, %p123
    %p125 = scmp.ne.s32.totalorder %s113, %s114
    %p126 = scmp.eq.s32.totalorder %s20, 1
    %p127 = por %p125, %p126
    %p129 = scmp.ne.s32.totalorder %s114, %s128
    %p130 = scmp.eq.s32.totalorder %s20, 0
    %p131 = por %p129, %p130
    %s132 = ssub.s32 %s14, %s21
    %p133 = scmp.eq.s32.totalorder %s132, 0
    %s135 = sadd.s32 %s134, 1
    %s136 = scalar_select %p133, %s134, %s135
    %p139 = pneg %p133
    %p140 = scmp.eq.s32.totalorder %s14, 1
    %p141 = por %p139, %p140
    %p142 = scmp.ne.s32.totalorder %s134, %s137
    %p143 = scmp.eq.s32.totalorder %s14, 0
    %p144 = por %p142, %p143
    %p145 = scmp.ne.s32.totalorder %s134, %s137
    %p146 = scmp.eq.s32.totalorder %s19, 1
    %p147 = por %p145, %p146
    %p148 = scmp.ne.s32.totalorder %s137, %s138
    %p149 = scmp.eq.s32.totalorder %s19, 0
    %p150 = por %p148, %p149
    %p151 = scmp.ne.s32.totalorder %s137, %s138
    %p152 = scmp.eq.s32.totalorder %s20, 1
    %p153 = por %p151, %p152
    %p155 = scmp.ne.s32.totalorder %s138, %s154
    %p156 = scmp.eq.s32.totalorder %s20, 0
    %p157 = por %p155, %p156
    %s158 = ssub.s32 %s14, %s21
    %p159 = scmp.eq.s32.totalorder %s158, 0
    %s161 = sadd.s32 %s160, 1
    %s162 = scalar_select %p159, %s160, %s161
    %p165 = pneg %p159
    %p166 = scmp.eq.s32.totalorder %s14, 1
    %p167 = por %p165, %p166
    %p168 = scmp.ne.s32.totalorder %s160, %s163
    %p169 = scmp.eq.s32.totalorder %s14, 0
    %p170 = por %p168, %p169
    %p171 = scmp.ne.s32.totalorder %s160, %s163
    %p172 = scmp.eq.s32.totalorder %s19, 1
    %p173 = por %p171, %p172
    %p174 = scmp.ne.s32.totalorder %s163, %s164
    %p175 = scmp.eq.s32.totalorder %s19, 0
    %p176 = por %p174, %p175
    %p177 = scmp.ne.s32.totalorder %s163, %s164
    %p178 = scmp.eq.s32.totalorder %s20, 1
    %p179 = por %p177, %p178
    %p181 = scmp.ne.s32.totalorder %s164, %s180
    %p182 = scmp.eq.s32.totalorder %s20, 0
    %p183 = por %p181, %p182
    %s184 = ssub.s32 %s14, %s21
    %p185 = scmp.eq.s32.totalorder %s184, 0
    %s187 = sadd.s32 %s186, 1
    %s188 = scalar_select %p185, %s186, %s187
    %p191 = pneg %p185
    %p192 = scmp.eq.s32.totalorder %s14, 1
    %p193 = por %p191, %p192
    %p194 = scmp.ne.s32.totalorder %s186, %s189
    %p195 = scmp.eq.s32.totalorder %s14, 0
    %p196 = por %p194, %p195
    %p197 = scmp.ne.s32.totalorder %s186, %s189
    %p198 = scmp.eq.s32.totalorder %s19, 1
    %p199 = por %p197, %p198
    %p200 = scmp.ne.s32.totalorder %s189, %s190
    %p201 = scmp.eq.s32.totalorder %s19, 0
    %p202 = por %p200, %p201
    %p203 = scmp.ne.s32.totalorder %s189, %s190
    %p204 = scmp.eq.s32.totalorder %s20, 1
    %p205 = por %p203, %p204
    %p207 = scmp.ne.s32.totalorder %s190, %s206
    %p208 = scmp.eq.s32.totalorder %s20, 0
    %p209 = por %p207, %p208
    %p210 = scmp.le.s32.totalorder 1, %s14
    %p211 = scmp.lt.s32.totalorder %s14, 3
    %p212 = pnand %p210, %p211
    %p213 = pneg %p212
    // Predicated region
    $region9: #{timbre_vae_forward.16} parent=5 // pred_check
      _
    $region10: #{timbre_vae_forward.16} parent=5 // pred_check_branch
      %215 = sbr.rel (%p212) target = $region12
    $region11: #{timbre_vae_forward.16} parent=5 // pred_region
      %s216 = ssub.s32 %s14, 1
      // Predicated region
      $region13: #{timbre_vae_forward.16} parent=11 // pred_check
        %p217 = pneg %p61
      $region14: #{timbre_vae_forward.16} parent=11 // pred_check_branch
        %219 = sbr.rel (%p217) target = $region16
      $region15: #{timbre_vae_forward.16} parent=11 // pred_region
        _
      $region16: #{timbre_vae_forward.16} parent=11 // pred_fallthru
        _
      // Predicated region
      $region17: #{timbre_vae_forward.16} parent=11 // pred_check
        %p220 = pneg %p82
      $region18: #{timbre_vae_forward.16} parent=11 // pred_check_branch
        %222 = sbr.rel (%p220) target = $region20
      $region19: #{timbre_vae_forward.16} parent=11 // pred_region
        _
      $region20: #{timbre_vae_forward.16} parent=11 // pred_fallthru
        _
      // Predicated region
      $region21: #{timbre_vae_forward.16} parent=11 // pred_check
        %p223 = pneg %p103
      $region22: #{timbre_vae_forward.16} parent=11 // pred_check_branch
        %225 = sbr.rel (%p223) target = $region24
      $region23: #{timbre_vae_forward.16} parent=11 // pred_region
        _
      $region24: #{timbre_vae_forward.16} parent=11 // pred_fallthru
        _
      // Predicated region
      $region25: #{timbre_vae_forward.16} parent=11 // pred_check
        %p226 = pneg %p124
      $region26: #{timbre_vae_forward.16} parent=11 // pred_check_branch
        %228 = sbr.rel (%p226) target = $region28
      $region27: #{timbre_vae_forward.16} parent=11 // pred_region
        _
      $region28: #{timbre_vae_forward.16} parent=11 // pred_fallthru
        _
    $region12: #{timbre_vae_forward.16} parent=5 // pred_fallthru
      _
    %p229 = scmp.lt.s32.totalorder %s14, 2
    // Predicated region
    $region29: #{timbre_vae_forward.16} parent=5 // pred_check
      %p230 = pneg %p229
    $region30: #{timbre_vae_forward.16} parent=5 // pred_check_branch
      %232 = sbr.rel (%p230) target = $region32
    $region31: #{timbre_vae_forward.16} parent=5 // pred_region
      // Predicated region
      $region33: #{timbre_vae_forward.16} parent=31 // pred_check
        %p233 = pneg %p34
      $region34: #{timbre_vae_forward.16} parent=31 // pred_check_branch
        %235 = sbr.rel (%p233) target = $region36
      $region35: #{timbre_vae_forward.16} parent=31 // pred_region
        %p236 = scmp.lt.s32.totalorder %s14, 1
        %s237 = scalar_select %p236, %s14, 1
        %s238 = smul.addr %s237, 18
        %s239 = smul.addr %s238, 4
        %s240 = scalar_lea.vmem %s0, %s239
      $region36: #{timbre_vae_forward.16} parent=31 // pred_fallthru
        _
    $region32: #{timbre_vae_forward.16} parent=5 // pred_fallthru
      _
    %p241 = scmp.le.s32.totalorder 1, %s14
    %p242 = scmp.lt.s32.totalorder %s14, 3
    %p243 = pnand %p241, %p242
    %p244 = pneg %p243
    // Predicated region
    $region37: #{timbre_vae_forward.16} parent=5 // pred_check
      _
    $region38: #{timbre_vae_forward.16} parent=5 // pred_check_branch
      %246 = sbr.rel (%p243) target = $region40
    $region39: #{timbre_vae_forward.16} parent=5 // pred_region
      %s247 = ssub.s32 %s14, 1
      %p248 = scmp.lt.s32.totalorder %s19, 1
      %s249 = scalar_select %p248, %s19, 1
      %s250 = smul.addr %s249, 18
      %s251 = smul.addr %s250, 4
      %s252 = scalar_lea.vmem %s0, %s251
      %p253 = pneg %p40
      %p254 = pneg %p37
      %p255 = pneg %p61
      %p256 = pneg %p58
      %p257 = pneg %p82
      %p258 = pneg %p79
      %p259 = pneg %p103
      %p260 = pneg %p100
      %p261 = pneg %p124
      %p262 = pneg %p121
      %p263 = pneg %p150
      %p264 = pneg %p147
      %p265 = scmp.lt.s32.totalorder %s19, 1
      %s266 = scalar_select %p265, %s19, 1
      %s267 = smul.addr %s266, 8
      %s268 = smul.addr %s267, 2
      %s269 = scalar_lea.vmem %s5, %s268
      %p270 = pneg %p176
      %p271 = pneg %p173
      %p272 = scmp.lt.s32.totalorder %s19, 1
      %s273 = scalar_select %p272, %s19, 1
      %s274 = scalar_lea.vmem %s6, %s273
      %p275 = pneg %p202
      %p276 = pneg %p199
      %p277 = scmp.lt.s32.totalorder %s19, 1
      %s278 = scalar_select %p277, %s19, 1
      %s279 = scalar_lea.vmem %s7, %s278
      %p280 = scmp.lt.s32.totalorder %s19, 1
      %s281 = scalar_select %p280, %s19, 1
      %s282 = smul.addr %s281, 18
      %s283 = smul.addr %s282, 4
      %s284 = scalar_lea.vmem %s0, %s283
      %p285 = scmp.lt.s32.totalorder %s19, 1
      %s286 = scalar_select %p285, %s19, 1
      %s287 = smul.addr %s286, 8
      %s288 = smul.addr %s287, 2
      %s289 = scalar_lea.vmem %s5, %s288
      %p290 = scmp.lt.s32.totalorder %s19, 1
      %s291 = scalar_select %p290, %s19, 1
      %s292 = scalar_lea.vmem %s6, %s291
      %p293 = scmp.lt.s32.totalorder %s19, 1
      %s294 = scalar_select %p293, %s19, 1
      %s295 = scalar_lea.vmem %s7, %s294
      %v297 = vld [vmem:[%s284] sm:$0xf]
      %v298 = vld [vmem:[%s284 + $0x4] sm:$0x1]
      %v299 = vld [vmem:[%s284 + $0x8] sm:$0xf]
      %v300 = vld [vmem:[%s284 + $0xc] sm:$0x1]
      %v301 = vld [vmem:[%s284 + $0x10] sm:$0xf]
      %v302 = vld [vmem:[%s284 + $0x14] sm:$0x1]
      %v303 = vld [vmem:[%s284 + $0x18] sm:$0xf]
      %v304 = vld [vmem:[%s284 + $0x1c] sm:$0x1]
      %v305 = vld [vmem:[%s284 + $0x20] sm:$0xf]
      %v306 = vld [vmem:[%s284 + $0x24] sm:$0x1]
      %v307 = vld [vmem:[%s284 + $0x28] sm:$0xf]
      %v308 = vld [vmem:[%s284 + $0x2c] sm:$0x1]
      %v309 = vld [vmem:[%s284 + $0x30] sm:$0xf]
      %v310 = vld [vmem:[%s284 + $0x34] sm:$0x1]
      %v311 = vld [vmem:[%s284 + $0x38] sm:$0xf]
      %v312 = vld [vmem:[%s284 + $0x3c] sm:$0x1]
      %v313 = vld [vmem:[%s284 + $0x40] sm:$0xf]
      %v314 = vld [vmem:[%s284 + $0x44] sm:$0x1]
      %v315 = vunpack.c.l.bf16 %v297
      %v316 = vunpack.c.l.bf16 %v298
      %v317 = vunpack.c.l.bf16 %v299
      %v318 = vunpack.c.l.bf16 %v300
      %v319 = vunpack.c.l.bf16 %v301
      %v320 = vunpack.c.l.bf16 %v302
      %v321 = vunpack.c.l.bf16 %v303
      %v322 = vunpack.c.l.bf16 %v304
      %v323 = vunpack.c.l.bf16 %v305
      %v324 = vunpack.c.l.bf16 %v306
      %v325 = vunpack.c.l.bf16 %v307
      %v326 = vunpack.c.l.bf16 %v308
      %v327 = vunpack.c.l.bf16 %v309
      %v328 = vunpack.c.l.bf16 %v310
      %v329 = vunpack.c.l.bf16 %v311
      %v330 = vunpack.c.l.bf16 %v312
      %v331 = vunpack.c.l.bf16 %v313
      %v332 = vunpack.c.l.bf16 %v314
      %v333 = vld [vmem:[%s3] sm:$0x1]
      %v335 = vlaneseq
      %v336 = vshrl.u32 %v335, 7
      %v337 = vsub.s32 0, %v336
      %v338 = vrot.slane %v333, %v337
      %v340 = vmul.f32 %v315, %v338
      %v341 = vmul.f32 %v316, %v338
      %v342 = vmul.f32 %v317, %v338
      %v343 = vmul.f32 %v318, %v338
      %v344 = vmul.f32 %v319, %v338
      %v345 = vmul.f32 %v320, %v338
      %v346 = vmul.f32 %v321, %v338
      %v347 = vmul.f32 %v322, %v338
      %v348 = vmul.f32 %v323, %v338
      %v349 = vmul.f32 %v324, %v338
      %v350 = vmul.f32 %v325, %v338
      %v351 = vmul.f32 %v326, %v338
      %v352 = vmul.f32 %v327, %v338
      %v353 = vmul.f32 %v328, %v338
      %v354 = vmul.f32 %v329, %v338
      %v355 = vmul.f32 %v330, %v338
      %v356 = vmul.f32 %v331, %v338
      %v357 = vmul.f32 %v332, %v338
      %v358 = vld [vmem:[%s4] sm:$0x1]
      %v360 = vlaneseq
      %v361 = vshrl.u32 %v360, 7
      %v362 = vsub.s32 0, %v361
      %v363 = vrot.slane %v358, %v362
      %v365 = vadd.f32 %v340, %v363
      %v366 = vadd.f32 %v341, %v363
      %v367 = vadd.f32 %v342, %v363
      %v368 = vadd.f32 %v343, %v363
      %v369 = vadd.f32 %v344, %v363
      %v370 = vadd.f32 %v345, %v363
      %v371 = vadd.f32 %v346, %v363
      %v372 = vadd.f32 %v347, %v363
      %v373 = vadd.f32 %v348, %v363
      %v374 = vadd.f32 %v349, %v363
      %v375 = vadd.f32 %v350, %v363
      %v376 = vadd.f32 %v351, %v363
      %v377 = vadd.f32 %v352, %v363
      %v378 = vadd.f32 %v353, %v363
      %v379 = vadd.f32 %v354, %v363
      %v380 = vadd.f32 %v355, %v363
      %v381 = vadd.f32 %v356, %v363
      %v382 = vadd.f32 %v357, %v363
      %vm383 = vcmp.gt.f32.partialorder %v365, 0.0
      %vm384 = vcmp.gt.f32.partialorder %v366, 0.0
      %vm385 = vcmp.gt.f32.partialorder %v367, 0.0
      %vm386 = vcmp.gt.f32.partialorder %v368, 0.0
      %vm387 = vcmp.gt.f32.partialorder %v369, 0.0
      %vm388 = vcmp.gt.f32.partialorder %v370, 0.0
      %vm389 = vcmp.gt.f32.partialorder %v371, 0.0
      %vm390 = vcmp.gt.f32.partialorder %v372, 0.0
      %vm391 = vcmp.gt.f32.partialorder %v373, 0.0
      %vm392 = vcmp.gt.f32.partialorder %v374, 0.0
      %vm393 = vcmp.gt.f32.partialorder %v375, 0.0
      %vm394 = vcmp.gt.f32.partialorder %v376, 0.0
      %vm395 = vcmp.gt.f32.partialorder %v377, 0.0
      %vm396 = vcmp.gt.f32.partialorder %v378, 0.0
      %vm397 = vcmp.gt.f32.partialorder %v379, 0.0
      %vm398 = vcmp.gt.f32.partialorder %v380, 0.0
      %vm399 = vcmp.gt.f32.partialorder %v381, 0.0
      %vm400 = vcmp.gt.f32.partialorder %v382, 0.0
      %v401 = vmul.f32 %v365, 0.01
      %v402 = vmul.f32 %v366, 0.01
      %v403 = vmul.f32 %v367, 0.01
      %v404 = vmul.f32 %v368, 0.01
      %v405 = vmul.f32 %v369, 0.01
      %v406 = vmul.f32 %v370, 0.01
      %v407 = vmul.f32 %v371, 0.01
      %v408 = vmul.f32 %v372, 0.01
      %v409 = vmul.f32 %v373, 0.01
      %v410 = vmul.f32 %v374, 0.01
      %v411 = vmul.f32 %v375, 0.01
      %v412 = vmul.f32 %v376, 0.01
      %v413 = vmul.f32 %v377, 0.01
      %v414 = vmul.f32 %v378, 0.01
      %v415 = vmul.f32 %v379, 0.01
      %v416 = vmul.f32 %v380, 0.01
      %v417 = vmul.f32 %v381, 0.01
      %v418 = vmul.f32 %v382, 0.01
      %v419 = vsel %vm383, %v365, %v401
      %v420 = vsel %vm384, %v366, %v402
      %v421 = vsel %vm385, %v367, %v403
      %v422 = vsel %vm386, %v368, %v404
      %v423 = vsel %vm387, %v369, %v405
      %v424 = vsel %vm388, %v370, %v406
      %v425 = vsel %vm389, %v371, %v407
      %v426 = vsel %vm390, %v372, %v408
      %v427 = vsel %vm391, %v373, %v409
      %v428 = vsel %vm392, %v374, %v410
      %v429 = vsel %vm393, %v375, %v411
      %v430 = vsel %vm394, %v376, %v412
      %v431 = vsel %vm395, %v377, %v413
      %v432 = vsel %vm396, %v378, %v414
      %v433 = vsel %vm397, %v379, %v415
      %v434 = vsel %vm398, %v380, %v416
      %v435 = vsel %vm399, %v381, %v417
      %v436 = vsel %vm400, %v382, %v418
      %v437 = vpack.c.bf16 %v421, %v419
      %v438 = vpack.c.bf16 %v425, %v423
      %v439 = vpack.c.bf16 %v429, %v427
      %v440 = vpack.c.bf16 %v433, %v431
      %v441 = vld [vmem:[%s1] sm:$0xf]
      %vm458 = vcmask 1046528
      %v459 = vrot.slane %v419, 1
      %v460 = vrot.slane %v420, 1
      %v461 = vsel %vm458, %v459, %v460
      %v462 = vrot.slane %v421, 1
      %v463 = vrot.slane %v422, 1
      %v464 = vsel %vm458, %v462, %v463
      %v465 = vrot.slane %v423, 1
      %v466 = vrot.slane %v424, 1
      %v467 = vsel %vm458, %v465, %v466
      %v468 = vrot.slane %v425, 1
      %v469 = vrot.slane %v426, 1
      %v470 = vsel %vm458, %v468, %v469
      %v471 = vrot.slane %v427, 1
      %v472 = vrot.slane %v428, 1
      %v473 = vsel %vm458, %v471, %v472
      %v474 = vrot.slane %v429, 1
      %v475 = vrot.slane %v430, 1
      %v476 = vsel %vm458, %v474, %v475
      %v477 = vrot.slane %v431, 1
      %v478 = vrot.slane %v432, 1
      %v479 = vsel %vm458, %v477, %v478
      %v480 = vrot.slane %v433, 1
      %v481 = vrot.slane %v434, 1
      %v482 = vsel %vm458, %v480, %v481
      %v491 = vpack.c.bf16 %v464, %v461
      %v492 = vpack.c.bf16 %v470, %v467
      %v493 = vpack.c.bf16 %v476, %v473
      %v494 = vpack.c.bf16 %v482, %v479
      %s495 = scalar_lea.vmem %s1, 4
      %v496 = vld [vmem:[%s495] sm:$0xf]
      %vm497 = vcmask 64512
      %v499 = vsel %vm497, %v491, 0
      %v502 = vsel %vm497, %v492, 0
      %v505 = vsel %vm497, %v493, 0
      %v508 = vsel %vm497, %v494, 0
      %vm510 = vcmask 1043456
      %v512 = vsel %vm510, %v496, 0
      %514 = vmatprep.subr.bf16.mxu0 0
      %515 = vmatpush1.bf16.msra.mxu0 0
      %516 = vmatprep.subr.bf16.mxu0 0
      %517 = vmatpush1.bf16.msra.mxu0 0
      %518 = vmatprep.subr.bf16.mxu0 0
      %519 = vmatpush1.bf16.msra.mxu0 0
      %520 = vmatprep.subr.bf16.mxu0 0
      %521 = vmatpush1.bf16.msra.mxu0 0
      %522 = vmatprep.subr.bf16.mxu0 0
      %523 = vmatpush1.bf16.msra.mxu0 0
      %524 = vmatprep.subr.bf16.mxu0 0
      %525 = vmatpush1.bf16.msra.mxu0 0
      %526 = vmatprep.subr.bf16.mxu0 0
      %527 = vmatpush1.bf16.msra.mxu0 0
      %528 = vmatprep.subr.bf16.mxu0 0
      %529 = vmatpush1.bf16.msra.mxu0 %v512
      %530 = vmatprep.subr.bf16.mxu0 0
      %531 = vmatpush2.bf16.msra.mxu0 0
      %532 = vmatprep.subr.bf16.mxu0 0
      %533 = vmatpush2.bf16.msra.mxu0 0
      %534 = vmatprep.subr.bf16.mxu0 0
      %535 = vmatpush2.bf16.msra.mxu0 0
      %536 = vmatprep.subr.bf16.mxu0 0
      %537 = vmatpush2.bf16.msra.mxu0 0
      %538 = vmatprep.subr.bf16.mxu0 0
      %539 = vmatpush2.bf16.msra.mxu0 0
      %540 = vmatprep.subr.bf16.mxu0 0
      %541 = vmatpush2.bf16.msra.mxu0 0
      %542 = vmatprep.subr.bf16.mxu0 0
      %543 = vmatpush2.bf16.msra.mxu0 0
      %544 = vmatprep.subr.bf16.mxu0 0
      %545 = vmatpush2.bf16.msra.mxu0 0
      %546 = vmatprep.mubr.bf16.mxu0 0
      %547 = vmatmul.mubr.bf16.gmra.mxu0 %v499
      %v548 = vpop.f32.mrf.mxu0
      %v549 = vadd.f32 0.0, %v548
      %v550 = vpop.f32.mrf.mxu0
      %v551 = vpop.f32.mrf.mxu0
      %v552 = vadd.f32 0.0, %v551
      %v553 = vpop.f32.mrf.mxu0
      %554 = vmatprep.mubr.bf16.mxu0 0
      %555 = vmatmul.mubr.bf16.gmra.mxu0 %v502
      %v556 = vpop.f32.mrf.mxu0
      %v557 = vadd.f32 0.0, %v556
      %v558 = vpop.f32.mrf.mxu0
      %v559 = vpop.f32.mrf.mxu0
      %v560 = vadd.f32 0.0, %v559
      %v561 = vpop.f32.mrf.mxu0
      %562 = vmatprep.mubr.bf16.mxu0 0
      %563 = vmatmul.mubr.bf16.gmra.mxu0 %v505
      %v564 = vpop.f32.mrf.mxu0
      %v565 = vadd.f32 0.0, %v564
      %v566 = vpop.f32.mrf.mxu0
      %v567 = vpop.f32.mrf.mxu0
      %v568 = vadd.f32 0.0, %v567
      %v569 = vpop.f32.mrf.mxu0
      %570 = vmatprep.mubr.bf16.mxu0 0
      %571 = vmatmul.mubr.bf16.gmra.mxu0 %v508
      %v572 = vpop.f32.mrf.mxu0
      %v573 = vadd.f32 0.0, %v572
      %v574 = vpop.f32.mrf.mxu0
      %v575 = vpop.f32.mrf.mxu0
      %v576 = vadd.f32 0.0, %v575
      %v577 = vpop.f32.mrf.mxu0
      %578 = vdwg.mxu0
      %v580 = vsel %vm497, %v437, 0
      %v583 = vsel %vm497, %v438, 0
      %v586 = vsel %vm497, %v439, 0
      %v589 = vsel %vm497, %v440, 0
      %v592 = vsel %vm510, %v441, 0
      %594 = vmatprep.subr.bf16.mxu0 0
      %595 = vmatpush1.bf16.msra.mxu0 0
      %596 = vmatprep.subr.bf16.mxu0 0
      %597 = vmatpush1.bf16.msra.mxu0 0
      %598 = vmatprep.subr.bf16.mxu0 0
      %599 = vmatpush1.bf16.msra.mxu0 0
      %600 = vmatprep.subr.bf16.mxu0 0
      %601 = vmatpush1.bf16.msra.mxu0 0
      %602 = vmatprep.subr.bf16.mxu0 0
      %603 = vmatpush1.bf16.msra.mxu0 0
      %604 = vmatprep.subr.bf16.mxu0 0
      %605 = vmatpush1.bf16.msra.mxu0 0
      %606 = vmatprep.subr.bf16.mxu0 0
      %607 = vmatpush1.bf16.msra.mxu0 0
      %608 = vmatprep.subr.bf16.mxu0 0
      %609 = vmatpush1.bf16.msra.mxu0 %v592
      %610 = vmatprep.subr.bf16.mxu0 0
      %611 = vmatpush2.bf16.msra.mxu0 0
      %612 = vmatprep.subr.bf16.mxu0 0
      %613 = vmatpush2.bf16.msra.mxu0 0
      %614 = vmatprep.subr.bf16.mxu0 0
      %615 = vmatpush2.bf16.msra.mxu0 0
      %616 = vmatprep.subr.bf16.mxu0 0
      %617 = vmatpush2.bf16.msra.mxu0 0
      %618 = vmatprep.subr.bf16.mxu0 0
      %619 = vmatpush2.bf16.msra.mxu0 0
      %620 = vmatprep.subr.bf16.mxu0 0
      %621 = vmatpush2.bf16.msra.mxu0 0
      %622 = vmatprep.subr.bf16.mxu0 0
      %623 = vmatpush2.bf16.msra.mxu0 0
      %624 = vmatprep.subr.bf16.mxu0 0
      %625 = vmatpush2.bf16.msra.mxu0 0
      %626 = vmatprep.mubr.bf16.mxu0 0
      %627 = vmatmul.mubr.bf16.gmra.mxu0 %v580
      %v628 = vpop.f32.mrf.mxu0
      %v629 = vadd.f32 %v549, %v628
      %v630 = vpop.f32.mrf.mxu0
      %v631 = vpop.f32.mrf.mxu0
      %v632 = vadd.f32 %v552, %v631
      %v633 = vpop.f32.mrf.mxu0
      %634 = vmatprep.mubr.bf16.mxu0 0
      %635 = vmatmul.mubr.bf16.gmra.mxu0 %v583
      %v636 = vpop.f32.mrf.mxu0
      %v637 = vadd.f32 %v557, %v636
      %v638 = vpop.f32.mrf.mxu0
      %v639 = vpop.f32.mrf.mxu0
      %v640 = vadd.f32 %v560, %v639
      %v641 = vpop.f32.mrf.mxu0
      %642 = vmatprep.mubr.bf16.mxu0 0
      %643 = vmatmul.mubr.bf16.gmra.mxu0 %v586
      %v644 = vpop.f32.mrf.mxu0
      %v645 = vadd.f32 %v565, %v644
      %v646 = vpop.f32.mrf.mxu0
      %v647 = vpop.f32.mrf.mxu0
      %v648 = vadd.f32 %v568, %v647
      %v649 = vpop.f32.mrf.mxu0
      %650 = vmatprep.mubr.bf16.mxu0 0
      %651 = vmatmul.mubr.bf16.gmra.mxu0 %v589
      %v652 = vpop.f32.mrf.mxu0
      %v653 = vadd.f32 %v573, %v652
      %v654 = vpop.f32.mrf.mxu0
      %v655 = vpop.f32.mrf.mxu0
      %v656 = vadd.f32 %v576, %v655
      %v657 = vpop.f32.mrf.mxu0
      %658 = vdwg.mxu0
      %v659 = vpack.c.bf16 %v423, %v421
      %v660 = vpack.c.bf16 %v427, %v425
      %v661 = vpack.c.bf16 %v431, %v429
      %v662 = vpack.c.bf16 %v435, %v433
      %s663 = scalar_lea.vmem %s1, 8
      %v664 = vld [vmem:[%s663] sm:$0xf]
      %v666 = vsel %vm497, %v659, 0
      %v669 = vsel %vm497, %v660, 0
      %v672 = vsel %vm497, %v661, 0
      %v675 = vsel %vm497, %v662, 0
      %v678 = vsel %vm510, %v664, 0
      %680 = vmatprep.subr.bf16.mxu0 0
      %681 = vmatpush1.bf16.msra.mxu0 0
      %682 = vmatprep.subr.bf16.mxu0 0
      %683 = vmatpush1.bf16.msra.mxu0 0
      %684 = vmatprep.subr.bf16.mxu0 0
      %685 = vmatpush1.bf16.msra.mxu0 0
      %686 = vmatprep.subr.bf16.mxu0 0
      %687 = vmatpush1.bf16.msra.mxu0 0
      %688 = vmatprep.subr.bf16.mxu0 0
      %689 = vmatpush1.bf16.msra.mxu0 0
      %690 = vmatprep.subr.bf16.mxu0 0
      %691 = vmatpush1.bf16.msra.mxu0 0
      %692 = vmatprep.subr.bf16.mxu0 0
      %693 = vmatpush1.bf16.msra.mxu0 0
      %694 = vmatprep.subr.bf16.mxu0 0
      %695 = vmatpush1.bf16.msra.mxu0 %v678
      %696 = vmatprep.subr.bf16.mxu0 0
      %697 = vmatpush2.bf16.msra.mxu0 0
      %698 = vmatprep.subr.bf16.mxu0 0
      %699 = vmatpush2.bf16.msra.mxu0 0
      %700 = vmatprep.subr.bf16.mxu0 0
      %701 = vmatpush2.bf16.msra.mxu0 0
      %702 = vmatprep.subr.bf16.mxu0 0
      %703 = vmatpush2.bf16.msra.mxu0 0
      %704 = vmatprep.subr.bf16.mxu0 0
      %705 = vmatpush2.bf16.msra.mxu0 0
      %706 = vmatprep.subr.bf16.mxu0 0
      %707 = vmatpush2.bf16.msra.mxu0 0
      %708 = vmatprep.subr.bf16.mxu0 0
      %709 = vmatpush2.bf16.msra.mxu0 0
      %710 = vmatprep.subr.bf16.mxu0 0
      %711 = vmatpush2.bf16.msra.mxu0 0
      %712 = vmatprep.mubr.bf16.mxu0 0
      %713 = vmatmul.mubr.bf16.gmra.mxu0 %v666
      %v714 = vpop.f32.mrf.mxu0
      %v715 = vadd.f32 0.0, %v714
      %v716 = vpop.f32.mrf.mxu0
      %v717 = vpop.f32.mrf.mxu0
      %v718 = vadd.f32 0.0, %v717
      %v719 = vpop.f32.mrf.mxu0
      %720 = vmatprep.mubr.bf16.mxu0 0
      %721 = vmatmul.mubr.bf16.gmra.mxu0 %v669
      %v722 = vpop.f32.mrf.mxu0
      %v723 = vadd.f32 0.0, %v722
      %v724 = vpop.f32.mrf.mxu0
      %v725 = vpop.f32.mrf.mxu0
      %v726 = vadd.f32 0.0, %v725
      %v727 = vpop.f32.mrf.mxu0
      %728 = vmatprep.mubr.bf16.mxu0 0
      %729 = vmatmul.mubr.bf16.gmra.mxu0 %v672
      %v730 = vpop.f32.mrf.mxu0
      %v731 = vadd.f32 0.0, %v730
      %v732 = vpop.f32.mrf.mxu0
      %v733 = vpop.f32.mrf.mxu0
      %v734 = vadd.f32 0.0, %v733
      %v735 = vpop.f32.mrf.mxu0
      %736 = vmatprep.mubr.bf16.mxu0 0
      %737 = vmatmul.mubr.bf16.gmra.mxu0 %v675
      %v738 = vpop.f32.mrf.mxu0
      %v739 = vadd.f32 0.0, %v738
      %v740 = vpop.f32.mrf.mxu0
      %v741 = vpop.f32.mrf.mxu0
      %v742 = vadd.f32 0.0, %v741
      %v743 = vpop.f32.mrf.mxu0
      %744 = vdwg.mxu0
      %v745 = vadd.f32 %v629, %v715
      %v746 = vadd.f32 %v632, %v718
      %v747 = vadd.f32 %v637, %v723
      %v748 = vadd.f32 %v640, %v726
      %v749 = vadd.f32 %v645, %v731
      %v750 = vadd.f32 %v648, %v734
      %v751 = vadd.f32 %v653, %v739
      %v752 = vadd.f32 %v656, %v742
      %v755 = vrot.slane %v435, 1
      %v756 = vrot.slane %v436, 1
      %v757 = vsel %vm458, %v755, %v756
      %v759 = vpack.c.bf16 %v467, %v464
      %v760 = vpack.c.bf16 %v473, %v470
      %v761 = vpack.c.bf16 %v479, %v476
      %v762 = vpack.c.bf16 %v757, %v482
      %s763 = scalar_lea.vmem %s1, 12
      %v764 = vld [vmem:[%s763] sm:$0xf]
      %v766 = vsel %vm497, %v759, 0
      %v769 = vsel %vm497, %v760, 0
      %v772 = vsel %vm497, %v761, 0
      %v775 = vsel %vm497, %v762, 0
      %v778 = vsel %vm510, %v764, 0
      %780 = vmatprep.subr.bf16.mxu0 0
      %781 = vmatpush1.bf16.msra.mxu0 0
      %782 = vmatprep.subr.bf16.mxu0 0
      %783 = vmatpush1.bf16.msra.mxu0 0
      %784 = vmatprep.subr.bf16.mxu0 0
      %785 = vmatpush1.bf16.msra.mxu0 0
      %786 = vmatprep.subr.bf16.mxu0 0
      %787 = vmatpush1.bf16.msra.mxu0 0
      %788 = vmatprep.subr.bf16.mxu0 0
      %789 = vmatpush1.bf16.msra.mxu0 0
      %790 = vmatprep.subr.bf16.mxu0 0
      %791 = vmatpush1.bf16.msra.mxu0 0
      %792 = vmatprep.subr.bf16.mxu0 0
      %793 = vmatpush1.bf16.msra.mxu0 0
      %794 = vmatprep.subr.bf16.mxu0 0
      %795 = vmatpush1.bf16.msra.mxu0 %v778
      %796 = vmatprep.subr.bf16.mxu0 0
      %797 = vmatpush2.bf16.msra.mxu0 0
      %798 = vmatprep.subr.bf16.mxu0 0
      %799 = vmatpush2.bf16.msra.mxu0 0
      %800 = vmatprep.subr.bf16.mxu0 0
      %801 = vmatpush2.bf16.msra.mxu0 0
      %802 = vmatprep.subr.bf16.mxu0 0
      %803 = vmatpush2.bf16.msra.mxu0 0
      %804 = vmatprep.subr.bf16.mxu0 0
      %805 = vmatpush2.bf16.msra.mxu0 0
      %806 = vmatprep.subr.bf16.mxu0 0
      %807 = vmatpush2.bf16.msra.mxu0 0
      %808 = vmatprep.subr.bf16.mxu0 0
      %809 = vmatpush2.bf16.msra.mxu0 0
      %810 = vmatprep.subr.bf16.mxu0 0
      %811 = vmatpush2.bf16.msra.mxu0 0
      %812 = vmatprep.mubr.bf16.mxu0 0
      %813 = vmatmul.mubr.bf16.gmra.mxu0 %v766
      %v814 = vpop.f32.mrf.mxu0
      %v815 = vadd.f32 0.0, %v814
      %v816 = vpop.f32.mrf.mxu0
      %v817 = vpop.f32.mrf.mxu0
      %v818 = vadd.f32 0.0, %v817
      %v819 = vpop.f32.mrf.mxu0
      %820 = vmatprep.mubr.bf16.mxu0 0
      %821 = vmatmul.mubr.bf16.gmra.mxu0 %v769
      %v822 = vpop.f32.mrf.mxu0
      %v823 = vadd.f32 0.0, %v822
      %v824 = vpop.f32.mrf.mxu0
      %v825 = vpop.f32.mrf.mxu0
      %v826 = vadd.f32 0.0, %v825
      %v827 = vpop.f32.mrf.mxu0
      %828 = vmatprep.mubr.bf16.mxu0 0
      %829 = vmatmul.mubr.bf16.gmra.mxu0 %v772
      %v830 = vpop.f32.mrf.mxu0
      %v831 = vadd.f32 0.0, %v830
      %v832 = vpop.f32.mrf.mxu0
      %v833 = vpop.f32.mrf.mxu0
      %v834 = vadd.f32 0.0, %v833
      %v835 = vpop.f32.mrf.mxu0
      %836 = vmatprep.mubr.bf16.mxu0 0
      %837 = vmatmul.mubr.bf16.gmra.mxu0 %v775
      %v838 = vpop.f32.mrf.mxu0
      %v839 = vadd.f32 0.0, %v838
      %v840 = vpop.f32.mrf.mxu0
      %v841 = vpop.f32.mrf.mxu0
      %v842 = vadd.f32 0.0, %v841
      %v843 = vpop.f32.mrf.mxu0
      %844 = vdwg.mxu0
      %v845 = vadd.f32 %v745, %v815
      %v846 = vadd.f32 %v746, %v818
      %v847 = vadd.f32 %v747, %v823
      %v848 = vadd.f32 %v748, %v826
      %v849 = vadd.f32 %v749, %v831
      %v850 = vadd.f32 %v750, %v834
      %v851 = vadd.f32 %v751, %v839
      %v852 = vadd.f32 %v752, %v842
      %v853 = vld [vmem:[%s2] sm:$0x1]
      %v855 = vlaneseq
      %v856 = vshrl.u32 %v855, 7
      %v857 = vsub.s32 0, %v856
      %v858 = vrot.slane %v853, %v857
      %v860 = vadd.f32 %v845, %v858
      %v861 = vadd.f32 %v846, %v858
      %v862 = vadd.f32 %v847, %v858
      %v863 = vadd.f32 %v848, %v858
      %v864 = vadd.f32 %v849, %v858
      %v865 = vadd.f32 %v850, %v858
      %v866 = vadd.f32 %v851, %v858
      %v867 = vadd.f32 %v852, %v858
      %v868 = vlaneseq
      %v869 = vshrl.u32 %v868, 7
      %v870 = vadd.s32 %v869, 8
      %v871 = vadd.s32 %v869, 16
      %v872 = vadd.s32 %v869, 24
      %v873 = vadd.s32 %v869, 32
      %v874 = vadd.s32 %v869, 40
      %v875 = vadd.s32 %v869, 48
      %v876 = vadd.s32 %v869, 56
      %vm877 = vcmp.lt.s32.totalorder %v869, 0
      %v878 = vsub.s32 0, %v869
      %v879 = vsel %vm877, %v878, %v869
      %v880 = vshrl.u32 %v879, 3
      %v881 = vand.u32 %v879, 7
      %v882 = vsub.s32 0, %v881
      %v883 = vsel %vm877, %v882, %v881
      %vm884 = vcmp.lt.s32.totalorder %v870, 0
      %v885 = vsub.s32 0, %v870
      %v886 = vsel %vm884, %v885, %v870
      %v887 = vshrl.u32 %v886, 3
      %v888 = vand.u32 %v886, 7
      %v889 = vsub.s32 0, %v888
      %v890 = vsel %vm884, %v889, %v888
      %vm891 = vcmp.lt.s32.totalorder %v871, 0
      %v892 = vsub.s32 0, %v871
      %v893 = vsel %vm891, %v892, %v871
      %v894 = vshrl.u32 %v893, 3
      %v895 = vand.u32 %v893, 7
      %v896 = vsub.s32 0, %v895
      %v897 = vsel %vm891, %v896, %v895
      %vm898 = vcmp.lt.s32.totalorder %v872, 0
      %v899 = vsub.s32 0, %v872
      %v900 = vsel %vm898, %v899, %v872
      %v901 = vshrl.u32 %v900, 3
      %v902 = vand.u32 %v900, 7
      %v903 = vsub.s32 0, %v902
      %v904 = vsel %vm898, %v903, %v902
      %vm905 = vcmp.lt.s32.totalorder %v873, 0
      %v906 = vsub.s32 0, %v873
      %v907 = vsel %vm905, %v906, %v873
      %v908 = vshrl.u32 %v907, 3
      %v909 = vand.u32 %v907, 7
      %v910 = vsub.s32 0, %v909
      %v911 = vsel %vm905, %v910, %v909
      %vm912 = vcmp.lt.s32.totalorder %v874, 0
      %v913 = vsub.s32 0, %v874
      %v914 = vsel %vm912, %v913, %v874
      %v915 = vshrl.u32 %v914, 3
      %v916 = vand.u32 %v914, 7
      %v917 = vsub.s32 0, %v916
      %v918 = vsel %vm912, %v917, %v916
      %vm919 = vcmp.lt.s32.totalorder %v875, 0
      %v920 = vsub.s32 0, %v875
      %v921 = vsel %vm919, %v920, %v875
      %v922 = vshrl.u32 %v921, 3
      %v923 = vand.u32 %v921, 7
      %v924 = vsub.s32 0, %v923
      %v925 = vsel %vm919, %v924, %v923
      %vm926 = vcmp.lt.s32.totalorder %v876, 0
      %v927 = vsub.s32 0, %v876
      %v928 = vsel %vm926, %v927, %v876
      %v929 = vshrl.u32 %v928, 3
      %v930 = vand.u32 %v928, 7
      %v931 = vsub.s32 0, %v930
      %v932 = vsel %vm926, %v931, %v930
      %vm933 = vcmp.ne.s32.totalorder %v883, 0
      %vm934 = vcmp.ne.s32.totalorder %v890, 0
      %vm935 = vcmp.ne.s32.totalorder %v897, 0
      %vm936 = vcmp.ne.s32.totalorder %v904, 0
      %vm937 = vcmp.ne.s32.totalorder %v911, 0
      %vm938 = vcmp.ne.s32.totalorder %v918, 0
      %vm939 = vcmp.ne.s32.totalorder %v925, 0
      %vm940 = vcmp.ne.s32.totalorder %v932, 0
      %vm941 = vcmp.lt.s32.totalorder %v883, 0
      %vm942 = vcmp.lt.s32.totalorder %v890, 0
      %vm943 = vcmp.lt.s32.totalorder %v897, 0
      %vm944 = vcmp.lt.s32.totalorder %v904, 0
      %vm945 = vcmp.lt.s32.totalorder %v911, 0
      %vm946 = vcmp.lt.s32.totalorder %v918, 0
      %vm947 = vcmp.lt.s32.totalorder %v925, 0
      %vm948 = vcmp.lt.s32.totalorder %v932, 0
      %vm949 = vmand %vm941, %vm933
      %vm950 = vmand %vm942, %vm934
      %vm951 = vmand %vm943, %vm935
      %vm952 = vmand %vm944, %vm936
      %vm953 = vmand %vm945, %vm937
      %vm954 = vmand %vm946, %vm938
      %vm955 = vmand %vm947, %vm939
      %vm956 = vmand %vm948, %vm940
      %v957 = vadd.s32 %v883, 8
      %v958 = vadd.s32 %v890, 8
      %v959 = vadd.s32 %v897, 8
      %v960 = vadd.s32 %v904, 8
      %v961 = vadd.s32 %v911, 8
      %v962 = vadd.s32 %v918, 8
      %v963 = vadd.s32 %v925, 8
      %v964 = vadd.s32 %v932, 8
      %v965 = vsel %vm949, %v957, %v883
      %v966 = vsel %vm950, %v958, %v890
      %v967 = vsel %vm951, %v959, %v897
      %v968 = vsel %vm952, %v960, %v904
      %v969 = vsel %vm953, %v961, %v911
      %v970 = vsel %vm954, %v962, %v918
      %v971 = vsel %vm955, %v963, %v925
      %v972 = vsel %vm956, %v964, %v932
      %vm973 = vcmp.lt.s32.totalorder %v965, 4
      %vm974 = vcmp.lt.s32.totalorder %v966, 4
      %vm975 = vcmp.lt.s32.totalorder %v967, 4
      %vm976 = vcmp.lt.s32.totalorder %v968, 4
      %vm977 = vcmp.lt.s32.totalorder %v969, 4
      %vm978 = vcmp.lt.s32.totalorder %v970, 4
      %vm979 = vcmp.lt.s32.totalorder %v971, 4
      %vm980 = vcmp.lt.s32.totalorder %v972, 4
      %v981 = vsel %vm973, 1, 0
      %v982 = vsel %vm974, 1, 0
      %v983 = vsel %vm975, 1, 0
      %v984 = vsel %vm976, 1, 0
      %v985 = vsel %vm977, 1, 0
      %v986 = vsel %vm978, 1, 0
      %v987 = vsel %vm979, 1, 0
      %v988 = vsel %vm980, 1, 0
      %vm989 = vcmp.eq.s32.totalorder %v981, 1
      %vm990 = vcmp.eq.s32.totalorder %v982, 1
      %vm991 = vcmp.eq.s32.totalorder %v983, 1
      %vm992 = vcmp.eq.s32.totalorder %v984, 1
      %vm993 = vcmp.eq.s32.totalorder %v985, 1
      %vm994 = vcmp.eq.s32.totalorder %v986, 1
      %vm995 = vcmp.eq.s32.totalorder %v987, 1
      %vm996 = vcmp.eq.s32.totalorder %v988, 1
      %v997 = vsel %vm989, %v860, 0.0
      %v998 = vsel %vm990, %v861, 0.0
      %v999 = vsel %vm991, %v862, 0.0
      %v1000 = vsel %vm992, %v863, 0.0
      %v1001 = vsel %vm993, %v864, 0.0
      %v1002 = vsel %vm994, %v865, 0.0
      %v1003 = vsel %vm995, %v866, 0.0
      %v1004 = vsel %vm996, %v867, 0.0
      %v1005 = vadd.f32 %v997, %v998
      %v1006 = vadd.f32 %v1005, %v999
      %v1007 = vadd.f32 %v1006, %v1000
      %v1008 = vadd.f32 %v1007, %v1001
      %v1009 = vadd.f32 %v1008, %v1002
      %v1010 = vadd.f32 %v1009, %v1003
      %v1011 = vadd.f32 %v1010, %v1004
      %v1012 = vrot.slane %v1011, 4
      %v1013 = vadd.f32 %v1011, %v1012
      %v1014 = vrot.slane %v1013, 2
      %v1015 = vadd.f32 %v1013, %v1014
      %v1016 = vrot.slane %v1015, 1
      %v1017 = vadd.f32 %v1015, %v1016
      %v1018 = vmul.f32 %v1017, 0.03125
      %v1019 = vsub.f32 %v860, %v1018
      %v1020 = vsub.f32 %v861, %v1018
      %v1021 = vsub.f32 %v862, %v1018
      %v1022 = vsub.f32 %v863, %v1018
      %v1023 = vsub.f32 %v864, %v1018
      %v1024 = vsub.f32 %v865, %v1018
      %v1025 = vsub.f32 %v866, %v1018
      %v1026 = vsub.f32 %v867, %v1018
      %v1027 = vsel %vm989, %v1019, 0.0
      %v1028 = vsel %vm990, %v1020, 0.0
      %v1029 = vsel %vm991, %v1021, 0.0
      %v1030 = vsel %vm992, %v1022, 0.0
      %v1031 = vsel %vm993, %v1023, 0.0
      %v1032 = vsel %vm994, %v1024, 0.0
      %v1033 = vsel %vm995, %v1025, 0.0
      %v1034 = vsel %vm996, %v1026, 0.0
      %v1035 = vmul.f32 %v1027, %v1027
      %v1036 = vmul.f32 %v1028, %v1028
      %v1037 = vmul.f32 %v1029, %v1029
      %v1038 = vmul.f32 %v1030, %v1030
      %v1039 = vmul.f32 %v1031, %v1031
      %v1040 = vmul.f32 %v1032, %v1032
      %v1041 = vmul.f32 %v1033, %v1033
      %v1042 = vmul.f32 %v1034, %v1034
      %v1043 = vadd.f32 %v1035, %v1036
      %v1044 = vadd.f32 %v1043, %v1037
      %v1045 = vadd.f32 %v1044, %v1038
      %v1046 = vadd.f32 %v1045, %v1039
      %v1047 = vadd.f32 %v1046, %v1040
      %v1048 = vadd.f32 %v1047, %v1041
      %v1049 = vadd.f32 %v1048, %v1042
      %v1050 = vrot.slane %v1049, 4
      %v1051 = vadd.f32 %v1049, %v1050
      %v1052 = vrot.slane %v1051, 2
      %v1053 = vadd.f32 %v1051, %v1052
      %v1054 = vrot.slane %v1053, 1
      %v1055 = vadd.f32 %v1053, %v1054
      %1056 = vst [vmem:[%s292] sm:$0x1] %v1017
      %1057 = vst [vmem:[%s295] sm:$0x1] %v1055
      %v1058 = vpack.c.bf16 %v860, %v860
      %v1059 = vpack.c.bf16 %v861, %v861
      %v1060 = vpack.c.bf16 %v862, %v862
      %v1061 = vpack.c.bf16 %v863, %v863
      %v1062 = vpack.c.bf16 %v864, %v864
      %v1063 = vpack.c.bf16 %v865, %v865
      %v1064 = vpack.c.bf16 %v866, %v866
      %v1065 = vpack.c.bf16 %v867, %v867
      %1066 = vst [vmem:[%s289] sm:$0x3] %v1058
      %1067 = vst [vmem:[%s289 + $0x2] sm:$0x3] %v1059
      %1068 = vst [vmem:[%s289 + $0x4] sm:$0x3] %v1060
      %1069 = vst [vmem:[%s289 + $0x6] sm:$0x3] %v1061
      %1070 = vst [vmem:[%s289 + $0x8] sm:$0x3] %v1062
      %1071 = vst [vmem:[%s289 + $0xa] sm:$0x3] %v1063
      %1072 = vst [vmem:[%s289 + $0xc] sm:$0x3] %v1064
      %1073 = vst [vmem:[%s289 + $0xe] sm:$0x3] %v1065
      %p1074 = scmp.lt.s32.totalorder %s19, 1
      %s1075 = scalar_select %p1074, %s19, 1
      %s1076 = smul.addr %s1075, 8
      %s1077 = smul.addr %s1076, 2
      %s1078 = scalar_lea.vmem %s5, %s1077
      %p1079 = scmp.lt.s32.totalorder %s19, 1
      %s1080 = scalar_select %p1079, %s19, 1
      %s1081 = scalar_lea.vmem %s6, %s1080
      %p1082 = scmp.lt.s32.totalorder %s19, 1
      %s1083 = scalar_select %p1082, %s19, 1
      %s1084 = scalar_lea.vmem %s7, %s1083
      // Predicated region
      $region41: #{timbre_vae_forward.16} parent=39 // pred_check
        %p1085 = pneg %p147
      $region42: #{timbre_vae_forward.16} parent=39 // pred_check_branch
        %1087 = sbr.rel (%p1085) target = $region44
      $region43: #{timbre_vae_forward.16} parent=39 // pred_region
        _
      $region44: #{timbre_vae_forward.16} parent=39 // pred_fallthru
        _
      // Predicated region
      $region45: #{timbre_vae_forward.16} parent=39 // pred_check
        %p1088 = pneg %p173
      $region46: #{timbre_vae_forward.16} parent=39 // pred_check_branch
        %1090 = sbr.rel (%p1088) target = $region48
      $region47: #{timbre_vae_forward.16} parent=39 // pred_region
        _
      $region48: #{timbre_vae_forward.16} parent=39 // pred_fallthru
        _
      // Predicated region
      $region49: #{timbre_vae_forward.16} parent=39 // pred_check
        %p1091 = pneg %p199
      $region50: #{timbre_vae_forward.16} parent=39 // pred_check_branch
        %1093 = sbr.rel (%p1091) target = $region52
      $region51: #{timbre_vae_forward.16} parent=39 // pred_region
        _
      $region52: #{timbre_vae_forward.16} parent=39 // pred_fallthru
        _
    $region40: #{timbre_vae_forward.16} parent=5 // pred_fallthru
      _
    %p1094 = scmp.le.s32.totalorder 2, %s14
    // Predicated region
    $region53: #{timbre_vae_forward.16} parent=5 // pred_check
      %p1095 = pneg %p1094
    $region54: #{timbre_vae_forward.16} parent=5 // pred_check_branch
      %1097 = sbr.rel (%p1095) target = $region56
    $region55: #{timbre_vae_forward.16} parent=5 // pred_region
      %s1098 = ssub.s32 %s14, 2
      // Predicated region
      $region57: #{timbre_vae_forward.16} parent=55 // pred_check
        %p1099 = pneg %p153
      $region58: #{timbre_vae_forward.16} parent=55 // pred_check_branch
        %1101 = sbr.rel (%p1099) target = $region60
      $region59: #{timbre_vae_forward.16} parent=55 // pred_region
        %p1102 = scmp.lt.s32.totalorder %s20, 1
        %s1103 = scalar_select %p1102, %s20, 1
        %s1104 = smul.addr %s1103, 8
        %s1105 = smul.addr %s1104, 2
        %s1106 = scalar_lea.vmem %s5, %s1105
      $region60: #{timbre_vae_forward.16} parent=55 // pred_fallthru
        _
      // Predicated region
      $region61: #{timbre_vae_forward.16} parent=55 // pred_check
        %p1107 = pneg %p179
      $region62: #{timbre_vae_forward.16} parent=55 // pred_check_branch
        %1109 = sbr.rel (%p1107) target = $region64
      $region63: #{timbre_vae_forward.16} parent=55 // pred_region
        %p1110 = scmp.lt.s32.totalorder %s20, 1
        %s1111 = scalar_select %p1110, %s20, 1
        %s1112 = scalar_lea.vmem %s6, %s1111
      $region64: #{timbre_vae_forward.16} parent=55 // pred_fallthru
        _
      // Predicated region
      $region65: #{timbre_vae_forward.16} parent=55 // pred_check
        %p1113 = pneg %p205
      $region66: #{timbre_vae_forward.16} parent=55 // pred_check_branch
        %1115 = sbr.rel (%p1113) target = $region68
      $region67: #{timbre_vae_forward.16} parent=55 // pred_region
        %p1116 = scmp.lt.s32.totalorder %s20, 1
        %s1117 = scalar_select %p1116, %s20, 1
        %s1118 = scalar_lea.vmem %s7, %s1117
      $region68: #{timbre_vae_forward.16} parent=55 // pred_fallthru
        _
    $region56: #{timbre_vae_forward.16} parent=5 // pred_fallthru
      _
  $region6: #{timbre_vae_forward.16} parent=0 // loop_footer
    %s18 = sadd.s32 1, %s14
  $region7: #{timbre_vae_forward.16} parent=0 // loop_footer_branch
    %13 = sbr.rel target = $region3
  $region8: #{timbre_vae_forward.16} parent=0 // loop_exit
    _

// kernel: timbre_vae_forward.17
$region0: #{timbre_vae_forward.17}
  #allocation0 [shape = 'u32[]', space=smem, size = 0x4, offset = 0x4, fixed_abs, tag = 'smem constant byte address 0x4 - core index']
  #allocation1 [shape = 'u32[144,128]{1,0:T(1,128)}', space=vmem, size = 0x12000, scoped, tag = 'internal scratch']
  %s0 = inlined_call_operand.vmem [shape: bf16[2,18,10,8], index: 0, kind: input, shape index: {}]
  %s1 = inlined_call_operand.vmem [shape: bf16[9,8,128], index: 1, kind: input, shape index: {}]
  %s2 = inlined_call_operand.vmem [shape: f32[1,128], index: 2, kind: input, shape index: {}]
  %s3 = inlined_call_operand.vmem [shape: f32[1,8], index: 3, kind: input, shape index: {}]
  %s4 = inlined_call_operand.vmem [shape: f32[1,8], index: 4, kind: input, shape index: {}]
  %s5 = inlined_call_operand.vmem [shape: f32[2,16,8,128], index: 5, kind: output, shape index: {}]
  %s6 = sld [smem:[#allocation0]]
  $region53: #{timbre_vae_forward.17} parent=0
    _
  %s8 = ssub.s32 1, %s6
  %s9 = scalar_select 0, %s8, %s6
  loop: start=0, step=1, limit=4
  $region2: #{timbre_vae_forward.17} parent=0 // loop_pre_header
    _
  $region3: #{timbre_vae_forward.17} parent=0 // loop_header
    %s11 = sphi 0, %s15
    %p12 = scmp.ge.s32.totalorder %s11, 4
    %s21 = sphi 0, %s23
    %s24 = sphi 0, %s21
    %s25 = sphi 0, %s24
    %s41 = sphi 0, %s25
    %s45 = sphi 0, %s45
    %s47 = sphi 0, %s45
    %s48 = sphi 0, %s47
    %s62 = sphi 0, %s48
    %s66 = sphi 0, %s66
    %s68 = sphi 0, %s66
    %s69 = sphi 0, %s68
    %s83 = sphi 0, %s69
    %s87 = sphi 0, %s87
    %s89 = sphi 0, %s87
    %s90 = sphi 0, %s89
    %s104 = sphi 0, %s90
    %s108 = sphi 0, %s108
    %s110 = sphi 0, %s108
    %s111 = sphi 0, %s110
    %s125 = sphi 0, %s111
    %s131 = sphi 0, %s133
    %s134 = sphi 0, %s131
    %s135 = sphi 0, %s134
    %s151 = sphi 0, %s135
  $region4: #{timbre_vae_forward.17} parent=0 // loop_header_branch
    %14 = sbr.rel (%p12) target = $region8
  $region5: #{timbre_vae_forward.17} parent=0 // loop_body
    %s16 = ssub.s32 %s11, 1
    %s17 = ssub.s32 %s11, 2
    %s18 = sadd.s32 %s11, 1
    %s19 = ssub.s32 %s11, %s18
    %p20 = scmp.eq.s32.totalorder %s19, 0
    %s22 = sadd.s32 %s21, 1
    %s23 = scalar_select %p20, %s21, %s22
    %p26 = pneg %p20
    %p27 = scmp.eq.s32.totalorder %s11, 1
    %p28 = por %p26, %p27
    %p29 = scmp.ne.s32.totalorder %s21, %s24
    %p30 = scmp.eq.s32.totalorder %s11, 0
    %p31 = por %p29, %p30
    %p32 = scmp.ne.s32.totalorder %s21, %s24
    %p33 = scmp.eq.s32.totalorder %s16, 1
    %p34 = por %p32, %p33
    %p35 = scmp.ne.s32.totalorder %s24, %s25
    %p36 = scmp.eq.s32.totalorder %s16, 0
    %p37 = por %p35, %p36
    %p38 = scmp.ne.s32.totalorder %s24, %s25
    %p39 = scmp.eq.s32.totalorder %s17, 1
    %p40 = por %p38, %p39
    %p42 = scmp.ne.s32.totalorder %s25, %s41
    %p43 = scmp.eq.s32.totalorder %s17, 0
    %p44 = por %p42, %p43
    %s46 = sadd.s32 %s45, 1
    %p49 = scmp.eq.s32.totalorder %s11, 1
    %p50 = scmp.ne.s32.totalorder %s45, %s47
    %p51 = scmp.eq.s32.totalorder %s11, 0
    %p52 = por %p50, %p51
    %p53 = scmp.ne.s32.totalorder %s45, %s47
    %p54 = scmp.eq.s32.totalorder %s16, 1
    %p55 = por %p53, %p54
    %p56 = scmp.ne.s32.totalorder %s47, %s48
    %p57 = scmp.eq.s32.totalorder %s16, 0
    %p58 = por %p56, %p57
    %p59 = scmp.ne.s32.totalorder %s47, %s48
    %p60 = scmp.eq.s32.totalorder %s17, 1
    %p61 = por %p59, %p60
    %p63 = scmp.ne.s32.totalorder %s48, %s62
    %p64 = scmp.eq.s32.totalorder %s17, 0
    %p65 = por %p63, %p64
    %s67 = sadd.s32 %s66, 1
    %p70 = scmp.eq.s32.totalorder %s11, 1
    %p71 = scmp.ne.s32.totalorder %s66, %s68
    %p72 = scmp.eq.s32.totalorder %s11, 0
    %p73 = por %p71, %p72
    %p74 = scmp.ne.s32.totalorder %s66, %s68
    %p75 = scmp.eq.s32.totalorder %s16, 1
    %p76 = por %p74, %p75
    %p77 = scmp.ne.s32.totalorder %s68, %s69
    %p78 = scmp.eq.s32.totalorder %s16, 0
    %p79 = por %p77, %p78
    %p80 = scmp.ne.s32.totalorder %s68, %s69
    %p81 = scmp.eq.s32.totalorder %s17, 1
    %p82 = por %p80, %p81
    %p84 = scmp.ne.s32.totalorder %s69, %s83
    %p85 = scmp.eq.s32.totalorder %s17, 0
    %p86 = por %p84, %p85
    %s88 = sadd.s32 %s87, 1
    %p91 = scmp.eq.s32.totalorder %s11, 1
    %p92 = scmp.ne.s32.totalorder %s87, %s89
    %p93 = scmp.eq.s32.totalorder %s11, 0
    %p94 = por %p92, %p93
    %p95 = scmp.ne.s32.totalorder %s87, %s89
    %p96 = scmp.eq.s32.totalorder %s16, 1
    %p97 = por %p95, %p96
    %p98 = scmp.ne.s32.totalorder %s89, %s90
    %p99 = scmp.eq.s32.totalorder %s16, 0
    %p100 = por %p98, %p99
    %p101 = scmp.ne.s32.totalorder %s89, %s90
    %p102 = scmp.eq.s32.totalorder %s17, 1
    %p103 = por %p101, %p102
    %p105 = scmp.ne.s32.totalorder %s90, %s104
    %p106 = scmp.eq.s32.totalorder %s17, 0
    %p107 = por %p105, %p106
    %s109 = sadd.s32 %s108, 1
    %p112 = scmp.eq.s32.totalorder %s11, 1
    %p113 = scmp.ne.s32.totalorder %s108, %s110
    %p114 = scmp.eq.s32.totalorder %s11, 0
    %p115 = por %p113, %p114
    %p116 = scmp.ne.s32.totalorder %s108, %s110
    %p117 = scmp.eq.s32.totalorder %s16, 1
    %p118 = por %p116, %p117
    %p119 = scmp.ne.s32.totalorder %s110, %s111
    %p120 = scmp.eq.s32.totalorder %s16, 0
    %p121 = por %p119, %p120
    %p122 = scmp.ne.s32.totalorder %s110, %s111
    %p123 = scmp.eq.s32.totalorder %s17, 1
    %p124 = por %p122, %p123
    %p126 = scmp.ne.s32.totalorder %s111, %s125
    %p127 = scmp.eq.s32.totalorder %s17, 0
    %p128 = por %p126, %p127
    %s129 = ssub.s32 %s11, %s18
    %p130 = scmp.eq.s32.totalorder %s129, 0
    %s132 = sadd.s32 %s131, 1
    %s133 = scalar_select %p130, %s131, %s132
    %p136 = pneg %p130
    %p137 = scmp.eq.s32.totalorder %s11, 1
    %p138 = por %p136, %p137
    %p139 = scmp.ne.s32.totalorder %s131, %s134
    %p140 = scmp.eq.s32.totalorder %s11, 0
    %p141 = por %p139, %p140
    %p142 = scmp.ne.s32.totalorder %s131, %s134
    %p143 = scmp.eq.s32.totalorder %s16, 1
    %p144 = por %p142, %p143
    %p145 = scmp.ne.s32.totalorder %s134, %s135
    %p146 = scmp.eq.s32.totalorder %s16, 0
    %p147 = por %p145, %p146
    %p148 = scmp.ne.s32.totalorder %s134, %s135
    %p149 = scmp.eq.s32.totalorder %s17, 1
    %p150 = por %p148, %p149
    %p152 = scmp.ne.s32.totalorder %s135, %s151
    %p153 = scmp.eq.s32.totalorder %s17, 0
    %p154 = por %p152, %p153
    %p155 = scmp.le.s32.totalorder 1, %s11
    %p156 = scmp.lt.s32.totalorder %s11, 3
    %p157 = pnand %p155, %p156
    %p158 = pneg %p157
    // Predicated region
    $region9: #{timbre_vae_forward.17} parent=5 // pred_check
      _
    $region10: #{timbre_vae_forward.17} parent=5 // pred_check_branch
      %160 = sbr.rel (%p157) target = $region12
    $region11: #{timbre_vae_forward.17} parent=5 // pred_region
      %s161 = ssub.s32 %s11, 1
      // Predicated region
      $region13: #{timbre_vae_forward.17} parent=11 // pred_check
        %p162 = pneg %p58
      $region14: #{timbre_vae_forward.17} parent=11 // pred_check_branch
        %164 = sbr.rel (%p162) target = $region16
      $region15: #{timbre_vae_forward.17} parent=11 // pred_region
        _
      $region16: #{timbre_vae_forward.17} parent=11 // pred_fallthru
        _
      // Predicated region
      $region17: #{timbre_vae_forward.17} parent=11 // pred_check
        %p165 = pneg %p79
      $region18: #{timbre_vae_forward.17} parent=11 // pred_check_branch
        %167 = sbr.rel (%p165) target = $region20
      $region19: #{timbre_vae_forward.17} parent=11 // pred_region
        _
      $region20: #{timbre_vae_forward.17} parent=11 // pred_fallthru
        _
      // Predicated region
      $region21: #{timbre_vae_forward.17} parent=11 // pred_check
        %p168 = pneg %p100
      $region22: #{timbre_vae_forward.17} parent=11 // pred_check_branch
        %170 = sbr.rel (%p168) target = $region24
      $region23: #{timbre_vae_forward.17} parent=11 // pred_region
        _
      $region24: #{timbre_vae_forward.17} parent=11 // pred_fallthru
        _
      // Predicated region
      $region25: #{timbre_vae_forward.17} parent=11 // pred_check
        %p171 = pneg %p121
      $region26: #{timbre_vae_forward.17} parent=11 // pred_check_branch
        %173 = sbr.rel (%p171) target = $region28
      $region27: #{timbre_vae_forward.17} parent=11 // pred_region
        _
      $region28: #{timbre_vae_forward.17} parent=11 // pred_fallthru
        _
    $region12: #{timbre_vae_forward.17} parent=5 // pred_fallthru
      _
    %p174 = scmp.lt.s32.totalorder %s11, 2
    // Predicated region
    $region29: #{timbre_vae_forward.17} parent=5 // pred_check
      %p175 = pneg %p174
    $region30: #{timbre_vae_forward.17} parent=5 // pred_check_branch
      %177 = sbr.rel (%p175) target = $region32
    $region31: #{timbre_vae_forward.17} parent=5 // pred_region
      // Predicated region
      $region33: #{timbre_vae_forward.17} parent=31 // pred_check
        %p178 = pneg %p31
      $region34: #{timbre_vae_forward.17} parent=31 // pred_check_branch
        %180 = sbr.rel (%p178) target = $region36
      $region35: #{timbre_vae_forward.17} parent=31 // pred_region
        %p181 = scmp.lt.s32.totalorder %s11, 1
        %s182 = scalar_select %p181, %s11, 1
        %s183 = smul.addr %s182, 36
        %s184 = smul.addr %s183, 4
        %s185 = scalar_lea.vmem %s0, %s184
      $region36: #{timbre_vae_forward.17} parent=31 // pred_fallthru
        _
    $region32: #{timbre_vae_forward.17} parent=5 // pred_fallthru
      _
    %p186 = scmp.le.s32.totalorder 1, %s11
    %p187 = scmp.lt.s32.totalorder %s11, 3
    %p188 = pnand %p186, %p187
    %p189 = pneg %p188
    // Predicated region
    $region37: #{timbre_vae_forward.17} parent=5 // pred_check
      _
    $region38: #{timbre_vae_forward.17} parent=5 // pred_check_branch
      %191 = sbr.rel (%p188) target = $region40
    $region39: #{timbre_vae_forward.17} parent=5 // pred_region
      %s192 = ssub.s32 %s11, 1
      %p193 = scmp.lt.s32.totalorder %s16, 1
      %s194 = scalar_select %p193, %s16, 1
      %s195 = smul.addr %s194, 36
      %s196 = smul.addr %s195, 4
      %s197 = scalar_lea.vmem %s0, %s196
      %p198 = pneg %p37
      %p199 = pneg %p34
      %p200 = pneg %p58
      %p201 = pneg %p55
      %p202 = pneg %p79
      %p203 = pneg %p76
      %p204 = pneg %p100
      %p205 = pneg %p97
      %p206 = pneg %p121
      %p207 = pneg %p118
      %p208 = pneg %p147
      %p209 = pneg %p144
      %p210 = scmp.lt.s32.totalorder %s16, 1
      %s211 = scalar_select %p210, %s16, 1
      %s212 = smul.addr %s211, 16
      %s213 = smul.addr %s212, 8
      %s214 = scalar_lea.vmem %s5, %s213
      %p215 = scmp.lt.s32.totalorder %s16, 1
      %s216 = scalar_select %p215, %s16, 1
      %s217 = smul.addr %s216, 36
      %s218 = smul.addr %s217, 4
      %s219 = scalar_lea.vmem %s0, %s218
      %p220 = scmp.lt.s32.totalorder %s16, 1
      %s221 = scalar_select %p220, %s16, 1
      %s222 = smul.addr %s221, 16
      %s223 = smul.addr %s222, 8
      %s224 = scalar_lea.vmem %s5, %s223
      %v226 = vld [vmem:[%s219] sm:$0xf]
      %v227 = vld [vmem:[%s219 + $0x4] sm:$0x1]
      %v228 = vld [vmem:[%s219 + $0x8] sm:$0xf]
      %v229 = vld [vmem:[%s219 + $0xc] sm:$0x1]
      %v230 = vld [vmem:[%s219 + $0x10] sm:$0xf]
      %v231 = vld [vmem:[%s219 + $0x14] sm:$0x1]
      %v232 = vld [vmem:[%s219 + $0x18] sm:$0xf]
      %v233 = vld [vmem:[%s219 + $0x1c] sm:$0x1]
      %v234 = vld [vmem:[%s219 + $0x20] sm:$0xf]
      %v235 = vld [vmem:[%s219 + $0x24] sm:$0x1]
      %v236 = vld [vmem:[%s219 + $0x28] sm:$0xf]
      %v237 = vld [vmem:[%s219 + $0x2c] sm:$0x1]
      %v238 = vld [vmem:[%s219 + $0x30] sm:$0xf]
      %v239 = vld [vmem:[%s219 + $0x34] sm:$0x1]
      %v240 = vld [vmem:[%s219 + $0x38] sm:$0xf]
      %v241 = vld [vmem:[%s219 + $0x3c] sm:$0x1]
      %v242 = vld [vmem:[%s219 + $0x40] sm:$0xf]
      %v243 = vld [vmem:[%s219 + $0x44] sm:$0x1]
      %v244 = vld [vmem:[%s219 + $0x48] sm:$0xf]
      %v245 = vld [vmem:[%s219 + $0x4c] sm:$0x1]
      %v246 = vld [vmem:[%s219 + $0x50] sm:$0xf]
      %v247 = vld [vmem:[%s219 + $0x54] sm:$0x1]
      %v248 = vld [vmem:[%s219 + $0x58] sm:$0xf]
      %v249 = vld [vmem:[%s219 + $0x5c] sm:$0x1]
      %v250 = vld [vmem:[%s219 + $0x60] sm:$0xf]
      %v251 = vld [vmem:[%s219 + $0x64] sm:$0x1]
      %v252 = vld [vmem:[%s219 + $0x68] sm:$0xf]
      %v253 = vld [vmem:[%s219 + $0x6c] sm:$0x1]
      %v254 = vld [vmem:[%s219 + $0x70] sm:$0xf]
      %v255 = vld [vmem:[%s219 + $0x74] sm:$0x1]
      %v256 = vld [vmem:[%s219 + $0x78] sm:$0xf]
      %v257 = vld [vmem:[%s219 + $0x7c] sm:$0x1]
      %v258 = vld [vmem:[%s219 + $0x80] sm:$0xf]
      %v259 = vld [vmem:[%s219 + $0x84] sm:$0x1]
      %v260 = vld [vmem:[%s219 + $0x88] sm:$0xf]
      %v261 = vld [vmem:[%s219 + $0x8c] sm:$0x1]
      %v262 = vunpack.c.l.bf16 %v226
      %v263 = vunpack.c.l.bf16 %v227
      %v264 = vunpack.c.l.bf16 %v228
      %v265 = vunpack.c.l.bf16 %v229
      %v266 = vunpack.c.l.bf16 %v230
      %v267 = vunpack.c.l.bf16 %v231
      %v268 = vunpack.c.l.bf16 %v232
      %v269 = vunpack.c.l.bf16 %v233
      %v270 = vunpack.c.l.bf16 %v234
      %v271 = vunpack.c.l.bf16 %v235
      %v272 = vunpack.c.l.bf16 %v236
      %v273 = vunpack.c.l.bf16 %v237
      %v274 = vunpack.c.l.bf16 %v238
      %v275 = vunpack.c.l.bf16 %v239
      %v276 = vunpack.c.l.bf16 %v240
      %v277 = vunpack.c.l.bf16 %v241
      %v278 = vunpack.c.l.bf16 %v242
      %v279 = vunpack.c.l.bf16 %v243
      %v280 = vunpack.c.l.bf16 %v244
      %v281 = vunpack.c.l.bf16 %v245
      %v282 = vunpack.c.l.bf16 %v246
      %v283 = vunpack.c.l.bf16 %v247
      %v284 = vunpack.c.l.bf16 %v248
      %v285 = vunpack.c.l.bf16 %v249
      %v286 = vunpack.c.l.bf16 %v250
      %v287 = vunpack.c.l.bf16 %v251
      %v288 = vunpack.c.l.bf16 %v252
      %v289 = vunpack.c.l.bf16 %v253
      %v290 = vunpack.c.l.bf16 %v254
      %v291 = vunpack.c.l.bf16 %v255
      %v292 = vunpack.c.l.bf16 %v256
      %v293 = vunpack.c.l.bf16 %v257
      %v294 = vunpack.c.l.bf16 %v258
      %v295 = vunpack.c.l.bf16 %v259
      %v296 = vunpack.c.l.bf16 %v260
      %v297 = vunpack.c.l.bf16 %v261
      %v298 = vld [vmem:[%s3] sm:$0x1]
      %v300 = vlaneseq
      %v301 = vshrl.u32 %v300, 7
      %v302 = vsub.s32 0, %v301
      %v303 = vrot.slane %v298, %v302
      %v305 = vmul.f32 %v262, %v303
      %v306 = vmul.f32 %v263, %v303
      %v307 = vmul.f32 %v264, %v303
      %v308 = vmul.f32 %v265, %v303
      %v309 = vmul.f32 %v266, %v303
      %v310 = vmul.f32 %v267, %v303
      %v311 = vmul.f32 %v268, %v303
      %v312 = vmul.f32 %v269, %v303
      %v313 = vmul.f32 %v270, %v303
      %v314 = vmul.f32 %v271, %v303
      %v315 = vmul.f32 %v272, %v303
      %v316 = vmul.f32 %v273, %v303
      %v317 = vmul.f32 %v274, %v303
      %v318 = vmul.f32 %v275, %v303
      %v319 = vmul.f32 %v276, %v303
      %v320 = vmul.f32 %v277, %v303
      %v321 = vmul.f32 %v278, %v303
      %v322 = vmul.f32 %v279, %v303
      %v323 = vmul.f32 %v280, %v303
      %v324 = vmul.f32 %v281, %v303
      %v325 = vmul.f32 %v282, %v303
      %v326 = vmul.f32 %v283, %v303
      %v327 = vmul.f32 %v284, %v303
      %v328 = vmul.f32 %v285, %v303
      %v329 = vmul.f32 %v286, %v303
      %v330 = vmul.f32 %v287, %v303
      %v331 = vmul.f32 %v288, %v303
      %v332 = vmul.f32 %v289, %v303
      %v333 = vmul.f32 %v290, %v303
      %v334 = vmul.f32 %v291, %v303
      %v335 = vmul.f32 %v292, %v303
      %v336 = vmul.f32 %v293, %v303
      %v337 = vmul.f32 %v294, %v303
      %v338 = vmul.f32 %v295, %v303
      %v339 = vmul.f32 %v296, %v303
      %v340 = vmul.f32 %v297, %v303
      %v341 = vld [vmem:[%s4] sm:$0x1]
      %v343 = vlaneseq
      %v344 = vshrl.u32 %v343, 7
      %v345 = vsub.s32 0, %v344
      %v346 = vrot.slane %v341, %v345
      %v348 = vadd.f32 %v305, %v346
      %v349 = vadd.f32 %v306, %v346
      %v350 = vadd.f32 %v307, %v346
      %v351 = vadd.f32 %v308, %v346
      %v352 = vadd.f32 %v309, %v346
      %v353 = vadd.f32 %v310, %v346
      %v354 = vadd.f32 %v311, %v346
      %v355 = vadd.f32 %v312, %v346
      %v356 = vadd.f32 %v313, %v346
      %v357 = vadd.f32 %v314, %v346
      %v358 = vadd.f32 %v315, %v346
      %v359 = vadd.f32 %v316, %v346
      %v360 = vadd.f32 %v317, %v346
      %v361 = vadd.f32 %v318, %v346
      %v362 = vadd.f32 %v319, %v346
      %v363 = vadd.f32 %v320, %v346
      %v364 = vadd.f32 %v321, %v346
      %v365 = vadd.f32 %v322, %v346
      %v366 = vadd.f32 %v323, %v346
      %v367 = vadd.f32 %v324, %v346
      %v368 = vadd.f32 %v325, %v346
      %v369 = vadd.f32 %v326, %v346
      %v370 = vadd.f32 %v327, %v346
      %v371 = vadd.f32 %v328, %v346
      %v372 = vadd.f32 %v329, %v346
      %v373 = vadd.f32 %v330, %v346
      %v374 = vadd.f32 %v331, %v346
      %v375 = vadd.f32 %v332, %v346
      %v376 = vadd.f32 %v333, %v346
      %v377 = vadd.f32 %v334, %v346
      %v378 = vadd.f32 %v335, %v346
      %v379 = vadd.f32 %v336, %v346
      %v380 = vadd.f32 %v337, %v346
      %v381 = vadd.f32 %v338, %v346
      %v382 = vadd.f32 %v339, %v346
      %v383 = vadd.f32 %v340, %v346
      %vm384 = vcmp.gt.f32.partialorder %v348, 0.0
      %vm385 = vcmp.gt.f32.partialorder %v349, 0.0
      %vm386 = vcmp.gt.f32.partialorder %v350, 0.0
      %vm387 = vcmp.gt.f32.partialorder %v351, 0.0
      %vm388 = vcmp.gt.f32.partialorder %v352, 0.0
      %vm389 = vcmp.gt.f32.partialorder %v353, 0.0
      %vm390 = vcmp.gt.f32.partialorder %v354, 0.0
      %vm391 = vcmp.gt.f32.partialorder %v355, 0.0
      %vm392 = vcmp.gt.f32.partialorder %v356, 0.0
      %vm393 = vcmp.gt.f32.partialorder %v357, 0.0
      %vm394 = vcmp.gt.f32.partialorder %v358, 0.0
      %vm395 = vcmp.gt.f32.partialorder %v359, 0.0
      %vm396 = vcmp.gt.f32.partialorder %v360, 0.0
      %vm397 = vcmp.gt.f32.partialorder %v361, 0.0
      %vm398 = vcmp.gt.f32.partialorder %v362, 0.0
      %vm399 = vcmp.gt.f32.partialorder %v363, 0.0
      %vm400 = vcmp.gt.f32.partialorder %v364, 0.0
      %vm401 = vcmp.gt.f32.partialorder %v365, 0.0
      %vm402 = vcmp.gt.f32.partialorder %v366, 0.0
      %vm403 = vcmp.gt.f32.partialorder %v367, 0.0
      %vm404 = vcmp.gt.f32.partialorder %v368, 0.0
      %vm405 = vcmp.gt.f32.partialorder %v369, 0.0
      %vm406 = vcmp.gt.f32.partialorder %v370, 0.0
      %vm407 = vcmp.gt.f32.partialorder %v371, 0.0
      %vm408 = vcmp.gt.f32.partialorder %v372, 0.0
      %vm409 = vcmp.gt.f32.partialorder %v373, 0.0
      %vm410 = vcmp.gt.f32.partialorder %v374, 0.0
      %vm411 = vcmp.gt.f32.partialorder %v375, 0.0
      %vm412 = vcmp.gt.f32.partialorder %v376, 0.0
      %vm413 = vcmp.gt.f32.partialorder %v377, 0.0
      %vm414 = vcmp.gt.f32.partialorder %v378, 0.0
      %vm415 = vcmp.gt.f32.partialorder %v379, 0.0
      %vm416 = vcmp.gt.f32.partialorder %v380, 0.0
      %vm417 = vcmp.gt.f32.partialorder %v381, 0.0
      %vm418 = vcmp.gt.f32.partialorder %v382, 0.0
      %vm419 = vcmp.gt.f32.partialorder %v383, 0.0
      %v420 = vmul.f32 %v348, 0.01
      %v421 = vmul.f32 %v349, 0.01
      %v422 = vmul.f32 %v350, 0.01
      %v423 = vmul.f32 %v351, 0.01
      %v424 = vmul.f32 %v352, 0.01
      %v425 = vmul.f32 %v353, 0.01
      %v426 = vmul.f32 %v354, 0.01
      %v427 = vmul.f32 %v355, 0.01
      %v428 = vmul.f32 %v356, 0.01
      %v429 = vmul.f32 %v357, 0.01
      %v430 = vmul.f32 %v358, 0.01
      %v431 = vmul.f32 %v359, 0.01
      %v432 = vmul.f32 %v360, 0.01
      %v433 = vmul.f32 %v361, 0.01
      %v434 = vmul.f32 %v362, 0.01
      %v435 = vmul.f32 %v363, 0.01
      %v436 = vmul.f32 %v364, 0.01
      %v437 = vmul.f32 %v365, 0.01
      %v438 = vmul.f32 %v366, 0.01
      %v439 = vmul.f32 %v367, 0.01
      %v440 = vmul.f32 %v368, 0.01
      %v441 = vmul.f32 %v369, 0.01
      %v442 = vmul.f32 %v370, 0.01
      %v443 = vmul.f32 %v371, 0.01
      %v444 = vmul.f32 %v372, 0.01
      %v445 = vmul.f32 %v373, 0.01
      %v446 = vmul.f32 %v374, 0.01
      %v447 = vmul.f32 %v375, 0.01
      %v448 = vmul.f32 %v376, 0.01
      %v449 = vmul.f32 %v377, 0.01
      %v450 = vmul.f32 %v378, 0.01
      %v451 = vmul.f32 %v379, 0.01
      %v452 = vmul.f32 %v380, 0.01
      %v453 = vmul.f32 %v381, 0.01
      %v454 = vmul.f32 %v382, 0.01
      %v455 = vmul.f32 %v383, 0.01
      %v456 = vsel %vm384, %v348, %v420
      %v457 = vsel %vm385, %v349, %v421
      %v458 = vsel %vm386, %v350, %v422
      %v459 = vsel %vm387, %v351, %v423
      %v460 = vsel %vm388, %v352, %v424
      %v461 = vsel %vm389, %v353, %v425
      %v462 = vsel %vm390, %v354, %v426
      %v463 = vsel %vm391, %v355, %v427
      %v464 = vsel %vm392, %v356, %v428
      %v465 = vsel %vm393, %v357, %v429
      %v466 = vsel %vm394, %v358, %v430
      %v467 = vsel %vm395, %v359, %v431
      %v468 = vsel %vm396, %v360, %v432
      %v469 = vsel %vm397, %v361, %v433
      %v470 = vsel %vm398, %v362, %v434
      %v471 = vsel %vm399, %v363, %v435
      %v472 = vsel %vm400, %v364, %v436
      %v473 = vsel %vm401, %v365, %v437
      %v474 = vsel %vm402, %v366, %v438
      %v475 = vsel %vm403, %v367, %v439
      %v476 = vsel %vm404, %v368, %v440
      %v477 = vsel %vm405, %v369, %v441
      %v478 = vsel %vm406, %v370, %v442
      %v479 = vsel %vm407, %v371, %v443
      %v480 = vsel %vm408, %v372, %v444
      %v481 = vsel %vm409, %v373, %v445
      %v482 = vsel %vm410, %v374, %v446
      %v483 = vsel %vm411, %v375, %v447
      %v484 = vsel %vm412, %v376, %v448
      %v485 = vsel %vm413, %v377, %v449
      %v486 = vsel %vm414, %v378, %v450
      %v487 = vsel %vm415, %v379, %v451
      %v488 = vsel %vm416, %v380, %v452
      %v489 = vsel %vm417, %v381, %v453
      %v490 = vsel %vm418, %v382, %v454
      %v491 = vsel %vm419, %v383, %v455
      %v492 = vpack.c.bf16 %v458, %v456
      %v493 = vpack.c.bf16 %v462, %v460
      %v494 = vpack.c.bf16 %v466, %v464
      %v495 = vpack.c.bf16 %v470, %v468
      %v496 = vpack.c.bf16 %v474, %v472
      %v497 = vpack.c.bf16 %v478, %v476
      %v498 = vpack.c.bf16 %v482, %v480
      %v499 = vpack.c.bf16 %v486, %v484
      %v500 = vld [vmem:[%s1] sm:$0xf]
      %vm533 = vcmask 1046528
      %v534 = vrot.slane %v456, 1
      %v535 = vrot.slane %v457, 1
      %v536 = vsel %vm533, %v534, %v535
      %v537 = vrot.slane %v458, 1
      %v538 = vrot.slane %v459, 1
      %v539 = vsel %vm533, %v537, %v538
      %v540 = vrot.slane %v460, 1
      %v541 = vrot.slane %v461, 1
      %v542 = vsel %vm533, %v540, %v541
      %v543 = vrot.slane %v462, 1
      %v544 = vrot.slane %v463, 1
      %v545 = vsel %vm533, %v543, %v544
      %v546 = vrot.slane %v464, 1
      %v547 = vrot.slane %v465, 1
      %v548 = vsel %vm533, %v546, %v547
      %v549 = vrot.slane %v466, 1
      %v550 = vrot.slane %v467, 1
      %v551 = vsel %vm533, %v549, %v550
      %v552 = vrot.slane %v468, 1
      %v553 = vrot.slane %v469, 1
      %v554 = vsel %vm533, %v552, %v553
      %v555 = vrot.slane %v470, 1
      %v556 = vrot.slane %v471, 1
      %v557 = vsel %vm533, %v555, %v556
      %v558 = vrot.slane %v472, 1
      %v559 = vrot.slane %v473, 1
      %v560 = vsel %vm533, %v558, %v559
      %v561 = vrot.slane %v474, 1
      %v562 = vrot.slane %v475, 1
      %v563 = vsel %vm533, %v561, %v562
      %v564 = vrot.slane %v476, 1
      %v565 = vrot.slane %v477, 1
      %v566 = vsel %vm533, %v564, %v565
      %v567 = vrot.slane %v478, 1
      %v568 = vrot.slane %v479, 1
      %v569 = vsel %vm533, %v567, %v568
      %v570 = vrot.slane %v480, 1
      %v571 = vrot.slane %v481, 1
      %v572 = vsel %vm533, %v570, %v571
      %v573 = vrot.slane %v482, 1
      %v574 = vrot.slane %v483, 1
      %v575 = vsel %vm533, %v573, %v574
      %v576 = vrot.slane %v484, 1
      %v577 = vrot.slane %v485, 1
      %v578 = vsel %vm533, %v576, %v577
      %v579 = vrot.slane %v486, 1
      %v580 = vrot.slane %v487, 1
      %v581 = vsel %vm533, %v579, %v580
      %v598 = vpack.c.bf16 %v539, %v536
      %v599 = vpack.c.bf16 %v545, %v542
      %v600 = vpack.c.bf16 %v551, %v548
      %v601 = vpack.c.bf16 %v557, %v554
      %v602 = vpack.c.bf16 %v563, %v560
      %v603 = vpack.c.bf16 %v569, %v566
      %v604 = vpack.c.bf16 %v575, %v572
      %v605 = vpack.c.bf16 %v581, %v578
      %s606 = scalar_lea.vmem %s1, 4
      %v607 = vld [vmem:[%s606] sm:$0xf]
      %vm608 = vcmask 64512
      %v610 = vsel %vm608, %v598, 0
      %v613 = vsel %vm608, %v599, 0
      %v616 = vsel %vm608, %v600, 0
      %v619 = vsel %vm608, %v601, 0
      %v622 = vsel %vm608, %v602, 0
      %v625 = vsel %vm608, %v603, 0
      %v628 = vsel %vm608, %v604, 0
      %v631 = vsel %vm608, %v605, 0
      %vm633 = vcmask 1043456
      %v635 = vsel %vm633, %v607, 0
      %637 = vmatprep.subr.bf16.mxu0 0
      %638 = vmatpush1.bf16.msra.mxu0 0
      %639 = vmatprep.subr.bf16.mxu0 0
      %640 = vmatpush1.bf16.msra.mxu0 0
      %641 = vmatprep.subr.bf16.mxu0 0
      %642 = vmatpush1.bf16.msra.mxu0 0
      %643 = vmatprep.subr.bf16.mxu0 0
      %644 = vmatpush1.bf16.msra.mxu0 0
      %645 = vmatprep.subr.bf16.mxu0 0
      %646 = vmatpush1.bf16.msra.mxu0 0
      %647 = vmatprep.subr.bf16.mxu0 0
      %648 = vmatpush1.bf16.msra.mxu0 0
      %649 = vmatprep.subr.bf16.mxu0 0
      %650 = vmatpush1.bf16.msra.mxu0 0
      %651 = vmatprep.subr.bf16.mxu0 0
      %652 = vmatpush1.bf16.msra.mxu0 %v635
      %653 = vmatprep.subr.bf16.mxu0 0
      %654 = vmatpush2.bf16.msra.mxu0 0
      %655 = vmatprep.subr.bf16.mxu0 0
      %656 = vmatpush2.bf16.msra.mxu0 0
      %657 = vmatprep.subr.bf16.mxu0 0
      %658 = vmatpush2.bf16.msra.mxu0 0
      %659 = vmatprep.subr.bf16.mxu0 0
      %660 = vmatpush2.bf16.msra.mxu0 0
      %661 = vmatprep.subr.bf16.mxu0 0
      %662 = vmatpush2.bf16.msra.mxu0 0
      %663 = vmatprep.subr.bf16.mxu0 0
      %664 = vmatpush2.bf16.msra.mxu0 0
      %665 = vmatprep.subr.bf16.mxu0 0
      %666 = vmatpush2.bf16.msra.mxu0 0
      %667 = vmatprep.subr.bf16.mxu0 0
      %668 = vmatpush2.bf16.msra.mxu0 0
      %669 = vmatprep.mubr.bf16.mxu0 0
      %670 = vmatmul.mubr.bf16.gmra.mxu0 %v610
      %v671 = vpop.f32.mrf.mxu0
      %v672 = vadd.f32 0.0, %v671
      %v673 = vpop.f32.mrf.mxu0
      %v674 = vpop.f32.mrf.mxu0
      %v675 = vadd.f32 0.0, %v674
      %v676 = vpop.f32.mrf.mxu0
      %677 = vmatprep.mubr.bf16.mxu0 0
      %678 = vmatmul.mubr.bf16.gmra.mxu0 %v613
      %v679 = vpop.f32.mrf.mxu0
      %v680 = vadd.f32 0.0, %v679
      %v681 = vpop.f32.mrf.mxu0
      %v682 = vpop.f32.mrf.mxu0
      %v683 = vadd.f32 0.0, %v682
      %v684 = vpop.f32.mrf.mxu0
      %685 = vmatprep.mubr.bf16.mxu0 0
      %686 = vmatmul.mubr.bf16.gmra.mxu0 %v616
      %v687 = vpop.f32.mrf.mxu0
      %v688 = vadd.f32 0.0, %v687
      %v689 = vpop.f32.mrf.mxu0
      %v690 = vpop.f32.mrf.mxu0
      %v691 = vadd.f32 0.0, %v690
      %v692 = vpop.f32.mrf.mxu0
      %693 = vmatprep.mubr.bf16.mxu0 0
      %694 = vmatmul.mubr.bf16.gmra.mxu0 %v619
      %v695 = vpop.f32.mrf.mxu0
      %v696 = vadd.f32 0.0, %v695
      %v697 = vpop.f32.mrf.mxu0
      %v698 = vpop.f32.mrf.mxu0
      %v699 = vadd.f32 0.0, %v698
      %v700 = vpop.f32.mrf.mxu0
      %701 = vmatprep.mubr.bf16.mxu0 0
      %702 = vmatmul.mubr.bf16.gmra.mxu0 %v622
      %v703 = vpop.f32.mrf.mxu0
      %v704 = vadd.f32 0.0, %v703
      %v705 = vpop.f32.mrf.mxu0
      %v706 = vpop.f32.mrf.mxu0
      %v707 = vadd.f32 0.0, %v706
      %v708 = vpop.f32.mrf.mxu0
      %709 = vmatprep.mubr.bf16.mxu0 0
      %710 = vmatmul.mubr.bf16.gmra.mxu0 %v625
      %v711 = vpop.f32.mrf.mxu0
      %v712 = vadd.f32 0.0, %v711
      %v713 = vpop.f32.mrf.mxu0
      %v714 = vpop.f32.mrf.mxu0
      %v715 = vadd.f32 0.0, %v714
      %v716 = vpop.f32.mrf.mxu0
      %717 = vmatprep.mubr.bf16.mxu0 0
      %718 = vmatmul.mubr.bf16.gmra.mxu0 %v628
      %v719 = vpop.f32.mrf.mxu0
      %v720 = vadd.f32 0.0, %v719
      %v721 = vpop.f32.mrf.mxu0
      %v722 = vpop.f32.mrf.mxu0
      %v723 = vadd.f32 0.0, %v722
      %v724 = vpop.f32.mrf.mxu0
      %725 = vmatprep.mubr.bf16.mxu0 0
      %726 = vmatmul.mubr.bf16.gmra.mxu0 %v631
      %v727 = vpop.f32.mrf.mxu0
      %v728 = vadd.f32 0.0, %v727
      %v729 = vpop.f32.mrf.mxu0
      %v730 = vpop.f32.mrf.mxu0
      %v731 = vadd.f32 0.0, %v730
      %v732 = vpop.f32.mrf.mxu0
      %733 = vdwg.mxu0
      %v735 = vsel %vm608, %v492, 0
      %v738 = vsel %vm608, %v493, 0
      %v741 = vsel %vm608, %v494, 0
      %v744 = vsel %vm608, %v495, 0
      %v747 = vsel %vm608, %v496, 0
      %v750 = vsel %vm608, %v497, 0
      %v753 = vsel %vm608, %v498, 0
      %v756 = vsel %vm608, %v499, 0
      %v759 = vsel %vm633, %v500, 0
      %761 = vmatprep.subr.bf16.mxu0 0
      %762 = vmatpush1.bf16.msra.mxu0 0
      %763 = vmatprep.subr.bf16.mxu0 0
      %764 = vmatpush1.bf16.msra.mxu0 0
      %765 = vmatprep.subr.bf16.mxu0 0
      %766 = vmatpush1.bf16.msra.mxu0 0
      %767 = vmatprep.subr.bf16.mxu0 0
      %768 = vmatpush1.bf16.msra.mxu0 0
      %769 = vmatprep.subr.bf16.mxu0 0
      %770 = vmatpush1.bf16.msra.mxu0 0
      %771 = vmatprep.subr.bf16.mxu0 0
      %772 = vmatpush1.bf16.msra.mxu0 0
      %773 = vmatprep.subr.bf16.mxu0 0
      %774 = vmatpush1.bf16.msra.mxu0 0
      %775 = vmatprep.subr.bf16.mxu0 0
      %776 = vmatpush1.bf16.msra.mxu0 %v759
      %777 = vmatprep.subr.bf16.mxu0 0
      %778 = vmatpush2.bf16.msra.mxu0 0
      %779 = vmatprep.subr.bf16.mxu0 0
      %780 = vmatpush2.bf16.msra.mxu0 0
      %781 = vmatprep.subr.bf16.mxu0 0
      %782 = vmatpush2.bf16.msra.mxu0 0
      %783 = vmatprep.subr.bf16.mxu0 0
      %784 = vmatpush2.bf16.msra.mxu0 0
      %785 = vmatprep.subr.bf16.mxu0 0
      %786 = vmatpush2.bf16.msra.mxu0 0
      %787 = vmatprep.subr.bf16.mxu0 0
      %788 = vmatpush2.bf16.msra.mxu0 0
      %789 = vmatprep.subr.bf16.mxu0 0
      %790 = vmatpush2.bf16.msra.mxu0 0
      %791 = vmatprep.subr.bf16.mxu0 0
      %792 = vmatpush2.bf16.msra.mxu0 0
      %793 = vmatprep.mubr.bf16.mxu0 0
      %794 = vmatmul.mubr.bf16.gmra.mxu0 %v735
      %v795 = vpop.f32.mrf.mxu0
      %v796 = vadd.f32 %v672, %v795
      %v797 = vpop.f32.mrf.mxu0
      %v798 = vpop.f32.mrf.mxu0
      %v799 = vadd.f32 %v675, %v798
      %v800 = vpop.f32.mrf.mxu0
      %801 = vmatprep.mubr.bf16.mxu0 0
      %802 = vmatmul.mubr.bf16.gmra.mxu0 %v738
      %v803 = vpop.f32.mrf.mxu0
      %v804 = vadd.f32 %v680, %v803
      %v805 = vpop.f32.mrf.mxu0
      %v806 = vpop.f32.mrf.mxu0
      %v807 = vadd.f32 %v683, %v806
      %v808 = vpop.f32.mrf.mxu0
      %809 = vmatprep.mubr.bf16.mxu0 0
      %810 = vmatmul.mubr.bf16.gmra.mxu0 %v741
      %v811 = vpop.f32.mrf.mxu0
      %v812 = vadd.f32 %v688, %v811
      %v813 = vpop.f32.mrf.mxu0
      %v814 = vpop.f32.mrf.mxu0
      %v815 = vadd.f32 %v691, %v814
      %v816 = vpop.f32.mrf.mxu0
      %817 = vmatprep.mubr.bf16.mxu0 0
      %818 = vmatmul.mubr.bf16.gmra.mxu0 %v744
      %v819 = vpop.f32.mrf.mxu0
      %v820 = vadd.f32 %v696, %v819
      %v821 = vpop.f32.mrf.mxu0
      %v822 = vpop.f32.mrf.mxu0
      %v823 = vadd.f32 %v699, %v822
      %v824 = vpop.f32.mrf.mxu0
      %825 = vmatprep.mubr.bf16.mxu0 0
      %826 = vmatmul.mubr.bf16.gmra.mxu0 %v747
      %v827 = vpop.f32.mrf.mxu0
      %v828 = vadd.f32 %v704, %v827
      %v829 = vpop.f32.mrf.mxu0
      %v830 = vpop.f32.mrf.mxu0
      %v831 = vadd.f32 %v707, %v830
      %v832 = vpop.f32.mrf.mxu0
      %833 = vmatprep.mubr.bf16.mxu0 0
      %834 = vmatmul.mubr.bf16.gmra.mxu0 %v750
      %v835 = vpop.f32.mrf.mxu0
      %v836 = vadd.f32 %v712, %v835
      %v837 = vpop.f32.mrf.mxu0
      %v838 = vpop.f32.mrf.mxu0
      %v839 = vadd.f32 %v715, %v838
      %v840 = vpop.f32.mrf.mxu0
      %841 = vmatprep.mubr.bf16.mxu0 0
      %842 = vmatmul.mubr.bf16.gmra.mxu0 %v753
      %v843 = vpop.f32.mrf.mxu0
      %v844 = vadd.f32 %v720, %v843
      %v845 = vpop.f32.mrf.mxu0
      %v846 = vpop.f32.mrf.mxu0
      %v847 = vadd.f32 %v723, %v846
      %v848 = vpop.f32.mrf.mxu0
      %849 = vmatprep.mubr.bf16.mxu0 0
      %850 = vmatmul.mubr.bf16.gmra.mxu0 %v756
      %v851 = vpop.f32.mrf.mxu0
      %v852 = vadd.f32 %v728, %v851
      %v853 = vpop.f32.mrf.mxu0
      %v854 = vpop.f32.mrf.mxu0
      %v855 = vadd.f32 %v731, %v854
      %v856 = vpop.f32.mrf.mxu0
      %857 = vdwg.mxu0
      %vm858 = vcmask 1045504
      %v859 = vrot.slane %v456, 2
      %v860 = vrot.slane %v457, 2
      %v861 = vsel %vm858, %v859, %v860
      %v862 = vrot.slane %v458, 2
      %v863 = vrot.slane %v459, 2
      %v864 = vsel %vm858, %v862, %v863
      %v865 = vrot.slane %v460, 2
      %v866 = vrot.slane %v461, 2
      %v867 = vsel %vm858, %v865, %v866
      %v868 = vrot.slane %v462, 2
      %v869 = vrot.slane %v463, 2
      %v870 = vsel %vm858, %v868, %v869
      %v871 = vrot.slane %v464, 2
      %v872 = vrot.slane %v465, 2
      %v873 = vsel %vm858, %v871, %v872
      %v874 = vrot.slane %v466, 2
      %v875 = vrot.slane %v467, 2
      %v876 = vsel %vm858, %v874, %v875
      %v877 = vrot.slane %v468, 2
      %v878 = vrot.slane %v469, 2
      %v879 = vsel %vm858, %v877, %v878
      %v880 = vrot.slane %v470, 2
      %v881 = vrot.slane %v471, 2
      %v882 = vsel %vm858, %v880, %v881
      %v883 = vrot.slane %v472, 2
      %v884 = vrot.slane %v473, 2
      %v885 = vsel %vm858, %v883, %v884
      %v886 = vrot.slane %v474, 2
      %v887 = vrot.slane %v475, 2
      %v888 = vsel %vm858, %v886, %v887
      %v889 = vrot.slane %v476, 2
      %v890 = vrot.slane %v477, 2
      %v891 = vsel %vm858, %v889, %v890
      %v892 = vrot.slane %v478, 2
      %v893 = vrot.slane %v479, 2
      %v894 = vsel %vm858, %v892, %v893
      %v895 = vrot.slane %v480, 2
      %v896 = vrot.slane %v481, 2
      %v897 = vsel %vm858, %v895, %v896
      %v898 = vrot.slane %v482, 2
      %v899 = vrot.slane %v483, 2
      %v900 = vsel %vm858, %v898, %v899
      %v901 = vrot.slane %v484, 2
      %v902 = vrot.slane %v485, 2
      %v903 = vsel %vm858, %v901, %v902
      %v904 = vrot.slane %v486, 2
      %v905 = vrot.slane %v487, 2
      %v906 = vsel %vm858, %v904, %v905
      %v923 = vpack.c.bf16 %v864, %v861
      %v924 = vpack.c.bf16 %v870, %v867
      %v925 = vpack.c.bf16 %v876, %v873
      %v926 = vpack.c.bf16 %v882, %v879
      %v927 = vpack.c.bf16 %v888, %v885
      %v928 = vpack.c.bf16 %v894, %v891
      %v929 = vpack.c.bf16 %v900, %v897
      %v930 = vpack.c.bf16 %v906, %v903
      %s931 = scalar_lea.vmem %s1, 8
      %v932 = vld [vmem:[%s931] sm:$0xf]
      %v934 = vsel %vm608, %v923, 0
      %v937 = vsel %vm608, %v924, 0
      %v940 = vsel %vm608, %v925, 0
      %v943 = vsel %vm608, %v926, 0
      %v946 = vsel %vm608, %v927, 0
      %v949 = vsel %vm608, %v928, 0
      %v952 = vsel %vm608, %v929, 0
      %v955 = vsel %vm608, %v930, 0
      %v958 = vsel %vm633, %v932, 0
      %960 = vmatprep.subr.bf16.mxu0 0
      %961 = vmatpush1.bf16.msra.mxu0 0
      %962 = vmatprep.subr.bf16.mxu0 0
      %963 = vmatpush1.bf16.msra.mxu0 0
      %964 = vmatprep.subr.bf16.mxu0 0
      %965 = vmatpush1.bf16.msra.mxu0 0
      %966 = vmatprep.subr.bf16.mxu0 0
      %967 = vmatpush1.bf16.msra.mxu0 0
      %968 = vmatprep.subr.bf16.mxu0 0
      %969 = vmatpush1.bf16.msra.mxu0 0
      %970 = vmatprep.subr.bf16.mxu0 0
      %971 = vmatpush1.bf16.msra.mxu0 0
      %972 = vmatprep.subr.bf16.mxu0 0
      %973 = vmatpush1.bf16.msra.mxu0 0
      %974 = vmatprep.subr.bf16.mxu0 0
      %975 = vmatpush1.bf16.msra.mxu0 %v958
      %976 = vmatprep.subr.bf16.mxu0 0
      %977 = vmatpush2.bf16.msra.mxu0 0
      %978 = vmatprep.subr.bf16.mxu0 0
      %979 = vmatpush2.bf16.msra.mxu0 0
      %980 = vmatprep.subr.bf16.mxu0 0
      %981 = vmatpush2.bf16.msra.mxu0 0
      %982 = vmatprep.subr.bf16.mxu0 0
      %983 = vmatpush2.bf16.msra.mxu0 0
      %984 = vmatprep.subr.bf16.mxu0 0
      %985 = vmatpush2.bf16.msra.mxu0 0
      %986 = vmatprep.subr.bf16.mxu0 0
      %987 = vmatpush2.bf16.msra.mxu0 0
      %988 = vmatprep.subr.bf16.mxu0 0
      %989 = vmatpush2.bf16.msra.mxu0 0
      %990 = vmatprep.subr.bf16.mxu0 0
      %991 = vmatpush2.bf16.msra.mxu0 0
      %992 = vmatprep.mubr.bf16.mxu0 0
      %993 = vmatmul.mubr.bf16.gmra.mxu0 %v934
      %v994 = vpop.f32.mrf.mxu0
      %v995 = vadd.f32 0.0, %v994
      %v996 = vpop.f32.mrf.mxu0
      %v997 = vpop.f32.mrf.mxu0
      %v998 = vadd.f32 0.0, %v997
      %v999 = vpop.f32.mrf.mxu0
      %1000 = vmatprep.mubr.bf16.mxu0 0
      %1001 = vmatmul.mubr.bf16.gmra.mxu0 %v937
      %v1002 = vpop.f32.mrf.mxu0
      %v1003 = vadd.f32 0.0, %v1002
      %v1004 = vpop.f32.mrf.mxu0
      %v1005 = vpop.f32.mrf.mxu0
      %v1006 = vadd.f32 0.0, %v1005
      %v1007 = vpop.f32.mrf.mxu0
      %1008 = vmatprep.mubr.bf16.mxu0 0
      %1009 = vmatmul.mubr.bf16.gmra.mxu0 %v940
      %v1010 = vpop.f32.mrf.mxu0
      %v1011 = vadd.f32 0.0, %v1010
      %v1012 = vpop.f32.mrf.mxu0
      %v1013 = vpop.f32.mrf.mxu0
      %v1014 = vadd.f32 0.0, %v1013
      %v1015 = vpop.f32.mrf.mxu0
      %1016 = vmatprep.mubr.bf16.mxu0 0
      %1017 = vmatmul.mubr.bf16.gmra.mxu0 %v943
      %v1018 = vpop.f32.mrf.mxu0
      %v1019 = vadd.f32 0.0, %v1018
      %v1020 = vpop.f32.mrf.mxu0
      %v1021 = vpop.f32.mrf.mxu0
      %v1022 = vadd.f32 0.0, %v1021
      %v1023 = vpop.f32.mrf.mxu0
      %1024 = vmatprep.mubr.bf16.mxu0 0
      %1025 = vmatmul.mubr.bf16.gmra.mxu0 %v946
      %v1026 = vpop.f32.mrf.mxu0
      %v1027 = vadd.f32 0.0, %v1026
      %v1028 = vpop.f32.mrf.mxu0
      %v1029 = vpop.f32.mrf.mxu0
      %v1030 = vadd.f32 0.0, %v1029
      %v1031 = vpop.f32.mrf.mxu0
      %1032 = vmatprep.mubr.bf16.mxu0 0
      %1033 = vmatmul.mubr.bf16.gmra.mxu0 %v949
      %v1034 = vpop.f32.mrf.mxu0
      %v1035 = vadd.f32 0.0, %v1034
      %v1036 = vpop.f32.mrf.mxu0
      %v1037 = vpop.f32.mrf.mxu0
      %v1038 = vadd.f32 0.0, %v1037
      %v1039 = vpop.f32.mrf.mxu0
      %1040 = vmatprep.mubr.bf16.mxu0 0
      %1041 = vmatmul.mubr.bf16.gmra.mxu0 %v952
      %v1042 = vpop.f32.mrf.mxu0
      %v1043 = vadd.f32 0.0, %v1042
      %v1044 = vpop.f32.mrf.mxu0
      %v1045 = vpop.f32.mrf.mxu0
      %v1046 = vadd.f32 0.0, %v1045
      %v1047 = vpop.f32.mrf.mxu0
      %1048 = vmatprep.mubr.bf16.mxu0 0
      %1049 = vmatmul.mubr.bf16.gmra.mxu0 %v955
      %v1050 = vpop.f32.mrf.mxu0
      %v1051 = vadd.f32 0.0, %v1050
      %v1052 = vpop.f32.mrf.mxu0
      %v1053 = vpop.f32.mrf.mxu0
      %v1054 = vadd.f32 0.0, %v1053
      %v1055 = vpop.f32.mrf.mxu0
      %1056 = vdwg.mxu0
      %v1057 = vadd.f32 %v796, %v995
      %v1058 = vadd.f32 %v799, %v998
      %v1059 = vadd.f32 %v804, %v1003
      %v1060 = vadd.f32 %v807, %v1006
      %v1061 = vadd.f32 %v812, %v1011
      %v1062 = vadd.f32 %v815, %v1014
      %v1063 = vadd.f32 %v820, %v1019
      %v1064 = vadd.f32 %v823, %v1022
      %v1065 = vadd.f32 %v828, %v1027
      %v1066 = vadd.f32 %v831, %v1030
      %v1067 = vadd.f32 %v836, %v1035
      %v1068 = vadd.f32 %v839, %v1038
      %v1069 = vadd.f32 %v844, %v1043
      %v1070 = vadd.f32 %v847, %v1046
      %v1071 = vadd.f32 %v852, %v1051
      %v1072 = vadd.f32 %v855, %v1054
      %v1073 = vpack.c.bf16 %v460, %v458
      %v1074 = vpack.c.bf16 %v464, %v462
      %v1075 = vpack.c.bf16 %v468, %v466
      %v1076 = vpack.c.bf16 %v472, %v470
      %v1077 = vpack.c.bf16 %v476, %v474
      %v1078 = vpack.c.bf16 %v480, %v478
      %v1079 = vpack.c.bf16 %v484, %v482
      %v1080 = vpack.c.bf16 %v488, %v486
      %s1081 = scalar_lea.vmem %s1, 12
      %v1082 = vld [vmem:[%s1081] sm:$0xf]
      %v1084 = vsel %vm608, %v1073, 0
      %v1087 = vsel %vm608, %v1074, 0
      %v1090 = vsel %vm608, %v1075, 0
      %v1093 = vsel %vm608, %v1076, 0
      %v1096 = vsel %vm608, %v1077, 0
      %v1099 = vsel %vm608, %v1078, 0
      %v1102 = vsel %vm608, %v1079, 0
      %v1105 = vsel %vm608, %v1080, 0
      %v1108 = vsel %vm633, %v1082, 0
      %1110 = vmatprep.subr.bf16.mxu0 0
      %1111 = vmatpush1.bf16.msra.mxu0 0
      %1112 = vmatprep.subr.bf16.mxu0 0
      %1113 = vmatpush1.bf16.msra.mxu0 0
      %1114 = vmatprep.subr.bf16.mxu0 0
      %1115 = vmatpush1.bf16.msra.mxu0 0
      %1116 = vmatprep.subr.bf16.mxu0 0
      %1117 = vmatpush1.bf16.msra.mxu0 0
      %1118 = vmatprep.subr.bf16.mxu0 0
      %1119 = vmatpush1.bf16.msra.mxu0 0
      %1120 = vmatprep.subr.bf16.mxu0 0
      %1121 = vmatpush1.bf16.msra.mxu0 0
      %1122 = vmatprep.subr.bf16.mxu0 0
      %1123 = vmatpush1.bf16.msra.mxu0 0
      %1124 = vmatprep.subr.bf16.mxu0 0
      %1125 = vmatpush1.bf16.msra.mxu0 %v1108
      %1126 = vmatprep.subr.bf16.mxu0 0
      %1127 = vmatpush2.bf16.msra.mxu0 0
      %1128 = vmatprep.subr.bf16.mxu0 0
      %1129 = vmatpush2.bf16.msra.mxu0 0
      %1130 = vmatprep.subr.bf16.mxu0 0
      %1131 = vmatpush2.bf16.msra.mxu0 0
      %1132 = vmatprep.subr.bf16.mxu0 0
      %1133 = vmatpush2.bf16.msra.mxu0 0
      %1134 = vmatprep.subr.bf16.mxu0 0
      %1135 = vmatpush2.bf16.msra.mxu0 0
      %1136 = vmatprep.subr.bf16.mxu0 0
      %1137 = vmatpush2.bf16.msra.mxu0 0
      %1138 = vmatprep.subr.bf16.mxu0 0
      %1139 = vmatpush2.bf16.msra.mxu0 0
      %1140 = vmatprep.subr.bf16.mxu0 0
      %1141 = vmatpush2.bf16.msra.mxu0 0
      %1142 = vmatprep.mubr.bf16.mxu0 0
      %1143 = vmatmul.mubr.bf16.gmra.mxu0 %v1084
      %v1144 = vpop.f32.mrf.mxu0
      %v1145 = vadd.f32 0.0, %v1144
      %v1146 = vpop.f32.mrf.mxu0
      %v1147 = vpop.f32.mrf.mxu0
      %v1148 = vadd.f32 0.0, %v1147
      %v1149 = vpop.f32.mrf.mxu0
      %1150 = vmatprep.mubr.bf16.mxu0 0
      %1151 = vmatmul.mubr.bf16.gmra.mxu0 %v1087
      %v1152 = vpop.f32.mrf.mxu0
      %v1153 = vadd.f32 0.0, %v1152
      %v1154 = vpop.f32.mrf.mxu0
      %v1155 = vpop.f32.mrf.mxu0
      %v1156 = vadd.f32 0.0, %v1155
      %v1157 = vpop.f32.mrf.mxu0
      %1158 = vmatprep.mubr.bf16.mxu0 0
      %1159 = vmatmul.mubr.bf16.gmra.mxu0 %v1090
      %v1160 = vpop.f32.mrf.mxu0
      %v1161 = vadd.f32 0.0, %v1160
      %v1162 = vpop.f32.mrf.mxu0
      %v1163 = vpop.f32.mrf.mxu0
      %v1164 = vadd.f32 0.0, %v1163
      %v1165 = vpop.f32.mrf.mxu0
      %1166 = vmatprep.mubr.bf16.mxu0 0
      %1167 = vmatmul.mubr.bf16.gmra.mxu0 %v1093
      %v1168 = vpop.f32.mrf.mxu0
      %v1169 = vadd.f32 0.0, %v1168
      %v1170 = vpop.f32.mrf.mxu0
      %v1171 = vpop.f32.mrf.mxu0
      %v1172 = vadd.f32 0.0, %v1171
      %v1173 = vpop.f32.mrf.mxu0
      %1174 = vmatprep.mubr.bf16.mxu0 0
      %1175 = vmatmul.mubr.bf16.gmra.mxu0 %v1096
      %v1176 = vpop.f32.mrf.mxu0
      %v1177 = vadd.f32 0.0, %v1176
      %v1178 = vpop.f32.mrf.mxu0
      %v1179 = vpop.f32.mrf.mxu0
      %v1180 = vadd.f32 0.0, %v1179
      %v1181 = vpop.f32.mrf.mxu0
      %1182 = vmatprep.mubr.bf16.mxu0 0
      %1183 = vmatmul.mubr.bf16.gmra.mxu0 %v1099
      %v1184 = vpop.f32.mrf.mxu0
      %v1185 = vadd.f32 0.0, %v1184
      %v1186 = vpop.f32.mrf.mxu0
      %v1187 = vpop.f32.mrf.mxu0
      %v1188 = vadd.f32 0.0, %v1187
      %v1189 = vpop.f32.mrf.mxu0
      %1190 = vmatprep.mubr.bf16.mxu0 0
      %1191 = vmatmul.mubr.bf16.gmra.mxu0 %v1102
      %v1192 = vpop.f32.mrf.mxu0
      %v1193 = vadd.f32 0.0, %v1192
      %v1194 = vpop.f32.mrf.mxu0
      %v1195 = vpop.f32.mrf.mxu0
      %v1196 = vadd.f32 0.0, %v1195
      %v1197 = vpop.f32.mrf.mxu0
      %1198 = vmatprep.mubr.bf16.mxu0 0
      %1199 = vmatmul.mubr.bf16.gmra.mxu0 %v1105
      %v1200 = vpop.f32.mrf.mxu0
      %v1201 = vadd.f32 0.0, %v1200
      %v1202 = vpop.f32.mrf.mxu0
      %v1203 = vpop.f32.mrf.mxu0
      %v1204 = vadd.f32 0.0, %v1203
      %v1205 = vpop.f32.mrf.mxu0
      %1206 = vdwg.mxu0
      %v1207 = vadd.f32 %v1057, %v1145
      %v1208 = vadd.f32 %v1058, %v1148
      %v1209 = vadd.f32 %v1059, %v1153
      %v1210 = vadd.f32 %v1060, %v1156
      %v1211 = vadd.f32 %v1061, %v1161
      %v1212 = vadd.f32 %v1062, %v1164
      %v1213 = vadd.f32 %v1063, %v1169
      %v1214 = vadd.f32 %v1064, %v1172
      %v1215 = vadd.f32 %v1065, %v1177
      %v1216 = vadd.f32 %v1066, %v1180
      %v1217 = vadd.f32 %v1067, %v1185
      %v1218 = vadd.f32 %v1068, %v1188
      %v1219 = vadd.f32 %v1069, %v1193
      %v1220 = vadd.f32 %v1070, %v1196
      %v1221 = vadd.f32 %v1071, %v1201
      %v1222 = vadd.f32 %v1072, %v1204
      %v1225 = vrot.slane %v488, 1
      %v1226 = vrot.slane %v489, 1
      %v1227 = vsel %vm533, %v1225, %v1226
      %v1229 = vpack.c.bf16 %v542, %v539
      %v1230 = vpack.c.bf16 %v548, %v545
      %v1231 = vpack.c.bf16 %v554, %v551
      %v1232 = vpack.c.bf16 %v560, %v557
      %v1233 = vpack.c.bf16 %v566, %v563
      %v1234 = vpack.c.bf16 %v572, %v569
      %v1235 = vpack.c.bf16 %v578, %v575
      %v1236 = vpack.c.bf16 %v1227, %v581
      %s1237 = scalar_lea.vmem %s1, 16
      %v1238 = vld [vmem:[%s1237] sm:$0xf]
      %v1240 = vsel %vm608, %v1229, 0
      %v1243 = vsel %vm608, %v1230, 0
      %v1246 = vsel %vm608, %v1231, 0
      %v1249 = vsel %vm608, %v1232, 0
      %v1252 = vsel %vm608, %v1233, 0
      %v1255 = vsel %vm608, %v1234, 0
      %v1258 = vsel %vm608, %v1235, 0
      %v1261 = vsel %vm608, %v1236, 0
      %v1264 = vsel %vm633, %v1238, 0
      %1266 = vmatprep.subr.bf16.mxu0 0
      %1267 = vmatpush1.bf16.msra.mxu0 0
      %1268 = vmatprep.subr.bf16.mxu0 0
      %1269 = vmatpush1.bf16.msra.mxu0 0
      %1270 = vmatprep.subr.bf16.mxu0 0
      %1271 = vmatpush1.bf16.msra.mxu0 0
      %1272 = vmatprep.subr.bf16.mxu0 0
      %1273 = vmatpush1.bf16.msra.mxu0 0
      %1274 = vmatprep.subr.bf16.mxu0 0
      %1275 = vmatpush1.bf16.msra.mxu0 0
      %1276 = vmatprep.subr.bf16.mxu0 0
      %1277 = vmatpush1.bf16.msra.mxu0 0
      %1278 = vmatprep.subr.bf16.mxu0 0
      %1279 = vmatpush1.bf16.msra.mxu0 0
      %1280 = vmatprep.subr.bf16.mxu0 0
      %1281 = vmatpush1.bf16.msra.mxu0 %v1264
      %1282 = vmatprep.subr.bf16.mxu0 0
      %1283 = vmatpush2.bf16.msra.mxu0 0
      %1284 = vmatprep.subr.bf16.mxu0 0
      %1285 = vmatpush2.bf16.msra.mxu0 0
      %1286 = vmatprep.subr.bf16.mxu0 0
      %1287 = vmatpush2.bf16.msra.mxu0 0
      %1288 = vmatprep.subr.bf16.mxu0 0
      %1289 = vmatpush2.bf16.msra.mxu0 0
      %1290 = vmatprep.subr.bf16.mxu0 0
      %1291 = vmatpush2.bf16.msra.mxu0 0
      %1292 = vmatprep.subr.bf16.mxu0 0
      %1293 = vmatpush2.bf16.msra.mxu0 0
      %1294 = vmatprep.subr.bf16.mxu0 0
      %1295 = vmatpush2.bf16.msra.mxu0 0
      %1296 = vmatprep.subr.bf16.mxu0 0
      %1297 = vmatpush2.bf16.msra.mxu0 0
      %1298 = vmatprep.mubr.bf16.mxu0 0
      %1299 = vmatmul.mubr.bf16.gmra.mxu0 %v1240
      %v1300 = vpop.f32.mrf.mxu0
      %v1301 = vadd.f32 0.0, %v1300
      %v1302 = vpop.f32.mrf.mxu0
      %v1303 = vpop.f32.mrf.mxu0
      %v1304 = vadd.f32 0.0, %v1303
      %v1305 = vpop.f32.mrf.mxu0
      %1306 = vmatprep.mubr.bf16.mxu0 0
      %1307 = vmatmul.mubr.bf16.gmra.mxu0 %v1243
      %v1308 = vpop.f32.mrf.mxu0
      %v1309 = vadd.f32 0.0, %v1308
      %v1310 = vpop.f32.mrf.mxu0
      %v1311 = vpop.f32.mrf.mxu0
      %v1312 = vadd.f32 0.0, %v1311
      %v1313 = vpop.f32.mrf.mxu0
      %1314 = vmatprep.mubr.bf16.mxu0 0
      %1315 = vmatmul.mubr.bf16.gmra.mxu0 %v1246
      %v1316 = vpop.f32.mrf.mxu0
      %v1317 = vadd.f32 0.0, %v1316
      %v1318 = vpop.f32.mrf.mxu0
      %v1319 = vpop.f32.mrf.mxu0
      %v1320 = vadd.f32 0.0, %v1319
      %v1321 = vpop.f32.mrf.mxu0
      %1322 = vmatprep.mubr.bf16.mxu0 0
      %1323 = vmatmul.mubr.bf16.gmra.mxu0 %v1249
      %v1324 = vpop.f32.mrf.mxu0
      %v1325 = vadd.f32 0.0, %v1324
      %v1326 = vpop.f32.mrf.mxu0
      %v1327 = vpop.f32.mrf.mxu0
      %v1328 = vadd.f32 0.0, %v1327
      %v1329 = vpop.f32.mrf.mxu0
      %1330 = vmatprep.mubr.bf16.mxu0 0
      %1331 = vmatmul.mubr.bf16.gmra.mxu0 %v1252
      %v1332 = vpop.f32.mrf.mxu0
      %v1333 = vadd.f32 0.0, %v1332
      %v1334 = vpop.f32.mrf.mxu0
      %v1335 = vpop.f32.mrf.mxu0
      %v1336 = vadd.f32 0.0, %v1335
      %v1337 = vpop.f32.mrf.mxu0
      %1338 = vmatprep.mubr.bf16.mxu0 0
      %1339 = vmatmul.mubr.bf16.gmra.mxu0 %v1255
      %v1340 = vpop.f32.mrf.mxu0
      %v1341 = vadd.f32 0.0, %v1340
      %v1342 = vpop.f32.mrf.mxu0
      %v1343 = vpop.f32.mrf.mxu0
      %v1344 = vadd.f32 0.0, %v1343
      %v1345 = vpop.f32.mrf.mxu0
      %1346 = vmatprep.mubr.bf16.mxu0 0
      %1347 = vmatmul.mubr.bf16.gmra.mxu0 %v1258
      %v1348 = vpop.f32.mrf.mxu0
      %v1349 = vadd.f32 0.0, %v1348
      %v1350 = vpop.f32.mrf.mxu0
      %v1351 = vpop.f32.mrf.mxu0
      %v1352 = vadd.f32 0.0, %v1351
      %v1353 = vpop.f32.mrf.mxu0
      %1354 = vmatprep.mubr.bf16.mxu0 0
      %1355 = vmatmul.mubr.bf16.gmra.mxu0 %v1261
      %v1356 = vpop.f32.mrf.mxu0
      %v1357 = vadd.f32 0.0, %v1356
      %v1358 = vpop.f32.mrf.mxu0
      %v1359 = vpop.f32.mrf.mxu0
      %v1360 = vadd.f32 0.0, %v1359
      %v1361 = vpop.f32.mrf.mxu0
      %1362 = vdwg.mxu0
      %v1363 = vadd.f32 %v1207, %v1301
      %v1364 = vadd.f32 %v1208, %v1304
      %v1365 = vadd.f32 %v1209, %v1309
      %v1366 = vadd.f32 %v1210, %v1312
      %v1367 = vadd.f32 %v1211, %v1317
      %v1368 = vadd.f32 %v1212, %v1320
      %v1369 = vadd.f32 %v1213, %v1325
      %v1370 = vadd.f32 %v1214, %v1328
      %v1371 = vadd.f32 %v1215, %v1333
      %v1372 = vadd.f32 %v1216, %v1336
      %v1373 = vadd.f32 %v1217, %v1341
      %v1374 = vadd.f32 %v1218, %v1344
      %v1375 = vadd.f32 %v1219, %v1349
      %v1376 = vadd.f32 %v1220, %v1352
      %v1377 = vadd.f32 %v1221, %v1357
      %v1378 = vadd.f32 %v1222, %v1360
      %v1379 = vrot.slane %v488, 2
      %v1380 = vrot.slane %v489, 2
      %v1381 = vsel %vm858, %v1379, %v1380
      %v1383 = vpack.c.bf16 %v867, %v864
      %v1384 = vpack.c.bf16 %v873, %v870
      %v1385 = vpack.c.bf16 %v879, %v876
      %v1386 = vpack.c.bf16 %v885, %v882
      %v1387 = vpack.c.bf16 %v891, %v888
      %v1388 = vpack.c.bf16 %v897, %v894
      %v1389 = vpack.c.bf16 %v903, %v900
      %v1390 = vpack.c.bf16 %v1381, %v906
      %s1391 = scalar_lea.vmem %s1, 20
      %v1392 = vld [vmem:[%s1391] sm:$0xf]
      %v1394 = vsel %vm608, %v1383, 0
      %v1397 = vsel %vm608, %v1384, 0
      %v1400 = vsel %vm608, %v1385, 0
      %v1403 = vsel %vm608, %v1386, 0
      %v1406 = vsel %vm608, %v1387, 0
      %v1409 = vsel %vm608, %v1388, 0
      %v1412 = vsel %vm608, %v1389, 0
      %v1415 = vsel %vm608, %v1390, 0
      %v1418 = vsel %vm633, %v1392, 0
      %1420 = vmatprep.subr.bf16.mxu0 0
      %1421 = vmatpush1.bf16.msra.mxu0 0
      %1422 = vmatprep.subr.bf16.mxu0 0
      %1423 = vmatpush1.bf16.msra.mxu0 0
      %1424 = vmatprep.subr.bf16.mxu0 0
      %1425 = vmatpush1.bf16.msra.mxu0 0
      %1426 = vmatprep.subr.bf16.mxu0 0
      %1427 = vmatpush1.bf16.msra.mxu0 0
      %1428 = vmatprep.subr.bf16.mxu0 0
      %1429 = vmatpush1.bf16.msra.mxu0 0
      %1430 = vmatprep.subr.bf16.mxu0 0
      %1431 = vmatpush1.bf16.msra.mxu0 0
      %1432 = vmatprep.subr.bf16.mxu0 0
      %1433 = vmatpush1.bf16.msra.mxu0 0
      %1434 = vmatprep.subr.bf16.mxu0 0
      %1435 = vmatpush1.bf16.msra.mxu0 %v1418
      %1436 = vmatprep.subr.bf16.mxu0 0
      %1437 = vmatpush2.bf16.msra.mxu0 0
      %1438 = vmatprep.subr.bf16.mxu0 0
      %1439 = vmatpush2.bf16.msra.mxu0 0
      %1440 = vmatprep.subr.bf16.mxu0 0
      %1441 = vmatpush2.bf16.msra.mxu0 0
      %1442 = vmatprep.subr.bf16.mxu0 0
      %1443 = vmatpush2.bf16.msra.mxu0 0
      %1444 = vmatprep.subr.bf16.mxu0 0
      %1445 = vmatpush2.bf16.msra.mxu0 0
      %1446 = vmatprep.subr.bf16.mxu0 0
      %1447 = vmatpush2.bf16.msra.mxu0 0
      %1448 = vmatprep.subr.bf16.mxu0 0
      %1449 = vmatpush2.bf16.msra.mxu0 0
      %1450 = vmatprep.subr.bf16.mxu0 0
      %1451 = vmatpush2.bf16.msra.mxu0 0
      %1452 = vmatprep.mubr.bf16.mxu0 0
      %1453 = vmatmul.mubr.bf16.gmra.mxu0 %v1394
      %v1454 = vpop.f32.mrf.mxu0
      %v1455 = vadd.f32 0.0, %v1454
      %v1456 = vpop.f32.mrf.mxu0
      %v1457 = vpop.f32.mrf.mxu0
      %v1458 = vadd.f32 0.0, %v1457
      %v1459 = vpop.f32.mrf.mxu0
      %1460 = vmatprep.mubr.bf16.mxu0 0
      %1461 = vmatmul.mubr.bf16.gmra.mxu0 %v1397
      %v1462 = vpop.f32.mrf.mxu0
      %v1463 = vadd.f32 0.0, %v1462
      %v1464 = vpop.f32.mrf.mxu0
      %v1465 = vpop.f32.mrf.mxu0
      %v1466 = vadd.f32 0.0, %v1465
      %v1467 = vpop.f32.mrf.mxu0
      %1468 = vmatprep.mubr.bf16.mxu0 0
      %1469 = vmatmul.mubr.bf16.gmra.mxu0 %v1400
      %v1470 = vpop.f32.mrf.mxu0
      %v1471 = vadd.f32 0.0, %v1470
      %v1472 = vpop.f32.mrf.mxu0
      %v1473 = vpop.f32.mrf.mxu0
      %v1474 = vadd.f32 0.0, %v1473
      %v1475 = vpop.f32.mrf.mxu0
      %1476 = vmatprep.mubr.bf16.mxu0 0
      %1477 = vmatmul.mubr.bf16.gmra.mxu0 %v1403
      %v1478 = vpop.f32.mrf.mxu0
      %v1479 = vadd.f32 0.0, %v1478
      %v1480 = vpop.f32.mrf.mxu0
      %v1481 = vpop.f32.mrf.mxu0
      %v1482 = vadd.f32 0.0, %v1481
      %v1483 = vpop.f32.mrf.mxu0
      %1484 = vmatprep.mubr.bf16.mxu0 0
      %1485 = vmatmul.mubr.bf16.gmra.mxu0 %v1406
      %v1486 = vpop.f32.mrf.mxu0
      %v1487 = vadd.f32 0.0, %v1486
      %v1488 = vpop.f32.mrf.mxu0
      %v1489 = vpop.f32.mrf.mxu0
      %v1490 = vadd.f32 0.0, %v1489
      %v1491 = vpop.f32.mrf.mxu0
      %1492 = vmatprep.mubr.bf16.mxu0 0
      %1493 = vmatmul.mubr.bf16.gmra.mxu0 %v1409
      %v1494 = vpop.f32.mrf.mxu0
      %v1495 = vadd.f32 0.0, %v1494
      %v1496 = vpop.f32.mrf.mxu0
      %v1497 = vpop.f32.mrf.mxu0
      %v1498 = vadd.f32 0.0, %v1497
      %v1499 = vpop.f32.mrf.mxu0
      %1500 = vmatprep.mubr.bf16.mxu0 0
      %1501 = vmatmul.mubr.bf16.gmra.mxu0 %v1412
      %v1502 = vpop.f32.mrf.mxu0
      %v1503 = vadd.f32 0.0, %v1502
      %v1504 = vpop.f32.mrf.mxu0
      %v1505 = vpop.f32.mrf.mxu0
      %v1506 = vadd.f32 0.0, %v1505
      %v1507 = vpop.f32.mrf.mxu0
      %1508 = vmatprep.mubr.bf16.mxu0 0
      %1509 = vmatmul.mubr.bf16.gmra.mxu0 %v1415
      %v1510 = vpop.f32.mrf.mxu0
      %v1511 = vadd.f32 0.0, %v1510
      %v1512 = vpop.f32.mrf.mxu0
      %v1513 = vpop.f32.mrf.mxu0
      %v1514 = vadd.f32 0.0, %v1513
      %v1515 = vpop.f32.mrf.mxu0
      %1516 = vdwg.mxu0
      %v1517 = vadd.f32 %v1363, %v1455
      %v1518 = vadd.f32 %v1364, %v1458
      %v1519 = vadd.f32 %v1365, %v1463
      %v1520 = vadd.f32 %v1366, %v1466
      %v1521 = vadd.f32 %v1367, %v1471
      %v1522 = vadd.f32 %v1368, %v1474
      %v1523 = vadd.f32 %v1369, %v1479
      %v1524 = vadd.f32 %v1370, %v1482
      %v1525 = vadd.f32 %v1371, %v1487
      %v1526 = vadd.f32 %v1372, %v1490
      %v1527 = vadd.f32 %v1373, %v1495
      %v1528 = vadd.f32 %v1374, %v1498
      %v1529 = vadd.f32 %v1375, %v1503
      %v1530 = vadd.f32 %v1376, %v1506
      %v1531 = vadd.f32 %v1377, %v1511
      %v1532 = vadd.f32 %v1378, %v1514
      %v1533 = vpack.c.bf16 %v490, %v488
      %s1534 = scalar_lea.vmem %s1, 24
      %v1535 = vld [vmem:[%s1534] sm:$0xf]
      %v1537 = vsel %vm608, %v1533, 0
      %v1540 = vsel %vm633, %v1535, 0
      %1542 = vmatprep.subr.bf16.mxu0 0
      %1543 = vmatpush1.bf16.msra.mxu0 0
      %1544 = vmatprep.subr.bf16.mxu0 0
      %1545 = vmatpush1.bf16.msra.mxu0 0
      %1546 = vmatprep.subr.bf16.mxu0 0
      %1547 = vmatpush1.bf16.msra.mxu0 0
      %1548 = vmatprep.subr.bf16.mxu0 0
      %1549 = vmatpush1.bf16.msra.mxu0 0
      %1550 = vmatprep.subr.bf16.mxu0 0
      %1551 = vmatpush1.bf16.msra.mxu0 0
      %1552 = vmatprep.subr.bf16.mxu0 0
      %1553 = vmatpush1.bf16.msra.mxu0 0
      %1554 = vmatprep.subr.bf16.mxu0 0
      %1555 = vmatpush1.bf16.msra.mxu0 0
      %1556 = vmatprep.subr.bf16.mxu0 0
      %1557 = vmatpush1.bf16.msra.mxu0 %v1540
      %1558 = vmatprep.subr.bf16.mxu0 0
      %1559 = vmatpush2.bf16.msra.mxu0 0
      %1560 = vmatprep.subr.bf16.mxu0 0
      %1561 = vmatpush2.bf16.msra.mxu0 0
      %1562 = vmatprep.subr.bf16.mxu0 0
      %1563 = vmatpush2.bf16.msra.mxu0 0
      %1564 = vmatprep.subr.bf16.mxu0 0
      %1565 = vmatpush2.bf16.msra.mxu0 0
      %1566 = vmatprep.subr.bf16.mxu0 0
      %1567 = vmatpush2.bf16.msra.mxu0 0
      %1568 = vmatprep.subr.bf16.mxu0 0
      %1569 = vmatpush2.bf16.msra.mxu0 0
      %1570 = vmatprep.subr.bf16.mxu0 0
      %1571 = vmatpush2.bf16.msra.mxu0 0
      %1572 = vmatprep.subr.bf16.mxu0 0
      %1573 = vmatpush2.bf16.msra.mxu0 0
      %1574 = vmatprep.mubr.bf16.mxu0 0
      %1575 = vmatmul.mubr.bf16.gmra.mxu0 %v738
      %v1576 = vpop.f32.mrf.mxu0
      %v1577 = vadd.f32 0.0, %v1576
      %v1578 = vpop.f32.mrf.mxu0
      %v1579 = vpop.f32.mrf.mxu0
      %v1580 = vadd.f32 0.0, %v1579
      %v1581 = vpop.f32.mrf.mxu0
      %1582 = vmatprep.mubr.bf16.mxu0 0
      %1583 = vmatmul.mubr.bf16.gmra.mxu0 %v741
      %v1584 = vpop.f32.mrf.mxu0
      %v1585 = vadd.f32 0.0, %v1584
      %v1586 = vpop.f32.mrf.mxu0
      %v1587 = vpop.f32.mrf.mxu0
      %v1588 = vadd.f32 0.0, %v1587
      %v1589 = vpop.f32.mrf.mxu0
      %1590 = vmatprep.mubr.bf16.mxu0 0
      %1591 = vmatmul.mubr.bf16.gmra.mxu0 %v744
      %v1592 = vpop.f32.mrf.mxu0
      %v1593 = vadd.f32 0.0, %v1592
      %v1594 = vpop.f32.mrf.mxu0
      %v1595 = vpop.f32.mrf.mxu0
      %v1596 = vadd.f32 0.0, %v1595
      %v1597 = vpop.f32.mrf.mxu0
      %1598 = vmatprep.mubr.bf16.mxu0 0
      %1599 = vmatmul.mubr.bf16.gmra.mxu0 %v747
      %v1600 = vpop.f32.mrf.mxu0
      %v1601 = vadd.f32 0.0, %v1600
      %v1602 = vpop.f32.mrf.mxu0
      %v1603 = vpop.f32.mrf.mxu0
      %v1604 = vadd.f32 0.0, %v1603
      %v1605 = vpop.f32.mrf.mxu0
      %1606 = vmatprep.mubr.bf16.mxu0 0
      %1607 = vmatmul.mubr.bf16.gmra.mxu0 %v750
      %v1608 = vpop.f32.mrf.mxu0
      %v1609 = vadd.f32 0.0, %v1608
      %v1610 = vpop.f32.mrf.mxu0
      %v1611 = vpop.f32.mrf.mxu0
      %v1612 = vadd.f32 0.0, %v1611
      %v1613 = vpop.f32.mrf.mxu0
      %1614 = vmatprep.mubr.bf16.mxu0 0
      %1615 = vmatmul.mubr.bf16.gmra.mxu0 %v753
      %v1616 = vpop.f32.mrf.mxu0
      %v1617 = vadd.f32 0.0, %v1616
      %v1618 = vpop.f32.mrf.mxu0
      %v1619 = vpop.f32.mrf.mxu0
      %v1620 = vadd.f32 0.0, %v1619
      %v1621 = vpop.f32.mrf.mxu0
      %1622 = vmatprep.mubr.bf16.mxu0 0
      %1623 = vmatmul.mubr.bf16.gmra.mxu0 %v756
      %v1624 = vpop.f32.mrf.mxu0
      %v1625 = vadd.f32 0.0, %v1624
      %v1626 = vpop.f32.mrf.mxu0
      %v1627 = vpop.f32.mrf.mxu0
      %v1628 = vadd.f32 0.0, %v1627
      %v1629 = vpop.f32.mrf.mxu0
      %1630 = vmatprep.mubr.bf16.mxu0 0
      %1631 = vmatmul.mubr.bf16.gmra.mxu0 %v1537
      %v1632 = vpop.f32.mrf.mxu0
      %v1633 = vadd.f32 0.0, %v1632
      %v1634 = vpop.f32.mrf.mxu0
      %v1635 = vpop.f32.mrf.mxu0
      %v1636 = vadd.f32 0.0, %v1635
      %v1637 = vpop.f32.mrf.mxu0
      %1638 = vdwg.mxu0
      %v1639 = vadd.f32 %v1517, %v1577
      %v1640 = vadd.f32 %v1518, %v1580
      %v1641 = vadd.f32 %v1519, %v1585
      %v1642 = vadd.f32 %v1520, %v1588
      %v1643 = vadd.f32 %v1521, %v1593
      %v1644 = vadd.f32 %v1522, %v1596
      %v1645 = vadd.f32 %v1523, %v1601
      %v1646 = vadd.f32 %v1524, %v1604
      %v1647 = vadd.f32 %v1525, %v1609
      %v1648 = vadd.f32 %v1526, %v1612
      %v1649 = vadd.f32 %v1527, %v1617
      %v1650 = vadd.f32 %v1528, %v1620
      %v1651 = vadd.f32 %v1529, %v1625
      %v1652 = vadd.f32 %v1530, %v1628
      %v1653 = vadd.f32 %v1531, %v1633
      %v1654 = vadd.f32 %v1532, %v1636
      %v1657 = vrot.slane %v490, 1
      %v1658 = vrot.slane %v491, 1
      %v1659 = vsel %vm533, %v1657, %v1658
      %v1661 = vpack.c.bf16 %v1659, %v1227
      %s1662 = scalar_lea.vmem %s1, 28
      %v1663 = vld [vmem:[%s1662] sm:$0xf]
      %v1665 = vsel %vm608, %v1661, 0
      %v1668 = vsel %vm633, %v1663, 0
      %1670 = vmatprep.subr.bf16.mxu0 0
      %1671 = vmatpush1.bf16.msra.mxu0 0
      %1672 = vmatprep.subr.bf16.mxu0 0
      %1673 = vmatpush1.bf16.msra.mxu0 0
      %1674 = vmatprep.subr.bf16.mxu0 0
      %1675 = vmatpush1.bf16.msra.mxu0 0
      %1676 = vmatprep.subr.bf16.mxu0 0
      %1677 = vmatpush1.bf16.msra.mxu0 0
      %1678 = vmatprep.subr.bf16.mxu0 0
      %1679 = vmatpush1.bf16.msra.mxu0 0
      %1680 = vmatprep.subr.bf16.mxu0 0
      %1681 = vmatpush1.bf16.msra.mxu0 0
      %1682 = vmatprep.subr.bf16.mxu0 0
      %1683 = vmatpush1.bf16.msra.mxu0 0
      %1684 = vmatprep.subr.bf16.mxu0 0
      %1685 = vmatpush1.bf16.msra.mxu0 %v1668
      %1686 = vmatprep.subr.bf16.mxu0 0
      %1687 = vmatpush2.bf16.msra.mxu0 0
      %1688 = vmatprep.subr.bf16.mxu0 0
      %1689 = vmatpush2.bf16.msra.mxu0 0
      %1690 = vmatprep.subr.bf16.mxu0 0
      %1691 = vmatpush2.bf16.msra.mxu0 0
      %1692 = vmatprep.subr.bf16.mxu0 0
      %1693 = vmatpush2.bf16.msra.mxu0 0
      %1694 = vmatprep.subr.bf16.mxu0 0
      %1695 = vmatpush2.bf16.msra.mxu0 0
      %1696 = vmatprep.subr.bf16.mxu0 0
      %1697 = vmatpush2.bf16.msra.mxu0 0
      %1698 = vmatprep.subr.bf16.mxu0 0
      %1699 = vmatpush2.bf16.msra.mxu0 0
      %1700 = vmatprep.subr.bf16.mxu0 0
      %1701 = vmatpush2.bf16.msra.mxu0 0
      %1702 = vmatprep.mubr.bf16.mxu0 0
      %1703 = vmatmul.mubr.bf16.gmra.mxu0 %v613
      %v1704 = vpop.f32.mrf.mxu0
      %v1705 = vadd.f32 0.0, %v1704
      %v1706 = vpop.f32.mrf.mxu0
      %v1707 = vpop.f32.mrf.mxu0
      %v1708 = vadd.f32 0.0, %v1707
      %v1709 = vpop.f32.mrf.mxu0
      %1710 = vmatprep.mubr.bf16.mxu0 0
      %1711 = vmatmul.mubr.bf16.gmra.mxu0 %v616
      %v1712 = vpop.f32.mrf.mxu0
      %v1713 = vadd.f32 0.0, %v1712
      %v1714 = vpop.f32.mrf.mxu0
      %v1715 = vpop.f32.mrf.mxu0
      %v1716 = vadd.f32 0.0, %v1715
      %v1717 = vpop.f32.mrf.mxu0
      %1718 = vmatprep.mubr.bf16.mxu0 0
      %1719 = vmatmul.mubr.bf16.gmra.mxu0 %v619
      %v1720 = vpop.f32.mrf.mxu0
      %v1721 = vadd.f32 0.0, %v1720
      %v1722 = vpop.f32.mrf.mxu0
      %v1723 = vpop.f32.mrf.mxu0
      %v1724 = vadd.f32 0.0, %v1723
      %v1725 = vpop.f32.mrf.mxu0
      %1726 = vmatprep.mubr.bf16.mxu0 0
      %1727 = vmatmul.mubr.bf16.gmra.mxu0 %v622
      %v1728 = vpop.f32.mrf.mxu0
      %v1729 = vadd.f32 0.0, %v1728
      %v1730 = vpop.f32.mrf.mxu0
      %v1731 = vpop.f32.mrf.mxu0
      %v1732 = vadd.f32 0.0, %v1731
      %v1733 = vpop.f32.mrf.mxu0
      %1734 = vmatprep.mubr.bf16.mxu0 0
      %1735 = vmatmul.mubr.bf16.gmra.mxu0 %v625
      %v1736 = vpop.f32.mrf.mxu0
      %v1737 = vadd.f32 0.0, %v1736
      %v1738 = vpop.f32.mrf.mxu0
      %v1739 = vpop.f32.mrf.mxu0
      %v1740 = vadd.f32 0.0, %v1739
      %v1741 = vpop.f32.mrf.mxu0
      %1742 = vmatprep.mubr.bf16.mxu0 0
      %1743 = vmatmul.mubr.bf16.gmra.mxu0 %v628
      %v1744 = vpop.f32.mrf.mxu0
      %v1745 = vadd.f32 0.0, %v1744
      %v1746 = vpop.f32.mrf.mxu0
      %v1747 = vpop.f32.mrf.mxu0
      %v1748 = vadd.f32 0.0, %v1747
      %v1749 = vpop.f32.mrf.mxu0
      %1750 = vmatprep.mubr.bf16.mxu0 0
      %1751 = vmatmul.mubr.bf16.gmra.mxu0 %v631
      %v1752 = vpop.f32.mrf.mxu0
      %v1753 = vadd.f32 0.0, %v1752
      %v1754 = vpop.f32.mrf.mxu0
      %v1755 = vpop.f32.mrf.mxu0
      %v1756 = vadd.f32 0.0, %v1755
      %v1757 = vpop.f32.mrf.mxu0
      %1758 = vmatprep.mubr.bf16.mxu0 0
      %1759 = vmatmul.mubr.bf16.gmra.mxu0 %v1665
      %v1760 = vpop.f32.mrf.mxu0
      %v1761 = vadd.f32 0.0, %v1760
      %v1762 = vpop.f32.mrf.mxu0
      %v1763 = vpop.f32.mrf.mxu0
      %v1764 = vadd.f32 0.0, %v1763
      %v1765 = vpop.f32.mrf.mxu0
      %1766 = vdwg.mxu0
      %v1767 = vadd.f32 %v1639, %v1705
      %v1768 = vadd.f32 %v1640, %v1708
      %v1769 = vadd.f32 %v1641, %v1713
      %v1770 = vadd.f32 %v1642, %v1716
      %v1771 = vadd.f32 %v1643, %v1721
      %v1772 = vadd.f32 %v1644, %v1724
      %v1773 = vadd.f32 %v1645, %v1729
      %v1774 = vadd.f32 %v1646, %v1732
      %v1775 = vadd.f32 %v1647, %v1737
      %v1776 = vadd.f32 %v1648, %v1740
      %v1777 = vadd.f32 %v1649, %v1745
      %v1778 = vadd.f32 %v1650, %v1748
      %v1779 = vadd.f32 %v1651, %v1753
      %v1780 = vadd.f32 %v1652, %v1756
      %v1781 = vadd.f32 %v1653, %v1761
      %v1782 = vadd.f32 %v1654, %v1764
      %v1783 = vrot.slane %v490, 2
      %v1784 = vrot.slane %v491, 2
      %v1785 = vsel %vm858, %v1783, %v1784
      %v1787 = vpack.c.bf16 %v1785, %v1381
      %s1788 = scalar_lea.vmem %s1, 32
      %v1789 = vld [vmem:[%s1788] sm:$0xf]
      %v1791 = vsel %vm608, %v1787, 0
      %v1794 = vsel %vm633, %v1789, 0
      %1796 = vmatprep.subr.bf16.mxu0 0
      %1797 = vmatpush1.bf16.msra.mxu0 0
      %1798 = vmatprep.subr.bf16.mxu0 0
      %1799 = vmatpush1.bf16.msra.mxu0 0
      %1800 = vmatprep.subr.bf16.mxu0 0
      %1801 = vmatpush1.bf16.msra.mxu0 0
      %1802 = vmatprep.subr.bf16.mxu0 0
      %1803 = vmatpush1.bf16.msra.mxu0 0
      %1804 = vmatprep.subr.bf16.mxu0 0
      %1805 = vmatpush1.bf16.msra.mxu0 0
      %1806 = vmatprep.subr.bf16.mxu0 0
      %1807 = vmatpush1.bf16.msra.mxu0 0
      %1808 = vmatprep.subr.bf16.mxu0 0
      %1809 = vmatpush1.bf16.msra.mxu0 0
      %1810 = vmatprep.subr.bf16.mxu0 0
      %1811 = vmatpush1.bf16.msra.mxu0 %v1794
      %1812 = vmatprep.subr.bf16.mxu0 0
      %1813 = vmatpush2.bf16.msra.mxu0 0
      %1814 = vmatprep.subr.bf16.mxu0 0
      %1815 = vmatpush2.bf16.msra.mxu0 0
      %1816 = vmatprep.subr.bf16.mxu0 0
      %1817 = vmatpush2.bf16.msra.mxu0 0
      %1818 = vmatprep.subr.bf16.mxu0 0
      %1819 = vmatpush2.bf16.msra.mxu0 0
      %1820 = vmatprep.subr.bf16.mxu0 0
      %1821 = vmatpush2.bf16.msra.mxu0 0
      %1822 = vmatprep.subr.bf16.mxu0 0
      %1823 = vmatpush2.bf16.msra.mxu0 0
      %1824 = vmatprep.subr.bf16.mxu0 0
      %1825 = vmatpush2.bf16.msra.mxu0 0
      %1826 = vmatprep.subr.bf16.mxu0 0
      %1827 = vmatpush2.bf16.msra.mxu0 0
      %1828 = vmatprep.mubr.bf16.mxu0 0
      %1829 = vmatmul.mubr.bf16.gmra.mxu0 %v937
      %v1830 = vpop.f32.mrf.mxu0
      %v1831 = vadd.f32 0.0, %v1830
      %v1832 = vpop.f32.mrf.mxu0
      %v1833 = vpop.f32.mrf.mxu0
      %v1834 = vadd.f32 0.0, %v1833
      %v1835 = vpop.f32.mrf.mxu0
      %1836 = vmatprep.mubr.bf16.mxu0 0
      %1837 = vmatmul.mubr.bf16.gmra.mxu0 %v940
      %v1838 = vpop.f32.mrf.mxu0
      %v1839 = vadd.f32 0.0, %v1838
      %v1840 = vpop.f32.mrf.mxu0
      %v1841 = vpop.f32.mrf.mxu0
      %v1842 = vadd.f32 0.0, %v1841
      %v1843 = vpop.f32.mrf.mxu0
      %1844 = vmatprep.mubr.bf16.mxu0 0
      %1845 = vmatmul.mubr.bf16.gmra.mxu0 %v943
      %v1846 = vpop.f32.mrf.mxu0
      %v1847 = vadd.f32 0.0, %v1846
      %v1848 = vpop.f32.mrf.mxu0
      %v1849 = vpop.f32.mrf.mxu0
      %v1850 = vadd.f32 0.0, %v1849
      %v1851 = vpop.f32.mrf.mxu0
      %1852 = vmatprep.mubr.bf16.mxu0 0
      %1853 = vmatmul.mubr.bf16.gmra.mxu0 %v946
      %v1854 = vpop.f32.mrf.mxu0
      %v1855 = vadd.f32 0.0, %v1854
      %v1856 = vpop.f32.mrf.mxu0
      %v1857 = vpop.f32.mrf.mxu0
      %v1858 = vadd.f32 0.0, %v1857
      %v1859 = vpop.f32.mrf.mxu0
      %1860 = vmatprep.mubr.bf16.mxu0 0
      %1861 = vmatmul.mubr.bf16.gmra.mxu0 %v949
      %v1862 = vpop.f32.mrf.mxu0
      %v1863 = vadd.f32 0.0, %v1862
      %v1864 = vpop.f32.mrf.mxu0
      %v1865 = vpop.f32.mrf.mxu0
      %v1866 = vadd.f32 0.0, %v1865
      %v1867 = vpop.f32.mrf.mxu0
      %1868 = vmatprep.mubr.bf16.mxu0 0
      %1869 = vmatmul.mubr.bf16.gmra.mxu0 %v952
      %v1870 = vpop.f32.mrf.mxu0
      %v1871 = vadd.f32 0.0, %v1870
      %v1872 = vpop.f32.mrf.mxu0
      %v1873 = vpop.f32.mrf.mxu0
      %v1874 = vadd.f32 0.0, %v1873
      %v1875 = vpop.f32.mrf.mxu0
      %1876 = vmatprep.mubr.bf16.mxu0 0
      %1877 = vmatmul.mubr.bf16.gmra.mxu0 %v955
      %v1878 = vpop.f32.mrf.mxu0
      %v1879 = vadd.f32 0.0, %v1878
      %v1880 = vpop.f32.mrf.mxu0
      %v1881 = vpop.f32.mrf.mxu0
      %v1882 = vadd.f32 0.0, %v1881
      %v1883 = vpop.f32.mrf.mxu0
      %1884 = vmatprep.mubr.bf16.mxu0 0
      %1885 = vmatmul.mubr.bf16.gmra.mxu0 %v1791
      %v1886 = vpop.f32.mrf.mxu0
      %v1887 = vadd.f32 0.0, %v1886
      %v1888 = vpop.f32.mrf.mxu0
      %v1889 = vpop.f32.mrf.mxu0
      %v1890 = vadd.f32 0.0, %v1889
      %v1891 = vpop.f32.mrf.mxu0
      %1892 = vdwg.mxu0
      %v1893 = vadd.f32 %v1767, %v1831
      %v1894 = vadd.f32 %v1768, %v1834
      %v1895 = vadd.f32 %v1769, %v1839
      %v1896 = vadd.f32 %v1770, %v1842
      %v1897 = vadd.f32 %v1771, %v1847
      %v1898 = vadd.f32 %v1772, %v1850
      %v1899 = vadd.f32 %v1773, %v1855
      %v1900 = vadd.f32 %v1774, %v1858
      %v1901 = vadd.f32 %v1775, %v1863
      %v1902 = vadd.f32 %v1776, %v1866
      %v1903 = vadd.f32 %v1777, %v1871
      %v1904 = vadd.f32 %v1778, %v1874
      %v1905 = vadd.f32 %v1779, %v1879
      %v1906 = vadd.f32 %v1780, %v1882
      %v1907 = vadd.f32 %v1781, %v1887
      %v1908 = vadd.f32 %v1782, %v1890
      %v1909 = vld [vmem:[%s2] sm:$0x1]
      %v1911 = vlaneseq
      %v1912 = vshrl.u32 %v1911, 7
      %v1913 = vsub.s32 0, %v1912
      %v1914 = vrot.slane %v1909, %v1913
      %v1916 = vadd.f32 %v1893, %v1914
      %v1917 = vadd.f32 %v1894, %v1914
      %v1918 = vadd.f32 %v1895, %v1914
      %v1919 = vadd.f32 %v1896, %v1914
      %v1920 = vadd.f32 %v1897, %v1914
      %v1921 = vadd.f32 %v1898, %v1914
      %v1922 = vadd.f32 %v1899, %v1914
      %v1923 = vadd.f32 %v1900, %v1914
      %v1924 = vadd.f32 %v1901, %v1914
      %v1925 = vadd.f32 %v1902, %v1914
      %v1926 = vadd.f32 %v1903, %v1914
      %v1927 = vadd.f32 %v1904, %v1914
      %v1928 = vadd.f32 %v1905, %v1914
      %v1929 = vadd.f32 %v1906, %v1914
      %v1930 = vadd.f32 %v1907, %v1914
      %v1931 = vadd.f32 %v1908, %v1914
      %v1932 = vtanh.pop %v1916
      %v1933 = vtanh.pop %v1917
      %v1934 = vtanh.pop %v1918
      %v1935 = vtanh.pop %v1919
      %v1936 = vtanh.pop %v1920
      %v1937 = vtanh.pop %v1921
      %v1938 = vtanh.pop %v1922
      %v1939 = vtanh.pop %v1923
      %v1940 = vtanh.pop %v1924
      %v1941 = vtanh.pop %v1925
      %v1942 = vtanh.pop %v1926
      %v1943 = vtanh.pop %v1927
      %v1944 = vtanh.pop %v1928
      %v1945 = vtanh.pop %v1929
      %v1946 = vtanh.pop %v1930
      %v1947 = vtanh.pop %v1931
      %1948 = vst [vmem:[%s224] sm:$0xff] %v1932
      %1949 = vst [vmem:[%s224 + $0x8] sm:$0xff] %v1933
      %1950 = vst [vmem:[%s224 + $0x10] sm:$0xff] %v1934
      %1951 = vst [vmem:[%s224 + $0x18] sm:$0xff] %v1935
      %1952 = vst [vmem:[%s224 + $0x20] sm:$0xff] %v1936
      %1953 = vst [vmem:[%s224 + $0x28] sm:$0xff] %v1937
      %1954 = vst [vmem:[%s224 + $0x30] sm:$0xff] %v1938
      %1955 = vst [vmem:[%s224 + $0x38] sm:$0xff] %v1939
      %1956 = vst [vmem:[%s224 + $0x40] sm:$0xff] %v1940
      %1957 = vst [vmem:[%s224 + $0x48] sm:$0xff] %v1941
      %1958 = vst [vmem:[%s224 + $0x50] sm:$0xff] %v1942
      %1959 = vst [vmem:[%s224 + $0x58] sm:$0xff] %v1943
      %1960 = vst [vmem:[%s224 + $0x60] sm:$0xff] %v1944
      %1961 = vst [vmem:[%s224 + $0x68] sm:$0xff] %v1945
      %1962 = vst [vmem:[%s224 + $0x70] sm:$0xff] %v1946
      %1963 = vst [vmem:[%s224 + $0x78] sm:$0xff] %v1947
      %p1964 = scmp.lt.s32.totalorder %s16, 1
      %s1965 = scalar_select %p1964, %s16, 1
      %s1966 = smul.addr %s1965, 16
      %s1967 = smul.addr %s1966, 8
      %s1968 = scalar_lea.vmem %s5, %s1967
      // Predicated region
      $region41: #{timbre_vae_forward.17} parent=39 // pred_check
        %p1969 = pneg %p144
      $region42: #{timbre_vae_forward.17} parent=39 // pred_check_branch
        %1971 = sbr.rel (%p1969) target = $region44
      $region43: #{timbre_vae_forward.17} parent=39 // pred_region
        _
      $region44: #{timbre_vae_forward.17} parent=39 // pred_fallthru
        _
    $region40: #{timbre_vae_forward.17} parent=5 // pred_fallthru
      _
    %p1972 = scmp.le.s32.totalorder 2, %s11
    // Predicated region
    $region45: #{timbre_vae_forward.17} parent=5 // pred_check
      %p1973 = pneg %p1972
    $region46: #{timbre_vae_forward.17} parent=5 // pred_check_branch
      %1975 = sbr.rel (%p1973) target = $region48
    $region47: #{timbre_vae_forward.17} parent=5 // pred_region
      %s1976 = ssub.s32 %s11, 2
      // Predicated region
      $region49: #{timbre_vae_forward.17} parent=47 // pred_check
        %p1977 = pneg %p150
      $region50: #{timbre_vae_forward.17} parent=47 // pred_check_branch
        %1979 = sbr.rel (%p1977) target = $region52
      $region51: #{timbre_vae_forward.17} parent=47 // pred_region
        %p1980 = scmp.lt.s32.totalorder %s17, 1
        %s1981 = scalar_select %p1980, %s17, 1
        %s1982 = smul.addr %s1981, 16
        %s1983 = smul.addr %s1982, 8
        %s1984 = scalar_lea.vmem %s5, %s1983
      $region52: #{timbre_vae_forward.17} parent=47 // pred_fallthru
        _
    $region48: #{timbre_vae_forward.17} parent=5 // pred_fallthru
      _
  $region6: #{timbre_vae_forward.17} parent=0 // loop_footer
    %s15 = sadd.s32 1, %s11
  $region7: #{timbre_vae_forward.17} parent=0 // loop_footer_branch
    %10 = sbr.rel target = $region3
  $region8: #{timbre_vae_forward.17} parent=0 // loop_exit
    _

</llo_original>
